<compile_context>
chip_gen: v6e
topology: v6e:2x2x1
jax: 0.10.0
libtpu: 0.0.40
codegen_flags: <defaults>
</compile_context>

<pallas_src>
import jax
import jax.numpy as jnp
from jax.experimental import pallas as pl
from jax.experimental.pallas import tpu as pltpu


# ---------------------------------------------------------------------------
# Fused kernel: all GRU layers over all timesteps + Linear + PReLU head.
# ---------------------------------------------------------------------------
def _fused_gru_head_kernel(gx1_ref, h0_ref,
                           whh1_ref, bhh1n_ref,
                           wihr_ref, bihr_ref, whhr_ref, bhhrn_ref,
                           wfc_ref, bfc_ref, alpha_ref,
                           out_ref, ht_ref):
    S = gx1_ref.shape[0]          # timesteps
    L = h0_ref.shape[0]           # number of GRU layers (>= 2)

    # Hoist loop-invariant weight/bias loads out of the unrolled time loop.
    whh1 = whh1_ref[...]          # (3, H, H)   layer-0 recurrent weights (W^T)
    bhh1n = bhh1n_ref[...]        # (1, H)      layer-0 b_hh (n gate only)
    wihr = wihr_ref[...]          # (L-1, 3, H, H) input weights, layers 1..L-1
    bihr = bihr_ref[...]          # (L-1, 3, 1, H) biases (r/z combined, n = b_ih_n)
    whhr = whhr_ref[...]          # (L-1, 3, H, H) recurrent weights
    bhhrn = bhhrn_ref[...]        # (L-1, 1, H)    b_hh (n gate only)

    def gru_cell(gx_r, gx_z, gx_n, h, w_r, w_z, w_n, bhh_n):
        # gx_* already include the input projection and, for r/z, BOTH biases.
        gh_r = jnp.dot(h, w_r, preferred_element_type=jnp.float32)
        gh_z = jnp.dot(h, w_z, preferred_element_type=jnp.float32)
        gh_n = jnp.dot(h, w_n, preferred_element_type=jnp.float32)
        r = jax.nn.sigmoid(gx_r + gh_r)
        z = jax.nn.sigmoid(gx_z + gh_z)
        n = jnp.tanh(gx_n + r * (gh_n + bhh_n))
        return (1.0 - z) * n + z * h

    def step(t, hs):
        # Layer 0: input projection precomputed (gx1), only recurrent work here.
        g1 = gx1_ref[t]                                    # (3, B, H)
        h_prev = gru_cell(g1[0], g1[1], g1[2], hs[0],
                          whh1[0], whh1[1], whh1[2], bhh1n)
        new_hs = [h_prev]
        # Layers 1..L-1: input is the previous layer's hidden state (serial
        # dep), so their input projections must stay inside the loop.
        for l in range(1, L):
            j = l - 1
            gx_r = jnp.dot(h_prev, wihr[j, 0],
                           preferred_element_type=jnp.float32) + bihr[j, 0]
            gx_z = jnp.dot(h_prev, wihr[j, 1],
                           preferred_element_type=jnp.float32) + bihr[j, 1]
            gx_n = jnp.dot(h_prev, wihr[j, 2],
                           preferred_element_type=jnp.float32) + bihr[j, 2]
            h_prev = gru_cell(gx_r, gx_z, gx_n, hs[l],
                              whhr[j, 0], whhr[j, 1], whhr[j, 2], bhhrn[j])
            new_hs.append(h_prev)
        return tuple(new_hs)

    hs0 = tuple(h0_ref[l] for l in range(L))
    hs = jax.lax.fori_loop(0, S, step, hs0, unroll=True)

    # Final hidden states (the only recurrent values the module returns).
    for l in range(L):
        ht_ref[l] = hs[l]

    # Fused classifier head: Linear(H -> C) + PReLU (single shared alpha).
    y = jnp.dot(hs[L - 1], wfc_ref[...],
                preferred_element_type=jnp.float32) + bfc_ref[...]
    a = alpha_ref[0]                                       # SMEM scalar
    out_ref[...] = jnp.where(y >= 0.0, y, a * y)


# ---------------------------------------------------------------------------
# Wrapper: hoisted layer-0 input projection (plain XLA) + one fused pallas_call
# ---------------------------------------------------------------------------
@jax.jit
def gru_forward(x, h0, kp):
    """x: (B, S, in_dim) batch_first; h0: (L, B, H). Returns (out, h_t1)."""
    B, S, D = x.shape
    L, _, H = h0.shape
    C = kp["w_fc_t"].shape[-1]

    # One dense (S*B, D) x (D, 3H) matmul — no serial dependency, done in XLA.
    x_tm = jnp.transpose(x, (1, 0, 2)).reshape(S * B, D)
    gx1 = x_tm @ kp["w_ih1_t"] + kp["b1_comb"]             # (S*B, 3H)
    gx1 = gx1.reshape(S, B, 3, H).transpose(0, 2, 1, 3)    # (S, 3, B, H)

    out, h_t1 = pl.pallas_call(
        _fused_gru_head_kernel,
        out_shape=(jax.ShapeDtypeStruct((B, C), jnp.float32),
                   jax.ShapeDtypeStruct((L, B, H), jnp.float32)),
        grid_spec=pltpu.PrefetchScalarGridSpec(
            num_scalar_prefetch=0,
            grid=(1,),
            in_specs=[
                pl.BlockSpec((S, 3, B, H), lambda i: (0, 0, 0, 0)),      # gx1
                pl.BlockSpec((L, B, H), lambda i: (0, 0, 0)),            # h0
                pl.BlockSpec((3, H, H), lambda i: (0, 0, 0)),            # whh layer0
                pl.BlockSpec((1, H), lambda i: (0, 0)),                  # b_hh_n l0
                pl.BlockSpec((L - 1, 3, H, H), lambda i: (0, 0, 0, 0)),  # w_ih rest
                pl.BlockSpec((L - 1, 3, 1, H), lambda i: (0, 0, 0, 0)),  # b rest
                pl.BlockSpec((L - 1, 3, H, H), lambda i: (0, 0, 0, 0)),  # w_hh rest
                pl.BlockSpec((L - 1, 1, H), lambda i: (0, 0, 0)),        # b_hh_n rest
                pl.BlockSpec((H, C), lambda i: (0, 0)),                  # fc weight^T
                pl.BlockSpec((1, C), lambda i: (0, 0)),                  # fc bias
                pl.BlockSpec(memory_space=pltpu.MemorySpace.SMEM),       # PReLU alpha
            ],
            out_specs=[
                pl.BlockSpec((B, C), lambda i: (0, 0)),                  # head output
                pl.BlockSpec((L, B, H), lambda i: (0, 0, 0)),            # h_t1
            ],
        ),
        compiler_params=pltpu.CompilerParams(
            dimension_semantics=("arbitrary",)),
    )(gx1, h0, kp["whh1_g"], kp["bhh1_n"],
      kp["wih_r"], kp["bih_r"], kp["whh_r"], kp["bhh_r_n"],
      kp["w_fc_t"], kp["b_fc"], kp["alpha"])
    return out, h_t1


# ---------------------------------------------------------------------------
# Parameters: PyTorch-layout source of truth + conversion to kernel layout
# ---------------------------------------------------------------------------
def init_torch_style_params(key, in_dim, hidden_dim, num_layer, num_classes):
    """Deterministic params in PyTorch conventions (weight_ih_l{k}: (3H, d_in), ...)."""
    tp = {}
    k = 1.0 / float(hidden_dim) ** 0.5
    keys = jax.random.split(key, num_layer * 4 + 2)
    ki = 0
    for l in range(num_layer):
        d_in = in_dim if l == 0 else hidden_dim
        tp[f"w_ih_l{l}"] = jax.random.uniform(keys[ki], (3 * hidden_dim, d_in),
                                              jnp.float32, -k, k); ki += 1
        tp[f"w_hh_l{l}"] = jax.random.uniform(keys[ki], (3 * hidden_dim, hidden_dim),
                                              jnp.float32, -k, k); ki += 1
        tp[f"b_ih_l{l}"] = jax.random.uniform(keys[ki], (3 * hidden_dim,),
                                              jnp.float32, -k, k); ki += 1
        tp[f"b_hh_l{l}"] = jax.random.uniform(keys[ki], (3 * hidden_dim,),
                                              jnp.float32, -k, k); ki += 1
    tp["fc_w"] = jax.random.uniform(keys[ki], (num_classes, hidden_dim),
                                    jnp.float32, -k, k); ki += 1
    tp["fc_b"] = jax.random.uniform(keys[ki], (num_classes,),
                                    jnp.float32, -k, k); ki += 1
    tp["alpha"] = jnp.array(0.25, jnp.float32)     # PReLU default init
    return tp


def prepare_kernel_params(tp, hidden_dim, num_layer):
    """Convert PyTorch-layout params into the fused-kernel layout (per-gate, transposed)."""
    assert num_layer >= 2, "fused kernel stacks layers 1..L-1; need num_layer >= 2"
    H = hidden_dim
    kp = {}

    # Layer 0: input projection happens in the wrapper (combined (D, 3H) weight),
    # with b_ih + b_hh pre-summed for the r/z gates (b_hh_n kept separate).
    b_ih0, b_hh0 = tp["b_ih_l0"], tp["b_hh_l0"]
    kp["w_ih1_t"] = tp["w_ih_l0"].T                                   # (D, 3H)
    kp["b1_comb"] = (b_ih0 + jnp.concatenate(
        [b_hh0[:2 * H], jnp.zeros((H,), jnp.float32)]))[None, :]      # (1, 3H)
    kp["whh1_g"] = tp["w_hh_l0"].reshape(3, H, H).transpose(0, 2, 1)  # (3, H, H) = W^T per gate
    kp["bhh1_n"] = b_hh0[2 * H:][None, :]                             # (1, H)

    # Layers 1..L-1: stacked per-gate weights (lane-aligned gate splits).
    wih_l, bih_l, whh_l, bhhn_l = [], [], [], []
    for l in range(1, num_layer):
        w_ih, w_hh = tp[f"w_ih_l{l}"], tp[f"w_hh_l{l}"]
        b_ih, b_hh = tp[f"b_ih_l{l}"], tp[f"b_hh_l{l}"]
        wih_l.append(w_ih.reshape(3, H, H).transpose(0, 2, 1))
        whh_l.append(w_hh.reshape(3, H, H).transpose(0, 2, 1))
        bc = b_ih + jnp.concatenate([b_hh[:2 * H], jnp.zeros((H,), jnp.float32)])
        bih_l.append(bc.reshape(3, 1, H))
        bhhn_l.append(b_hh[2 * H:][None, :])
    kp["wih_r"] = jnp.stack(wih_l)      # (L-1, 3, H, H)
    kp["bih_r"] = jnp.stack(bih_l)      # (L-1, 3, 1, H)
    kp["whh_r"] = jnp.stack(whh_l)      # (L-1, 3, H, H)
    kp["bhh_r_n"] = jnp.stack(bhhn_l)   # (L-1, 1, H)

    # Head.
    kp["w_fc_t"] = tp["fc_w"].T           # (H, C)
    kp["b_fc"] = tp["fc_b"][None, :]      # (1, C)
    kp["alpha"] = tp["alpha"].reshape(1)  # (1,) — goes to SMEM
    return kp


# ---------------------------------------------------------------------------
# Pure-JAX reference (PyTorch eval semantics), used only for verification.
# ---------------------------------------------------------------------------
def gru_forward_ref(x, h0, tp, num_layer):
    B, S, _ = x.shape
    H = tp["w_hh_l0"].shape[1]
    layer_in = jnp.transpose(x, (1, 0, 2))          # (S, B, D)
    h_finals = []
    for l in range(num_layer):
        w_ih, w_hh = tp[f"w_ih_l{l}"], tp[f"w_hh_l{l}"]
        b_ih, b_hh = tp[f"b_ih_l{l}"], tp[f"b_hh_l{l}"]
        h = h0[l]
        outs = []
        for t in range(S):
            gx = layer_in[t] @ w_ih.T + b_ih
            gh = h @ w_hh.T + b_hh
            r = jax.nn.sigmoid(gx[:, :H] + gh[:, :H])
            z = jax.nn.sigmoid(gx[:, H:2 * H] + gh[:, H:2 * H])
            n = jnp.tanh(gx[:, 2 * H:] + r * gh[:, 2 * H:])
            h = (1.0 - z) * n + z * h
            outs.append(h)
        layer_in = jnp.stack(outs, axis=0)
        h_finals.append(h)
    h_t1 = jnp.stack(h_finals, axis=0)
    y = h_t1[-1] @ tp["fc_w"].T + tp["fc_b"]
    y = jnp.where(y >= 0.0, y, tp["alpha"] * y)
    return y, h_t1


if __name__ == "__main__":
    B, S, IN_DIM, HIDDEN, NUM_LAYER, NUM_CLASSES = 2, 8, 16, 32, 2, 5

    root = jax.random.PRNGKey(0)
    kx, kh, kparam = jax.random.split(root, 3)
    x = jax.random.normal(kx, (B, S, IN_DIM), jnp.float32)
    h0 = jax.random.normal(kh, (NUM_LAYER, B, HIDDEN), jnp.float32)

    torch_params = init_torch_style_params(kparam, IN_DIM, HIDDEN, NUM_LAYER, NUM_CLASSES)
    kernel_params = prepare_kernel_params(torch_params, HIDDEN, NUM_LAYER)

    out, h_t1 = gru_forward(x, h0, kernel_params)
    out = jax.block_until_ready(out)
    h_t1 = jax.block_until_ready(h_t1)

    out_ref, h_ref = gru_forward_ref(x, h0, torch_params, NUM_LAYER)
    assert out.shape == (B, NUM_CLASSES) and h_t1.shape == (NUM_LAYER, B, HIDDEN)
    assert jnp.allclose(out, out_ref, atol=1e-5, rtol=1e-5), "output mismatch"
    assert jnp.allclose(h_t1, h_ref, atol=1e-5, rtol=1e-5), "hidden mismatch"

    print("KERNEL_OK")
</pallas_src>

<mosaic_0001>
module attributes {stable_mosaic.version = 11 : i64} {
  func.func @_fused_gru_head_kernel(%arg0: i32, %arg1: memref<8x3x2x32xf32, #tpu.memory_space<vmem>>, %arg2: memref<2x2x32xf32, #tpu.memory_space<vmem>>, %arg3: memref<3x32x32xf32, #tpu.memory_space<vmem>>, %arg4: memref<1x32xf32, #tpu.memory_space<vmem>>, %arg5: memref<1x3x32x32xf32, #tpu.memory_space<vmem>>, %arg6: memref<1x3x1x32xf32, #tpu.memory_space<vmem>>, %arg7: memref<1x3x32x32xf32, #tpu.memory_space<vmem>>, %arg8: memref<1x1x32xf32, #tpu.memory_space<vmem>>, %arg9: memref<32x5xf32, #tpu.memory_space<vmem>>, %arg10: memref<1x5xf32, #tpu.memory_space<vmem>>, %arg11: memref<1xf32, #tpu.memory_space<smem>>, %arg12: memref<2x5xf32, #tpu.memory_space<vmem>>, %arg13: memref<2x2x32xf32, #tpu.memory_space<vmem>>) attributes {dimension_semantics = [#tpu.dimension_semantics<arbitrary>], iteration_bounds = array<i64: 1>, scalar_prefetch = 0 : i64, scratch_operands = 0 : i64, tpu.core_type = #tpu.core_type<tc>, window_params = [{pipeline_mode = #tpu.pipeline_mode<synchronous>, transform_indices = @transform_0, window_bounds = array<i64: 8, 3, 2, 32>}, {pipeline_mode = #tpu.pipeline_mode<synchronous>, transform_indices = @transform_1, window_bounds = array<i64: 2, 2, 32>}, {pipeline_mode = #tpu.pipeline_mode<synchronous>, transform_indices = @transform_2, window_bounds = array<i64: 3, 32, 32>}, {pipeline_mode = #tpu.pipeline_mode<synchronous>, transform_indices = @transform_3, window_bounds = array<i64: 1, 32>}, {pipeline_mode = #tpu.pipeline_mode<synchronous>, transform_indices = @transform_4, window_bounds = array<i64: 1, 3, 32, 32>}, {pipeline_mode = #tpu.pipeline_mode<synchronous>, transform_indices = @transform_5, window_bounds = array<i64: 1, 3, 1, 32>}, {pipeline_mode = #tpu.pipeline_mode<synchronous>, transform_indices = @transform_6, window_bounds = array<i64: 1, 3, 32, 32>}, {pipeline_mode = #tpu.pipeline_mode<synchronous>, transform_indices = @transform_7, window_bounds = array<i64: 1, 1, 32>}, {pipeline_mode = #tpu.pipeline_mode<synchronous>, transform_indices = @transform_8, window_bounds = array<i64: 32, 5>}, {pipeline_mode = #tpu.pipeline_mode<synchronous>, transform_indices = @transform_9, window_bounds = array<i64: 1, 5>}, {transform_indices = @transform_10, window_bounds = array<i64: 1>}, {pipeline_mode = #tpu.pipeline_mode<synchronous>, transform_indices = @transform_11, window_bounds = array<i64: 2, 5>}, {pipeline_mode = #tpu.pipeline_mode<synchronous>, transform_indices = @transform_12, window_bounds = array<i64: 2, 2, 32>}]} {
    %c0 = arith.constant 0 : index
    %c0_0 = arith.constant 0 : index
    %c0_1 = arith.constant 0 : index
    %0 = vector.load %arg3[%c0, %c0_0, %c0_1] : memref<3x32x32xf32, #tpu.memory_space<vmem>>, vector<3x32x32xf32>
    %c0_2 = arith.constant 0 : index
    %c0_3 = arith.constant 0 : index
    %1 = vector.load %arg4[%c0_2, %c0_3] : memref<1x32xf32, #tpu.memory_space<vmem>>, vector<1x32xf32>
    %c0_4 = arith.constant 0 : index
    %c0_5 = arith.constant 0 : index
    %c0_6 = arith.constant 0 : index
    %c0_7 = arith.constant 0 : index
    %2 = vector.load %arg5[%c0_4, %c0_5, %c0_6, %c0_7] : memref<1x3x32x32xf32, #tpu.memory_space<vmem>>, vector<1x3x32x32xf32>
    %c0_8 = arith.constant 0 : index
    %c0_9 = arith.constant 0 : index
    %c0_10 = arith.constant 0 : index
    %c0_11 = arith.constant 0 : index
    %3 = vector.load %arg6[%c0_8, %c0_9, %c0_10, %c0_11] : memref<1x3x1x32xf32, #tpu.memory_space<vmem>>, vector<1x3x1x32xf32>
    %c0_12 = arith.constant 0 : index
    %c0_13 = arith.constant 0 : index
    %c0_14 = arith.constant 0 : index
    %c0_15 = arith.constant 0 : index
    %4 = vector.load %arg7[%c0_12, %c0_13, %c0_14, %c0_15] : memref<1x3x32x32xf32, #tpu.memory_space<vmem>>, vector<1x3x32x32xf32>
    %c0_16 = arith.constant 0 : index
    %c0_17 = arith.constant 0 : index
    %c0_18 = arith.constant 0 : index
    %5 = vector.load %arg8[%c0_16, %c0_17, %c0_18] : memref<1x1x32xf32, #tpu.memory_space<vmem>>, vector<1x1x32xf32>
    %c0_19 = arith.constant 0 : index
    %c0_20 = arith.constant 0 : index
    %c0_21 = arith.constant 0 : index
    %6 = vector.load %arg2[%c0_19, %c0_20, %c0_21] : memref<2x2x32xf32, #tpu.memory_space<vmem>>, vector<1x2x32xf32>
    %7 = vector.shape_cast %6 : vector<1x2x32xf32> to vector<2x32xf32>
    %c1 = arith.constant 1 : index
    %c0_22 = arith.constant 0 : index
    %c0_23 = arith.constant 0 : index
    %8 = vector.load %arg2[%c1, %c0_22, %c0_23] : memref<2x2x32xf32, #tpu.memory_space<vmem>>, vector<1x2x32xf32>
    %9 = vector.shape_cast %8 : vector<1x2x32xf32> to vector<2x32xf32>
    %c0_i32 = arith.constant 0 : i32
    %10 = arith.index_cast %c0_i32 : i32 to index
    %c0_24 = arith.constant 0 : index
    %c0_25 = arith.constant 0 : index
    %c0_26 = arith.constant 0 : index
    %11 = vector.load %arg1[%10, %c0_24, %c0_25, %c0_26] : memref<8x3x2x32xf32, #tpu.memory_space<vmem>>, vector<1x3x2x32xf32>
    %12 = vector.shape_cast %11 : vector<1x3x2x32xf32> to vector<3x2x32xf32>
    %13 = vector.extract_strided_slice %12 {offsets = [0, 0, 0], sizes = [1, 2, 32], strides = [1, 1, 1]} : vector<3x2x32xf32> to vector<1x2x32xf32>
    %14 = vector.shape_cast %13 : vector<1x2x32xf32> to vector<2x32xf32>
    %15 = vector.extract_strided_slice %12 {offsets = [1, 0, 0], sizes = [1, 2, 32], strides = [1, 1, 1]} : vector<3x2x32xf32> to vector<1x2x32xf32>
    %16 = vector.shape_cast %15 : vector<1x2x32xf32> to vector<2x32xf32>
    %17 = vector.extract_strided_slice %12 {offsets = [2, 0, 0], sizes = [1, 2, 32], strides = [1, 1, 1]} : vector<3x2x32xf32> to vector<1x2x32xf32>
    %18 = vector.shape_cast %17 : vector<1x2x32xf32> to vector<2x32xf32>
    %19 = vector.extract_strided_slice %0 {offsets = [0, 0, 0], sizes = [1, 32, 32], strides = [1, 1, 1]} : vector<3x32x32xf32> to vector<1x32x32xf32>
    %20 = vector.shape_cast %19 : vector<1x32x32xf32> to vector<32x32xf32>
    %21 = vector.extract_strided_slice %0 {offsets = [1, 0, 0], sizes = [1, 32, 32], strides = [1, 1, 1]} : vector<3x32x32xf32> to vector<1x32x32xf32>
    %22 = vector.shape_cast %21 : vector<1x32x32xf32> to vector<32x32xf32>
    %23 = vector.extract_strided_slice %0 {offsets = [2, 0, 0], sizes = [1, 32, 32], strides = [1, 1, 1]} : vector<3x32x32xf32> to vector<1x32x32xf32>
    %24 = vector.shape_cast %23 : vector<1x32x32xf32> to vector<32x32xf32>
    %cst = arith.constant dense<0.000000e+00> : vector<2x32xf32>
    %25 = tpu.matmul %7, %20, %cst {dimension_numbers = #tpu.dot_dimension_numbers<[1], [0], [0], [1], [0, 0, 1, 1], [], []>} : vector<2x32xf32>, vector<32x32xf32>, vector<2x32xf32> -> vector<2x32xf32>
    %cst_27 = arith.constant dense<0.000000e+00> : vector<2x32xf32>
    %26 = tpu.matmul %7, %22, %cst_27 {dimension_numbers = #tpu.dot_dimension_numbers<[1], [0], [0], [1], [0, 0, 1, 1], [], []>} : vector<2x32xf32>, vector<32x32xf32>, vector<2x32xf32> -> vector<2x32xf32>
    %cst_28 = arith.constant dense<0.000000e+00> : vector<2x32xf32>
    %27 = tpu.matmul %7, %24, %cst_28 {dimension_numbers = #tpu.dot_dimension_numbers<[1], [0], [0], [1], [0, 0, 1, 1], [], []>} : vector<2x32xf32>, vector<32x32xf32>, vector<2x32xf32> -> vector<2x32xf32>
    %28 = arith.addf %14, %25 : vector<2x32xf32>
    %29 = arith.negf %28 : vector<2x32xf32>
    %30 = math.exp %29 : vector<2x32xf32>
    %cst_29 = arith.constant 1.000000e+00 : f32
    %31 = vector.broadcast %cst_29 : f32 to vector<2x32xf32>
    %32 = arith.addf %31, %30 : vector<2x32xf32>
    %33 = arith.divf %31, %32 : vector<2x32xf32>
    %34 = arith.addf %16, %26 : vector<2x32xf32>
    %35 = arith.negf %34 : vector<2x32xf32>
    %36 = math.exp %35 : vector<2x32xf32>
    %cst_30 = arith.constant 1.000000e+00 : f32
    %37 = vector.broadcast %cst_30 : f32 to vector<2x32xf32>
    %38 = arith.addf %37, %36 : vector<2x32xf32>
    %39 = arith.divf %37, %38 : vector<2x32xf32>
    %40 = vector.broadcast %1 : vector<1x32xf32> to vector<2x32xf32>
    %41 = arith.addf %27, %40 : vector<2x32xf32>
    %42 = arith.mulf %33, %41 : vector<2x32xf32>
    %43 = arith.addf %18, %42 : vector<2x32xf32>
    %44 = math.tanh %43 : vector<2x32xf32>
    %cst_31 = arith.constant 1.000000e+00 : f32
    %45 = vector.broadcast %cst_31 : f32 to vector<2x32xf32>
    %46 = arith.subf %45, %39 : vector<2x32xf32>
    %47 = arith.mulf %46, %44 : vector<2x32xf32>
    %48 = arith.mulf %39, %7 : vector<2x32xf32>
    %49 = arith.addf %47, %48 : vector<2x32xf32>
    %50 = vector.extract_strided_slice %2 {offsets = [0, 0, 0, 0], sizes = [1, 1, 32, 32], strides = [1, 1, 1, 1]} : vector<1x3x32x32xf32> to vector<1x1x32x32xf32>
    %51 = vector.shape_cast %50 : vector<1x1x32x32xf32> to vector<32x32xf32>
    %cst_32 = arith.constant dense<0.000000e+00> : vector<2x32xf32>
    %52 = tpu.matmul %49, %51, %cst_32 {dimension_numbers = #tpu.dot_dimension_numbers<[1], [0], [0], [1], [0, 0, 1, 1], [], []>} : vector<2x32xf32>, vector<32x32xf32>, vector<2x32xf32> -> vector<2x32xf32>
    %53 = vector.extract_strided_slice %3 {offsets = [0, 0, 0, 0], sizes = [1, 1, 1, 32], strides = [1, 1, 1, 1]} : vector<1x3x1x32xf32> to vector<1x1x1x32xf32>
    %54 = vector.shape_cast %53 : vector<1x1x1x32xf32> to vector<1x32xf32>
    %55 = vector.broadcast %54 : vector<1x32xf32> to vector<2x32xf32>
    %56 = arith.addf %52, %55 : vector<2x32xf32>
    %57 = vector.extract_strided_slice %2 {offsets = [0, 1, 0, 0], sizes = [1, 1, 32, 32], strides = [1, 1, 1, 1]} : vector<1x3x32x32xf32> to vector<1x1x32x32xf32>
    %58 = vector.shape_cast %57 : vector<1x1x32x32xf32> to vector<32x32xf32>
    %cst_33 = arith.constant dense<0.000000e+00> : vector<2x32xf32>
    %59 = tpu.matmul %49, %58, %cst_33 {dimension_numbers = #tpu.dot_dimension_numbers<[1], [0], [0], [1], [0, 0, 1, 1], [], []>} : vector<2x32xf32>, vector<32x32xf32>, vector<2x32xf32> -> vector<2x32xf32>
    %60 = vector.extract_strided_slice %3 {offsets = [0, 1, 0, 0], sizes = [1, 1, 1, 32], strides = [1, 1, 1, 1]} : vector<1x3x1x32xf32> to vector<1x1x1x32xf32>
    %61 = vector.shape_cast %60 : vector<1x1x1x32xf32> to vector<1x32xf32>
    %62 = vector.broadcast %61 : vector<1x32xf32> to vector<2x32xf32>
    %63 = arith.addf %59, %62 : vector<2x32xf32>
    %64 = vector.extract_strided_slice %2 {offsets = [0, 2, 0, 0], sizes = [1, 1, 32, 32], strides = [1, 1, 1, 1]} : vector<1x3x32x32xf32> to vector<1x1x32x32xf32>
    %65 = vector.shape_cast %64 : vector<1x1x32x32xf32> to vector<32x32xf32>
    %cst_34 = arith.constant dense<0.000000e+00> : vector<2x32xf32>
    %66 = tpu.matmul %49, %65, %cst_34 {dimension_numbers = #tpu.dot_dimension_numbers<[1], [0], [0], [1], [0, 0, 1, 1], [], []>} : vector<2x32xf32>, vector<32x32xf32>, vector<2x32xf32> -> vector<2x32xf32>
    %67 = vector.extract_strided_slice %3 {offsets = [0, 2, 0, 0], sizes = [1, 1, 1, 32], strides = [1, 1, 1, 1]} : vector<1x3x1x32xf32> to vector<1x1x1x32xf32>
    %68 = vector.shape_cast %67 : vector<1x1x1x32xf32> to vector<1x32xf32>
    %69 = vector.broadcast %68 : vector<1x32xf32> to vector<2x32xf32>
    %70 = arith.addf %66, %69 : vector<2x32xf32>
    %71 = vector.extract_strided_slice %4 {offsets = [0, 0, 0, 0], sizes = [1, 1, 32, 32], strides = [1, 1, 1, 1]} : vector<1x3x32x32xf32> to vector<1x1x32x32xf32>
    %72 = vector.shape_cast %71 : vector<1x1x32x32xf32> to vector<32x32xf32>
    %73 = vector.extract_strided_slice %4 {offsets = [0, 1, 0, 0], sizes = [1, 1, 32, 32], strides = [1, 1, 1, 1]} : vector<1x3x32x32xf32> to vector<1x1x32x32xf32>
    %74 = vector.shape_cast %73 : vector<1x1x32x32xf32> to vector<32x32xf32>
    %75 = vector.extract_strided_slice %4 {offsets = [0, 2, 0, 0], sizes = [1, 1, 32, 32], strides = [1, 1, 1, 1]} : vector<1x3x32x32xf32> to vector<1x1x32x32xf32>
    %76 = vector.shape_cast %75 : vector<1x1x32x32xf32> to vector<32x32xf32>
    %77 = vector.shape_cast %5 : vector<1x1x32xf32> to vector<1x32xf32>
    %cst_35 = arith.constant dense<0.000000e+00> : vector<2x32xf32>
    %78 = tpu.matmul %9, %72, %cst_35 {dimension_numbers = #tpu.dot_dimension_numbers<[1], [0], [0], [1], [0, 0, 1, 1], [], []>} : vector<2x32xf32>, vector<32x32xf32>, vector<2x32xf32> -> vector<2x32xf32>
    %cst_36 = arith.constant dense<0.000000e+00> : vector<2x32xf32>
    %79 = tpu.matmul %9, %74, %cst_36 {dimension_numbers = #tpu.dot_dimension_numbers<[1], [0], [0], [1], [0, 0, 1, 1], [], []>} : vector<2x32xf32>, vector<32x32xf32>, vector<2x32xf32> -> vector<2x32xf32>
    %cst_37 = arith.constant dense<0.000000e+00> : vector<2x32xf32>
    %80 = tpu.matmul %9, %76, %cst_37 {dimension_numbers = #tpu.dot_dimension_numbers<[1], [0], [0], [1], [0, 0, 1, 1], [], []>} : vector<2x32xf32>, vector<32x32xf32>, vector<2x32xf32> -> vector<2x32xf32>
    %81 = arith.addf %56, %78 : vector<2x32xf32>
    %82 = arith.negf %81 : vector<2x32xf32>
    %83 = math.exp %82 : vector<2x32xf32>
    %cst_38 = arith.constant 1.000000e+00 : f32
    %84 = vector.broadcast %cst_38 : f32 to vector<2x32xf32>
    %85 = arith.addf %84, %83 : vector<2x32xf32>
    %86 = arith.divf %84, %85 : vector<2x32xf32>
    %87 = arith.addf %63, %79 : vector<2x32xf32>
    %88 = arith.negf %87 : vector<2x32xf32>
    %89 = math.exp %88 : vector<2x32xf32>
    %cst_39 = arith.constant 1.000000e+00 : f32
    %90 = vector.broadcast %cst_39 : f32 to vector<2x32xf32>
    %91 = arith.addf %90, %89 : vector<2x32xf32>
    %92 = arith.divf %90, %91 : vector<2x32xf32>
    %93 = vector.broadcast %77 : vector<1x32xf32> to vector<2x32xf32>
    %94 = arith.addf %80, %93 : vector<2x32xf32>
    %95 = arith.mulf %86, %94 : vector<2x32xf32>
    %96 = arith.addf %70, %95 : vector<2x32xf32>
    %97 = math.tanh %96 : vector<2x32xf32>
    %cst_40 = arith.constant 1.000000e+00 : f32
    %98 = vector.broadcast %cst_40 : f32 to vector<2x32xf32>
    %99 = arith.subf %98, %92 : vector<2x32xf32>
    %100 = arith.mulf %99, %97 : vector<2x32xf32>
    %101 = arith.mulf %92, %9 : vector<2x32xf32>
    %102 = arith.addf %100, %101 : vector<2x32xf32>
    %c1_i32 = arith.constant 1 : i32
    %103 = arith.index_cast %c1_i32 : i32 to index
    %c0_41 = arith.constant 0 : index
    %c0_42 = arith.constant 0 : index
    %c0_43 = arith.constant 0 : index
    %104 = vector.load %arg1[%103, %c0_41, %c0_42, %c0_43] : memref<8x3x2x32xf32, #tpu.memory_space<vmem>>, vector<1x3x2x32xf32>
    %105 = vector.shape_cast %104 : vector<1x3x2x32xf32> to vector<3x2x32xf32>
    %106 = vector.extract_strided_slice %105 {offsets = [0, 0, 0], sizes = [1, 2, 32], strides = [1, 1, 1]} : vector<3x2x32xf32> to vector<1x2x32xf32>
    %107 = vector.shape_cast %106 : vector<1x2x32xf32> to vector<2x32xf32>
    %108 = vector.extract_strided_slice %105 {offsets = [1, 0, 0], sizes = [1, 2, 32], strides = [1, 1, 1]} : vector<3x2x32xf32> to vector<1x2x32xf32>
    %109 = vector.shape_cast %108 : vector<1x2x32xf32> to vector<2x32xf32>
    %110 = vector.extract_strided_slice %105 {offsets = [2, 0, 0], sizes = [1, 2, 32], strides = [1, 1, 1]} : vector<3x2x32xf32> to vector<1x2x32xf32>
    %111 = vector.shape_cast %110 : vector<1x2x32xf32> to vector<2x32xf32>
    %112 = vector.extract_strided_slice %0 {offsets = [0, 0, 0], sizes = [1, 32, 32], strides = [1, 1, 1]} : vector<3x32x32xf32> to vector<1x32x32xf32>
    %113 = vector.shape_cast %112 : vector<1x32x32xf32> to vector<32x32xf32>
    %114 = vector.extract_strided_slice %0 {offsets = [1, 0, 0], sizes = [1, 32, 32], strides = [1, 1, 1]} : vector<3x32x32xf32> to vector<1x32x32xf32>
    %115 = vector.shape_cast %114 : vector<1x32x32xf32> to vector<32x32xf32>
    %116 = vector.extract_strided_slice %0 {offsets = [2, 0, 0], sizes = [1, 32, 32], strides = [1, 1, 1]} : vector<3x32x32xf32> to vector<1x32x32xf32>
    %117 = vector.shape_cast %116 : vector<1x32x32xf32> to vector<32x32xf32>
    %cst_44 = arith.constant dense<0.000000e+00> : vector<2x32xf32>
    %118 = tpu.matmul %49, %113, %cst_44 {dimension_numbers = #tpu.dot_dimension_numbers<[1], [0], [0], [1], [0, 0, 1, 1], [], []>} : vector<2x32xf32>, vector<32x32xf32>, vector<2x32xf32> -> vector<2x32xf32>
    %cst_45 = arith.constant dense<0.000000e+00> : vector<2x32xf32>
    %119 = tpu.matmul %49, %115, %cst_45 {dimension_numbers = #tpu.dot_dimension_numbers<[1], [0], [0], [1], [0, 0, 1, 1], [], []>} : vector<2x32xf32>, vector<32x32xf32>, vector<2x32xf32> -> vector<2x32xf32>
    %cst_46 = arith.constant dense<0.000000e+00> : vector<2x32xf32>
    %120 = tpu.matmul %49, %117, %cst_46 {dimension_numbers = #tpu.dot_dimension_numbers<[1], [0], [0], [1], [0, 0, 1, 1], [], []>} : vector<2x32xf32>, vector<32x32xf32>, vector<2x32xf32> -> vector<2x32xf32>
    %121 = arith.addf %107, %118 : vector<2x32xf32>
    %122 = arith.negf %121 : vector<2x32xf32>
    %123 = math.exp %122 : vector<2x32xf32>
    %cst_47 = arith.constant 1.000000e+00 : f32
    %124 = vector.broadcast %cst_47 : f32 to vector<2x32xf32>
    %125 = arith.addf %124, %123 : vector<2x32xf32>
    %126 = arith.divf %124, %125 : vector<2x32xf32>
    %127 = arith.addf %109, %119 : vector<2x32xf32>
    %128 = arith.negf %127 : vector<2x32xf32>
    %129 = math.exp %128 : vector<2x32xf32>
    %cst_48 = arith.constant 1.000000e+00 : f32
    %130 = vector.broadcast %cst_48 : f32 to vector<2x32xf32>
    %131 = arith.addf %130, %129 : vector<2x32xf32>
    %132 = arith.divf %130, %131 : vector<2x32xf32>
    %133 = vector.broadcast %1 : vector<1x32xf32> to vector<2x32xf32>
    %134 = arith.addf %120, %133 : vector<2x32xf32>
    %135 = arith.mulf %126, %134 : vector<2x32xf32>
    %136 = arith.addf %111, %135 : vector<2x32xf32>
    %137 = math.tanh %136 : vector<2x32xf32>
    %cst_49 = arith.constant 1.000000e+00 : f32
    %138 = vector.broadcast %cst_49 : f32 to vector<2x32xf32>
    %139 = arith.subf %138, %132 : vector<2x32xf32>
    %140 = arith.mulf %139, %137 : vector<2x32xf32>
    %141 = arith.mulf %132, %49 : vector<2x32xf32>
    %142 = arith.addf %140, %141 : vector<2x32xf32>
    %143 = vector.extract_strided_slice %2 {offsets = [0, 0, 0, 0], sizes = [1, 1, 32, 32], strides = [1, 1, 1, 1]} : vector<1x3x32x32xf32> to vector<1x1x32x32xf32>
    %144 = vector.shape_cast %143 : vector<1x1x32x32xf32> to vector<32x32xf32>
    %cst_50 = arith.constant dense<0.000000e+00> : vector<2x32xf32>
    %145 = tpu.matmul %142, %144, %cst_50 {dimension_numbers = #tpu.dot_dimension_numbers<[1], [0], [0], [1], [0, 0, 1, 1], [], []>} : vector<2x32xf32>, vector<32x32xf32>, vector<2x32xf32> -> vector<2x32xf32>
    %146 = vector.extract_strided_slice %3 {offsets = [0, 0, 0, 0], sizes = [1, 1, 1, 32], strides = [1, 1, 1, 1]} : vector<1x3x1x32xf32> to vector<1x1x1x32xf32>
    %147 = vector.shape_cast %146 : vector<1x1x1x32xf32> to vector<1x32xf32>
    %148 = vector.broadcast %147 : vector<1x32xf32> to vector<2x32xf32>
    %149 = arith.addf %145, %148 : vector<2x32xf32>
    %150 = vector.extract_strided_slice %2 {offsets = [0, 1, 0, 0], sizes = [1, 1, 32, 32], strides = [1, 1, 1, 1]} : vector<1x3x32x32xf32> to vector<1x1x32x32xf32>
    %151 = vector.shape_cast %150 : vector<1x1x32x32xf32> to vector<32x32xf32>
    %cst_51 = arith.constant dense<0.000000e+00> : vector<2x32xf32>
    %152 = tpu.matmul %142, %151, %cst_51 {dimension_numbers = #tpu.dot_dimension_numbers<[1], [0], [0], [1], [0, 0, 1, 1], [], []>} : vector<2x32xf32>, vector<32x32xf32>, vector<2x32xf32> -> vector<2x32xf32>
    %153 = vector.extract_strided_slice %3 {offsets = [0, 1, 0, 0], sizes = [1, 1, 1, 32], strides = [1, 1, 1, 1]} : vector<1x3x1x32xf32> to vector<1x1x1x32xf32>
    %154 = vector.shape_cast %153 : vector<1x1x1x32xf32> to vector<1x32xf32>
    %155 = vector.broadcast %154 : vector<1x32xf32> to vector<2x32xf32>
    %156 = arith.addf %152, %155 : vector<2x32xf32>
    %157 = vector.extract_strided_slice %2 {offsets = [0, 2, 0, 0], sizes = [1, 1, 32, 32], strides = [1, 1, 1, 1]} : vector<1x3x32x32xf32> to vector<1x1x32x32xf32>
    %158 = vector.shape_cast %157 : vector<1x1x32x32xf32> to vector<32x32xf32>
    %cst_52 = arith.constant dense<0.000000e+00> : vector<2x32xf32>
    %159 = tpu.matmul %142, %158, %cst_52 {dimension_numbers = #tpu.dot_dimension_numbers<[1], [0], [0], [1], [0, 0, 1, 1], [], []>} : vector<2x32xf32>, vector<32x32xf32>, vector<2x32xf32> -> vector<2x32xf32>
    %160 = vector.extract_strided_slice %3 {offsets = [0, 2, 0, 0], sizes = [1, 1, 1, 32], strides = [1, 1, 1, 1]} : vector<1x3x1x32xf32> to vector<1x1x1x32xf32>
    %161 = vector.shape_cast %160 : vector<1x1x1x32xf32> to vector<1x32xf32>
    %162 = vector.broadcast %161 : vector<1x32xf32> to vector<2x32xf32>
    %163 = arith.addf %159, %162 : vector<2x32xf32>
    %164 = vector.extract_strided_slice %4 {offsets = [0, 0, 0, 0], sizes = [1, 1, 32, 32], strides = [1, 1, 1, 1]} : vector<1x3x32x32xf32> to vector<1x1x32x32xf32>
    %165 = vector.shape_cast %164 : vector<1x1x32x32xf32> to vector<32x32xf32>
    %166 = vector.extract_strided_slice %4 {offsets = [0, 1, 0, 0], sizes = [1, 1, 32, 32], strides = [1, 1, 1, 1]} : vector<1x3x32x32xf32> to vector<1x1x32x32xf32>
    %167 = vector.shape_cast %166 : vector<1x1x32x32xf32> to vector<32x32xf32>
    %168 = vector.extract_strided_slice %4 {offsets = [0, 2, 0, 0], sizes = [1, 1, 32, 32], strides = [1, 1, 1, 1]} : vector<1x3x32x32xf32> to vector<1x1x32x32xf32>
    %169 = vector.shape_cast %168 : vector<1x1x32x32xf32> to vector<32x32xf32>
    %170 = vector.shape_cast %5 : vector<1x1x32xf32> to vector<1x32xf32>
    %cst_53 = arith.constant dense<0.000000e+00> : vector<2x32xf32>
    %171 = tpu.matmul %102, %165, %cst_53 {dimension_numbers = #tpu.dot_dimension_numbers<[1], [0], [0], [1], [0, 0, 1, 1], [], []>} : vector<2x32xf32>, vector<32x32xf32>, vector<2x32xf32> -> vector<2x32xf32>
    %cst_54 = arith.constant dense<0.000000e+00> : vector<2x32xf32>
    %172 = tpu.matmul %102, %167, %cst_54 {dimension_numbers = #tpu.dot_dimension_numbers<[1], [0], [0], [1], [0, 0, 1, 1], [], []>} : vector<2x32xf32>, vector<32x32xf32>, vector<2x32xf32> -> vector<2x32xf32>
    %cst_55 = arith.constant dense<0.000000e+00> : vector<2x32xf32>
    %173 = tpu.matmul %102, %169, %cst_55 {dimension_numbers = #tpu.dot_dimension_numbers<[1], [0], [0], [1], [0, 0, 1, 1], [], []>} : vector<2x32xf32>, vector<32x32xf32>, vector<2x32xf32> -> vector<2x32xf32>
    %174 = arith.addf %149, %171 : vector<2x32xf32>
    %175 = arith.negf %174 : vector<2x32xf32>
    %176 = math.exp %175 : vector<2x32xf32>
    %cst_56 = arith.constant 1.000000e+00 : f32
    %177 = vector.broadcast %cst_56 : f32 to vector<2x32xf32>
    %178 = arith.addf %177, %176 : vector<2x32xf32>
    %179 = arith.divf %177, %178 : vector<2x32xf32>
    %180 = arith.addf %156, %172 : vector<2x32xf32>
    %181 = arith.negf %180 : vector<2x32xf32>
    %182 = math.exp %181 : vector<2x32xf32>
    %cst_57 = arith.constant 1.000000e+00 : f32
    %183 = vector.broadcast %cst_57 : f32 to vector<2x32xf32>
    %184 = arith.addf %183, %182 : vector<2x32xf32>
    %185 = arith.divf %183, %184 : vector<2x32xf32>
    %186 = vector.broadcast %170 : vector<1x32xf32> to vector<2x32xf32>
    %187 = arith.addf %173, %186 : vector<2x32xf32>
    %188 = arith.mulf %179, %187 : vector<2x32xf32>
    %189 = arith.addf %163, %188 : vector<2x32xf32>
    %190 = math.tanh %189 : vector<2x32xf32>
    %cst_58 = arith.constant 1.000000e+00 : f32
    %191 = vector.broadcast %cst_58 : f32 to vector<2x32xf32>
    %192 = arith.subf %191, %185 : vector<2x32xf32>
    %193 = arith.mulf %192, %190 : vector<2x32xf32>
    %194 = arith.mulf %185, %102 : vector<2x32xf32>
    %195 = arith.addf %193, %194 : vector<2x32xf32>
    %c2_i32 = arith.constant 2 : i32
    %196 = arith.index_cast %c2_i32 : i32 to index
    %c0_59 = arith.constant 0 : index
    %c0_60 = arith.constant 0 : index
    %c0_61 = arith.constant 0 : index
    %197 = vector.load %arg1[%196, %c0_59, %c0_60, %c0_61] : memref<8x3x2x32xf32, #tpu.memory_space<vmem>>, vector<1x3x2x32xf32>
    %198 = vector.shape_cast %197 : vector<1x3x2x32xf32> to vector<3x2x32xf32>
    %199 = vector.extract_strided_slice %198 {offsets = [0, 0, 0], sizes = [1, 2, 32], strides = [1, 1, 1]} : vector<3x2x32xf32> to vector<1x2x32xf32>
    %200 = vector.shape_cast %199 : vector<1x2x32xf32> to vector<2x32xf32>
    %201 = vector.extract_strided_slice %198 {offsets = [1, 0, 0], sizes = [1, 2, 32], strides = [1, 1, 1]} : vector<3x2x32xf32> to vector<1x2x32xf32>
    %202 = vector.shape_cast %201 : vector<1x2x32xf32> to vector<2x32xf32>
    %203 = vector.extract_strided_slice %198 {offsets = [2, 0, 0], sizes = [1, 2, 32], strides = [1, 1, 1]} : vector<3x2x32xf32> to vector<1x2x32xf32>
    %204 = vector.shape_cast %203 : vector<1x2x32xf32> to vector<2x32xf32>
    %205 = vector.extract_strided_slice %0 {offsets = [0, 0, 0], sizes = [1, 32, 32], strides = [1, 1, 1]} : vector<3x32x32xf32> to vector<1x32x32xf32>
    %206 = vector.shape_cast %205 : vector<1x32x32xf32> to vector<32x32xf32>
    %207 = vector.extract_strided_slice %0 {offsets = [1, 0, 0], sizes = [1, 32, 32], strides = [1, 1, 1]} : vector<3x32x32xf32> to vector<1x32x32xf32>
    %208 = vector.shape_cast %207 : vector<1x32x32xf32> to vector<32x32xf32>
    %209 = vector.extract_strided_slice %0 {offsets = [2, 0, 0], sizes = [1, 32, 32], strides = [1, 1, 1]} : vector<3x32x32xf32> to vector<1x32x32xf32>
    %210 = vector.shape_cast %209 : vector<1x32x32xf32> to vector<32x32xf32>
    %cst_62 = arith.constant dense<0.000000e+00> : vector<2x32xf32>
    %211 = tpu.matmul %142, %206, %cst_62 {dimension_numbers = #tpu.dot_dimension_numbers<[1], [0], [0], [1], [0, 0, 1, 1], [], []>} : vector<2x32xf32>, vector<32x32xf32>, vector<2x32xf32> -> vector<2x32xf32>
    %cst_63 = arith.constant dense<0.000000e+00> : vector<2x32xf32>
    %212 = tpu.matmul %142, %208, %cst_63 {dimension_numbers = #tpu.dot_dimension_numbers<[1], [0], [0], [1], [0, 0, 1, 1], [], []>} : vector<2x32xf32>, vector<32x32xf32>, vector<2x32xf32> -> vector<2x32xf32>
    %cst_64 = arith.constant dense<0.000000e+00> : vector<2x32xf32>
    %213 = tpu.matmul %142, %210, %cst_64 {dimension_numbers = #tpu.dot_dimension_numbers<[1], [0], [0], [1], [0, 0, 1, 1], [], []>} : vector<2x32xf32>, vector<32x32xf32>, vector<2x32xf32> -> vector<2x32xf32>
    %214 = arith.addf %200, %211 : vector<2x32xf32>
    %215 = arith.negf %214 : vector<2x32xf32>
    %216 = math.exp %215 : vector<2x32xf32>
    %cst_65 = arith.constant 1.000000e+00 : f32
    %217 = vector.broadcast %cst_65 : f32 to vector<2x32xf32>
    %218 = arith.addf %217, %216 : vector<2x32xf32>
    %219 = arith.divf %217, %218 : vector<2x32xf32>
    %220 = arith.addf %202, %212 : vector<2x32xf32>
    %221 = arith.negf %220 : vector<2x32xf32>
    %222 = math.exp %221 : vector<2x32xf32>
    %cst_66 = arith.constant 1.000000e+00 : f32
    %223 = vector.broadcast %cst_66 : f32 to vector<2x32xf32>
    %224 = arith.addf %223, %222 : vector<2x32xf32>
    %225 = arith.divf %223, %224 : vector<2x32xf32>
    %226 = vector.broadcast %1 : vector<1x32xf32> to vector<2x32xf32>
    %227 = arith.addf %213, %226 : vector<2x32xf32>
    %228 = arith.mulf %219, %227 : vector<2x32xf32>
    %229 = arith.addf %204, %228 : vector<2x32xf32>
    %230 = math.tanh %229 : vector<2x32xf32>
    %cst_67 = arith.constant 1.000000e+00 : f32
    %231 = vector.broadcast %cst_67 : f32 to vector<2x32xf32>
    %232 = arith.subf %231, %225 : vector<2x32xf32>
    %233 = arith.mulf %232, %230 : vector<2x32xf32>
    %234 = arith.mulf %225, %142 : vector<2x32xf32>
    %235 = arith.addf %233, %234 : vector<2x32xf32>
    %236 = vector.extract_strided_slice %2 {offsets = [0, 0, 0, 0], sizes = [1, 1, 32, 32], strides = [1, 1, 1, 1]} : vector<1x3x32x32xf32> to vector<1x1x32x32xf32>
    %237 = vector.shape_cast %236 : vector<1x1x32x32xf32> to vector<32x32xf32>
    %cst_68 = arith.constant dense<0.000000e+00> : vector<2x32xf32>
    %238 = tpu.matmul %235, %237, %cst_68 {dimension_numbers = #tpu.dot_dimension_numbers<[1], [0], [0], [1], [0, 0, 1, 1], [], []>} : vector<2x32xf32>, vector<32x32xf32>, vector<2x32xf32> -> vector<2x32xf32>
    %239 = vector.extract_strided_slice %3 {offsets = [0, 0, 0, 0], sizes = [1, 1, 1, 32], strides = [1, 1, 1, 1]} : vector<1x3x1x32xf32> to vector<1x1x1x32xf32>
    %240 = vector.shape_cast %239 : vector<1x1x1x32xf32> to vector<1x32xf32>
    %241 = vector.broadcast %240 : vector<1x32xf32> to vector<2x32xf32>
    %242 = arith.addf %238, %241 : vector<2x32xf32>
    %243 = vector.extract_strided_slice %2 {offsets = [0, 1, 0, 0], sizes = [1, 1, 32, 32], strides = [1, 1, 1, 1]} : vector<1x3x32x32xf32> to vector<1x1x32x32xf32>
    %244 = vector.shape_cast %243 : vector<1x1x32x32xf32> to vector<32x32xf32>
    %cst_69 = arith.constant dense<0.000000e+00> : vector<2x32xf32>
    %245 = tpu.matmul %235, %244, %cst_69 {dimension_numbers = #tpu.dot_dimension_numbers<[1], [0], [0], [1], [0, 0, 1, 1], [], []>} : vector<2x32xf32>, vector<32x32xf32>, vector<2x32xf32> -> vector<2x32xf32>
    %246 = vector.extract_strided_slice %3 {offsets = [0, 1, 0, 0], sizes = [1, 1, 1, 32], strides = [1, 1, 1, 1]} : vector<1x3x1x32xf32> to vector<1x1x1x32xf32>
    %247 = vector.shape_cast %246 : vector<1x1x1x32xf32> to vector<1x32xf32>
    %248 = vector.broadcast %247 : vector<1x32xf32> to vector<2x32xf32>
    %249 = arith.addf %245, %248 : vector<2x32xf32>
    %250 = vector.extract_strided_slice %2 {offsets = [0, 2, 0, 0], sizes = [1, 1, 32, 32], strides = [1, 1, 1, 1]} : vector<1x3x32x32xf32> to vector<1x1x32x32xf32>
    %251 = vector.shape_cast %250 : vector<1x1x32x32xf32> to vector<32x32xf32>
    %cst_70 = arith.constant dense<0.000000e+00> : vector<2x32xf32>
    %252 = tpu.matmul %235, %251, %cst_70 {dimension_numbers = #tpu.dot_dimension_numbers<[1], [0], [0], [1], [0, 0, 1, 1], [], []>} : vector<2x32xf32>, vector<32x32xf32>, vector<2x32xf32> -> vector<2x32xf32>
    %253 = vector.extract_strided_slice %3 {offsets = [0, 2, 0, 0], sizes = [1, 1, 1, 32], strides = [1, 1, 1, 1]} : vector<1x3x1x32xf32> to vector<1x1x1x32xf32>
    %254 = vector.shape_cast %253 : vector<1x1x1x32xf32> to vector<1x32xf32>
    %255 = vector.broadcast %254 : vector<1x32xf32> to vector<2x32xf32>
    %256 = arith.addf %252, %255 : vector<2x32xf32>
    %257 = vector.extract_strided_slice %4 {offsets = [0, 0, 0, 0], sizes = [1, 1, 32, 32], strides = [1, 1, 1, 1]} : vector<1x3x32x32xf32> to vector<1x1x32x32xf32>
    %258 = vector.shape_cast %257 : vector<1x1x32x32xf32> to vector<32x32xf32>
    %259 = vector.extract_strided_slice %4 {offsets = [0, 1, 0, 0], sizes = [1, 1, 32, 32], strides = [1, 1, 1, 1]} : vector<1x3x32x32xf32> to vector<1x1x32x32xf32>
    %260 = vector.shape_cast %259 : vector<1x1x32x32xf32> to vector<32x32xf32>
    %261 = vector.extract_strided_slice %4 {offsets = [0, 2, 0, 0], sizes = [1, 1, 32, 32], strides = [1, 1, 1, 1]} : vector<1x3x32x32xf32> to vector<1x1x32x32xf32>
    %262 = vector.shape_cast %261 : vector<1x1x32x32xf32> to vector<32x32xf32>
    %263 = vector.shape_cast %5 : vector<1x1x32xf32> to vector<1x32xf32>
    %cst_71 = arith.constant dense<0.000000e+00> : vector<2x32xf32>
    %264 = tpu.matmul %195, %258, %cst_71 {dimension_numbers = #tpu.dot_dimension_numbers<[1], [0], [0], [1], [0, 0, 1, 1], [], []>} : vector<2x32xf32>, vector<32x32xf32>, vector<2x32xf32> -> vector<2x32xf32>
    %cst_72 = arith.constant dense<0.000000e+00> : vector<2x32xf32>
    %265 = tpu.matmul %195, %260, %cst_72 {dimension_numbers = #tpu.dot_dimension_numbers<[1], [0], [0], [1], [0, 0, 1, 1], [], []>} : vector<2x32xf32>, vector<32x32xf32>, vector<2x32xf32> -> vector<2x32xf32>
    %cst_73 = arith.constant dense<0.000000e+00> : vector<2x32xf32>
    %266 = tpu.matmul %195, %262, %cst_73 {dimension_numbers = #tpu.dot_dimension_numbers<[1], [0], [0], [1], [0, 0, 1, 1], [], []>} : vector<2x32xf32>, vector<32x32xf32>, vector<2x32xf32> -> vector<2x32xf32>
    %267 = arith.addf %242, %264 : vector<2x32xf32>
    %268 = arith.negf %267 : vector<2x32xf32>
    %269 = math.exp %268 : vector<2x32xf32>
    %cst_74 = arith.constant 1.000000e+00 : f32
    %270 = vector.broadcast %cst_74 : f32 to vector<2x32xf32>
    %271 = arith.addf %270, %269 : vector<2x32xf32>
    %272 = arith.divf %270, %271 : vector<2x32xf32>
    %273 = arith.addf %249, %265 : vector<2x32xf32>
    %274 = arith.negf %273 : vector<2x32xf32>
    %275 = math.exp %274 : vector<2x32xf32>
    %cst_75 = arith.constant 1.000000e+00 : f32
    %276 = vector.broadcast %cst_75 : f32 to vector<2x32xf32>
    %277 = arith.addf %276, %275 : vector<2x32xf32>
    %278 = arith.divf %276, %277 : vector<2x32xf32>
    %279 = vector.broadcast %263 : vector<1x32xf32> to vector<2x32xf32>
    %280 = arith.addf %266, %279 : vector<2x32xf32>
    %281 = arith.mulf %272, %280 : vector<2x32xf32>
    %282 = arith.addf %256, %281 : vector<2x32xf32>
    %283 = math.tanh %282 : vector<2x32xf32>
    %cst_76 = arith.constant 1.000000e+00 : f32
    %284 = vector.broadcast %cst_76 : f32 to vector<2x32xf32>
    %285 = arith.subf %284, %278 : vector<2x32xf32>
    %286 = arith.mulf %285, %283 : vector<2x32xf32>
    %287 = arith.mulf %278, %195 : vector<2x32xf32>
    %288 = arith.addf %286, %287 : vector<2x32xf32>
    %c3_i32 = arith.constant 3 : i32
    %289 = arith.index_cast %c3_i32 : i32 to index
    %c0_77 = arith.constant 0 : index
    %c0_78 = arith.constant 0 : index
    %c0_79 = arith.constant 0 : index
    %290 = vector.load %arg1[%289, %c0_77, %c0_78, %c0_79] : memref<8x3x2x32xf32, #tpu.memory_space<vmem>>, vector<1x3x2x32xf32>
    %291 = vector.shape_cast %290 : vector<1x3x2x32xf32> to vector<3x2x32xf32>
    %292 = vector.extract_strided_slice %291 {offsets = [0, 0, 0], sizes = [1, 2, 32], strides = [1, 1, 1]} : vector<3x2x32xf32> to vector<1x2x32xf32>
    %293 = vector.shape_cast %292 : vector<1x2x32xf32> to vector<2x32xf32>
    %294 = vector.extract_strided_slice %291 {offsets = [1, 0, 0], sizes = [1, 2, 32], strides = [1, 1, 1]} : vector<3x2x32xf32> to vector<1x2x32xf32>
    %295 = vector.shape_cast %294 : vector<1x2x32xf32> to vector<2x32xf32>
    %296 = vector.extract_strided_slice %291 {offsets = [2, 0, 0], sizes = [1, 2, 32], strides = [1, 1, 1]} : vector<3x2x32xf32> to vector<1x2x32xf32>
    %297 = vector.shape_cast %296 : vector<1x2x32xf32> to vector<2x32xf32>
    %298 = vector.extract_strided_slice %0 {offsets = [0, 0, 0], sizes = [1, 32, 32], strides = [1, 1, 1]} : vector<3x32x32xf32> to vector<1x32x32xf32>
    %299 = vector.shape_cast %298 : vector<1x32x32xf32> to vector<32x32xf32>
    %300 = vector.extract_strided_slice %0 {offsets = [1, 0, 0], sizes = [1, 32, 32], strides = [1, 1, 1]} : vector<3x32x32xf32> to vector<1x32x32xf32>
    %301 = vector.shape_cast %300 : vector<1x32x32xf32> to vector<32x32xf32>
    %302 = vector.extract_strided_slice %0 {offsets = [2, 0, 0], sizes = [1, 32, 32], strides = [1, 1, 1]} : vector<3x32x32xf32> to vector<1x32x32xf32>
    %303 = vector.shape_cast %302 : vector<1x32x32xf32> to vector<32x32xf32>
    %cst_80 = arith.constant dense<0.000000e+00> : vector<2x32xf32>
    %304 = tpu.matmul %235, %299, %cst_80 {dimension_numbers = #tpu.dot_dimension_numbers<[1], [0], [0], [1], [0, 0, 1, 1], [], []>} : vector<2x32xf32>, vector<32x32xf32>, vector<2x32xf32> -> vector<2x32xf32>
    %cst_81 = arith.constant dense<0.000000e+00> : vector<2x32xf32>
    %305 = tpu.matmul %235, %301, %cst_81 {dimension_numbers = #tpu.dot_dimension_numbers<[1], [0], [0], [1], [0, 0, 1, 1], [], []>} : vector<2x32xf32>, vector<32x32xf32>, vector<2x32xf32> -> vector<2x32xf32>
    %cst_82 = arith.constant dense<0.000000e+00> : vector<2x32xf32>
    %306 = tpu.matmul %235, %303, %cst_82 {dimension_numbers = #tpu.dot_dimension_numbers<[1], [0], [0], [1], [0, 0, 1, 1], [], []>} : vector<2x32xf32>, vector<32x32xf32>, vector<2x32xf32> -> vector<2x32xf32>
    %307 = arith.addf %293, %304 : vector<2x32xf32>
    %308 = arith.negf %307 : vector<2x32xf32>
    %309 = math.exp %308 : vector<2x32xf32>
    %cst_83 = arith.constant 1.000000e+00 : f32
    %310 = vector.broadcast %cst_83 : f32 to vector<2x32xf32>
    %311 = arith.addf %310, %309 : vector<2x32xf32>
    %312 = arith.divf %310, %311 : vector<2x32xf32>
    %313 = arith.addf %295, %305 : vector<2x32xf32>
    %314 = arith.negf %313 : vector<2x32xf32>
    %315 = math.exp %314 : vector<2x32xf32>
    %cst_84 = arith.constant 1.000000e+00 : f32
    %316 = vector.broadcast %cst_84 : f32 to vector<2x32xf32>
    %317 = arith.addf %316, %315 : vector<2x32xf32>
    %318 = arith.divf %316, %317 : vector<2x32xf32>
    %319 = vector.broadcast %1 : vector<1x32xf32> to vector<2x32xf32>
    %320 = arith.addf %306, %319 : vector<2x32xf32>
    %321 = arith.mulf %312, %320 : vector<2x32xf32>
    %322 = arith.addf %297, %321 : vector<2x32xf32>
    %323 = math.tanh %322 : vector<2x32xf32>
    %cst_85 = arith.constant 1.000000e+00 : f32
    %324 = vector.broadcast %cst_85 : f32 to vector<2x32xf32>
    %325 = arith.subf %324, %318 : vector<2x32xf32>
    %326 = arith.mulf %325, %323 : vector<2x32xf32>
    %327 = arith.mulf %318, %235 : vector<2x32xf32>
    %328 = arith.addf %326, %327 : vector<2x32xf32>
    %329 = vector.extract_strided_slice %2 {offsets = [0, 0, 0, 0], sizes = [1, 1, 32, 32], strides = [1, 1, 1, 1]} : vector<1x3x32x32xf32> to vector<1x1x32x32xf32>
    %330 = vector.shape_cast %329 : vector<1x1x32x32xf32> to vector<32x32xf32>
    %cst_86 = arith.constant dense<0.000000e+00> : vector<2x32xf32>
    %331 = tpu.matmul %328, %330, %cst_86 {dimension_numbers = #tpu.dot_dimension_numbers<[1], [0], [0], [1], [0, 0, 1, 1], [], []>} : vector<2x32xf32>, vector<32x32xf32>, vector<2x32xf32> -> vector<2x32xf32>
    %332 = vector.extract_strided_slice %3 {offsets = [0, 0, 0, 0], sizes = [1, 1, 1, 32], strides = [1, 1, 1, 1]} : vector<1x3x1x32xf32> to vector<1x1x1x32xf32>
    %333 = vector.shape_cast %332 : vector<1x1x1x32xf32> to vector<1x32xf32>
    %334 = vector.broadcast %333 : vector<1x32xf32> to vector<2x32xf32>
    %335 = arith.addf %331, %334 : vector<2x32xf32>
    %336 = vector.extract_strided_slice %2 {offsets = [0, 1, 0, 0], sizes = [1, 1, 32, 32], strides = [1, 1, 1, 1]} : vector<1x3x32x32xf32> to vector<1x1x32x32xf32>
    %337 = vector.shape_cast %336 : vector<1x1x32x32xf32> to vector<32x32xf32>
    %cst_87 = arith.constant dense<0.000000e+00> : vector<2x32xf32>
    %338 = tpu.matmul %328, %337, %cst_87 {dimension_numbers = #tpu.dot_dimension_numbers<[1], [0], [0], [1], [0, 0, 1, 1], [], []>} : vector<2x32xf32>, vector<32x32xf32>, vector<2x32xf32> -> vector<2x32xf32>
    %339 = vector.extract_strided_slice %3 {offsets = [0, 1, 0, 0], sizes = [1, 1, 1, 32], strides = [1, 1, 1, 1]} : vector<1x3x1x32xf32> to vector<1x1x1x32xf32>
    %340 = vector.shape_cast %339 : vector<1x1x1x32xf32> to vector<1x32xf32>
    %341 = vector.broadcast %340 : vector<1x32xf32> to vector<2x32xf32>
    %342 = arith.addf %338, %341 : vector<2x32xf32>
    %343 = vector.extract_strided_slice %2 {offsets = [0, 2, 0, 0], sizes = [1, 1, 32, 32], strides = [1, 1, 1, 1]} : vector<1x3x32x32xf32> to vector<1x1x32x32xf32>
    %344 = vector.shape_cast %343 : vector<1x1x32x32xf32> to vector<32x32xf32>
    %cst_88 = arith.constant dense<0.000000e+00> : vector<2x32xf32>
    %345 = tpu.matmul %328, %344, %cst_88 {dimension_numbers = #tpu.dot_dimension_numbers<[1], [0], [0], [1], [0, 0, 1, 1], [], []>} : vector<2x32xf32>, vector<32x32xf32>, vector<2x32xf32> -> vector<2x32xf32>
    %346 = vector.extract_strided_slice %3 {offsets = [0, 2, 0, 0], sizes = [1, 1, 1, 32], strides = [1, 1, 1, 1]} : vector<1x3x1x32xf32> to vector<1x1x1x32xf32>
    %347 = vector.shape_cast %346 : vector<1x1x1x32xf32> to vector<1x32xf32>
    %348 = vector.broadcast %347 : vector<1x32xf32> to vector<2x32xf32>
    %349 = arith.addf %345, %348 : vector<2x32xf32>
    %350 = vector.extract_strided_slice %4 {offsets = [0, 0, 0, 0], sizes = [1, 1, 32, 32], strides = [1, 1, 1, 1]} : vector<1x3x32x32xf32> to vector<1x1x32x32xf32>
    %351 = vector.shape_cast %350 : vector<1x1x32x32xf32> to vector<32x32xf32>
    %352 = vector.extract_strided_slice %4 {offsets = [0, 1, 0, 0], sizes = [1, 1, 32, 32], strides = [1, 1, 1, 1]} : vector<1x3x32x32xf32> to vector<1x1x32x32xf32>
    %353 = vector.shape_cast %352 : vector<1x1x32x32xf32> to vector<32x32xf32>
    %354 = vector.extract_strided_slice %4 {offsets = [0, 2, 0, 0], sizes = [1, 1, 32, 32], strides = [1, 1, 1, 1]} : vector<1x3x32x32xf32> to vector<1x1x32x32xf32>
    %355 = vector.shape_cast %354 : vector<1x1x32x32xf32> to vector<32x32xf32>
    %356 = vector.shape_cast %5 : vector<1x1x32xf32> to vector<1x32xf32>
    %cst_89 = arith.constant dense<0.000000e+00> : vector<2x32xf32>
    %357 = tpu.matmul %288, %351, %cst_89 {dimension_numbers = #tpu.dot_dimension_numbers<[1], [0], [0], [1], [0, 0, 1, 1], [], []>} : vector<2x32xf32>, vector<32x32xf32>, vector<2x32xf32> -> vector<2x32xf32>
    %cst_90 = arith.constant dense<0.000000e+00> : vector<2x32xf32>
    %358 = tpu.matmul %288, %353, %cst_90 {dimension_numbers = #tpu.dot_dimension_numbers<[1], [0], [0], [1], [0, 0, 1, 1], [], []>} : vector<2x32xf32>, vector<32x32xf32>, vector<2x32xf32> -> vector<2x32xf32>
    %cst_91 = arith.constant dense<0.000000e+00> : vector<2x32xf32>
    %359 = tpu.matmul %288, %355, %cst_91 {dimension_numbers = #tpu.dot_dimension_numbers<[1], [0], [0], [1], [0, 0, 1, 1], [], []>} : vector<2x32xf32>, vector<32x32xf32>, vector<2x32xf32> -> vector<2x32xf32>
    %360 = arith.addf %335, %357 : vector<2x32xf32>
    %361 = arith.negf %360 : vector<2x32xf32>
    %362 = math.exp %361 : vector<2x32xf32>
    %cst_92 = arith.constant 1.000000e+00 : f32
    %363 = vector.broadcast %cst_92 : f32 to vector<2x32xf32>
    %364 = arith.addf %363, %362 : vector<2x32xf32>
    %365 = arith.divf %363, %364 : vector<2x32xf32>
    %366 = arith.addf %342, %358 : vector<2x32xf32>
    %367 = arith.negf %366 : vector<2x32xf32>
    %368 = math.exp %367 : vector<2x32xf32>
    %cst_93 = arith.constant 1.000000e+00 : f32
    %369 = vector.broadcast %cst_93 : f32 to vector<2x32xf32>
    %370 = arith.addf %369, %368 : vector<2x32xf32>
    %371 = arith.divf %369, %370 : vector<2x32xf32>
    %372 = vector.broadcast %356 : vector<1x32xf32> to vector<2x32xf32>
    %373 = arith.addf %359, %372 : vector<2x32xf32>
    %374 = arith.mulf %365, %373 : vector<2x32xf32>
    %375 = arith.addf %349, %374 : vector<2x32xf32>
    %376 = math.tanh %375 : vector<2x32xf32>
    %cst_94 = arith.constant 1.000000e+00 : f32
    %377 = vector.broadcast %cst_94 : f32 to vector<2x32xf32>
    %378 = arith.subf %377, %371 : vector<2x32xf32>
    %379 = arith.mulf %378, %376 : vector<2x32xf32>
    %380 = arith.mulf %371, %288 : vector<2x32xf32>
    %381 = arith.addf %379, %380 : vector<2x32xf32>
    %c4_i32 = arith.constant 4 : i32
    %382 = arith.index_cast %c4_i32 : i32 to index
    %c0_95 = arith.constant 0 : index
    %c0_96 = arith.constant 0 : index
    %c0_97 = arith.constant 0 : index
    %383 = vector.load %arg1[%382, %c0_95, %c0_96, %c0_97] : memref<8x3x2x32xf32, #tpu.memory_space<vmem>>, vector<1x3x2x32xf32>
    %384 = vector.shape_cast %383 : vector<1x3x2x32xf32> to vector<3x2x32xf32>
    %385 = vector.extract_strided_slice %384 {offsets = [0, 0, 0], sizes = [1, 2, 32], strides = [1, 1, 1]} : vector<3x2x32xf32> to vector<1x2x32xf32>
    %386 = vector.shape_cast %385 : vector<1x2x32xf32> to vector<2x32xf32>
    %387 = vector.extract_strided_slice %384 {offsets = [1, 0, 0], sizes = [1, 2, 32], strides = [1, 1, 1]} : vector<3x2x32xf32> to vector<1x2x32xf32>
    %388 = vector.shape_cast %387 : vector<1x2x32xf32> to vector<2x32xf32>
    %389 = vector.extract_strided_slice %384 {offsets = [2, 0, 0], sizes = [1, 2, 32], strides = [1, 1, 1]} : vector<3x2x32xf32> to vector<1x2x32xf32>
    %390 = vector.shape_cast %389 : vector<1x2x32xf32> to vector<2x32xf32>
    %391 = vector.extract_strided_slice %0 {offsets = [0, 0, 0], sizes = [1, 32, 32], strides = [1, 1, 1]} : vector<3x32x32xf32> to vector<1x32x32xf32>
    %392 = vector.shape_cast %391 : vector<1x32x32xf32> to vector<32x32xf32>
    %393 = vector.extract_strided_slice %0 {offsets = [1, 0, 0], sizes = [1, 32, 32], strides = [1, 1, 1]} : vector<3x32x32xf32> to vector<1x32x32xf32>
    %394 = vector.shape_cast %393 : vector<1x32x32xf32> to vector<32x32xf32>
    %395 = vector.extract_strided_slice %0 {offsets = [2, 0, 0], sizes = [1, 32, 32], strides = [1, 1, 1]} : vector<3x32x32xf32> to vector<1x32x32xf32>
    %396 = vector.shape_cast %395 : vector<1x32x32xf32> to vector<32x32xf32>
    %cst_98 = arith.constant dense<0.000000e+00> : vector<2x32xf32>
    %397 = tpu.matmul %328, %392, %cst_98 {dimension_numbers = #tpu.dot_dimension_numbers<[1], [0], [0], [1], [0, 0, 1, 1], [], []>} : vector<2x32xf32>, vector<32x32xf32>, vector<2x32xf32> -> vector<2x32xf32>
    %cst_99 = arith.constant dense<0.000000e+00> : vector<2x32xf32>
    %398 = tpu.matmul %328, %394, %cst_99 {dimension_numbers = #tpu.dot_dimension_numbers<[1], [0], [0], [1], [0, 0, 1, 1], [], []>} : vector<2x32xf32>, vector<32x32xf32>, vector<2x32xf32> -> vector<2x32xf32>
    %cst_100 = arith.constant dense<0.000000e+00> : vector<2x32xf32>
    %399 = tpu.matmul %328, %396, %cst_100 {dimension_numbers = #tpu.dot_dimension_numbers<[1], [0], [0], [1], [0, 0, 1, 1], [], []>} : vector<2x32xf32>, vector<32x32xf32>, vector<2x32xf32> -> vector<2x32xf32>
    %400 = arith.addf %386, %397 : vector<2x32xf32>
    %401 = arith.negf %400 : vector<2x32xf32>
    %402 = math.exp %401 : vector<2x32xf32>
    %cst_101 = arith.constant 1.000000e+00 : f32
    %403 = vector.broadcast %cst_101 : f32 to vector<2x32xf32>
    %404 = arith.addf %403, %402 : vector<2x32xf32>
    %405 = arith.divf %403, %404 : vector<2x32xf32>
    %406 = arith.addf %388, %398 : vector<2x32xf32>
    %407 = arith.negf %406 : vector<2x32xf32>
    %408 = math.exp %407 : vector<2x32xf32>
    %cst_102 = arith.constant 1.000000e+00 : f32
    %409 = vector.broadcast %cst_102 : f32 to vector<2x32xf32>
    %410 = arith.addf %409, %408 : vector<2x32xf32>
    %411 = arith.divf %409, %410 : vector<2x32xf32>
    %412 = vector.broadcast %1 : vector<1x32xf32> to vector<2x32xf32>
    %413 = arith.addf %399, %412 : vector<2x32xf32>
    %414 = arith.mulf %405, %413 : vector<2x32xf32>
    %415 = arith.addf %390, %414 : vector<2x32xf32>
    %416 = math.tanh %415 : vector<2x32xf32>
    %cst_103 = arith.constant 1.000000e+00 : f32
    %417 = vector.broadcast %cst_103 : f32 to vector<2x32xf32>
    %418 = arith.subf %417, %411 : vector<2x32xf32>
    %419 = arith.mulf %418, %416 : vector<2x32xf32>
    %420 = arith.mulf %411, %328 : vector<2x32xf32>
    %421 = arith.addf %419, %420 : vector<2x32xf32>
    %422 = vector.extract_strided_slice %2 {offsets = [0, 0, 0, 0], sizes = [1, 1, 32, 32], strides = [1, 1, 1, 1]} : vector<1x3x32x32xf32> to vector<1x1x32x32xf32>
    %423 = vector.shape_cast %422 : vector<1x1x32x32xf32> to vector<32x32xf32>
    %cst_104 = arith.constant dense<0.000000e+00> : vector<2x32xf32>
    %424 = tpu.matmul %421, %423, %cst_104 {dimension_numbers = #tpu.dot_dimension_numbers<[1], [0], [0], [1], [0, 0, 1, 1], [], []>} : vector<2x32xf32>, vector<32x32xf32>, vector<2x32xf32> -> vector<2x32xf32>
    %425 = vector.extract_strided_slice %3 {offsets = [0, 0, 0, 0], sizes = [1, 1, 1, 32], strides = [1, 1, 1, 1]} : vector<1x3x1x32xf32> to vector<1x1x1x32xf32>
    %426 = vector.shape_cast %425 : vector<1x1x1x32xf32> to vector<1x32xf32>
    %427 = vector.broadcast %426 : vector<1x32xf32> to vector<2x32xf32>
    %428 = arith.addf %424, %427 : vector<2x32xf32>
    %429 = vector.extract_strided_slice %2 {offsets = [0, 1, 0, 0], sizes = [1, 1, 32, 32], strides = [1, 1, 1, 1]} : vector<1x3x32x32xf32> to vector<1x1x32x32xf32>
    %430 = vector.shape_cast %429 : vector<1x1x32x32xf32> to vector<32x32xf32>
    %cst_105 = arith.constant dense<0.000000e+00> : vector<2x32xf32>
    %431 = tpu.matmul %421, %430, %cst_105 {dimension_numbers = #tpu.dot_dimension_numbers<[1], [0], [0], [1], [0, 0, 1, 1], [], []>} : vector<2x32xf32>, vector<32x32xf32>, vector<2x32xf32> -> vector<2x32xf32>
    %432 = vector.extract_strided_slice %3 {offsets = [0, 1, 0, 0], sizes = [1, 1, 1, 32], strides = [1, 1, 1, 1]} : vector<1x3x1x32xf32> to vector<1x1x1x32xf32>
    %433 = vector.shape_cast %432 : vector<1x1x1x32xf32> to vector<1x32xf32>
    %434 = vector.broadcast %433 : vector<1x32xf32> to vector<2x32xf32>
    %435 = arith.addf %431, %434 : vector<2x32xf32>
    %436 = vector.extract_strided_slice %2 {offsets = [0, 2, 0, 0], sizes = [1, 1, 32, 32], strides = [1, 1, 1, 1]} : vector<1x3x32x32xf32> to vector<1x1x32x32xf32>
    %437 = vector.shape_cast %436 : vector<1x1x32x32xf32> to vector<32x32xf32>
    %cst_106 = arith.constant dense<0.000000e+00> : vector<2x32xf32>
    %438 = tpu.matmul %421, %437, %cst_106 {dimension_numbers = #tpu.dot_dimension_numbers<[1], [0], [0], [1], [0, 0, 1, 1], [], []>} : vector<2x32xf32>, vector<32x32xf32>, vector<2x32xf32> -> vector<2x32xf32>
    %439 = vector.extract_strided_slice %3 {offsets = [0, 2, 0, 0], sizes = [1, 1, 1, 32], strides = [1, 1, 1, 1]} : vector<1x3x1x32xf32> to vector<1x1x1x32xf32>
    %440 = vector.shape_cast %439 : vector<1x1x1x32xf32> to vector<1x32xf32>
    %441 = vector.broadcast %440 : vector<1x32xf32> to vector<2x32xf32>
    %442 = arith.addf %438, %441 : vector<2x32xf32>
    %443 = vector.extract_strided_slice %4 {offsets = [0, 0, 0, 0], sizes = [1, 1, 32, 32], strides = [1, 1, 1, 1]} : vector<1x3x32x32xf32> to vector<1x1x32x32xf32>
    %444 = vector.shape_cast %443 : vector<1x1x32x32xf32> to vector<32x32xf32>
    %445 = vector.extract_strided_slice %4 {offsets = [0, 1, 0, 0], sizes = [1, 1, 32, 32], strides = [1, 1, 1, 1]} : vector<1x3x32x32xf32> to vector<1x1x32x32xf32>
    %446 = vector.shape_cast %445 : vector<1x1x32x32xf32> to vector<32x32xf32>
    %447 = vector.extract_strided_slice %4 {offsets = [0, 2, 0, 0], sizes = [1, 1, 32, 32], strides = [1, 1, 1, 1]} : vector<1x3x32x32xf32> to vector<1x1x32x32xf32>
    %448 = vector.shape_cast %447 : vector<1x1x32x32xf32> to vector<32x32xf32>
    %449 = vector.shape_cast %5 : vector<1x1x32xf32> to vector<1x32xf32>
    %cst_107 = arith.constant dense<0.000000e+00> : vector<2x32xf32>
    %450 = tpu.matmul %381, %444, %cst_107 {dimension_numbers = #tpu.dot_dimension_numbers<[1], [0], [0], [1], [0, 0, 1, 1], [], []>} : vector<2x32xf32>, vector<32x32xf32>, vector<2x32xf32> -> vector<2x32xf32>
    %cst_108 = arith.constant dense<0.000000e+00> : vector<2x32xf32>
    %451 = tpu.matmul %381, %446, %cst_108 {dimension_numbers = #tpu.dot_dimension_numbers<[1], [0], [0], [1], [0, 0, 1, 1], [], []>} : vector<2x32xf32>, vector<32x32xf32>, vector<2x32xf32> -> vector<2x32xf32>
    %cst_109 = arith.constant dense<0.000000e+00> : vector<2x32xf32>
    %452 = tpu.matmul %381, %448, %cst_109 {dimension_numbers = #tpu.dot_dimension_numbers<[1], [0], [0], [1], [0, 0, 1, 1], [], []>} : vector<2x32xf32>, vector<32x32xf32>, vector<2x32xf32> -> vector<2x32xf32>
    %453 = arith.addf %428, %450 : vector<2x32xf32>
    %454 = arith.negf %453 : vector<2x32xf32>
    %455 = math.exp %454 : vector<2x32xf32>
    %cst_110 = arith.constant 1.000000e+00 : f32
    %456 = vector.broadcast %cst_110 : f32 to vector<2x32xf32>
    %457 = arith.addf %456, %455 : vector<2x32xf32>
    %458 = arith.divf %456, %457 : vector<2x32xf32>
    %459 = arith.addf %435, %451 : vector<2x32xf32>
    %460 = arith.negf %459 : vector<2x32xf32>
    %461 = math.exp %460 : vector<2x32xf32>
    %cst_111 = arith.constant 1.000000e+00 : f32
    %462 = vector.broadcast %cst_111 : f32 to vector<2x32xf32>
    %463 = arith.addf %462, %461 : vector<2x32xf32>
    %464 = arith.divf %462, %463 : vector<2x32xf32>
    %465 = vector.broadcast %449 : vector<1x32xf32> to vector<2x32xf32>
    %466 = arith.addf %452, %465 : vector<2x32xf32>
    %467 = arith.mulf %458, %466 : vector<2x32xf32>
    %468 = arith.addf %442, %467 : vector<2x32xf32>
    %469 = math.tanh %468 : vector<2x32xf32>
    %cst_112 = arith.constant 1.000000e+00 : f32
    %470 = vector.broadcast %cst_112 : f32 to vector<2x32xf32>
    %471 = arith.subf %470, %464 : vector<2x32xf32>
    %472 = arith.mulf %471, %469 : vector<2x32xf32>
    %473 = arith.mulf %464, %381 : vector<2x32xf32>
    %474 = arith.addf %472, %473 : vector<2x32xf32>
    %c5_i32 = arith.constant 5 : i32
    %475 = arith.index_cast %c5_i32 : i32 to index
    %c0_113 = arith.constant 0 : index
    %c0_114 = arith.constant 0 : index
    %c0_115 = arith.constant 0 : index
    %476 = vector.load %arg1[%475, %c0_113, %c0_114, %c0_115] : memref<8x3x2x32xf32, #tpu.memory_space<vmem>>, vector<1x3x2x32xf32>
    %477 = vector.shape_cast %476 : vector<1x3x2x32xf32> to vector<3x2x32xf32>
    %478 = vector.extract_strided_slice %477 {offsets = [0, 0, 0], sizes = [1, 2, 32], strides = [1, 1, 1]} : vector<3x2x32xf32> to vector<1x2x32xf32>
    %479 = vector.shape_cast %478 : vector<1x2x32xf32> to vector<2x32xf32>
    %480 = vector.extract_strided_slice %477 {offsets = [1, 0, 0], sizes = [1, 2, 32], strides = [1, 1, 1]} : vector<3x2x32xf32> to vector<1x2x32xf32>
    %481 = vector.shape_cast %480 : vector<1x2x32xf32> to vector<2x32xf32>
    %482 = vector.extract_strided_slice %477 {offsets = [2, 0, 0], sizes = [1, 2, 32], strides = [1, 1, 1]} : vector<3x2x32xf32> to vector<1x2x32xf32>
    %483 = vector.shape_cast %482 : vector<1x2x32xf32> to vector<2x32xf32>
    %484 = vector.extract_strided_slice %0 {offsets = [0, 0, 0], sizes = [1, 32, 32], strides = [1, 1, 1]} : vector<3x32x32xf32> to vector<1x32x32xf32>
    %485 = vector.shape_cast %484 : vector<1x32x32xf32> to vector<32x32xf32>
    %486 = vector.extract_strided_slice %0 {offsets = [1, 0, 0], sizes = [1, 32, 32], strides = [1, 1, 1]} : vector<3x32x32xf32> to vector<1x32x32xf32>
    %487 = vector.shape_cast %486 : vector<1x32x32xf32> to vector<32x32xf32>
    %488 = vector.extract_strided_slice %0 {offsets = [2, 0, 0], sizes = [1, 32, 32], strides = [1, 1, 1]} : vector<3x32x32xf32> to vector<1x32x32xf32>
    %489 = vector.shape_cast %488 : vector<1x32x32xf32> to vector<32x32xf32>
    %cst_116 = arith.constant dense<0.000000e+00> : vector<2x32xf32>
    %490 = tpu.matmul %421, %485, %cst_116 {dimension_numbers = #tpu.dot_dimension_numbers<[1], [0], [0], [1], [0, 0, 1, 1], [], []>} : vector<2x32xf32>, vector<32x32xf32>, vector<2x32xf32> -> vector<2x32xf32>
    %cst_117 = arith.constant dense<0.000000e+00> : vector<2x32xf32>
    %491 = tpu.matmul %421, %487, %cst_117 {dimension_numbers = #tpu.dot_dimension_numbers<[1], [0], [0], [1], [0, 0, 1, 1], [], []>} : vector<2x32xf32>, vector<32x32xf32>, vector<2x32xf32> -> vector<2x32xf32>
    %cst_118 = arith.constant dense<0.000000e+00> : vector<2x32xf32>
    %492 = tpu.matmul %421, %489, %cst_118 {dimension_numbers = #tpu.dot_dimension_numbers<[1], [0], [0], [1], [0, 0, 1, 1], [], []>} : vector<2x32xf32>, vector<32x32xf32>, vector<2x32xf32> -> vector<2x32xf32>
    %493 = arith.addf %479, %490 : vector<2x32xf32>
    %494 = arith.negf %493 : vector<2x32xf32>
    %495 = math.exp %494 : vector<2x32xf32>
    %cst_119 = arith.constant 1.000000e+00 : f32
    %496 = vector.broadcast %cst_119 : f32 to vector<2x32xf32>
    %497 = arith.addf %496, %495 : vector<2x32xf32>
    %498 = arith.divf %496, %497 : vector<2x32xf32>
    %499 = arith.addf %481, %491 : vector<2x32xf32>
    %500 = arith.negf %499 : vector<2x32xf32>
    %501 = math.exp %500 : vector<2x32xf32>
    %cst_120 = arith.constant 1.000000e+00 : f32
    %502 = vector.broadcast %cst_120 : f32 to vector<2x32xf32>
    %503 = arith.addf %502, %501 : vector<2x32xf32>
    %504 = arith.divf %502, %503 : vector<2x32xf32>
    %505 = vector.broadcast %1 : vector<1x32xf32> to vector<2x32xf32>
    %506 = arith.addf %492, %505 : vector<2x32xf32>
    %507 = arith.mulf %498, %506 : vector<2x32xf32>
    %508 = arith.addf %483, %507 : vector<2x32xf32>
    %509 = math.tanh %508 : vector<2x32xf32>
    %cst_121 = arith.constant 1.000000e+00 : f32
    %510 = vector.broadcast %cst_121 : f32 to vector<2x32xf32>
    %511 = arith.subf %510, %504 : vector<2x32xf32>
    %512 = arith.mulf %511, %509 : vector<2x32xf32>
    %513 = arith.mulf %504, %421 : vector<2x32xf32>
    %514 = arith.addf %512, %513 : vector<2x32xf32>
    %515 = vector.extract_strided_slice %2 {offsets = [0, 0, 0, 0], sizes = [1, 1, 32, 32], strides = [1, 1, 1, 1]} : vector<1x3x32x32xf32> to vector<1x1x32x32xf32>
    %516 = vector.shape_cast %515 : vector<1x1x32x32xf32> to vector<32x32xf32>
    %cst_122 = arith.constant dense<0.000000e+00> : vector<2x32xf32>
    %517 = tpu.matmul %514, %516, %cst_122 {dimension_numbers = #tpu.dot_dimension_numbers<[1], [0], [0], [1], [0, 0, 1, 1], [], []>} : vector<2x32xf32>, vector<32x32xf32>, vector<2x32xf32> -> vector<2x32xf32>
    %518 = vector.extract_strided_slice %3 {offsets = [0, 0, 0, 0], sizes = [1, 1, 1, 32], strides = [1, 1, 1, 1]} : vector<1x3x1x32xf32> to vector<1x1x1x32xf32>
    %519 = vector.shape_cast %518 : vector<1x1x1x32xf32> to vector<1x32xf32>
    %520 = vector.broadcast %519 : vector<1x32xf32> to vector<2x32xf32>
    %521 = arith.addf %517, %520 : vector<2x32xf32>
    %522 = vector.extract_strided_slice %2 {offsets = [0, 1, 0, 0], sizes = [1, 1, 32, 32], strides = [1, 1, 1, 1]} : vector<1x3x32x32xf32> to vector<1x1x32x32xf32>
    %523 = vector.shape_cast %522 : vector<1x1x32x32xf32> to vector<32x32xf32>
    %cst_123 = arith.constant dense<0.000000e+00> : vector<2x32xf32>
    %524 = tpu.matmul %514, %523, %cst_123 {dimension_numbers = #tpu.dot_dimension_numbers<[1], [0], [0], [1], [0, 0, 1, 1], [], []>} : vector<2x32xf32>, vector<32x32xf32>, vector<2x32xf32> -> vector<2x32xf32>
    %525 = vector.extract_strided_slice %3 {offsets = [0, 1, 0, 0], sizes = [1, 1, 1, 32], strides = [1, 1, 1, 1]} : vector<1x3x1x32xf32> to vector<1x1x1x32xf32>
    %526 = vector.shape_cast %525 : vector<1x1x1x32xf32> to vector<1x32xf32>
    %527 = vector.broadcast %526 : vector<1x32xf32> to vector<2x32xf32>
    %528 = arith.addf %524, %527 : vector<2x32xf32>
    %529 = vector.extract_strided_slice %2 {offsets = [0, 2, 0, 0], sizes = [1, 1, 32, 32], strides = [1, 1, 1, 1]} : vector<1x3x32x32xf32> to vector<1x1x32x32xf32>
    %530 = vector.shape_cast %529 : vector<1x1x32x32xf32> to vector<32x32xf32>
    %cst_124 = arith.constant dense<0.000000e+00> : vector<2x32xf32>
    %531 = tpu.matmul %514, %530, %cst_124 {dimension_numbers = #tpu.dot_dimension_numbers<[1], [0], [0], [1], [0, 0, 1, 1], [], []>} : vector<2x32xf32>, vector<32x32xf32>, vector<2x32xf32> -> vector<2x32xf32>
    %532 = vector.extract_strided_slice %3 {offsets = [0, 2, 0, 0], sizes = [1, 1, 1, 32], strides = [1, 1, 1, 1]} : vector<1x3x1x32xf32> to vector<1x1x1x32xf32>
    %533 = vector.shape_cast %532 : vector<1x1x1x32xf32> to vector<1x32xf32>
    %534 = vector.broadcast %533 : vector<1x32xf32> to vector<2x32xf32>
    %535 = arith.addf %531, %534 : vector<2x32xf32>
    %536 = vector.extract_strided_slice %4 {offsets = [0, 0, 0, 0], sizes = [1, 1, 32, 32], strides = [1, 1, 1, 1]} : vector<1x3x32x32xf32> to vector<1x1x32x32xf32>
    %537 = vector.shape_cast %536 : vector<1x1x32x32xf32> to vector<32x32xf32>
    %538 = vector.extract_strided_slice %4 {offsets = [0, 1, 0, 0], sizes = [1, 1, 32, 32], strides = [1, 1, 1, 1]} : vector<1x3x32x32xf32> to vector<1x1x32x32xf32>
    %539 = vector.shape_cast %538 : vector<1x1x32x32xf32> to vector<32x32xf32>
    %540 = vector.extract_strided_slice %4 {offsets = [0, 2, 0, 0], sizes = [1, 1, 32, 32], strides = [1, 1, 1, 1]} : vector<1x3x32x32xf32> to vector<1x1x32x32xf32>
    %541 = vector.shape_cast %540 : vector<1x1x32x32xf32> to vector<32x32xf32>
    %542 = vector.shape_cast %5 : vector<1x1x32xf32> to vector<1x32xf32>
    %cst_125 = arith.constant dense<0.000000e+00> : vector<2x32xf32>
    %543 = tpu.matmul %474, %537, %cst_125 {dimension_numbers = #tpu.dot_dimension_numbers<[1], [0], [0], [1], [0, 0, 1, 1], [], []>} : vector<2x32xf32>, vector<32x32xf32>, vector<2x32xf32> -> vector<2x32xf32>
    %cst_126 = arith.constant dense<0.000000e+00> : vector<2x32xf32>
    %544 = tpu.matmul %474, %539, %cst_126 {dimension_numbers = #tpu.dot_dimension_numbers<[1], [0], [0], [1], [0, 0, 1, 1], [], []>} : vector<2x32xf32>, vector<32x32xf32>, vector<2x32xf32> -> vector<2x32xf32>
    %cst_127 = arith.constant dense<0.000000e+00> : vector<2x32xf32>
    %545 = tpu.matmul %474, %541, %cst_127 {dimension_numbers = #tpu.dot_dimension_numbers<[1], [0], [0], [1], [0, 0, 1, 1], [], []>} : vector<2x32xf32>, vector<32x32xf32>, vector<2x32xf32> -> vector<2x32xf32>
    %546 = arith.addf %521, %543 : vector<2x32xf32>
    %547 = arith.negf %546 : vector<2x32xf32>
    %548 = math.exp %547 : vector<2x32xf32>
    %cst_128 = arith.constant 1.000000e+00 : f32
    %549 = vector.broadcast %cst_128 : f32 to vector<2x32xf32>
    %550 = arith.addf %549, %548 : vector<2x32xf32>
    %551 = arith.divf %549, %550 : vector<2x32xf32>
    %552 = arith.addf %528, %544 : vector<2x32xf32>
    %553 = arith.negf %552 : vector<2x32xf32>
    %554 = math.exp %553 : vector<2x32xf32>
    %cst_129 = arith.constant 1.000000e+00 : f32
    %555 = vector.broadcast %cst_129 : f32 to vector<2x32xf32>
    %556 = arith.addf %555, %554 : vector<2x32xf32>
    %557 = arith.divf %555, %556 : vector<2x32xf32>
    %558 = vector.broadcast %542 : vector<1x32xf32> to vector<2x32xf32>
    %559 = arith.addf %545, %558 : vector<2x32xf32>
    %560 = arith.mulf %551, %559 : vector<2x32xf32>
    %561 = arith.addf %535, %560 : vector<2x32xf32>
    %562 = math.tanh %561 : vector<2x32xf32>
    %cst_130 = arith.constant 1.000000e+00 : f32
    %563 = vector.broadcast %cst_130 : f32 to vector<2x32xf32>
    %564 = arith.subf %563, %557 : vector<2x32xf32>
    %565 = arith.mulf %564, %562 : vector<2x32xf32>
    %566 = arith.mulf %557, %474 : vector<2x32xf32>
    %567 = arith.addf %565, %566 : vector<2x32xf32>
    %c6_i32 = arith.constant 6 : i32
    %568 = arith.index_cast %c6_i32 : i32 to index
    %c0_131 = arith.constant 0 : index
    %c0_132 = arith.constant 0 : index
    %c0_133 = arith.constant 0 : index
    %569 = vector.load %arg1[%568, %c0_131, %c0_132, %c0_133] : memref<8x3x2x32xf32, #tpu.memory_space<vmem>>, vector<1x3x2x32xf32>
    %570 = vector.shape_cast %569 : vector<1x3x2x32xf32> to vector<3x2x32xf32>
    %571 = vector.extract_strided_slice %570 {offsets = [0, 0, 0], sizes = [1, 2, 32], strides = [1, 1, 1]} : vector<3x2x32xf32> to vector<1x2x32xf32>
    %572 = vector.shape_cast %571 : vector<1x2x32xf32> to vector<2x32xf32>
    %573 = vector.extract_strided_slice %570 {offsets = [1, 0, 0], sizes = [1, 2, 32], strides = [1, 1, 1]} : vector<3x2x32xf32> to vector<1x2x32xf32>
    %574 = vector.shape_cast %573 : vector<1x2x32xf32> to vector<2x32xf32>
    %575 = vector.extract_strided_slice %570 {offsets = [2, 0, 0], sizes = [1, 2, 32], strides = [1, 1, 1]} : vector<3x2x32xf32> to vector<1x2x32xf32>
    %576 = vector.shape_cast %575 : vector<1x2x32xf32> to vector<2x32xf32>
    %577 = vector.extract_strided_slice %0 {offsets = [0, 0, 0], sizes = [1, 32, 32], strides = [1, 1, 1]} : vector<3x32x32xf32> to vector<1x32x32xf32>
    %578 = vector.shape_cast %577 : vector<1x32x32xf32> to vector<32x32xf32>
    %579 = vector.extract_strided_slice %0 {offsets = [1, 0, 0], sizes = [1, 32, 32], strides = [1, 1, 1]} : vector<3x32x32xf32> to vector<1x32x32xf32>
    %580 = vector.shape_cast %579 : vector<1x32x32xf32> to vector<32x32xf32>
    %581 = vector.extract_strided_slice %0 {offsets = [2, 0, 0], sizes = [1, 32, 32], strides = [1, 1, 1]} : vector<3x32x32xf32> to vector<1x32x32xf32>
    %582 = vector.shape_cast %581 : vector<1x32x32xf32> to vector<32x32xf32>
    %cst_134 = arith.constant dense<0.000000e+00> : vector<2x32xf32>
    %583 = tpu.matmul %514, %578, %cst_134 {dimension_numbers = #tpu.dot_dimension_numbers<[1], [0], [0], [1], [0, 0, 1, 1], [], []>} : vector<2x32xf32>, vector<32x32xf32>, vector<2x32xf32> -> vector<2x32xf32>
    %cst_135 = arith.constant dense<0.000000e+00> : vector<2x32xf32>
    %584 = tpu.matmul %514, %580, %cst_135 {dimension_numbers = #tpu.dot_dimension_numbers<[1], [0], [0], [1], [0, 0, 1, 1], [], []>} : vector<2x32xf32>, vector<32x32xf32>, vector<2x32xf32> -> vector<2x32xf32>
    %cst_136 = arith.constant dense<0.000000e+00> : vector<2x32xf32>
    %585 = tpu.matmul %514, %582, %cst_136 {dimension_numbers = #tpu.dot_dimension_numbers<[1], [0], [0], [1], [0, 0, 1, 1], [], []>} : vector<2x32xf32>, vector<32x32xf32>, vector<2x32xf32> -> vector<2x32xf32>
    %586 = arith.addf %572, %583 : vector<2x32xf32>
    %587 = arith.negf %586 : vector<2x32xf32>
    %588 = math.exp %587 : vector<2x32xf32>
    %cst_137 = arith.constant 1.000000e+00 : f32
    %589 = vector.broadcast %cst_137 : f32 to vector<2x32xf32>
    %590 = arith.addf %589, %588 : vector<2x32xf32>
    %591 = arith.divf %589, %590 : vector<2x32xf32>
    %592 = arith.addf %574, %584 : vector<2x32xf32>
    %593 = arith.negf %592 : vector<2x32xf32>
    %594 = math.exp %593 : vector<2x32xf32>
    %cst_138 = arith.constant 1.000000e+00 : f32
    %595 = vector.broadcast %cst_138 : f32 to vector<2x32xf32>
    %596 = arith.addf %595, %594 : vector<2x32xf32>
    %597 = arith.divf %595, %596 : vector<2x32xf32>
    %598 = vector.broadcast %1 : vector<1x32xf32> to vector<2x32xf32>
    %599 = arith.addf %585, %598 : vector<2x32xf32>
    %600 = arith.mulf %591, %599 : vector<2x32xf32>
    %601 = arith.addf %576, %600 : vector<2x32xf32>
    %602 = math.tanh %601 : vector<2x32xf32>
    %cst_139 = arith.constant 1.000000e+00 : f32
    %603 = vector.broadcast %cst_139 : f32 to vector<2x32xf32>
    %604 = arith.subf %603, %597 : vector<2x32xf32>
    %605 = arith.mulf %604, %602 : vector<2x32xf32>
    %606 = arith.mulf %597, %514 : vector<2x32xf32>
    %607 = arith.addf %605, %606 : vector<2x32xf32>
    %608 = vector.extract_strided_slice %2 {offsets = [0, 0, 0, 0], sizes = [1, 1, 32, 32], strides = [1, 1, 1, 1]} : vector<1x3x32x32xf32> to vector<1x1x32x32xf32>
    %609 = vector.shape_cast %608 : vector<1x1x32x32xf32> to vector<32x32xf32>
    %cst_140 = arith.constant dense<0.000000e+00> : vector<2x32xf32>
    %610 = tpu.matmul %607, %609, %cst_140 {dimension_numbers = #tpu.dot_dimension_numbers<[1], [0], [0], [1], [0, 0, 1, 1], [], []>} : vector<2x32xf32>, vector<32x32xf32>, vector<2x32xf32> -> vector<2x32xf32>
    %611 = vector.extract_strided_slice %3 {offsets = [0, 0, 0, 0], sizes = [1, 1, 1, 32], strides = [1, 1, 1, 1]} : vector<1x3x1x32xf32> to vector<1x1x1x32xf32>
    %612 = vector.shape_cast %611 : vector<1x1x1x32xf32> to vector<1x32xf32>
    %613 = vector.broadcast %612 : vector<1x32xf32> to vector<2x32xf32>
    %614 = arith.addf %610, %613 : vector<2x32xf32>
    %615 = vector.extract_strided_slice %2 {offsets = [0, 1, 0, 0], sizes = [1, 1, 32, 32], strides = [1, 1, 1, 1]} : vector<1x3x32x32xf32> to vector<1x1x32x32xf32>
    %616 = vector.shape_cast %615 : vector<1x1x32x32xf32> to vector<32x32xf32>
    %cst_141 = arith.constant dense<0.000000e+00> : vector<2x32xf32>
    %617 = tpu.matmul %607, %616, %cst_141 {dimension_numbers = #tpu.dot_dimension_numbers<[1], [0], [0], [1], [0, 0, 1, 1], [], []>} : vector<2x32xf32>, vector<32x32xf32>, vector<2x32xf32> -> vector<2x32xf32>
    %618 = vector.extract_strided_slice %3 {offsets = [0, 1, 0, 0], sizes = [1, 1, 1, 32], strides = [1, 1, 1, 1]} : vector<1x3x1x32xf32> to vector<1x1x1x32xf32>
    %619 = vector.shape_cast %618 : vector<1x1x1x32xf32> to vector<1x32xf32>
    %620 = vector.broadcast %619 : vector<1x32xf32> to vector<2x32xf32>
    %621 = arith.addf %617, %620 : vector<2x32xf32>
    %622 = vector.extract_strided_slice %2 {offsets = [0, 2, 0, 0], sizes = [1, 1, 32, 32], strides = [1, 1, 1, 1]} : vector<1x3x32x32xf32> to vector<1x1x32x32xf32>
    %623 = vector.shape_cast %622 : vector<1x1x32x32xf32> to vector<32x32xf32>
    %cst_142 = arith.constant dense<0.000000e+00> : vector<2x32xf32>
    %624 = tpu.matmul %607, %623, %cst_142 {dimension_numbers = #tpu.dot_dimension_numbers<[1], [0], [0], [1], [0, 0, 1, 1], [], []>} : vector<2x32xf32>, vector<32x32xf32>, vector<2x32xf32> -> vector<2x32xf32>
    %625 = vector.extract_strided_slice %3 {offsets = [0, 2, 0, 0], sizes = [1, 1, 1, 32], strides = [1, 1, 1, 1]} : vector<1x3x1x32xf32> to vector<1x1x1x32xf32>
    %626 = vector.shape_cast %625 : vector<1x1x1x32xf32> to vector<1x32xf32>
    %627 = vector.broadcast %626 : vector<1x32xf32> to vector<2x32xf32>
    %628 = arith.addf %624, %627 : vector<2x32xf32>
    %629 = vector.extract_strided_slice %4 {offsets = [0, 0, 0, 0], sizes = [1, 1, 32, 32], strides = [1, 1, 1, 1]} : vector<1x3x32x32xf32> to vector<1x1x32x32xf32>
    %630 = vector.shape_cast %629 : vector<1x1x32x32xf32> to vector<32x32xf32>
    %631 = vector.extract_strided_slice %4 {offsets = [0, 1, 0, 0], sizes = [1, 1, 32, 32], strides = [1, 1, 1, 1]} : vector<1x3x32x32xf32> to vector<1x1x32x32xf32>
    %632 = vector.shape_cast %631 : vector<1x1x32x32xf32> to vector<32x32xf32>
    %633 = vector.extract_strided_slice %4 {offsets = [0, 2, 0, 0], sizes = [1, 1, 32, 32], strides = [1, 1, 1, 1]} : vector<1x3x32x32xf32> to vector<1x1x32x32xf32>
    %634 = vector.shape_cast %633 : vector<1x1x32x32xf32> to vector<32x32xf32>
    %635 = vector.shape_cast %5 : vector<1x1x32xf32> to vector<1x32xf32>
    %cst_143 = arith.constant dense<0.000000e+00> : vector<2x32xf32>
    %636 = tpu.matmul %567, %630, %cst_143 {dimension_numbers = #tpu.dot_dimension_numbers<[1], [0], [0], [1], [0, 0, 1, 1], [], []>} : vector<2x32xf32>, vector<32x32xf32>, vector<2x32xf32> -> vector<2x32xf32>
    %cst_144 = arith.constant dense<0.000000e+00> : vector<2x32xf32>
    %637 = tpu.matmul %567, %632, %cst_144 {dimension_numbers = #tpu.dot_dimension_numbers<[1], [0], [0], [1], [0, 0, 1, 1], [], []>} : vector<2x32xf32>, vector<32x32xf32>, vector<2x32xf32> -> vector<2x32xf32>
    %cst_145 = arith.constant dense<0.000000e+00> : vector<2x32xf32>
    %638 = tpu.matmul %567, %634, %cst_145 {dimension_numbers = #tpu.dot_dimension_numbers<[1], [0], [0], [1], [0, 0, 1, 1], [], []>} : vector<2x32xf32>, vector<32x32xf32>, vector<2x32xf32> -> vector<2x32xf32>
    %639 = arith.addf %614, %636 : vector<2x32xf32>
    %640 = arith.negf %639 : vector<2x32xf32>
    %641 = math.exp %640 : vector<2x32xf32>
    %cst_146 = arith.constant 1.000000e+00 : f32
    %642 = vector.broadcast %cst_146 : f32 to vector<2x32xf32>
    %643 = arith.addf %642, %641 : vector<2x32xf32>
    %644 = arith.divf %642, %643 : vector<2x32xf32>
    %645 = arith.addf %621, %637 : vector<2x32xf32>
    %646 = arith.negf %645 : vector<2x32xf32>
    %647 = math.exp %646 : vector<2x32xf32>
    %cst_147 = arith.constant 1.000000e+00 : f32
    %648 = vector.broadcast %cst_147 : f32 to vector<2x32xf32>
    %649 = arith.addf %648, %647 : vector<2x32xf32>
    %650 = arith.divf %648, %649 : vector<2x32xf32>
    %651 = vector.broadcast %635 : vector<1x32xf32> to vector<2x32xf32>
    %652 = arith.addf %638, %651 : vector<2x32xf32>
    %653 = arith.mulf %644, %652 : vector<2x32xf32>
    %654 = arith.addf %628, %653 : vector<2x32xf32>
    %655 = math.tanh %654 : vector<2x32xf32>
    %cst_148 = arith.constant 1.000000e+00 : f32
    %656 = vector.broadcast %cst_148 : f32 to vector<2x32xf32>
    %657 = arith.subf %656, %650 : vector<2x32xf32>
    %658 = arith.mulf %657, %655 : vector<2x32xf32>
    %659 = arith.mulf %650, %567 : vector<2x32xf32>
    %660 = arith.addf %658, %659 : vector<2x32xf32>
    %c7_i32 = arith.constant 7 : i32
    %661 = arith.index_cast %c7_i32 : i32 to index
    %c0_149 = arith.constant 0 : index
    %c0_150 = arith.constant 0 : index
    %c0_151 = arith.constant 0 : index
    %662 = vector.load %arg1[%661, %c0_149, %c0_150, %c0_151] : memref<8x3x2x32xf32, #tpu.memory_space<vmem>>, vector<1x3x2x32xf32>
    %663 = vector.shape_cast %662 : vector<1x3x2x32xf32> to vector<3x2x32xf32>
    %664 = vector.extract_strided_slice %663 {offsets = [0, 0, 0], sizes = [1, 2, 32], strides = [1, 1, 1]} : vector<3x2x32xf32> to vector<1x2x32xf32>
    %665 = vector.shape_cast %664 : vector<1x2x32xf32> to vector<2x32xf32>
    %666 = vector.extract_strided_slice %663 {offsets = [1, 0, 0], sizes = [1, 2, 32], strides = [1, 1, 1]} : vector<3x2x32xf32> to vector<1x2x32xf32>
    %667 = vector.shape_cast %666 : vector<1x2x32xf32> to vector<2x32xf32>
    %668 = vector.extract_strided_slice %663 {offsets = [2, 0, 0], sizes = [1, 2, 32], strides = [1, 1, 1]} : vector<3x2x32xf32> to vector<1x2x32xf32>
    %669 = vector.shape_cast %668 : vector<1x2x32xf32> to vector<2x32xf32>
    %670 = vector.extract_strided_slice %0 {offsets = [0, 0, 0], sizes = [1, 32, 32], strides = [1, 1, 1]} : vector<3x32x32xf32> to vector<1x32x32xf32>
    %671 = vector.shape_cast %670 : vector<1x32x32xf32> to vector<32x32xf32>
    %672 = vector.extract_strided_slice %0 {offsets = [1, 0, 0], sizes = [1, 32, 32], strides = [1, 1, 1]} : vector<3x32x32xf32> to vector<1x32x32xf32>
    %673 = vector.shape_cast %672 : vector<1x32x32xf32> to vector<32x32xf32>
    %674 = vector.extract_strided_slice %0 {offsets = [2, 0, 0], sizes = [1, 32, 32], strides = [1, 1, 1]} : vector<3x32x32xf32> to vector<1x32x32xf32>
    %675 = vector.shape_cast %674 : vector<1x32x32xf32> to vector<32x32xf32>
    %cst_152 = arith.constant dense<0.000000e+00> : vector<2x32xf32>
    %676 = tpu.matmul %607, %671, %cst_152 {dimension_numbers = #tpu.dot_dimension_numbers<[1], [0], [0], [1], [0, 0, 1, 1], [], []>} : vector<2x32xf32>, vector<32x32xf32>, vector<2x32xf32> -> vector<2x32xf32>
    %cst_153 = arith.constant dense<0.000000e+00> : vector<2x32xf32>
    %677 = tpu.matmul %607, %673, %cst_153 {dimension_numbers = #tpu.dot_dimension_numbers<[1], [0], [0], [1], [0, 0, 1, 1], [], []>} : vector<2x32xf32>, vector<32x32xf32>, vector<2x32xf32> -> vector<2x32xf32>
    %cst_154 = arith.constant dense<0.000000e+00> : vector<2x32xf32>
    %678 = tpu.matmul %607, %675, %cst_154 {dimension_numbers = #tpu.dot_dimension_numbers<[1], [0], [0], [1], [0, 0, 1, 1], [], []>} : vector<2x32xf32>, vector<32x32xf32>, vector<2x32xf32> -> vector<2x32xf32>
    %679 = arith.addf %665, %676 : vector<2x32xf32>
    %680 = arith.negf %679 : vector<2x32xf32>
    %681 = math.exp %680 : vector<2x32xf32>
    %cst_155 = arith.constant 1.000000e+00 : f32
    %682 = vector.broadcast %cst_155 : f32 to vector<2x32xf32>
    %683 = arith.addf %682, %681 : vector<2x32xf32>
    %684 = arith.divf %682, %683 : vector<2x32xf32>
    %685 = arith.addf %667, %677 : vector<2x32xf32>
    %686 = arith.negf %685 : vector<2x32xf32>
    %687 = math.exp %686 : vector<2x32xf32>
    %cst_156 = arith.constant 1.000000e+00 : f32
    %688 = vector.broadcast %cst_156 : f32 to vector<2x32xf32>
    %689 = arith.addf %688, %687 : vector<2x32xf32>
    %690 = arith.divf %688, %689 : vector<2x32xf32>
    %691 = vector.broadcast %1 : vector<1x32xf32> to vector<2x32xf32>
    %692 = arith.addf %678, %691 : vector<2x32xf32>
    %693 = arith.mulf %684, %692 : vector<2x32xf32>
    %694 = arith.addf %669, %693 : vector<2x32xf32>
    %695 = math.tanh %694 : vector<2x32xf32>
    %cst_157 = arith.constant 1.000000e+00 : f32
    %696 = vector.broadcast %cst_157 : f32 to vector<2x32xf32>
    %697 = arith.subf %696, %690 : vector<2x32xf32>
    %698 = arith.mulf %697, %695 : vector<2x32xf32>
    %699 = arith.mulf %690, %607 : vector<2x32xf32>
    %700 = arith.addf %698, %699 : vector<2x32xf32>
    %701 = vector.extract_strided_slice %2 {offsets = [0, 0, 0, 0], sizes = [1, 1, 32, 32], strides = [1, 1, 1, 1]} : vector<1x3x32x32xf32> to vector<1x1x32x32xf32>
    %702 = vector.shape_cast %701 : vector<1x1x32x32xf32> to vector<32x32xf32>
    %cst_158 = arith.constant dense<0.000000e+00> : vector<2x32xf32>
    %703 = tpu.matmul %700, %702, %cst_158 {dimension_numbers = #tpu.dot_dimension_numbers<[1], [0], [0], [1], [0, 0, 1, 1], [], []>} : vector<2x32xf32>, vector<32x32xf32>, vector<2x32xf32> -> vector<2x32xf32>
    %704 = vector.extract_strided_slice %3 {offsets = [0, 0, 0, 0], sizes = [1, 1, 1, 32], strides = [1, 1, 1, 1]} : vector<1x3x1x32xf32> to vector<1x1x1x32xf32>
    %705 = vector.shape_cast %704 : vector<1x1x1x32xf32> to vector<1x32xf32>
    %706 = vector.broadcast %705 : vector<1x32xf32> to vector<2x32xf32>
    %707 = arith.addf %703, %706 : vector<2x32xf32>
    %708 = vector.extract_strided_slice %2 {offsets = [0, 1, 0, 0], sizes = [1, 1, 32, 32], strides = [1, 1, 1, 1]} : vector<1x3x32x32xf32> to vector<1x1x32x32xf32>
    %709 = vector.shape_cast %708 : vector<1x1x32x32xf32> to vector<32x32xf32>
    %cst_159 = arith.constant dense<0.000000e+00> : vector<2x32xf32>
    %710 = tpu.matmul %700, %709, %cst_159 {dimension_numbers = #tpu.dot_dimension_numbers<[1], [0], [0], [1], [0, 0, 1, 1], [], []>} : vector<2x32xf32>, vector<32x32xf32>, vector<2x32xf32> -> vector<2x32xf32>
    %711 = vector.extract_strided_slice %3 {offsets = [0, 1, 0, 0], sizes = [1, 1, 1, 32], strides = [1, 1, 1, 1]} : vector<1x3x1x32xf32> to vector<1x1x1x32xf32>
    %712 = vector.shape_cast %711 : vector<1x1x1x32xf32> to vector<1x32xf32>
    %713 = vector.broadcast %712 : vector<1x32xf32> to vector<2x32xf32>
    %714 = arith.addf %710, %713 : vector<2x32xf32>
    %715 = vector.extract_strided_slice %2 {offsets = [0, 2, 0, 0], sizes = [1, 1, 32, 32], strides = [1, 1, 1, 1]} : vector<1x3x32x32xf32> to vector<1x1x32x32xf32>
    %716 = vector.shape_cast %715 : vector<1x1x32x32xf32> to vector<32x32xf32>
    %cst_160 = arith.constant dense<0.000000e+00> : vector<2x32xf32>
    %717 = tpu.matmul %700, %716, %cst_160 {dimension_numbers = #tpu.dot_dimension_numbers<[1], [0], [0], [1], [0, 0, 1, 1], [], []>} : vector<2x32xf32>, vector<32x32xf32>, vector<2x32xf32> -> vector<2x32xf32>
    %718 = vector.extract_strided_slice %3 {offsets = [0, 2, 0, 0], sizes = [1, 1, 1, 32], strides = [1, 1, 1, 1]} : vector<1x3x1x32xf32> to vector<1x1x1x32xf32>
    %719 = vector.shape_cast %718 : vector<1x1x1x32xf32> to vector<1x32xf32>
    %720 = vector.broadcast %719 : vector<1x32xf32> to vector<2x32xf32>
    %721 = arith.addf %717, %720 : vector<2x32xf32>
    %722 = vector.extract_strided_slice %4 {offsets = [0, 0, 0, 0], sizes = [1, 1, 32, 32], strides = [1, 1, 1, 1]} : vector<1x3x32x32xf32> to vector<1x1x32x32xf32>
    %723 = vector.shape_cast %722 : vector<1x1x32x32xf32> to vector<32x32xf32>
    %724 = vector.extract_strided_slice %4 {offsets = [0, 1, 0, 0], sizes = [1, 1, 32, 32], strides = [1, 1, 1, 1]} : vector<1x3x32x32xf32> to vector<1x1x32x32xf32>
    %725 = vector.shape_cast %724 : vector<1x1x32x32xf32> to vector<32x32xf32>
    %726 = vector.extract_strided_slice %4 {offsets = [0, 2, 0, 0], sizes = [1, 1, 32, 32], strides = [1, 1, 1, 1]} : vector<1x3x32x32xf32> to vector<1x1x32x32xf32>
    %727 = vector.shape_cast %726 : vector<1x1x32x32xf32> to vector<32x32xf32>
    %728 = vector.shape_cast %5 : vector<1x1x32xf32> to vector<1x32xf32>
    %cst_161 = arith.constant dense<0.000000e+00> : vector<2x32xf32>
    %729 = tpu.matmul %660, %723, %cst_161 {dimension_numbers = #tpu.dot_dimension_numbers<[1], [0], [0], [1], [0, 0, 1, 1], [], []>} : vector<2x32xf32>, vector<32x32xf32>, vector<2x32xf32> -> vector<2x32xf32>
    %cst_162 = arith.constant dense<0.000000e+00> : vector<2x32xf32>
    %730 = tpu.matmul %660, %725, %cst_162 {dimension_numbers = #tpu.dot_dimension_numbers<[1], [0], [0], [1], [0, 0, 1, 1], [], []>} : vector<2x32xf32>, vector<32x32xf32>, vector<2x32xf32> -> vector<2x32xf32>
    %cst_163 = arith.constant dense<0.000000e+00> : vector<2x32xf32>
    %731 = tpu.matmul %660, %727, %cst_163 {dimension_numbers = #tpu.dot_dimension_numbers<[1], [0], [0], [1], [0, 0, 1, 1], [], []>} : vector<2x32xf32>, vector<32x32xf32>, vector<2x32xf32> -> vector<2x32xf32>
    %732 = arith.addf %707, %729 : vector<2x32xf32>
    %733 = arith.negf %732 : vector<2x32xf32>
    %734 = math.exp %733 : vector<2x32xf32>
    %cst_164 = arith.constant 1.000000e+00 : f32
    %735 = vector.broadcast %cst_164 : f32 to vector<2x32xf32>
    %736 = arith.addf %735, %734 : vector<2x32xf32>
    %737 = arith.divf %735, %736 : vector<2x32xf32>
    %738 = arith.addf %714, %730 : vector<2x32xf32>
    %739 = arith.negf %738 : vector<2x32xf32>
    %740 = math.exp %739 : vector<2x32xf32>
    %cst_165 = arith.constant 1.000000e+00 : f32
    %741 = vector.broadcast %cst_165 : f32 to vector<2x32xf32>
    %742 = arith.addf %741, %740 : vector<2x32xf32>
    %743 = arith.divf %741, %742 : vector<2x32xf32>
    %744 = vector.broadcast %728 : vector<1x32xf32> to vector<2x32xf32>
    %745 = arith.addf %731, %744 : vector<2x32xf32>
    %746 = arith.mulf %737, %745 : vector<2x32xf32>
    %747 = arith.addf %721, %746 : vector<2x32xf32>
    %748 = math.tanh %747 : vector<2x32xf32>
    %cst_166 = arith.constant 1.000000e+00 : f32
    %749 = vector.broadcast %cst_166 : f32 to vector<2x32xf32>
    %750 = arith.subf %749, %743 : vector<2x32xf32>
    %751 = arith.mulf %750, %748 : vector<2x32xf32>
    %752 = arith.mulf %743, %660 : vector<2x32xf32>
    %753 = arith.addf %751, %752 : vector<2x32xf32>
    %c8_i32 = arith.constant 8 : i32
    %c0_167 = arith.constant 0 : index
    %c0_168 = arith.constant 0 : index
    %c0_169 = arith.constant 0 : index
    %754 = vector.load %arg13[%c0_167, %c0_168, %c0_169] : memref<2x2x32xf32, #tpu.memory_space<vmem>>, vector<1x2x32xf32>
    %755 = vector.shape_cast %754 : vector<1x2x32xf32> to vector<2x32xf32>
    %756 = vector.shape_cast %700 : vector<2x32xf32> to vector<1x2x32xf32>
    tpu.vector_store %arg13[%c0_167, %c0_168, %c0_169], %756 {strides = array<i32>} : memref<2x2x32xf32, #tpu.memory_space<vmem>>, vector<1x2x32xf32>,
    %c1_170 = arith.constant 1 : index
    %c0_171 = arith.constant 0 : index
    %c0_172 = arith.constant 0 : index
    %757 = vector.load %arg13[%c1_170, %c0_171, %c0_172] : memref<2x2x32xf32, #tpu.memory_space<vmem>>, vector<1x2x32xf32>
    %758 = vector.shape_cast %757 : vector<1x2x32xf32> to vector<2x32xf32>
    %759 = vector.shape_cast %753 : vector<2x32xf32> to vector<1x2x32xf32>
    tpu.vector_store %arg13[%c1_170, %c0_171, %c0_172], %759 {strides = array<i32>} : memref<2x2x32xf32, #tpu.memory_space<vmem>>, vector<1x2x32xf32>,
    %c0_173 = arith.constant 0 : index
    %c0_174 = arith.constant 0 : index
    %760 = vector.load %arg9[%c0_173, %c0_174] : memref<32x5xf32, #tpu.memory_space<vmem>>, vector<32x5xf32>
    %cst_175 = arith.constant dense<0.000000e+00> : vector<2x5xf32>
    %761 = tpu.matmul %753, %760, %cst_175 {dimension_numbers = #tpu.dot_dimension_numbers<[1], [0], [0], [1], [0, 0, 1, 1], [], []>} : vector<2x32xf32>, vector<32x5xf32>, vector<2x5xf32> -> vector<2x5xf32>
    %c0_176 = arith.constant 0 : index
    %c0_177 = arith.constant 0 : index
    %762 = vector.load %arg10[%c0_176, %c0_177] : memref<1x5xf32, #tpu.memory_space<vmem>>, vector<1x5xf32>
    %763 = vector.broadcast %762 : vector<1x5xf32> to vector<2x5xf32>
    %764 = arith.addf %761, %763 : vector<2x5xf32>
    %c0_178 = arith.constant 0 : index
    %765 = memref.load %arg11[%c0_178] : memref<1xf32, #tpu.memory_space<smem>>
    %cst_179 = arith.constant 0.000000e+00 : f32
    %766 = vector.broadcast %cst_179 : f32 to vector<2x5xf32>
    %767 = arith.cmpf oge, %764, %766 : vector<2x5xf32>
    %768 = vector.broadcast %765 : f32 to vector<2x5xf32>
    %769 = arith.mulf %768, %764 : vector<2x5xf32>
    %770 = arith.select %767, %764, %769 : vector<2x5xi1>, vector<2x5xf32>
    %c0_180 = arith.constant 0 : index
    %c0_181 = arith.constant 0 : index
    %771 = vector.load %arg12[%c0_180, %c0_181] : memref<2x5xf32, #tpu.memory_space<vmem>>, vector<2x5xf32>
    tpu.vector_store %arg12[%c0_180, %c0_181], %770 {strides = array<i32>} : memref<2x5xf32, #tpu.memory_space<vmem>>, vector<2x5xf32>,
    return
  }
  func.func @transform_0(%arg0: i32) -> (i32, i32, i32, i32) {
    %c0_i32 = arith.constant 0 : i32
    %c0_i32_0 = arith.constant 0 : i32
    %c0_i32_1 = arith.constant 0 : i32
    %c0_i32_2 = arith.constant 0 : i32
    %c0_i32_3 = arith.constant 0 : i32
    return %c0_i32, %c0_i32_0, %c0_i32_1, %c0_i32_2 : i32, i32, i32, i32
  }
  func.func @transform_1(%arg0: i32) -> (i32, i32, i32) {
    %c0_i32 = arith.constant 0 : i32
    %c0_i32_0 = arith.constant 0 : i32
    %c0_i32_1 = arith.constant 0 : i32
    %c0_i32_2 = arith.constant 0 : i32
    return %c0_i32, %c0_i32_0, %c0_i32_1 : i32, i32, i32
  }
  func.func @transform_2(%arg0: i32) -> (i32, i32, i32) {
    %c0_i32 = arith.constant 0 : i32
    %c0_i32_0 = arith.constant 0 : i32
    %c0_i32_1 = arith.constant 0 : i32
    %c0_i32_2 = arith.constant 0 : i32
    return %c0_i32, %c0_i32_0, %c0_i32_1 : i32, i32, i32
  }
  func.func @transform_3(%arg0: i32) -> (i32, i32) {
    %c0_i32 = arith.constant 0 : i32
    %c0_i32_0 = arith.constant 0 : i32
    %c0_i32_1 = arith.constant 0 : i32
    return %c0_i32, %c0_i32_0 : i32, i32
  }
  func.func @transform_4(%arg0: i32) -> (i32, i32, i32, i32) {
    %c0_i32 = arith.constant 0 : i32
    %c0_i32_0 = arith.constant 0 : i32
    %c0_i32_1 = arith.constant 0 : i32
    %c0_i32_2 = arith.constant 0 : i32
    %c0_i32_3 = arith.constant 0 : i32
    return %c0_i32, %c0_i32_0, %c0_i32_1, %c0_i32_2 : i32, i32, i32, i32
  }
  func.func @transform_5(%arg0: i32) -> (i32, i32, i32, i32) {
    %c0_i32 = arith.constant 0 : i32
    %c0_i32_0 = arith.constant 0 : i32
    %c0_i32_1 = arith.constant 0 : i32
    %c0_i32_2 = arith.constant 0 : i32
    %c0_i32_3 = arith.constant 0 : i32
    return %c0_i32, %c0_i32_0, %c0_i32_1, %c0_i32_2 : i32, i32, i32, i32
  }
  func.func @transform_6(%arg0: i32) -> (i32, i32, i32, i32) {
    %c0_i32 = arith.constant 0 : i32
    %c0_i32_0 = arith.constant 0 : i32
    %c0_i32_1 = arith.constant 0 : i32
    %c0_i32_2 = arith.constant 0 : i32
    %c0_i32_3 = arith.constant 0 : i32
    return %c0_i32, %c0_i32_0, %c0_i32_1, %c0_i32_2 : i32, i32, i32, i32
  }
  func.func @transform_7(%arg0: i32) -> (i32, i32, i32) {
    %c0_i32 = arith.constant 0 : i32
    %c0_i32_0 = arith.constant 0 : i32
    %c0_i32_1 = arith.constant 0 : i32
    %c0_i32_2 = arith.constant 0 : i32
    return %c0_i32, %c0_i32_0, %c0_i32_1 : i32, i32, i32
  }
  func.func @transform_8(%arg0: i32) -> (i32, i32) {
    %c0_i32 = arith.constant 0 : i32
    %c0_i32_0 = arith.constant 0 : i32
    %c0_i32_1 = arith.constant 0 : i32
    return %c0_i32, %c0_i32_0 : i32, i32
  }
  func.func @transform_9(%arg0: i32) -> (i32, i32) {
    %c0_i32 = arith.constant 0 : i32
    %c0_i32_0 = arith.constant 0 : i32
    %c0_i32_1 = arith.constant 0 : i32
    return %c0_i32, %c0_i32_0 : i32, i32
  }
  func.func @transform_10(%arg0: i32) -> i32 {
    %c0_i32 = arith.constant 0 : i32
    %c0_i32_0 = arith.constant 0 : i32
    return %c0_i32 : i32
  }
  func.func @transform_11(%arg0: i32) -> (i32, i32) {
    %c0_i32 = arith.constant 0 : i32
    %c0_i32_0 = arith.constant 0 : i32
    %c0_i32_1 = arith.constant 0 : i32
    return %c0_i32, %c0_i32_0 : i32, i32
  }
  func.func @transform_12(%arg0: i32) -> (i32, i32, i32) {
    %c0_i32 = arith.constant 0 : i32
    %c0_i32_0 = arith.constant 0 : i32
    %c0_i32_1 = arith.constant 0 : i32
    %c0_i32_2 = arith.constant 0 : i32
    return %c0_i32, %c0_i32_0, %c0_i32_1 : i32, i32, i32
  }
}

</mosaic_0001>

<llo_original>
// kernel: gru_forward.1
$region0: #{gru_forward.1}
  #allocation0 [shape = 'u32[]', space=smem, size = 0x4, offset = 0x4, fixed_abs, tag = 'smem constant byte address 0x4 - core index']
  #allocation1 [shape = 'u32[144,128]{1,0:T(1,128)}', space=vmem, size = 0x12000, scoped, tag = 'internal scratch']
  #allocation2 [shape = 'f32[1]{0:T(128)S(6)}', space=smem, size = 0x200, scoped, tag = 'scoped memory for gru_forward.1']
  %s0 = inlined_call_operand.vmem [shape: f32[8,3,2,32], index: 0, kind: input, shape index: {}]
  %s1 = inlined_call_operand.vmem [shape: f32[2,2,32], index: 1, kind: input, shape index: {}]
  %s2 = inlined_call_operand.vmem [shape: f32[3,32,32], index: 2, kind: input, shape index: {}]
  %s3 = inlined_call_operand.vmem [shape: f32[1,32], index: 3, kind: input, shape index: {}]
  %s4 = inlined_call_operand.vmem [shape: f32[1,3,32,32], index: 4, kind: input, shape index: {}]
  %s5 = inlined_call_operand.vmem [shape: f32[1,3,1,32], index: 5, kind: input, shape index: {}]
  %s6 = inlined_call_operand.vmem [shape: f32[1,3,32,32], index: 6, kind: input, shape index: {}]
  %s7 = inlined_call_operand.vmem [shape: f32[1,1,32], index: 7, kind: input, shape index: {}]
  %s8 = inlined_call_operand.vmem [shape: f32[32,5], index: 8, kind: input, shape index: {}]
  %s9 = inlined_call_operand.vmem [shape: f32[1,5], index: 9, kind: input, shape index: {}]
  %s10 = inlined_call_operand.<no memory space> [shape: f32[1], index: 10, kind: input, shape index: {}]
  %s11 = inlined_call_operand.hbm [shape: f32[2,5], index: 11, kind: output, shape index: {0}]
  %s12 = inlined_call_operand.hbm [shape: f32[2,2,32], index: 12, kind: output, shape index: {1}]
  %13 = xla_tuple %s11, %s12
  %s14 = sld [smem:[#allocation0]]
  $region62: #{gru_forward.1} parent=0
    _
  %s16 = ssub.s32 1, %s14
  %s17 = scalar_select 0, %s16, %s14
  %18 = sst [smem:[#allocation2]] %s10
  $region1: #{gru_forward.1} parent=0
    #allocation3 [shape = 'u8[1024]{0}', space=vmem, size = 0x400, scoped, tag = 'output window, operand 0, single buffered']
    #allocation4 [shape = 's32[1]{0}', space=sflag, size = 0x4, scoped, tag = 'scoped memory for gru_forward.1']
    #allocation5 [shape = 'u8[2048]{0}', space=vmem, size = 0x800, scoped, tag = 'output window, operand 1, single buffered']
    #allocation6 [shape = 's32[1]{0}', space=sflag, size = 0x4, scoped, tag = 'scoped memory for gru_forward.1']
    %19 = vsyncpa [#allocation4], 0
    %20 = vsyncpa [#allocation6], 0
    // Predicated region
    $region2: #{gru_forward.1} parent=1 // pred_check
      _
    $region3: #{gru_forward.1} parent=1 // pred_check_branch
      %22 = sbr.rel (0) target = $region5
    $region4: #{gru_forward.1} parent=1 // pred_region
      _
    $region5: #{gru_forward.1} parent=1 // pred_fallthru
      _
    // Predicated region
    $region6: #{gru_forward.1} parent=1 // pred_check
      _
    $region7: #{gru_forward.1} parent=1 // pred_check_branch
      %24 = sbr.rel (0) target = $region9
    $region8: #{gru_forward.1} parent=1 // pred_region
      _
    $region9: #{gru_forward.1} parent=1 // pred_fallthru
      _
    // Predicated region
    $region10: #{gru_forward.1} parent=1 // pred_check
      _
    $region11: #{gru_forward.1} parent=1 // pred_check_branch
      %26 = sbr.rel (0) target = $region13
    $region12: #{gru_forward.1} parent=1 // pred_region
      _
    $region13: #{gru_forward.1} parent=1 // pred_fallthru
      _
    // Predicated region
    $region14: #{gru_forward.1} parent=1 // pred_check
      _
    $region15: #{gru_forward.1} parent=1 // pred_check_branch
      %28 = sbr.rel (0) target = $region17
    $region16: #{gru_forward.1} parent=1 // pred_region
      _
    $region17: #{gru_forward.1} parent=1 // pred_fallthru
      _
    // Predicated region
    $region18: #{gru_forward.1} parent=1 // pred_check
      _
    $region19: #{gru_forward.1} parent=1 // pred_check_branch
      %30 = sbr.rel (0) target = $region21
    $region20: #{gru_forward.1} parent=1 // pred_region
      _
    $region21: #{gru_forward.1} parent=1 // pred_fallthru
      _
    // Predicated region
    $region22: #{gru_forward.1} parent=1 // pred_check
      _
    $region23: #{gru_forward.1} parent=1 // pred_check_branch
      %32 = sbr.rel (0) target = $region25
    $region24: #{gru_forward.1} parent=1 // pred_region
      _
    $region25: #{gru_forward.1} parent=1 // pred_fallthru
      _
    // Predicated region
    $region26: #{gru_forward.1} parent=1 // pred_check
      _
    $region27: #{gru_forward.1} parent=1 // pred_check_branch
      %34 = sbr.rel (0) target = $region29
    $region28: #{gru_forward.1} parent=1 // pred_region
      _
    $region29: #{gru_forward.1} parent=1 // pred_fallthru
      _
    // Predicated region
    $region30: #{gru_forward.1} parent=1 // pred_check
      _
    $region31: #{gru_forward.1} parent=1 // pred_check_branch
      %36 = sbr.rel (0) target = $region33
    $region32: #{gru_forward.1} parent=1 // pred_region
      _
    $region33: #{gru_forward.1} parent=1 // pred_fallthru
      _
    // Predicated region
    $region34: #{gru_forward.1} parent=1 // pred_check
      _
    $region35: #{gru_forward.1} parent=1 // pred_check_branch
      %38 = sbr.rel (0) target = $region37
    $region36: #{gru_forward.1} parent=1 // pred_region
      _
    $region37: #{gru_forward.1} parent=1 // pred_fallthru
      _
    // Predicated region
    $region38: #{gru_forward.1} parent=1 // pred_check
      _
    $region39: #{gru_forward.1} parent=1 // pred_check_branch
      %40 = sbr.rel (0) target = $region41
    $region40: #{gru_forward.1} parent=1 // pred_region
      _
    $region41: #{gru_forward.1} parent=1 // pred_fallthru
      _
    // Predicated region
    $region42: #{gru_forward.1} parent=1 // pred_check
      _
    $region43: #{gru_forward.1} parent=1 // pred_check_branch
      %42 = sbr.rel (0) target = $region45
    $region44: #{gru_forward.1} parent=1 // pred_region
      _
    $region45: #{gru_forward.1} parent=1 // pred_fallthru
      _
    %v43 = vld [vmem:[%s2] sm:$0xff]
    %v44 = vld [vmem:[%s2 + $0x8] sm:$0xff]
    %v45 = vld [vmem:[%s2 + $0x10] sm:$0xff]
    %v46 = vld [vmem:[%s2 + $0x18] sm:$0xff]
    %v47 = vld [vmem:[%s2 + $0x20] sm:$0xff]
    %v48 = vld [vmem:[%s2 + $0x28] sm:$0xff]
    %v49 = vld [vmem:[%s2 + $0x30] sm:$0xff]
    %v50 = vld [vmem:[%s2 + $0x38] sm:$0xff]
    %v51 = vld [vmem:[%s2 + $0x40] sm:$0xff]
    %v52 = vld [vmem:[%s2 + $0x48] sm:$0xff]
    %v53 = vld [vmem:[%s2 + $0x50] sm:$0xff]
    %v54 = vld [vmem:[%s2 + $0x58] sm:$0xff]
    %v55 = vld [vmem:[%s3] sm:$0x1]
    %v56 = vld [vmem:[%s4] sm:$0xff]
    %v57 = vld [vmem:[%s4 + $0x8] sm:$0xff]
    %v58 = vld [vmem:[%s4 + $0x10] sm:$0xff]
    %v59 = vld [vmem:[%s4 + $0x18] sm:$0xff]
    %v60 = vld [vmem:[%s4 + $0x20] sm:$0xff]
    %v61 = vld [vmem:[%s4 + $0x28] sm:$0xff]
    %v62 = vld [vmem:[%s4 + $0x30] sm:$0xff]
    %v63 = vld [vmem:[%s4 + $0x38] sm:$0xff]
    %v64 = vld [vmem:[%s4 + $0x40] sm:$0xff]
    %v65 = vld [vmem:[%s4 + $0x48] sm:$0xff]
    %v66 = vld [vmem:[%s4 + $0x50] sm:$0xff]
    %v67 = vld [vmem:[%s4 + $0x58] sm:$0xff]
    %v68 = vld [vmem:[%s5] sm:$0x1]
    %v69 = vld [vmem:[%s5 + $0x1] sm:$0x1]
    %v70 = vld [vmem:[%s5 + $0x2] sm:$0x1]
    %v71 = vld [vmem:[%s6] sm:$0xff]
    %v72 = vld [vmem:[%s6 + $0x8] sm:$0xff]
    %v73 = vld [vmem:[%s6 + $0x10] sm:$0xff]
    %v74 = vld [vmem:[%s6 + $0x18] sm:$0xff]
    %v75 = vld [vmem:[%s6 + $0x20] sm:$0xff]
    %v76 = vld [vmem:[%s6 + $0x28] sm:$0xff]
    %v77 = vld [vmem:[%s6 + $0x30] sm:$0xff]
    %v78 = vld [vmem:[%s6 + $0x38] sm:$0xff]
    %v79 = vld [vmem:[%s6 + $0x40] sm:$0xff]
    %v80 = vld [vmem:[%s6 + $0x48] sm:$0xff]
    %v81 = vld [vmem:[%s6 + $0x50] sm:$0xff]
    %v82 = vld [vmem:[%s6 + $0x58] sm:$0xff]
    %v83 = vld [vmem:[%s7] sm:$0x1]
    %v84 = vld [vmem:[%s1] sm:$0x3]
    %s85 = scalar_lea.vmem %s1, 2
    %v86 = vld [vmem:[%s85] sm:$0x3]
    %v87 = vld [vmem:[%s0] sm:$0x3]
    %v88 = vld [vmem:[%s0 + $0x2] sm:$0x3]
    %v89 = vld [vmem:[%s0 + $0x4] sm:$0x3]
    %vm90 = vcmask 261120
    %v92 = vsel %vm90, %v84, 0
    %94 = vmatprep.subr.mxu0 0.0
    %95 = vmatpush1.msra.mxu0 0.0
    %96 = vmatprep.subr.mxu0 0.0
    %97 = vmatpush1.msra.mxu0 0.0
    %98 = vmatprep.subr.mxu0 0.0
    %99 = vmatpush1.msra.mxu0 0.0
    %100 = vmatprep.subr.mxu0 0.0
    %101 = vmatpush1.msra.mxu0 0.0
    %102 = vmatprep.subr.mxu0 0.0
    %103 = vmatpush1.msra.mxu0 0.0
    %104 = vmatprep.subr.mxu0 0.0
    %105 = vmatpush1.msra.mxu0 0.0
    %106 = vmatprep.subr.mxu0 0.0
    %107 = vmatpush1.msra.mxu0 0.0
    %108 = vmatprep.subr.mxu0 0.0
    %109 = vmatpush1.msra.mxu0 0.0
    %110 = vmatprep.subr.mxu0 0.0
    %111 = vmatpush1.msra.mxu0 0.0
    %112 = vmatprep.subr.mxu0 0.0
    %113 = vmatpush1.msra.mxu0 0.0
    %114 = vmatprep.subr.mxu0 0.0
    %115 = vmatpush1.msra.mxu0 0.0
    %116 = vmatprep.subr.mxu0 0.0
    %117 = vmatpush1.msra.mxu0 0.0
    %118 = vmatprep.subr.mxu0 0.0
    %119 = vmatpush1.msra.mxu0 %v46
    %120 = vmatprep.subr.mxu0 0.0
    %121 = vmatpush1.msra.mxu0 %v45
    %122 = vmatprep.subr.mxu0 0.0
    %123 = vmatpush1.msra.mxu0 %v44
    %124 = vmatprep.subr.mxu0 0.0
    %125 = vmatpush1.msra.mxu0 %v43
    %126 = vmatprep.subr.mxu0 0.0
    %127 = vmatpush2.msra.mxu0 0.0
    %128 = vmatprep.subr.mxu0 0.0
    %129 = vmatpush2.msra.mxu0 0.0
    %130 = vmatprep.subr.mxu0 0.0
    %131 = vmatpush2.msra.mxu0 0.0
    %132 = vmatprep.subr.mxu0 0.0
    %133 = vmatpush2.msra.mxu0 0.0
    %134 = vmatprep.subr.mxu0 0.0
    %135 = vmatpush2.msra.mxu0 0.0
    %136 = vmatprep.subr.mxu0 0.0
    %137 = vmatpush2.msra.mxu0 0.0
    %138 = vmatprep.subr.mxu0 0.0
    %139 = vmatpush2.msra.mxu0 0.0
    %140 = vmatprep.subr.mxu0 0.0
    %141 = vmatpush2.msra.mxu0 0.0
    %142 = vmatprep.subr.mxu0 0.0
    %143 = vmatpush2.msra.mxu0 0.0
    %144 = vmatprep.subr.mxu0 0.0
    %145 = vmatpush2.msra.mxu0 0.0
    %146 = vmatprep.subr.mxu0 0.0
    %147 = vmatpush2.msra.mxu0 0.0
    %148 = vmatprep.subr.mxu0 0.0
    %149 = vmatpush2.msra.mxu0 0.0
    %150 = vmatprep.subr.mxu0 0.0
    %151 = vmatpush2.msra.mxu0 0.0
    %152 = vmatprep.subr.mxu0 0.0
    %153 = vmatpush2.msra.mxu0 0.0
    %154 = vmatprep.subr.mxu0 0.0
    %155 = vmatpush2.msra.mxu0 0.0
    %156 = vmatprep.subr.mxu0 0.0
    %157 = vmatpush2.msra.mxu0 0.0
    %158 = vmatprep.mubr.f32.mxu0 0.0
    %159 = vmatmul.mubr.f32.gmra.mxu0 %v92
    %v160 = vpop.f32.mrf.mxu0
    %v161 = vadd.f32 0.0, %v160
    %v162 = vpop.f32.mrf.mxu0
    %163 = vdwg.mxu0
    %164 = vmatprep.subr.mxu0 0.0
    %165 = vmatpush1.msra.mxu0 0.0
    %166 = vmatprep.subr.mxu0 0.0
    %167 = vmatpush1.msra.mxu0 0.0
    %168 = vmatprep.subr.mxu0 0.0
    %169 = vmatpush1.msra.mxu0 0.0
    %170 = vmatprep.subr.mxu0 0.0
    %171 = vmatpush1.msra.mxu0 0.0
    %172 = vmatprep.subr.mxu0 0.0
    %173 = vmatpush1.msra.mxu0 0.0
    %174 = vmatprep.subr.mxu0 0.0
    %175 = vmatpush1.msra.mxu0 0.0
    %176 = vmatprep.subr.mxu0 0.0
    %177 = vmatpush1.msra.mxu0 0.0
    %178 = vmatprep.subr.mxu0 0.0
    %179 = vmatpush1.msra.mxu0 0.0
    %180 = vmatprep.subr.mxu0 0.0
    %181 = vmatpush1.msra.mxu0 0.0
    %182 = vmatprep.subr.mxu0 0.0
    %183 = vmatpush1.msra.mxu0 0.0
    %184 = vmatprep.subr.mxu0 0.0
    %185 = vmatpush1.msra.mxu0 0.0
    %186 = vmatprep.subr.mxu0 0.0
    %187 = vmatpush1.msra.mxu0 0.0
    %188 = vmatprep.subr.mxu0 0.0
    %189 = vmatpush1.msra.mxu0 %v50
    %190 = vmatprep.subr.mxu0 0.0
    %191 = vmatpush1.msra.mxu0 %v49
    %192 = vmatprep.subr.mxu0 0.0
    %193 = vmatpush1.msra.mxu0 %v48
    %194 = vmatprep.subr.mxu0 0.0
    %195 = vmatpush1.msra.mxu0 %v47
    %196 = vmatprep.subr.mxu0 0.0
    %197 = vmatpush2.msra.mxu0 0.0
    %198 = vmatprep.subr.mxu0 0.0
    %199 = vmatpush2.msra.mxu0 0.0
    %200 = vmatprep.subr.mxu0 0.0
    %201 = vmatpush2.msra.mxu0 0.0
    %202 = vmatprep.subr.mxu0 0.0
    %203 = vmatpush2.msra.mxu0 0.0
    %204 = vmatprep.subr.mxu0 0.0
    %205 = vmatpush2.msra.mxu0 0.0
    %206 = vmatprep.subr.mxu0 0.0
    %207 = vmatpush2.msra.mxu0 0.0
    %208 = vmatprep.subr.mxu0 0.0
    %209 = vmatpush2.msra.mxu0 0.0
    %210 = vmatprep.subr.mxu0 0.0
    %211 = vmatpush2.msra.mxu0 0.0
    %212 = vmatprep.subr.mxu0 0.0
    %213 = vmatpush2.msra.mxu0 0.0
    %214 = vmatprep.subr.mxu0 0.0
    %215 = vmatpush2.msra.mxu0 0.0
    %216 = vmatprep.subr.mxu0 0.0
    %217 = vmatpush2.msra.mxu0 0.0
    %218 = vmatprep.subr.mxu0 0.0
    %219 = vmatpush2.msra.mxu0 0.0
    %220 = vmatprep.subr.mxu0 0.0
    %221 = vmatpush2.msra.mxu0 0.0
    %222 = vmatprep.subr.mxu0 0.0
    %223 = vmatpush2.msra.mxu0 0.0
    %224 = vmatprep.subr.mxu0 0.0
    %225 = vmatpush2.msra.mxu0 0.0
    %226 = vmatprep.subr.mxu0 0.0
    %227 = vmatpush2.msra.mxu0 0.0
    %228 = vmatprep.mubr.f32.mxu0 0.0
    %229 = vmatmul.mubr.f32.gmra.mxu0 %v92
    %v230 = vpop.f32.mrf.mxu0
    %v231 = vadd.f32 0.0, %v230
    %v232 = vpop.f32.mrf.mxu0
    %233 = vdwg.mxu0
    %v234 = vadd.f32 %v87, %v161
    %v235 = vxor.u32 %v234, 2147483648
    %v236 = vmul.f32 %v235, 1.442695
    %v237 = vpow.pop %v236
    %v238 = vadd.f32 %v237, 1.0
    %v239 = vrcp.pop %v238
    %v240 = vmul.f32 1.0, %v239
    %v241 = vadd.f32 %v88, %v231
    %v242 = vxor.u32 %v241, 2147483648
    %v243 = vmul.f32 %v242, 1.442695
    %v244 = vpow.pop %v243
    %v245 = vadd.f32 %v244, 1.0
    %v246 = vrcp.pop %v245
    %v247 = vmul.f32 1.0, %v246
    %v249 = vlaneseq
    %v250 = vshrl.u32 %v249, 7
    %v251 = vsub.s32 0, %v250
    %v252 = vrot.slane %v55, %v251
    %254 = vmatprep.subr.mxu0 0.0
    %255 = vmatpush1.msra.mxu0 0.0
    %256 = vmatprep.subr.mxu0 0.0
    %257 = vmatpush1.msra.mxu0 0.0
    %258 = vmatprep.subr.mxu0 0.0
    %259 = vmatpush1.msra.mxu0 0.0
    %260 = vmatprep.subr.mxu0 0.0
    %261 = vmatpush1.msra.mxu0 0.0
    %262 = vmatprep.subr.mxu0 0.0
    %263 = vmatpush1.msra.mxu0 0.0
    %264 = vmatprep.subr.mxu0 0.0
    %265 = vmatpush1.msra.mxu0 0.0
    %266 = vmatprep.subr.mxu0 0.0
    %267 = vmatpush1.msra.mxu0 0.0
    %268 = vmatprep.subr.mxu0 0.0
    %269 = vmatpush1.msra.mxu0 0.0
    %270 = vmatprep.subr.mxu0 0.0
    %271 = vmatpush1.msra.mxu0 0.0
    %272 = vmatprep.subr.mxu0 0.0
    %273 = vmatpush1.msra.mxu0 0.0
    %274 = vmatprep.subr.mxu0 0.0
    %275 = vmatpush1.msra.mxu0 0.0
    %276 = vmatprep.subr.mxu0 0.0
    %277 = vmatpush1.msra.mxu0 0.0
    %278 = vmatprep.subr.mxu0 0.0
    %279 = vmatpush1.msra.mxu0 %v54
    %280 = vmatprep.subr.mxu0 0.0
    %281 = vmatpush1.msra.mxu0 %v53
    %282 = vmatprep.subr.mxu0 0.0
    %283 = vmatpush1.msra.mxu0 %v52
    %284 = vmatprep.subr.mxu0 0.0
    %285 = vmatpush1.msra.mxu0 %v51
    %286 = vmatprep.subr.mxu0 0.0
    %287 = vmatpush2.msra.mxu0 0.0
    %288 = vmatprep.subr.mxu0 0.0
    %289 = vmatpush2.msra.mxu0 0.0
    %290 = vmatprep.subr.mxu0 0.0
    %291 = vmatpush2.msra.mxu0 0.0
    %292 = vmatprep.subr.mxu0 0.0
    %293 = vmatpush2.msra.mxu0 0.0
    %294 = vmatprep.subr.mxu0 0.0
    %295 = vmatpush2.msra.mxu0 0.0
    %296 = vmatprep.subr.mxu0 0.0
    %297 = vmatpush2.msra.mxu0 0.0
    %298 = vmatprep.subr.mxu0 0.0
    %299 = vmatpush2.msra.mxu0 0.0
    %300 = vmatprep.subr.mxu0 0.0
    %301 = vmatpush2.msra.mxu0 0.0
    %302 = vmatprep.subr.mxu0 0.0
    %303 = vmatpush2.msra.mxu0 0.0
    %304 = vmatprep.subr.mxu0 0.0
    %305 = vmatpush2.msra.mxu0 0.0
    %306 = vmatprep.subr.mxu0 0.0
    %307 = vmatpush2.msra.mxu0 0.0
    %308 = vmatprep.subr.mxu0 0.0
    %309 = vmatpush2.msra.mxu0 0.0
    %310 = vmatprep.subr.mxu0 0.0
    %311 = vmatpush2.msra.mxu0 0.0
    %312 = vmatprep.subr.mxu0 0.0
    %313 = vmatpush2.msra.mxu0 0.0
    %314 = vmatprep.subr.mxu0 0.0
    %315 = vmatpush2.msra.mxu0 0.0
    %316 = vmatprep.subr.mxu0 0.0
    %317 = vmatpush2.msra.mxu0 0.0
    %318 = vmatprep.mubr.f32.mxu0 0.0
    %319 = vmatmul.mubr.f32.gmra.mxu0 %v92
    %v320 = vpop.f32.mrf.mxu0
    %v321 = vadd.f32 %v252, %v320
    %v322 = vpop.f32.mrf.mxu0
    %323 = vdwg.mxu0
    %v324 = vmul.f32 %v240, %v321
    %v325 = vadd.f32 %v89, %v324
    %v326 = vtanh.pop %v325
    %v327 = vsub.f32 1.0, %v247
    %v328 = vmul.f32 %v327, %v326
    %v329 = vmul.f32 %v247, %v84
    %v330 = vadd.f32 %v328, %v329
    %v332 = vlaneseq
    %v333 = vshrl.u32 %v332, 7
    %v334 = vsub.s32 0, %v333
    %v335 = vrot.slane %v68, %v334
    %v338 = vsel %vm90, %v330, 0
    %340 = vmatprep.subr.mxu0 0.0
    %341 = vmatpush1.msra.mxu0 0.0
    %342 = vmatprep.subr.mxu0 0.0
    %343 = vmatpush1.msra.mxu0 0.0
    %344 = vmatprep.subr.mxu0 0.0
    %345 = vmatpush1.msra.mxu0 0.0
    %346 = vmatprep.subr.mxu0 0.0
    %347 = vmatpush1.msra.mxu0 0.0
    %348 = vmatprep.subr.mxu0 0.0
    %349 = vmatpush1.msra.mxu0 0.0
    %350 = vmatprep.subr.mxu0 0.0
    %351 = vmatpush1.msra.mxu0 0.0
    %352 = vmatprep.subr.mxu0 0.0
    %353 = vmatpush1.msra.mxu0 0.0
    %354 = vmatprep.subr.mxu0 0.0
    %355 = vmatpush1.msra.mxu0 0.0
    %356 = vmatprep.subr.mxu0 0.0
    %357 = vmatpush1.msra.mxu0 0.0
    %358 = vmatprep.subr.mxu0 0.0
    %359 = vmatpush1.msra.mxu0 0.0
    %360 = vmatprep.subr.mxu0 0.0
    %361 = vmatpush1.msra.mxu0 0.0
    %362 = vmatprep.subr.mxu0 0.0
    %363 = vmatpush1.msra.mxu0 0.0
    %364 = vmatprep.subr.mxu0 0.0
    %365 = vmatpush1.msra.mxu0 %v59
    %366 = vmatprep.subr.mxu0 0.0
    %367 = vmatpush1.msra.mxu0 %v58
    %368 = vmatprep.subr.mxu0 0.0
    %369 = vmatpush1.msra.mxu0 %v57
    %370 = vmatprep.subr.mxu0 0.0
    %371 = vmatpush1.msra.mxu0 %v56
    %372 = vmatprep.subr.mxu0 0.0
    %373 = vmatpush2.msra.mxu0 0.0
    %374 = vmatprep.subr.mxu0 0.0
    %375 = vmatpush2.msra.mxu0 0.0
    %376 = vmatprep.subr.mxu0 0.0
    %377 = vmatpush2.msra.mxu0 0.0
    %378 = vmatprep.subr.mxu0 0.0
    %379 = vmatpush2.msra.mxu0 0.0
    %380 = vmatprep.subr.mxu0 0.0
    %381 = vmatpush2.msra.mxu0 0.0
    %382 = vmatprep.subr.mxu0 0.0
    %383 = vmatpush2.msra.mxu0 0.0
    %384 = vmatprep.subr.mxu0 0.0
    %385 = vmatpush2.msra.mxu0 0.0
    %386 = vmatprep.subr.mxu0 0.0
    %387 = vmatpush2.msra.mxu0 0.0
    %388 = vmatprep.subr.mxu0 0.0
    %389 = vmatpush2.msra.mxu0 0.0
    %390 = vmatprep.subr.mxu0 0.0
    %391 = vmatpush2.msra.mxu0 0.0
    %392 = vmatprep.subr.mxu0 0.0
    %393 = vmatpush2.msra.mxu0 0.0
    %394 = vmatprep.subr.mxu0 0.0
    %395 = vmatpush2.msra.mxu0 0.0
    %396 = vmatprep.subr.mxu0 0.0
    %397 = vmatpush2.msra.mxu0 0.0
    %398 = vmatprep.subr.mxu0 0.0
    %399 = vmatpush2.msra.mxu0 0.0
    %400 = vmatprep.subr.mxu0 0.0
    %401 = vmatpush2.msra.mxu0 0.0
    %402 = vmatprep.subr.mxu0 0.0
    %403 = vmatpush2.msra.mxu0 0.0
    %404 = vmatprep.mubr.f32.mxu0 0.0
    %405 = vmatmul.mubr.f32.gmra.mxu0 %v338
    %v406 = vpop.f32.mrf.mxu0
    %v407 = vadd.f32 %v335, %v406
    %v408 = vpop.f32.mrf.mxu0
    %409 = vdwg.mxu0
    %v411 = vlaneseq
    %v412 = vshrl.u32 %v411, 7
    %v413 = vsub.s32 0, %v412
    %v414 = vrot.slane %v69, %v413
    %416 = vmatprep.subr.mxu0 0.0
    %417 = vmatpush1.msra.mxu0 0.0
    %418 = vmatprep.subr.mxu0 0.0
    %419 = vmatpush1.msra.mxu0 0.0
    %420 = vmatprep.subr.mxu0 0.0
    %421 = vmatpush1.msra.mxu0 0.0
    %422 = vmatprep.subr.mxu0 0.0
    %423 = vmatpush1.msra.mxu0 0.0
    %424 = vmatprep.subr.mxu0 0.0
    %425 = vmatpush1.msra.mxu0 0.0
    %426 = vmatprep.subr.mxu0 0.0
    %427 = vmatpush1.msra.mxu0 0.0
    %428 = vmatprep.subr.mxu0 0.0
    %429 = vmatpush1.msra.mxu0 0.0
    %430 = vmatprep.subr.mxu0 0.0
    %431 = vmatpush1.msra.mxu0 0.0
    %432 = vmatprep.subr.mxu0 0.0
    %433 = vmatpush1.msra.mxu0 0.0
    %434 = vmatprep.subr.mxu0 0.0
    %435 = vmatpush1.msra.mxu0 0.0
    %436 = vmatprep.subr.mxu0 0.0
    %437 = vmatpush1.msra.mxu0 0.0
    %438 = vmatprep.subr.mxu0 0.0
    %439 = vmatpush1.msra.mxu0 0.0
    %440 = vmatprep.subr.mxu0 0.0
    %441 = vmatpush1.msra.mxu0 %v63
    %442 = vmatprep.subr.mxu0 0.0
    %443 = vmatpush1.msra.mxu0 %v62
    %444 = vmatprep.subr.mxu0 0.0
    %445 = vmatpush1.msra.mxu0 %v61
    %446 = vmatprep.subr.mxu0 0.0
    %447 = vmatpush1.msra.mxu0 %v60
    %448 = vmatprep.subr.mxu0 0.0
    %449 = vmatpush2.msra.mxu0 0.0
    %450 = vmatprep.subr.mxu0 0.0
    %451 = vmatpush2.msra.mxu0 0.0
    %452 = vmatprep.subr.mxu0 0.0
    %453 = vmatpush2.msra.mxu0 0.0
    %454 = vmatprep.subr.mxu0 0.0
    %455 = vmatpush2.msra.mxu0 0.0
    %456 = vmatprep.subr.mxu0 0.0
    %457 = vmatpush2.msra.mxu0 0.0
    %458 = vmatprep.subr.mxu0 0.0
    %459 = vmatpush2.msra.mxu0 0.0
    %460 = vmatprep.subr.mxu0 0.0
    %461 = vmatpush2.msra.mxu0 0.0
    %462 = vmatprep.subr.mxu0 0.0
    %463 = vmatpush2.msra.mxu0 0.0
    %464 = vmatprep.subr.mxu0 0.0
    %465 = vmatpush2.msra.mxu0 0.0
    %466 = vmatprep.subr.mxu0 0.0
    %467 = vmatpush2.msra.mxu0 0.0
    %468 = vmatprep.subr.mxu0 0.0
    %469 = vmatpush2.msra.mxu0 0.0
    %470 = vmatprep.subr.mxu0 0.0
    %471 = vmatpush2.msra.mxu0 0.0
    %472 = vmatprep.subr.mxu0 0.0
    %473 = vmatpush2.msra.mxu0 0.0
    %474 = vmatprep.subr.mxu0 0.0
    %475 = vmatpush2.msra.mxu0 0.0
    %476 = vmatprep.subr.mxu0 0.0
    %477 = vmatpush2.msra.mxu0 0.0
    %478 = vmatprep.subr.mxu0 0.0
    %479 = vmatpush2.msra.mxu0 0.0
    %480 = vmatprep.mubr.f32.mxu0 0.0
    %481 = vmatmul.mubr.f32.gmra.mxu0 %v338
    %v482 = vpop.f32.mrf.mxu0
    %v483 = vadd.f32 %v414, %v482
    %v484 = vpop.f32.mrf.mxu0
    %485 = vdwg.mxu0
    %v487 = vlaneseq
    %v488 = vshrl.u32 %v487, 7
    %v489 = vsub.s32 0, %v488
    %v490 = vrot.slane %v70, %v489
    %492 = vmatprep.subr.mxu0 0.0
    %493 = vmatpush1.msra.mxu0 0.0
    %494 = vmatprep.subr.mxu0 0.0
    %495 = vmatpush1.msra.mxu0 0.0
    %496 = vmatprep.subr.mxu0 0.0
    %497 = vmatpush1.msra.mxu0 0.0
    %498 = vmatprep.subr.mxu0 0.0
    %499 = vmatpush1.msra.mxu0 0.0
    %500 = vmatprep.subr.mxu0 0.0
    %501 = vmatpush1.msra.mxu0 0.0
    %502 = vmatprep.subr.mxu0 0.0
    %503 = vmatpush1.msra.mxu0 0.0
    %504 = vmatprep.subr.mxu0 0.0
    %505 = vmatpush1.msra.mxu0 0.0
    %506 = vmatprep.subr.mxu0 0.0
    %507 = vmatpush1.msra.mxu0 0.0
    %508 = vmatprep.subr.mxu0 0.0
    %509 = vmatpush1.msra.mxu0 0.0
    %510 = vmatprep.subr.mxu0 0.0
    %511 = vmatpush1.msra.mxu0 0.0
    %512 = vmatprep.subr.mxu0 0.0
    %513 = vmatpush1.msra.mxu0 0.0
    %514 = vmatprep.subr.mxu0 0.0
    %515 = vmatpush1.msra.mxu0 0.0
    %516 = vmatprep.subr.mxu0 0.0
    %517 = vmatpush1.msra.mxu0 %v67
    %518 = vmatprep.subr.mxu0 0.0
    %519 = vmatpush1.msra.mxu0 %v66
    %520 = vmatprep.subr.mxu0 0.0
    %521 = vmatpush1.msra.mxu0 %v65
    %522 = vmatprep.subr.mxu0 0.0
    %523 = vmatpush1.msra.mxu0 %v64
    %524 = vmatprep.subr.mxu0 0.0
    %525 = vmatpush2.msra.mxu0 0.0
    %526 = vmatprep.subr.mxu0 0.0
    %527 = vmatpush2.msra.mxu0 0.0
    %528 = vmatprep.subr.mxu0 0.0
    %529 = vmatpush2.msra.mxu0 0.0
    %530 = vmatprep.subr.mxu0 0.0
    %531 = vmatpush2.msra.mxu0 0.0
    %532 = vmatprep.subr.mxu0 0.0
    %533 = vmatpush2.msra.mxu0 0.0
    %534 = vmatprep.subr.mxu0 0.0
    %535 = vmatpush2.msra.mxu0 0.0
    %536 = vmatprep.subr.mxu0 0.0
    %537 = vmatpush2.msra.mxu0 0.0
    %538 = vmatprep.subr.mxu0 0.0
    %539 = vmatpush2.msra.mxu0 0.0
    %540 = vmatprep.subr.mxu0 0.0
    %541 = vmatpush2.msra.mxu0 0.0
    %542 = vmatprep.subr.mxu0 0.0
    %543 = vmatpush2.msra.mxu0 0.0
    %544 = vmatprep.subr.mxu0 0.0
    %545 = vmatpush2.msra.mxu0 0.0
    %546 = vmatprep.subr.mxu0 0.0
    %547 = vmatpush2.msra.mxu0 0.0
    %548 = vmatprep.subr.mxu0 0.0
    %549 = vmatpush2.msra.mxu0 0.0
    %550 = vmatprep.subr.mxu0 0.0
    %551 = vmatpush2.msra.mxu0 0.0
    %552 = vmatprep.subr.mxu0 0.0
    %553 = vmatpush2.msra.mxu0 0.0
    %554 = vmatprep.subr.mxu0 0.0
    %555 = vmatpush2.msra.mxu0 0.0
    %556 = vmatprep.mubr.f32.mxu0 0.0
    %557 = vmatmul.mubr.f32.gmra.mxu0 %v338
    %v558 = vpop.f32.mrf.mxu0
    %v559 = vadd.f32 %v490, %v558
    %v560 = vpop.f32.mrf.mxu0
    %561 = vdwg.mxu0
    %v563 = vsel %vm90, %v86, 0
    %565 = vmatprep.subr.mxu0 0.0
    %566 = vmatpush1.msra.mxu0 0.0
    %567 = vmatprep.subr.mxu0 0.0
    %568 = vmatpush1.msra.mxu0 0.0
    %569 = vmatprep.subr.mxu0 0.0
    %570 = vmatpush1.msra.mxu0 0.0
    %571 = vmatprep.subr.mxu0 0.0
    %572 = vmatpush1.msra.mxu0 0.0
    %573 = vmatprep.subr.mxu0 0.0
    %574 = vmatpush1.msra.mxu0 0.0
    %575 = vmatprep.subr.mxu0 0.0
    %576 = vmatpush1.msra.mxu0 0.0
    %577 = vmatprep.subr.mxu0 0.0
    %578 = vmatpush1.msra.mxu0 0.0
    %579 = vmatprep.subr.mxu0 0.0
    %580 = vmatpush1.msra.mxu0 0.0
    %581 = vmatprep.subr.mxu0 0.0
    %582 = vmatpush1.msra.mxu0 0.0
    %583 = vmatprep.subr.mxu0 0.0
    %584 = vmatpush1.msra.mxu0 0.0
    %585 = vmatprep.subr.mxu0 0.0
    %586 = vmatpush1.msra.mxu0 0.0
    %587 = vmatprep.subr.mxu0 0.0
    %588 = vmatpush1.msra.mxu0 0.0
    %589 = vmatprep.subr.mxu0 0.0
    %590 = vmatpush1.msra.mxu0 %v74
    %591 = vmatprep.subr.mxu0 0.0
    %592 = vmatpush1.msra.mxu0 %v73
    %593 = vmatprep.subr.mxu0 0.0
    %594 = vmatpush1.msra.mxu0 %v72
    %595 = vmatprep.subr.mxu0 0.0
    %596 = vmatpush1.msra.mxu0 %v71
    %597 = vmatprep.subr.mxu0 0.0
    %598 = vmatpush2.msra.mxu0 0.0
    %599 = vmatprep.subr.mxu0 0.0
    %600 = vmatpush2.msra.mxu0 0.0
    %601 = vmatprep.subr.mxu0 0.0
    %602 = vmatpush2.msra.mxu0 0.0
    %603 = vmatprep.subr.mxu0 0.0
    %604 = vmatpush2.msra.mxu0 0.0
    %605 = vmatprep.subr.mxu0 0.0
    %606 = vmatpush2.msra.mxu0 0.0
    %607 = vmatprep.subr.mxu0 0.0
    %608 = vmatpush2.msra.mxu0 0.0
    %609 = vmatprep.subr.mxu0 0.0
    %610 = vmatpush2.msra.mxu0 0.0
    %611 = vmatprep.subr.mxu0 0.0
    %612 = vmatpush2.msra.mxu0 0.0
    %613 = vmatprep.subr.mxu0 0.0
    %614 = vmatpush2.msra.mxu0 0.0
    %615 = vmatprep.subr.mxu0 0.0
    %616 = vmatpush2.msra.mxu0 0.0
    %617 = vmatprep.subr.mxu0 0.0
    %618 = vmatpush2.msra.mxu0 0.0
    %619 = vmatprep.subr.mxu0 0.0
    %620 = vmatpush2.msra.mxu0 0.0
    %621 = vmatprep.subr.mxu0 0.0
    %622 = vmatpush2.msra.mxu0 0.0
    %623 = vmatprep.subr.mxu0 0.0
    %624 = vmatpush2.msra.mxu0 0.0
    %625 = vmatprep.subr.mxu0 0.0
    %626 = vmatpush2.msra.mxu0 0.0
    %627 = vmatprep.subr.mxu0 0.0
    %628 = vmatpush2.msra.mxu0 0.0
    %629 = vmatprep.mubr.f32.mxu0 0.0
    %630 = vmatmul.mubr.f32.gmra.mxu0 %v563
    %v631 = vpop.f32.mrf.mxu0
    %v632 = vadd.f32 0.0, %v631
    %v633 = vpop.f32.mrf.mxu0
    %634 = vdwg.mxu0
    %635 = vmatprep.subr.mxu0 0.0
    %636 = vmatpush1.msra.mxu0 0.0
    %637 = vmatprep.subr.mxu0 0.0
    %638 = vmatpush1.msra.mxu0 0.0
    %639 = vmatprep.subr.mxu0 0.0
    %640 = vmatpush1.msra.mxu0 0.0
    %641 = vmatprep.subr.mxu0 0.0
    %642 = vmatpush1.msra.mxu0 0.0
    %643 = vmatprep.subr.mxu0 0.0
    %644 = vmatpush1.msra.mxu0 0.0
    %645 = vmatprep.subr.mxu0 0.0
    %646 = vmatpush1.msra.mxu0 0.0
    %647 = vmatprep.subr.mxu0 0.0
    %648 = vmatpush1.msra.mxu0 0.0
    %649 = vmatprep.subr.mxu0 0.0
    %650 = vmatpush1.msra.mxu0 0.0
    %651 = vmatprep.subr.mxu0 0.0
    %652 = vmatpush1.msra.mxu0 0.0
    %653 = vmatprep.subr.mxu0 0.0
    %654 = vmatpush1.msra.mxu0 0.0
    %655 = vmatprep.subr.mxu0 0.0
    %656 = vmatpush1.msra.mxu0 0.0
    %657 = vmatprep.subr.mxu0 0.0
    %658 = vmatpush1.msra.mxu0 0.0
    %659 = vmatprep.subr.mxu0 0.0
    %660 = vmatpush1.msra.mxu0 %v78
    %661 = vmatprep.subr.mxu0 0.0
    %662 = vmatpush1.msra.mxu0 %v77
    %663 = vmatprep.subr.mxu0 0.0
    %664 = vmatpush1.msra.mxu0 %v76
    %665 = vmatprep.subr.mxu0 0.0
    %666 = vmatpush1.msra.mxu0 %v75
    %667 = vmatprep.subr.mxu0 0.0
    %668 = vmatpush2.msra.mxu0 0.0
    %669 = vmatprep.subr.mxu0 0.0
    %670 = vmatpush2.msra.mxu0 0.0
    %671 = vmatprep.subr.mxu0 0.0
    %672 = vmatpush2.msra.mxu0 0.0
    %673 = vmatprep.subr.mxu0 0.0
    %674 = vmatpush2.msra.mxu0 0.0
    %675 = vmatprep.subr.mxu0 0.0
    %676 = vmatpush2.msra.mxu0 0.0
    %677 = vmatprep.subr.mxu0 0.0
    %678 = vmatpush2.msra.mxu0 0.0
    %679 = vmatprep.subr.mxu0 0.0
    %680 = vmatpush2.msra.mxu0 0.0
    %681 = vmatprep.subr.mxu0 0.0
    %682 = vmatpush2.msra.mxu0 0.0
    %683 = vmatprep.subr.mxu0 0.0
    %684 = vmatpush2.msra.mxu0 0.0
    %685 = vmatprep.subr.mxu0 0.0
    %686 = vmatpush2.msra.mxu0 0.0
    %687 = vmatprep.subr.mxu0 0.0
    %688 = vmatpush2.msra.mxu0 0.0
    %689 = vmatprep.subr.mxu0 0.0
    %690 = vmatpush2.msra.mxu0 0.0
    %691 = vmatprep.subr.mxu0 0.0
    %692 = vmatpush2.msra.mxu0 0.0
    %693 = vmatprep.subr.mxu0 0.0
    %694 = vmatpush2.msra.mxu0 0.0
    %695 = vmatprep.subr.mxu0 0.0
    %696 = vmatpush2.msra.mxu0 0.0
    %697 = vmatprep.subr.mxu0 0.0
    %698 = vmatpush2.msra.mxu0 0.0
    %699 = vmatprep.mubr.f32.mxu0 0.0
    %700 = vmatmul.mubr.f32.gmra.mxu0 %v563
    %v701 = vpop.f32.mrf.mxu0
    %v702 = vadd.f32 0.0, %v701
    %v703 = vpop.f32.mrf.mxu0
    %704 = vdwg.mxu0
    %v705 = vadd.f32 %v407, %v632
    %v706 = vxor.u32 %v705, 2147483648
    %v707 = vmul.f32 %v706, 1.442695
    %v708 = vpow.pop %v707
    %v709 = vadd.f32 %v708, 1.0
    %v710 = vrcp.pop %v709
    %v711 = vmul.f32 1.0, %v710
    %v712 = vadd.f32 %v483, %v702
    %v713 = vxor.u32 %v712, 2147483648
    %v714 = vmul.f32 %v713, 1.442695
    %v715 = vpow.pop %v714
    %v716 = vadd.f32 %v715, 1.0
    %v717 = vrcp.pop %v716
    %v718 = vmul.f32 1.0, %v717
    %v720 = vlaneseq
    %v721 = vshrl.u32 %v720, 7
    %v722 = vsub.s32 0, %v721
    %v723 = vrot.slane %v83, %v722
    %725 = vmatprep.subr.mxu0 0.0
    %726 = vmatpush1.msra.mxu0 0.0
    %727 = vmatprep.subr.mxu0 0.0
    %728 = vmatpush1.msra.mxu0 0.0
    %729 = vmatprep.subr.mxu0 0.0
    %730 = vmatpush1.msra.mxu0 0.0
    %731 = vmatprep.subr.mxu0 0.0
    %732 = vmatpush1.msra.mxu0 0.0
    %733 = vmatprep.subr.mxu0 0.0
    %734 = vmatpush1.msra.mxu0 0.0
    %735 = vmatprep.subr.mxu0 0.0
    %736 = vmatpush1.msra.mxu0 0.0
    %737 = vmatprep.subr.mxu0 0.0
    %738 = vmatpush1.msra.mxu0 0.0
    %739 = vmatprep.subr.mxu0 0.0
    %740 = vmatpush1.msra.mxu0 0.0
    %741 = vmatprep.subr.mxu0 0.0
    %742 = vmatpush1.msra.mxu0 0.0
    %743 = vmatprep.subr.mxu0 0.0
    %744 = vmatpush1.msra.mxu0 0.0
    %745 = vmatprep.subr.mxu0 0.0
    %746 = vmatpush1.msra.mxu0 0.0
    %747 = vmatprep.subr.mxu0 0.0
    %748 = vmatpush1.msra.mxu0 0.0
    %749 = vmatprep.subr.mxu0 0.0
    %750 = vmatpush1.msra.mxu0 %v82
    %751 = vmatprep.subr.mxu0 0.0
    %752 = vmatpush1.msra.mxu0 %v81
    %753 = vmatprep.subr.mxu0 0.0
    %754 = vmatpush1.msra.mxu0 %v80
    %755 = vmatprep.subr.mxu0 0.0
    %756 = vmatpush1.msra.mxu0 %v79
    %757 = vmatprep.subr.mxu0 0.0
    %758 = vmatpush2.msra.mxu0 0.0
    %759 = vmatprep.subr.mxu0 0.0
    %760 = vmatpush2.msra.mxu0 0.0
    %761 = vmatprep.subr.mxu0 0.0
    %762 = vmatpush2.msra.mxu0 0.0
    %763 = vmatprep.subr.mxu0 0.0
    %764 = vmatpush2.msra.mxu0 0.0
    %765 = vmatprep.subr.mxu0 0.0
    %766 = vmatpush2.msra.mxu0 0.0
    %767 = vmatprep.subr.mxu0 0.0
    %768 = vmatpush2.msra.mxu0 0.0
    %769 = vmatprep.subr.mxu0 0.0
    %770 = vmatpush2.msra.mxu0 0.0
    %771 = vmatprep.subr.mxu0 0.0
    %772 = vmatpush2.msra.mxu0 0.0
    %773 = vmatprep.subr.mxu0 0.0
    %774 = vmatpush2.msra.mxu0 0.0
    %775 = vmatprep.subr.mxu0 0.0
    %776 = vmatpush2.msra.mxu0 0.0
    %777 = vmatprep.subr.mxu0 0.0
    %778 = vmatpush2.msra.mxu0 0.0
    %779 = vmatprep.subr.mxu0 0.0
    %780 = vmatpush2.msra.mxu0 0.0
    %781 = vmatprep.subr.mxu0 0.0
    %782 = vmatpush2.msra.mxu0 0.0
    %783 = vmatprep.subr.mxu0 0.0
    %784 = vmatpush2.msra.mxu0 0.0
    %785 = vmatprep.subr.mxu0 0.0
    %786 = vmatpush2.msra.mxu0 0.0
    %787 = vmatprep.subr.mxu0 0.0
    %788 = vmatpush2.msra.mxu0 0.0
    %789 = vmatprep.mubr.f32.mxu0 0.0
    %790 = vmatmul.mubr.f32.gmra.mxu0 %v563
    %v791 = vpop.f32.mrf.mxu0
    %v792 = vadd.f32 %v723, %v791
    %v793 = vpop.f32.mrf.mxu0
    %794 = vdwg.mxu0
    %v795 = vmul.f32 %v711, %v792
    %v796 = vadd.f32 %v559, %v795
    %v797 = vtanh.pop %v796
    %v798 = vsub.f32 1.0, %v718
    %v799 = vmul.f32 %v798, %v797
    %v800 = vmul.f32 %v718, %v86
    %v801 = vadd.f32 %v799, %v800
    %s802 = scalar_lea.vmem %s0, 6
    %v803 = vld [vmem:[%s802] sm:$0x3]
    %v804 = vld [vmem:[%s802 + $0x2] sm:$0x3]
    %v805 = vld [vmem:[%s802 + $0x4] sm:$0x3]
    %806 = vmatprep.subr.mxu0 0.0
    %807 = vmatpush1.msra.mxu0 0.0
    %808 = vmatprep.subr.mxu0 0.0
    %809 = vmatpush1.msra.mxu0 0.0
    %810 = vmatprep.subr.mxu0 0.0
    %811 = vmatpush1.msra.mxu0 0.0
    %812 = vmatprep.subr.mxu0 0.0
    %813 = vmatpush1.msra.mxu0 0.0
    %814 = vmatprep.subr.mxu0 0.0
    %815 = vmatpush1.msra.mxu0 0.0
    %816 = vmatprep.subr.mxu0 0.0
    %817 = vmatpush1.msra.mxu0 0.0
    %818 = vmatprep.subr.mxu0 0.0
    %819 = vmatpush1.msra.mxu0 0.0
    %820 = vmatprep.subr.mxu0 0.0
    %821 = vmatpush1.msra.mxu0 0.0
    %822 = vmatprep.subr.mxu0 0.0
    %823 = vmatpush1.msra.mxu0 0.0
    %824 = vmatprep.subr.mxu0 0.0
    %825 = vmatpush1.msra.mxu0 0.0
    %826 = vmatprep.subr.mxu0 0.0
    %827 = vmatpush1.msra.mxu0 0.0
    %828 = vmatprep.subr.mxu0 0.0
    %829 = vmatpush1.msra.mxu0 0.0
    %830 = vmatprep.subr.mxu0 0.0
    %831 = vmatpush1.msra.mxu0 %v46
    %832 = vmatprep.subr.mxu0 0.0
    %833 = vmatpush1.msra.mxu0 %v45
    %834 = vmatprep.subr.mxu0 0.0
    %835 = vmatpush1.msra.mxu0 %v44
    %836 = vmatprep.subr.mxu0 0.0
    %837 = vmatpush1.msra.mxu0 %v43
    %838 = vmatprep.subr.mxu0 0.0
    %839 = vmatpush2.msra.mxu0 0.0
    %840 = vmatprep.subr.mxu0 0.0
    %841 = vmatpush2.msra.mxu0 0.0
    %842 = vmatprep.subr.mxu0 0.0
    %843 = vmatpush2.msra.mxu0 0.0
    %844 = vmatprep.subr.mxu0 0.0
    %845 = vmatpush2.msra.mxu0 0.0
    %846 = vmatprep.subr.mxu0 0.0
    %847 = vmatpush2.msra.mxu0 0.0
    %848 = vmatprep.subr.mxu0 0.0
    %849 = vmatpush2.msra.mxu0 0.0
    %850 = vmatprep.subr.mxu0 0.0
    %851 = vmatpush2.msra.mxu0 0.0
    %852 = vmatprep.subr.mxu0 0.0
    %853 = vmatpush2.msra.mxu0 0.0
    %854 = vmatprep.subr.mxu0 0.0
    %855 = vmatpush2.msra.mxu0 0.0
    %856 = vmatprep.subr.mxu0 0.0
    %857 = vmatpush2.msra.mxu0 0.0
    %858 = vmatprep.subr.mxu0 0.0
    %859 = vmatpush2.msra.mxu0 0.0
    %860 = vmatprep.subr.mxu0 0.0
    %861 = vmatpush2.msra.mxu0 0.0
    %862 = vmatprep.subr.mxu0 0.0
    %863 = vmatpush2.msra.mxu0 0.0
    %864 = vmatprep.subr.mxu0 0.0
    %865 = vmatpush2.msra.mxu0 0.0
    %866 = vmatprep.subr.mxu0 0.0
    %867 = vmatpush2.msra.mxu0 0.0
    %868 = vmatprep.subr.mxu0 0.0
    %869 = vmatpush2.msra.mxu0 0.0
    %870 = vmatprep.mubr.f32.mxu0 0.0
    %871 = vmatmul.mubr.f32.gmra.mxu0 %v338
    %v872 = vpop.f32.mrf.mxu0
    %v873 = vadd.f32 0.0, %v872
    %v874 = vpop.f32.mrf.mxu0
    %875 = vdwg.mxu0
    %876 = vmatprep.subr.mxu0 0.0
    %877 = vmatpush1.msra.mxu0 0.0
    %878 = vmatprep.subr.mxu0 0.0
    %879 = vmatpush1.msra.mxu0 0.0
    %880 = vmatprep.subr.mxu0 0.0
    %881 = vmatpush1.msra.mxu0 0.0
    %882 = vmatprep.subr.mxu0 0.0
    %883 = vmatpush1.msra.mxu0 0.0
    %884 = vmatprep.subr.mxu0 0.0
    %885 = vmatpush1.msra.mxu0 0.0
    %886 = vmatprep.subr.mxu0 0.0
    %887 = vmatpush1.msra.mxu0 0.0
    %888 = vmatprep.subr.mxu0 0.0
    %889 = vmatpush1.msra.mxu0 0.0
    %890 = vmatprep.subr.mxu0 0.0
    %891 = vmatpush1.msra.mxu0 0.0
    %892 = vmatprep.subr.mxu0 0.0
    %893 = vmatpush1.msra.mxu0 0.0
    %894 = vmatprep.subr.mxu0 0.0
    %895 = vmatpush1.msra.mxu0 0.0
    %896 = vmatprep.subr.mxu0 0.0
    %897 = vmatpush1.msra.mxu0 0.0
    %898 = vmatprep.subr.mxu0 0.0
    %899 = vmatpush1.msra.mxu0 0.0
    %900 = vmatprep.subr.mxu0 0.0
    %901 = vmatpush1.msra.mxu0 %v50
    %902 = vmatprep.subr.mxu0 0.0
    %903 = vmatpush1.msra.mxu0 %v49
    %904 = vmatprep.subr.mxu0 0.0
    %905 = vmatpush1.msra.mxu0 %v48
    %906 = vmatprep.subr.mxu0 0.0
    %907 = vmatpush1.msra.mxu0 %v47
    %908 = vmatprep.subr.mxu0 0.0
    %909 = vmatpush2.msra.mxu0 0.0
    %910 = vmatprep.subr.mxu0 0.0
    %911 = vmatpush2.msra.mxu0 0.0
    %912 = vmatprep.subr.mxu0 0.0
    %913 = vmatpush2.msra.mxu0 0.0
    %914 = vmatprep.subr.mxu0 0.0
    %915 = vmatpush2.msra.mxu0 0.0
    %916 = vmatprep.subr.mxu0 0.0
    %917 = vmatpush2.msra.mxu0 0.0
    %918 = vmatprep.subr.mxu0 0.0
    %919 = vmatpush2.msra.mxu0 0.0
    %920 = vmatprep.subr.mxu0 0.0
    %921 = vmatpush2.msra.mxu0 0.0
    %922 = vmatprep.subr.mxu0 0.0
    %923 = vmatpush2.msra.mxu0 0.0
    %924 = vmatprep.subr.mxu0 0.0
    %925 = vmatpush2.msra.mxu0 0.0
    %926 = vmatprep.subr.mxu0 0.0
    %927 = vmatpush2.msra.mxu0 0.0
    %928 = vmatprep.subr.mxu0 0.0
    %929 = vmatpush2.msra.mxu0 0.0
    %930 = vmatprep.subr.mxu0 0.0
    %931 = vmatpush2.msra.mxu0 0.0
    %932 = vmatprep.subr.mxu0 0.0
    %933 = vmatpush2.msra.mxu0 0.0
    %934 = vmatprep.subr.mxu0 0.0
    %935 = vmatpush2.msra.mxu0 0.0
    %936 = vmatprep.subr.mxu0 0.0
    %937 = vmatpush2.msra.mxu0 0.0
    %938 = vmatprep.subr.mxu0 0.0
    %939 = vmatpush2.msra.mxu0 0.0
    %940 = vmatprep.mubr.f32.mxu0 0.0
    %941 = vmatmul.mubr.f32.gmra.mxu0 %v338
    %v942 = vpop.f32.mrf.mxu0
    %v943 = vadd.f32 0.0, %v942
    %v944 = vpop.f32.mrf.mxu0
    %945 = vdwg.mxu0
    %v946 = vadd.f32 %v803, %v873
    %v947 = vxor.u32 %v946, 2147483648
    %v948 = vmul.f32 %v947, 1.442695
    %v949 = vpow.pop %v948
    %v950 = vadd.f32 %v949, 1.0
    %v951 = vrcp.pop %v950
    %v952 = vmul.f32 1.0, %v951
    %v953 = vadd.f32 %v804, %v943
    %v954 = vxor.u32 %v953, 2147483648
    %v955 = vmul.f32 %v954, 1.442695
    %v956 = vpow.pop %v955
    %v957 = vadd.f32 %v956, 1.0
    %v958 = vrcp.pop %v957
    %v959 = vmul.f32 1.0, %v958
    %960 = vmatprep.subr.mxu0 0.0
    %961 = vmatpush1.msra.mxu0 0.0
    %962 = vmatprep.subr.mxu0 0.0
    %963 = vmatpush1.msra.mxu0 0.0
    %964 = vmatprep.subr.mxu0 0.0
    %965 = vmatpush1.msra.mxu0 0.0
    %966 = vmatprep.subr.mxu0 0.0
    %967 = vmatpush1.msra.mxu0 0.0
    %968 = vmatprep.subr.mxu0 0.0
    %969 = vmatpush1.msra.mxu0 0.0
    %970 = vmatprep.subr.mxu0 0.0
    %971 = vmatpush1.msra.mxu0 0.0
    %972 = vmatprep.subr.mxu0 0.0
    %973 = vmatpush1.msra.mxu0 0.0
    %974 = vmatprep.subr.mxu0 0.0
    %975 = vmatpush1.msra.mxu0 0.0
    %976 = vmatprep.subr.mxu0 0.0
    %977 = vmatpush1.msra.mxu0 0.0
    %978 = vmatprep.subr.mxu0 0.0
    %979 = vmatpush1.msra.mxu0 0.0
    %980 = vmatprep.subr.mxu0 0.0
    %981 = vmatpush1.msra.mxu0 0.0
    %982 = vmatprep.subr.mxu0 0.0
    %983 = vmatpush1.msra.mxu0 0.0
    %984 = vmatprep.subr.mxu0 0.0
    %985 = vmatpush1.msra.mxu0 %v54
    %986 = vmatprep.subr.mxu0 0.0
    %987 = vmatpush1.msra.mxu0 %v53
    %988 = vmatprep.subr.mxu0 0.0
    %989 = vmatpush1.msra.mxu0 %v52
    %990 = vmatprep.subr.mxu0 0.0
    %991 = vmatpush1.msra.mxu0 %v51
    %992 = vmatprep.subr.mxu0 0.0
    %993 = vmatpush2.msra.mxu0 0.0
    %994 = vmatprep.subr.mxu0 0.0
    %995 = vmatpush2.msra.mxu0 0.0
    %996 = vmatprep.subr.mxu0 0.0
    %997 = vmatpush2.msra.mxu0 0.0
    %998 = vmatprep.subr.mxu0 0.0
    %999 = vmatpush2.msra.mxu0 0.0
    %1000 = vmatprep.subr.mxu0 0.0
    %1001 = vmatpush2.msra.mxu0 0.0
    %1002 = vmatprep.subr.mxu0 0.0
    %1003 = vmatpush2.msra.mxu0 0.0
    %1004 = vmatprep.subr.mxu0 0.0
    %1005 = vmatpush2.msra.mxu0 0.0
    %1006 = vmatprep.subr.mxu0 0.0
    %1007 = vmatpush2.msra.mxu0 0.0
    %1008 = vmatprep.subr.mxu0 0.0
    %1009 = vmatpush2.msra.mxu0 0.0
    %1010 = vmatprep.subr.mxu0 0.0
    %1011 = vmatpush2.msra.mxu0 0.0
    %1012 = vmatprep.subr.mxu0 0.0
    %1013 = vmatpush2.msra.mxu0 0.0
    %1014 = vmatprep.subr.mxu0 0.0
    %1015 = vmatpush2.msra.mxu0 0.0
    %1016 = vmatprep.subr.mxu0 0.0
    %1017 = vmatpush2.msra.mxu0 0.0
    %1018 = vmatprep.subr.mxu0 0.0
    %1019 = vmatpush2.msra.mxu0 0.0
    %1020 = vmatprep.subr.mxu0 0.0
    %1021 = vmatpush2.msra.mxu0 0.0
    %1022 = vmatprep.subr.mxu0 0.0
    %1023 = vmatpush2.msra.mxu0 0.0
    %1024 = vmatprep.mubr.f32.mxu0 0.0
    %1025 = vmatmul.mubr.f32.gmra.mxu0 %v338
    %v1026 = vpop.f32.mrf.mxu0
    %v1027 = vadd.f32 %v252, %v1026
    %v1028 = vpop.f32.mrf.mxu0
    %1029 = vdwg.mxu0
    %v1030 = vmul.f32 %v952, %v1027
    %v1031 = vadd.f32 %v805, %v1030
    %v1032 = vtanh.pop %v1031
    %v1033 = vsub.f32 1.0, %v959
    %v1034 = vmul.f32 %v1033, %v1032
    %v1035 = vmul.f32 %v959, %v330
    %v1036 = vadd.f32 %v1034, %v1035
    %v1038 = vsel %vm90, %v1036, 0
    %1040 = vmatprep.subr.mxu0 0.0
    %1041 = vmatpush1.msra.mxu0 0.0
    %1042 = vmatprep.subr.mxu0 0.0
    %1043 = vmatpush1.msra.mxu0 0.0
    %1044 = vmatprep.subr.mxu0 0.0
    %1045 = vmatpush1.msra.mxu0 0.0
    %1046 = vmatprep.subr.mxu0 0.0
    %1047 = vmatpush1.msra.mxu0 0.0
    %1048 = vmatprep.subr.mxu0 0.0
    %1049 = vmatpush1.msra.mxu0 0.0
    %1050 = vmatprep.subr.mxu0 0.0
    %1051 = vmatpush1.msra.mxu0 0.0
    %1052 = vmatprep.subr.mxu0 0.0
    %1053 = vmatpush1.msra.mxu0 0.0
    %1054 = vmatprep.subr.mxu0 0.0
    %1055 = vmatpush1.msra.mxu0 0.0
    %1056 = vmatprep.subr.mxu0 0.0
    %1057 = vmatpush1.msra.mxu0 0.0
    %1058 = vmatprep.subr.mxu0 0.0
    %1059 = vmatpush1.msra.mxu0 0.0
    %1060 = vmatprep.subr.mxu0 0.0
    %1061 = vmatpush1.msra.mxu0 0.0
    %1062 = vmatprep.subr.mxu0 0.0
    %1063 = vmatpush1.msra.mxu0 0.0
    %1064 = vmatprep.subr.mxu0 0.0
    %1065 = vmatpush1.msra.mxu0 %v59
    %1066 = vmatprep.subr.mxu0 0.0
    %1067 = vmatpush1.msra.mxu0 %v58
    %1068 = vmatprep.subr.mxu0 0.0
    %1069 = vmatpush1.msra.mxu0 %v57
    %1070 = vmatprep.subr.mxu0 0.0
    %1071 = vmatpush1.msra.mxu0 %v56
    %1072 = vmatprep.subr.mxu0 0.0
    %1073 = vmatpush2.msra.mxu0 0.0
    %1074 = vmatprep.subr.mxu0 0.0
    %1075 = vmatpush2.msra.mxu0 0.0
    %1076 = vmatprep.subr.mxu0 0.0
    %1077 = vmatpush2.msra.mxu0 0.0
    %1078 = vmatprep.subr.mxu0 0.0
    %1079 = vmatpush2.msra.mxu0 0.0
    %1080 = vmatprep.subr.mxu0 0.0
    %1081 = vmatpush2.msra.mxu0 0.0
    %1082 = vmatprep.subr.mxu0 0.0
    %1083 = vmatpush2.msra.mxu0 0.0
    %1084 = vmatprep.subr.mxu0 0.0
    %1085 = vmatpush2.msra.mxu0 0.0
    %1086 = vmatprep.subr.mxu0 0.0
    %1087 = vmatpush2.msra.mxu0 0.0
    %1088 = vmatprep.subr.mxu0 0.0
    %1089 = vmatpush2.msra.mxu0 0.0
    %1090 = vmatprep.subr.mxu0 0.0
    %1091 = vmatpush2.msra.mxu0 0.0
    %1092 = vmatprep.subr.mxu0 0.0
    %1093 = vmatpush2.msra.mxu0 0.0
    %1094 = vmatprep.subr.mxu0 0.0
    %1095 = vmatpush2.msra.mxu0 0.0
    %1096 = vmatprep.subr.mxu0 0.0
    %1097 = vmatpush2.msra.mxu0 0.0
    %1098 = vmatprep.subr.mxu0 0.0
    %1099 = vmatpush2.msra.mxu0 0.0
    %1100 = vmatprep.subr.mxu0 0.0
    %1101 = vmatpush2.msra.mxu0 0.0
    %1102 = vmatprep.subr.mxu0 0.0
    %1103 = vmatpush2.msra.mxu0 0.0
    %1104 = vmatprep.mubr.f32.mxu0 0.0
    %1105 = vmatmul.mubr.f32.gmra.mxu0 %v1038
    %v1106 = vpop.f32.mrf.mxu0
    %v1107 = vadd.f32 %v335, %v1106
    %v1108 = vpop.f32.mrf.mxu0
    %1109 = vdwg.mxu0
    %1110 = vmatprep.subr.mxu0 0.0
    %1111 = vmatpush1.msra.mxu0 0.0
    %1112 = vmatprep.subr.mxu0 0.0
    %1113 = vmatpush1.msra.mxu0 0.0
    %1114 = vmatprep.subr.mxu0 0.0
    %1115 = vmatpush1.msra.mxu0 0.0
    %1116 = vmatprep.subr.mxu0 0.0
    %1117 = vmatpush1.msra.mxu0 0.0
    %1118 = vmatprep.subr.mxu0 0.0
    %1119 = vmatpush1.msra.mxu0 0.0
    %1120 = vmatprep.subr.mxu0 0.0
    %1121 = vmatpush1.msra.mxu0 0.0
    %1122 = vmatprep.subr.mxu0 0.0
    %1123 = vmatpush1.msra.mxu0 0.0
    %1124 = vmatprep.subr.mxu0 0.0
    %1125 = vmatpush1.msra.mxu0 0.0
    %1126 = vmatprep.subr.mxu0 0.0
    %1127 = vmatpush1.msra.mxu0 0.0
    %1128 = vmatprep.subr.mxu0 0.0
    %1129 = vmatpush1.msra.mxu0 0.0
    %1130 = vmatprep.subr.mxu0 0.0
    %1131 = vmatpush1.msra.mxu0 0.0
    %1132 = vmatprep.subr.mxu0 0.0
    %1133 = vmatpush1.msra.mxu0 0.0
    %1134 = vmatprep.subr.mxu0 0.0
    %1135 = vmatpush1.msra.mxu0 %v63
    %1136 = vmatprep.subr.mxu0 0.0
    %1137 = vmatpush1.msra.mxu0 %v62
    %1138 = vmatprep.subr.mxu0 0.0
    %1139 = vmatpush1.msra.mxu0 %v61
    %1140 = vmatprep.subr.mxu0 0.0
    %1141 = vmatpush1.msra.mxu0 %v60
    %1142 = vmatprep.subr.mxu0 0.0
    %1143 = vmatpush2.msra.mxu0 0.0
    %1144 = vmatprep.subr.mxu0 0.0
    %1145 = vmatpush2.msra.mxu0 0.0
    %1146 = vmatprep.subr.mxu0 0.0
    %1147 = vmatpush2.msra.mxu0 0.0
    %1148 = vmatprep.subr.mxu0 0.0
    %1149 = vmatpush2.msra.mxu0 0.0
    %1150 = vmatprep.subr.mxu0 0.0
    %1151 = vmatpush2.msra.mxu0 0.0
    %1152 = vmatprep.subr.mxu0 0.0
    %1153 = vmatpush2.msra.mxu0 0.0
    %1154 = vmatprep.subr.mxu0 0.0
    %1155 = vmatpush2.msra.mxu0 0.0
    %1156 = vmatprep.subr.mxu0 0.0
    %1157 = vmatpush2.msra.mxu0 0.0
    %1158 = vmatprep.subr.mxu0 0.0
    %1159 = vmatpush2.msra.mxu0 0.0
    %1160 = vmatprep.subr.mxu0 0.0
    %1161 = vmatpush2.msra.mxu0 0.0
    %1162 = vmatprep.subr.mxu0 0.0
    %1163 = vmatpush2.msra.mxu0 0.0
    %1164 = vmatprep.subr.mxu0 0.0
    %1165 = vmatpush2.msra.mxu0 0.0
    %1166 = vmatprep.subr.mxu0 0.0
    %1167 = vmatpush2.msra.mxu0 0.0
    %1168 = vmatprep.subr.mxu0 0.0
    %1169 = vmatpush2.msra.mxu0 0.0
    %1170 = vmatprep.subr.mxu0 0.0
    %1171 = vmatpush2.msra.mxu0 0.0
    %1172 = vmatprep.subr.mxu0 0.0
    %1173 = vmatpush2.msra.mxu0 0.0
    %1174 = vmatprep.mubr.f32.mxu0 0.0
    %1175 = vmatmul.mubr.f32.gmra.mxu0 %v1038
    %v1176 = vpop.f32.mrf.mxu0
    %v1177 = vadd.f32 %v414, %v1176
    %v1178 = vpop.f32.mrf.mxu0
    %1179 = vdwg.mxu0
    %1180 = vmatprep.subr.mxu0 0.0
    %1181 = vmatpush1.msra.mxu0 0.0
    %1182 = vmatprep.subr.mxu0 0.0
    %1183 = vmatpush1.msra.mxu0 0.0
    %1184 = vmatprep.subr.mxu0 0.0
    %1185 = vmatpush1.msra.mxu0 0.0
    %1186 = vmatprep.subr.mxu0 0.0
    %1187 = vmatpush1.msra.mxu0 0.0
    %1188 = vmatprep.subr.mxu0 0.0
    %1189 = vmatpush1.msra.mxu0 0.0
    %1190 = vmatprep.subr.mxu0 0.0
    %1191 = vmatpush1.msra.mxu0 0.0
    %1192 = vmatprep.subr.mxu0 0.0
    %1193 = vmatpush1.msra.mxu0 0.0
    %1194 = vmatprep.subr.mxu0 0.0
    %1195 = vmatpush1.msra.mxu0 0.0
    %1196 = vmatprep.subr.mxu0 0.0
    %1197 = vmatpush1.msra.mxu0 0.0
    %1198 = vmatprep.subr.mxu0 0.0
    %1199 = vmatpush1.msra.mxu0 0.0
    %1200 = vmatprep.subr.mxu0 0.0
    %1201 = vmatpush1.msra.mxu0 0.0
    %1202 = vmatprep.subr.mxu0 0.0
    %1203 = vmatpush1.msra.mxu0 0.0
    %1204 = vmatprep.subr.mxu0 0.0
    %1205 = vmatpush1.msra.mxu0 %v67
    %1206 = vmatprep.subr.mxu0 0.0
    %1207 = vmatpush1.msra.mxu0 %v66
    %1208 = vmatprep.subr.mxu0 0.0
    %1209 = vmatpush1.msra.mxu0 %v65
    %1210 = vmatprep.subr.mxu0 0.0
    %1211 = vmatpush1.msra.mxu0 %v64
    %1212 = vmatprep.subr.mxu0 0.0
    %1213 = vmatpush2.msra.mxu0 0.0
    %1214 = vmatprep.subr.mxu0 0.0
    %1215 = vmatpush2.msra.mxu0 0.0
    %1216 = vmatprep.subr.mxu0 0.0
    %1217 = vmatpush2.msra.mxu0 0.0
    %1218 = vmatprep.subr.mxu0 0.0
    %1219 = vmatpush2.msra.mxu0 0.0
    %1220 = vmatprep.subr.mxu0 0.0
    %1221 = vmatpush2.msra.mxu0 0.0
    %1222 = vmatprep.subr.mxu0 0.0
    %1223 = vmatpush2.msra.mxu0 0.0
    %1224 = vmatprep.subr.mxu0 0.0
    %1225 = vmatpush2.msra.mxu0 0.0
    %1226 = vmatprep.subr.mxu0 0.0
    %1227 = vmatpush2.msra.mxu0 0.0
    %1228 = vmatprep.subr.mxu0 0.0
    %1229 = vmatpush2.msra.mxu0 0.0
    %1230 = vmatprep.subr.mxu0 0.0
    %1231 = vmatpush2.msra.mxu0 0.0
    %1232 = vmatprep.subr.mxu0 0.0
    %1233 = vmatpush2.msra.mxu0 0.0
    %1234 = vmatprep.subr.mxu0 0.0
    %1235 = vmatpush2.msra.mxu0 0.0
    %1236 = vmatprep.subr.mxu0 0.0
    %1237 = vmatpush2.msra.mxu0 0.0
    %1238 = vmatprep.subr.mxu0 0.0
    %1239 = vmatpush2.msra.mxu0 0.0
    %1240 = vmatprep.subr.mxu0 0.0
    %1241 = vmatpush2.msra.mxu0 0.0
    %1242 = vmatprep.subr.mxu0 0.0
    %1243 = vmatpush2.msra.mxu0 0.0
    %1244 = vmatprep.mubr.f32.mxu0 0.0
    %1245 = vmatmul.mubr.f32.gmra.mxu0 %v1038
    %v1246 = vpop.f32.mrf.mxu0
    %v1247 = vadd.f32 %v490, %v1246
    %v1248 = vpop.f32.mrf.mxu0
    %1249 = vdwg.mxu0
    %v1251 = vsel %vm90, %v801, 0
    %1253 = vmatprep.subr.mxu0 0.0
    %1254 = vmatpush1.msra.mxu0 0.0
    %1255 = vmatprep.subr.mxu0 0.0
    %1256 = vmatpush1.msra.mxu0 0.0
    %1257 = vmatprep.subr.mxu0 0.0
    %1258 = vmatpush1.msra.mxu0 0.0
    %1259 = vmatprep.subr.mxu0 0.0
    %1260 = vmatpush1.msra.mxu0 0.0
    %1261 = vmatprep.subr.mxu0 0.0
    %1262 = vmatpush1.msra.mxu0 0.0
    %1263 = vmatprep.subr.mxu0 0.0
    %1264 = vmatpush1.msra.mxu0 0.0
    %1265 = vmatprep.subr.mxu0 0.0
    %1266 = vmatpush1.msra.mxu0 0.0
    %1267 = vmatprep.subr.mxu0 0.0
    %1268 = vmatpush1.msra.mxu0 0.0
    %1269 = vmatprep.subr.mxu0 0.0
    %1270 = vmatpush1.msra.mxu0 0.0
    %1271 = vmatprep.subr.mxu0 0.0
    %1272 = vmatpush1.msra.mxu0 0.0
    %1273 = vmatprep.subr.mxu0 0.0
    %1274 = vmatpush1.msra.mxu0 0.0
    %1275 = vmatprep.subr.mxu0 0.0
    %1276 = vmatpush1.msra.mxu0 0.0
    %1277 = vmatprep.subr.mxu0 0.0
    %1278 = vmatpush1.msra.mxu0 %v74
    %1279 = vmatprep.subr.mxu0 0.0
    %1280 = vmatpush1.msra.mxu0 %v73
    %1281 = vmatprep.subr.mxu0 0.0
    %1282 = vmatpush1.msra.mxu0 %v72
    %1283 = vmatprep.subr.mxu0 0.0
    %1284 = vmatpush1.msra.mxu0 %v71
    %1285 = vmatprep.subr.mxu0 0.0
    %1286 = vmatpush2.msra.mxu0 0.0
    %1287 = vmatprep.subr.mxu0 0.0
    %1288 = vmatpush2.msra.mxu0 0.0
    %1289 = vmatprep.subr.mxu0 0.0
    %1290 = vmatpush2.msra.mxu0 0.0
    %1291 = vmatprep.subr.mxu0 0.0
    %1292 = vmatpush2.msra.mxu0 0.0
    %1293 = vmatprep.subr.mxu0 0.0
    %1294 = vmatpush2.msra.mxu0 0.0
    %1295 = vmatprep.subr.mxu0 0.0
    %1296 = vmatpush2.msra.mxu0 0.0
    %1297 = vmatprep.subr.mxu0 0.0
    %1298 = vmatpush2.msra.mxu0 0.0
    %1299 = vmatprep.subr.mxu0 0.0
    %1300 = vmatpush2.msra.mxu0 0.0
    %1301 = vmatprep.subr.mxu0 0.0
    %1302 = vmatpush2.msra.mxu0 0.0
    %1303 = vmatprep.subr.mxu0 0.0
    %1304 = vmatpush2.msra.mxu0 0.0
    %1305 = vmatprep.subr.mxu0 0.0
    %1306 = vmatpush2.msra.mxu0 0.0
    %1307 = vmatprep.subr.mxu0 0.0
    %1308 = vmatpush2.msra.mxu0 0.0
    %1309 = vmatprep.subr.mxu0 0.0
    %1310 = vmatpush2.msra.mxu0 0.0
    %1311 = vmatprep.subr.mxu0 0.0
    %1312 = vmatpush2.msra.mxu0 0.0
    %1313 = vmatprep.subr.mxu0 0.0
    %1314 = vmatpush2.msra.mxu0 0.0
    %1315 = vmatprep.subr.mxu0 0.0
    %1316 = vmatpush2.msra.mxu0 0.0
    %1317 = vmatprep.mubr.f32.mxu0 0.0
    %1318 = vmatmul.mubr.f32.gmra.mxu0 %v1251
    %v1319 = vpop.f32.mrf.mxu0
    %v1320 = vadd.f32 0.0, %v1319
    %v1321 = vpop.f32.mrf.mxu0
    %1322 = vdwg.mxu0
    %1323 = vmatprep.subr.mxu0 0.0
    %1324 = vmatpush1.msra.mxu0 0.0
    %1325 = vmatprep.subr.mxu0 0.0
    %1326 = vmatpush1.msra.mxu0 0.0
    %1327 = vmatprep.subr.mxu0 0.0
    %1328 = vmatpush1.msra.mxu0 0.0
    %1329 = vmatprep.subr.mxu0 0.0
    %1330 = vmatpush1.msra.mxu0 0.0
    %1331 = vmatprep.subr.mxu0 0.0
    %1332 = vmatpush1.msra.mxu0 0.0
    %1333 = vmatprep.subr.mxu0 0.0
    %1334 = vmatpush1.msra.mxu0 0.0
    %1335 = vmatprep.subr.mxu0 0.0
    %1336 = vmatpush1.msra.mxu0 0.0
    %1337 = vmatprep.subr.mxu0 0.0
    %1338 = vmatpush1.msra.mxu0 0.0
    %1339 = vmatprep.subr.mxu0 0.0
    %1340 = vmatpush1.msra.mxu0 0.0
    %1341 = vmatprep.subr.mxu0 0.0
    %1342 = vmatpush1.msra.mxu0 0.0
    %1343 = vmatprep.subr.mxu0 0.0
    %1344 = vmatpush1.msra.mxu0 0.0
    %1345 = vmatprep.subr.mxu0 0.0
    %1346 = vmatpush1.msra.mxu0 0.0
    %1347 = vmatprep.subr.mxu0 0.0
    %1348 = vmatpush1.msra.mxu0 %v78
    %1349 = vmatprep.subr.mxu0 0.0
    %1350 = vmatpush1.msra.mxu0 %v77
    %1351 = vmatprep.subr.mxu0 0.0
    %1352 = vmatpush1.msra.mxu0 %v76
    %1353 = vmatprep.subr.mxu0 0.0
    %1354 = vmatpush1.msra.mxu0 %v75
    %1355 = vmatprep.subr.mxu0 0.0
    %1356 = vmatpush2.msra.mxu0 0.0
    %1357 = vmatprep.subr.mxu0 0.0
    %1358 = vmatpush2.msra.mxu0 0.0
    %1359 = vmatprep.subr.mxu0 0.0
    %1360 = vmatpush2.msra.mxu0 0.0
    %1361 = vmatprep.subr.mxu0 0.0
    %1362 = vmatpush2.msra.mxu0 0.0
    %1363 = vmatprep.subr.mxu0 0.0
    %1364 = vmatpush2.msra.mxu0 0.0
    %1365 = vmatprep.subr.mxu0 0.0
    %1366 = vmatpush2.msra.mxu0 0.0
    %1367 = vmatprep.subr.mxu0 0.0
    %1368 = vmatpush2.msra.mxu0 0.0
    %1369 = vmatprep.subr.mxu0 0.0
    %1370 = vmatpush2.msra.mxu0 0.0
    %1371 = vmatprep.subr.mxu0 0.0
    %1372 = vmatpush2.msra.mxu0 0.0
    %1373 = vmatprep.subr.mxu0 0.0
    %1374 = vmatpush2.msra.mxu0 0.0
    %1375 = vmatprep.subr.mxu0 0.0
    %1376 = vmatpush2.msra.mxu0 0.0
    %1377 = vmatprep.subr.mxu0 0.0
    %1378 = vmatpush2.msra.mxu0 0.0
    %1379 = vmatprep.subr.mxu0 0.0
    %1380 = vmatpush2.msra.mxu0 0.0
    %1381 = vmatprep.subr.mxu0 0.0
    %1382 = vmatpush2.msra.mxu0 0.0
    %1383 = vmatprep.subr.mxu0 0.0
    %1384 = vmatpush2.msra.mxu0 0.0
    %1385 = vmatprep.subr.mxu0 0.0
    %1386 = vmatpush2.msra.mxu0 0.0
    %1387 = vmatprep.mubr.f32.mxu0 0.0
    %1388 = vmatmul.mubr.f32.gmra.mxu0 %v1251
    %v1389 = vpop.f32.mrf.mxu0
    %v1390 = vadd.f32 0.0, %v1389
    %v1391 = vpop.f32.mrf.mxu0
    %1392 = vdwg.mxu0
    %v1393 = vadd.f32 %v1107, %v1320
    %v1394 = vxor.u32 %v1393, 2147483648
    %v1395 = vmul.f32 %v1394, 1.442695
    %v1396 = vpow.pop %v1395
    %v1397 = vadd.f32 %v1396, 1.0
    %v1398 = vrcp.pop %v1397
    %v1399 = vmul.f32 1.0, %v1398
    %v1400 = vadd.f32 %v1177, %v1390
    %v1401 = vxor.u32 %v1400, 2147483648
    %v1402 = vmul.f32 %v1401, 1.442695
    %v1403 = vpow.pop %v1402
    %v1404 = vadd.f32 %v1403, 1.0
    %v1405 = vrcp.pop %v1404
    %v1406 = vmul.f32 1.0, %v1405
    %1407 = vmatprep.subr.mxu0 0.0
    %1408 = vmatpush1.msra.mxu0 0.0
    %1409 = vmatprep.subr.mxu0 0.0
    %1410 = vmatpush1.msra.mxu0 0.0
    %1411 = vmatprep.subr.mxu0 0.0
    %1412 = vmatpush1.msra.mxu0 0.0
    %1413 = vmatprep.subr.mxu0 0.0
    %1414 = vmatpush1.msra.mxu0 0.0
    %1415 = vmatprep.subr.mxu0 0.0
    %1416 = vmatpush1.msra.mxu0 0.0
    %1417 = vmatprep.subr.mxu0 0.0
    %1418 = vmatpush1.msra.mxu0 0.0
    %1419 = vmatprep.subr.mxu0 0.0
    %1420 = vmatpush1.msra.mxu0 0.0
    %1421 = vmatprep.subr.mxu0 0.0
    %1422 = vmatpush1.msra.mxu0 0.0
    %1423 = vmatprep.subr.mxu0 0.0
    %1424 = vmatpush1.msra.mxu0 0.0
    %1425 = vmatprep.subr.mxu0 0.0
    %1426 = vmatpush1.msra.mxu0 0.0
    %1427 = vmatprep.subr.mxu0 0.0
    %1428 = vmatpush1.msra.mxu0 0.0
    %1429 = vmatprep.subr.mxu0 0.0
    %1430 = vmatpush1.msra.mxu0 0.0
    %1431 = vmatprep.subr.mxu0 0.0
    %1432 = vmatpush1.msra.mxu0 %v82
    %1433 = vmatprep.subr.mxu0 0.0
    %1434 = vmatpush1.msra.mxu0 %v81
    %1435 = vmatprep.subr.mxu0 0.0
    %1436 = vmatpush1.msra.mxu0 %v80
    %1437 = vmatprep.subr.mxu0 0.0
    %1438 = vmatpush1.msra.mxu0 %v79
    %1439 = vmatprep.subr.mxu0 0.0
    %1440 = vmatpush2.msra.mxu0 0.0
    %1441 = vmatprep.subr.mxu0 0.0
    %1442 = vmatpush2.msra.mxu0 0.0
    %1443 = vmatprep.subr.mxu0 0.0
    %1444 = vmatpush2.msra.mxu0 0.0
    %1445 = vmatprep.subr.mxu0 0.0
    %1446 = vmatpush2.msra.mxu0 0.0
    %1447 = vmatprep.subr.mxu0 0.0
    %1448 = vmatpush2.msra.mxu0 0.0
    %1449 = vmatprep.subr.mxu0 0.0
    %1450 = vmatpush2.msra.mxu0 0.0
    %1451 = vmatprep.subr.mxu0 0.0
    %1452 = vmatpush2.msra.mxu0 0.0
    %1453 = vmatprep.subr.mxu0 0.0
    %1454 = vmatpush2.msra.mxu0 0.0
    %1455 = vmatprep.subr.mxu0 0.0
    %1456 = vmatpush2.msra.mxu0 0.0
    %1457 = vmatprep.subr.mxu0 0.0
    %1458 = vmatpush2.msra.mxu0 0.0
    %1459 = vmatprep.subr.mxu0 0.0
    %1460 = vmatpush2.msra.mxu0 0.0
    %1461 = vmatprep.subr.mxu0 0.0
    %1462 = vmatpush2.msra.mxu0 0.0
    %1463 = vmatprep.subr.mxu0 0.0
    %1464 = vmatpush2.msra.mxu0 0.0
    %1465 = vmatprep.subr.mxu0 0.0
    %1466 = vmatpush2.msra.mxu0 0.0
    %1467 = vmatprep.subr.mxu0 0.0
    %1468 = vmatpush2.msra.mxu0 0.0
    %1469 = vmatprep.subr.mxu0 0.0
    %1470 = vmatpush2.msra.mxu0 0.0
    %1471 = vmatprep.mubr.f32.mxu0 0.0
    %1472 = vmatmul.mubr.f32.gmra.mxu0 %v1251
    %v1473 = vpop.f32.mrf.mxu0
    %v1474 = vadd.f32 %v723, %v1473
    %v1475 = vpop.f32.mrf.mxu0
    %1476 = vdwg.mxu0
    %v1477 = vmul.f32 %v1399, %v1474
    %v1478 = vadd.f32 %v1247, %v1477
    %v1479 = vtanh.pop %v1478
    %v1480 = vsub.f32 1.0, %v1406
    %v1481 = vmul.f32 %v1480, %v1479
    %v1482 = vmul.f32 %v1406, %v801
    %v1483 = vadd.f32 %v1481, %v1482
    %s1484 = scalar_lea.vmem %s0, 12
    %v1485 = vld [vmem:[%s1484] sm:$0x3]
    %v1486 = vld [vmem:[%s1484 + $0x2] sm:$0x3]
    %v1487 = vld [vmem:[%s1484 + $0x4] sm:$0x3]
    %1488 = vmatprep.subr.mxu0 0.0
    %1489 = vmatpush1.msra.mxu0 0.0
    %1490 = vmatprep.subr.mxu0 0.0
    %1491 = vmatpush1.msra.mxu0 0.0
    %1492 = vmatprep.subr.mxu0 0.0
    %1493 = vmatpush1.msra.mxu0 0.0
    %1494 = vmatprep.subr.mxu0 0.0
    %1495 = vmatpush1.msra.mxu0 0.0
    %1496 = vmatprep.subr.mxu0 0.0
    %1497 = vmatpush1.msra.mxu0 0.0
    %1498 = vmatprep.subr.mxu0 0.0
    %1499 = vmatpush1.msra.mxu0 0.0
    %1500 = vmatprep.subr.mxu0 0.0
    %1501 = vmatpush1.msra.mxu0 0.0
    %1502 = vmatprep.subr.mxu0 0.0
    %1503 = vmatpush1.msra.mxu0 0.0
    %1504 = vmatprep.subr.mxu0 0.0
    %1505 = vmatpush1.msra.mxu0 0.0
    %1506 = vmatprep.subr.mxu0 0.0
    %1507 = vmatpush1.msra.mxu0 0.0
    %1508 = vmatprep.subr.mxu0 0.0
    %1509 = vmatpush1.msra.mxu0 0.0
    %1510 = vmatprep.subr.mxu0 0.0
    %1511 = vmatpush1.msra.mxu0 0.0
    %1512 = vmatprep.subr.mxu0 0.0
    %1513 = vmatpush1.msra.mxu0 %v46
    %1514 = vmatprep.subr.mxu0 0.0
    %1515 = vmatpush1.msra.mxu0 %v45
    %1516 = vmatprep.subr.mxu0 0.0
    %1517 = vmatpush1.msra.mxu0 %v44
    %1518 = vmatprep.subr.mxu0 0.0
    %1519 = vmatpush1.msra.mxu0 %v43
    %1520 = vmatprep.subr.mxu0 0.0
    %1521 = vmatpush2.msra.mxu0 0.0
    %1522 = vmatprep.subr.mxu0 0.0
    %1523 = vmatpush2.msra.mxu0 0.0
    %1524 = vmatprep.subr.mxu0 0.0
    %1525 = vmatpush2.msra.mxu0 0.0
    %1526 = vmatprep.subr.mxu0 0.0
    %1527 = vmatpush2.msra.mxu0 0.0
    %1528 = vmatprep.subr.mxu0 0.0
    %1529 = vmatpush2.msra.mxu0 0.0
    %1530 = vmatprep.subr.mxu0 0.0
    %1531 = vmatpush2.msra.mxu0 0.0
    %1532 = vmatprep.subr.mxu0 0.0
    %1533 = vmatpush2.msra.mxu0 0.0
    %1534 = vmatprep.subr.mxu0 0.0
    %1535 = vmatpush2.msra.mxu0 0.0
    %1536 = vmatprep.subr.mxu0 0.0
    %1537 = vmatpush2.msra.mxu0 0.0
    %1538 = vmatprep.subr.mxu0 0.0
    %1539 = vmatpush2.msra.mxu0 0.0
    %1540 = vmatprep.subr.mxu0 0.0
    %1541 = vmatpush2.msra.mxu0 0.0
    %1542 = vmatprep.subr.mxu0 0.0
    %1543 = vmatpush2.msra.mxu0 0.0
    %1544 = vmatprep.subr.mxu0 0.0
    %1545 = vmatpush2.msra.mxu0 0.0
    %1546 = vmatprep.subr.mxu0 0.0
    %1547 = vmatpush2.msra.mxu0 0.0
    %1548 = vmatprep.subr.mxu0 0.0
    %1549 = vmatpush2.msra.mxu0 0.0
    %1550 = vmatprep.subr.mxu0 0.0
    %1551 = vmatpush2.msra.mxu0 0.0
    %1552 = vmatprep.mubr.f32.mxu0 0.0
    %1553 = vmatmul.mubr.f32.gmra.mxu0 %v1038
    %v1554 = vpop.f32.mrf.mxu0
    %v1555 = vadd.f32 0.0, %v1554
    %v1556 = vpop.f32.mrf.mxu0
    %1557 = vdwg.mxu0
    %1558 = vmatprep.subr.mxu0 0.0
    %1559 = vmatpush1.msra.mxu0 0.0
    %1560 = vmatprep.subr.mxu0 0.0
    %1561 = vmatpush1.msra.mxu0 0.0
    %1562 = vmatprep.subr.mxu0 0.0
    %1563 = vmatpush1.msra.mxu0 0.0
    %1564 = vmatprep.subr.mxu0 0.0
    %1565 = vmatpush1.msra.mxu0 0.0
    %1566 = vmatprep.subr.mxu0 0.0
    %1567 = vmatpush1.msra.mxu0 0.0
    %1568 = vmatprep.subr.mxu0 0.0
    %1569 = vmatpush1.msra.mxu0 0.0
    %1570 = vmatprep.subr.mxu0 0.0
    %1571 = vmatpush1.msra.mxu0 0.0
    %1572 = vmatprep.subr.mxu0 0.0
    %1573 = vmatpush1.msra.mxu0 0.0
    %1574 = vmatprep.subr.mxu0 0.0
    %1575 = vmatpush1.msra.mxu0 0.0
    %1576 = vmatprep.subr.mxu0 0.0
    %1577 = vmatpush1.msra.mxu0 0.0
    %1578 = vmatprep.subr.mxu0 0.0
    %1579 = vmatpush1.msra.mxu0 0.0
    %1580 = vmatprep.subr.mxu0 0.0
    %1581 = vmatpush1.msra.mxu0 0.0
    %1582 = vmatprep.subr.mxu0 0.0
    %1583 = vmatpush1.msra.mxu0 %v50
    %1584 = vmatprep.subr.mxu0 0.0
    %1585 = vmatpush1.msra.mxu0 %v49
    %1586 = vmatprep.subr.mxu0 0.0
    %1587 = vmatpush1.msra.mxu0 %v48
    %1588 = vmatprep.subr.mxu0 0.0
    %1589 = vmatpush1.msra.mxu0 %v47
    %1590 = vmatprep.subr.mxu0 0.0
    %1591 = vmatpush2.msra.mxu0 0.0
    %1592 = vmatprep.subr.mxu0 0.0
    %1593 = vmatpush2.msra.mxu0 0.0
    %1594 = vmatprep.subr.mxu0 0.0
    %1595 = vmatpush2.msra.mxu0 0.0
    %1596 = vmatprep.subr.mxu0 0.0
    %1597 = vmatpush2.msra.mxu0 0.0
    %1598 = vmatprep.subr.mxu0 0.0
    %1599 = vmatpush2.msra.mxu0 0.0
    %1600 = vmatprep.subr.mxu0 0.0
    %1601 = vmatpush2.msra.mxu0 0.0
    %1602 = vmatprep.subr.mxu0 0.0
    %1603 = vmatpush2.msra.mxu0 0.0
    %1604 = vmatprep.subr.mxu0 0.0
    %1605 = vmatpush2.msra.mxu0 0.0
    %1606 = vmatprep.subr.mxu0 0.0
    %1607 = vmatpush2.msra.mxu0 0.0
    %1608 = vmatprep.subr.mxu0 0.0
    %1609 = vmatpush2.msra.mxu0 0.0
    %1610 = vmatprep.subr.mxu0 0.0
    %1611 = vmatpush2.msra.mxu0 0.0
    %1612 = vmatprep.subr.mxu0 0.0
    %1613 = vmatpush2.msra.mxu0 0.0
    %1614 = vmatprep.subr.mxu0 0.0
    %1615 = vmatpush2.msra.mxu0 0.0
    %1616 = vmatprep.subr.mxu0 0.0
    %1617 = vmatpush2.msra.mxu0 0.0
    %1618 = vmatprep.subr.mxu0 0.0
    %1619 = vmatpush2.msra.mxu0 0.0
    %1620 = vmatprep.subr.mxu0 0.0
    %1621 = vmatpush2.msra.mxu0 0.0
    %1622 = vmatprep.mubr.f32.mxu0 0.0
    %1623 = vmatmul.mubr.f32.gmra.mxu0 %v1038
    %v1624 = vpop.f32.mrf.mxu0
    %v1625 = vadd.f32 0.0, %v1624
    %v1626 = vpop.f32.mrf.mxu0
    %1627 = vdwg.mxu0
    %v1628 = vadd.f32 %v1485, %v1555
    %v1629 = vxor.u32 %v1628, 2147483648
    %v1630 = vmul.f32 %v1629, 1.442695
    %v1631 = vpow.pop %v1630
    %v1632 = vadd.f32 %v1631, 1.0
    %v1633 = vrcp.pop %v1632
    %v1634 = vmul.f32 1.0, %v1633
    %v1635 = vadd.f32 %v1486, %v1625
    %v1636 = vxor.u32 %v1635, 2147483648
    %v1637 = vmul.f32 %v1636, 1.442695
    %v1638 = vpow.pop %v1637
    %v1639 = vadd.f32 %v1638, 1.0
    %v1640 = vrcp.pop %v1639
    %v1641 = vmul.f32 1.0, %v1640
    %1642 = vmatprep.subr.mxu0 0.0
    %1643 = vmatpush1.msra.mxu0 0.0
    %1644 = vmatprep.subr.mxu0 0.0
    %1645 = vmatpush1.msra.mxu0 0.0
    %1646 = vmatprep.subr.mxu0 0.0
    %1647 = vmatpush1.msra.mxu0 0.0
    %1648 = vmatprep.subr.mxu0 0.0
    %1649 = vmatpush1.msra.mxu0 0.0
    %1650 = vmatprep.subr.mxu0 0.0
    %1651 = vmatpush1.msra.mxu0 0.0
    %1652 = vmatprep.subr.mxu0 0.0
    %1653 = vmatpush1.msra.mxu0 0.0
    %1654 = vmatprep.subr.mxu0 0.0
    %1655 = vmatpush1.msra.mxu0 0.0
    %1656 = vmatprep.subr.mxu0 0.0
    %1657 = vmatpush1.msra.mxu0 0.0
    %1658 = vmatprep.subr.mxu0 0.0
    %1659 = vmatpush1.msra.mxu0 0.0
    %1660 = vmatprep.subr.mxu0 0.0
    %1661 = vmatpush1.msra.mxu0 0.0
    %1662 = vmatprep.subr.mxu0 0.0
    %1663 = vmatpush1.msra.mxu0 0.0
    %1664 = vmatprep.subr.mxu0 0.0
    %1665 = vmatpush1.msra.mxu0 0.0
    %1666 = vmatprep.subr.mxu0 0.0
    %1667 = vmatpush1.msra.mxu0 %v54
    %1668 = vmatprep.subr.mxu0 0.0
    %1669 = vmatpush1.msra.mxu0 %v53
    %1670 = vmatprep.subr.mxu0 0.0
    %1671 = vmatpush1.msra.mxu0 %v52
    %1672 = vmatprep.subr.mxu0 0.0
    %1673 = vmatpush1.msra.mxu0 %v51
    %1674 = vmatprep.subr.mxu0 0.0
    %1675 = vmatpush2.msra.mxu0 0.0
    %1676 = vmatprep.subr.mxu0 0.0
    %1677 = vmatpush2.msra.mxu0 0.0
    %1678 = vmatprep.subr.mxu0 0.0
    %1679 = vmatpush2.msra.mxu0 0.0
    %1680 = vmatprep.subr.mxu0 0.0
    %1681 = vmatpush2.msra.mxu0 0.0
    %1682 = vmatprep.subr.mxu0 0.0
    %1683 = vmatpush2.msra.mxu0 0.0
    %1684 = vmatprep.subr.mxu0 0.0
    %1685 = vmatpush2.msra.mxu0 0.0
    %1686 = vmatprep.subr.mxu0 0.0
    %1687 = vmatpush2.msra.mxu0 0.0
    %1688 = vmatprep.subr.mxu0 0.0
    %1689 = vmatpush2.msra.mxu0 0.0
    %1690 = vmatprep.subr.mxu0 0.0
    %1691 = vmatpush2.msra.mxu0 0.0
    %1692 = vmatprep.subr.mxu0 0.0
    %1693 = vmatpush2.msra.mxu0 0.0
    %1694 = vmatprep.subr.mxu0 0.0
    %1695 = vmatpush2.msra.mxu0 0.0
    %1696 = vmatprep.subr.mxu0 0.0
    %1697 = vmatpush2.msra.mxu0 0.0
    %1698 = vmatprep.subr.mxu0 0.0
    %1699 = vmatpush2.msra.mxu0 0.0
    %1700 = vmatprep.subr.mxu0 0.0
    %1701 = vmatpush2.msra.mxu0 0.0
    %1702 = vmatprep.subr.mxu0 0.0
    %1703 = vmatpush2.msra.mxu0 0.0
    %1704 = vmatprep.subr.mxu0 0.0
    %1705 = vmatpush2.msra.mxu0 0.0
    %1706 = vmatprep.mubr.f32.mxu0 0.0
    %1707 = vmatmul.mubr.f32.gmra.mxu0 %v1038
    %v1708 = vpop.f32.mrf.mxu0
    %v1709 = vadd.f32 %v252, %v1708
    %v1710 = vpop.f32.mrf.mxu0
    %1711 = vdwg.mxu0
    %v1712 = vmul.f32 %v1634, %v1709
    %v1713 = vadd.f32 %v1487, %v1712
    %v1714 = vtanh.pop %v1713
    %v1715 = vsub.f32 1.0, %v1641
    %v1716 = vmul.f32 %v1715, %v1714
    %v1717 = vmul.f32 %v1641, %v1036
    %v1718 = vadd.f32 %v1716, %v1717
    %v1720 = vsel %vm90, %v1718, 0
    %1722 = vmatprep.subr.mxu0 0.0
    %1723 = vmatpush1.msra.mxu0 0.0
    %1724 = vmatprep.subr.mxu0 0.0
    %1725 = vmatpush1.msra.mxu0 0.0
    %1726 = vmatprep.subr.mxu0 0.0
    %1727 = vmatpush1.msra.mxu0 0.0
    %1728 = vmatprep.subr.mxu0 0.0
    %1729 = vmatpush1.msra.mxu0 0.0
    %1730 = vmatprep.subr.mxu0 0.0
    %1731 = vmatpush1.msra.mxu0 0.0
    %1732 = vmatprep.subr.mxu0 0.0
    %1733 = vmatpush1.msra.mxu0 0.0
    %1734 = vmatprep.subr.mxu0 0.0
    %1735 = vmatpush1.msra.mxu0 0.0
    %1736 = vmatprep.subr.mxu0 0.0
    %1737 = vmatpush1.msra.mxu0 0.0
    %1738 = vmatprep.subr.mxu0 0.0
    %1739 = vmatpush1.msra.mxu0 0.0
    %1740 = vmatprep.subr.mxu0 0.0
    %1741 = vmatpush1.msra.mxu0 0.0
    %1742 = vmatprep.subr.mxu0 0.0
    %1743 = vmatpush1.msra.mxu0 0.0
    %1744 = vmatprep.subr.mxu0 0.0
    %1745 = vmatpush1.msra.mxu0 0.0
    %1746 = vmatprep.subr.mxu0 0.0
    %1747 = vmatpush1.msra.mxu0 %v59
    %1748 = vmatprep.subr.mxu0 0.0
    %1749 = vmatpush1.msra.mxu0 %v58
    %1750 = vmatprep.subr.mxu0 0.0
    %1751 = vmatpush1.msra.mxu0 %v57
    %1752 = vmatprep.subr.mxu0 0.0
    %1753 = vmatpush1.msra.mxu0 %v56
    %1754 = vmatprep.subr.mxu0 0.0
    %1755 = vmatpush2.msra.mxu0 0.0
    %1756 = vmatprep.subr.mxu0 0.0
    %1757 = vmatpush2.msra.mxu0 0.0
    %1758 = vmatprep.subr.mxu0 0.0
    %1759 = vmatpush2.msra.mxu0 0.0
    %1760 = vmatprep.subr.mxu0 0.0
    %1761 = vmatpush2.msra.mxu0 0.0
    %1762 = vmatprep.subr.mxu0 0.0
    %1763 = vmatpush2.msra.mxu0 0.0
    %1764 = vmatprep.subr.mxu0 0.0
    %1765 = vmatpush2.msra.mxu0 0.0
    %1766 = vmatprep.subr.mxu0 0.0
    %1767 = vmatpush2.msra.mxu0 0.0
    %1768 = vmatprep.subr.mxu0 0.0
    %1769 = vmatpush2.msra.mxu0 0.0
    %1770 = vmatprep.subr.mxu0 0.0
    %1771 = vmatpush2.msra.mxu0 0.0
    %1772 = vmatprep.subr.mxu0 0.0
    %1773 = vmatpush2.msra.mxu0 0.0
    %1774 = vmatprep.subr.mxu0 0.0
    %1775 = vmatpush2.msra.mxu0 0.0
    %1776 = vmatprep.subr.mxu0 0.0
    %1777 = vmatpush2.msra.mxu0 0.0
    %1778 = vmatprep.subr.mxu0 0.0
    %1779 = vmatpush2.msra.mxu0 0.0
    %1780 = vmatprep.subr.mxu0 0.0
    %1781 = vmatpush2.msra.mxu0 0.0
    %1782 = vmatprep.subr.mxu0 0.0
    %1783 = vmatpush2.msra.mxu0 0.0
    %1784 = vmatprep.subr.mxu0 0.0
    %1785 = vmatpush2.msra.mxu0 0.0
    %1786 = vmatprep.mubr.f32.mxu0 0.0
    %1787 = vmatmul.mubr.f32.gmra.mxu0 %v1720
    %v1788 = vpop.f32.mrf.mxu0
    %v1789 = vadd.f32 %v335, %v1788
    %v1790 = vpop.f32.mrf.mxu0
    %1791 = vdwg.mxu0
    %1792 = vmatprep.subr.mxu0 0.0
    %1793 = vmatpush1.msra.mxu0 0.0
    %1794 = vmatprep.subr.mxu0 0.0
    %1795 = vmatpush1.msra.mxu0 0.0
    %1796 = vmatprep.subr.mxu0 0.0
    %1797 = vmatpush1.msra.mxu0 0.0
    %1798 = vmatprep.subr.mxu0 0.0
    %1799 = vmatpush1.msra.mxu0 0.0
    %1800 = vmatprep.subr.mxu0 0.0
    %1801 = vmatpush1.msra.mxu0 0.0
    %1802 = vmatprep.subr.mxu0 0.0
    %1803 = vmatpush1.msra.mxu0 0.0
    %1804 = vmatprep.subr.mxu0 0.0
    %1805 = vmatpush1.msra.mxu0 0.0
    %1806 = vmatprep.subr.mxu0 0.0
    %1807 = vmatpush1.msra.mxu0 0.0
    %1808 = vmatprep.subr.mxu0 0.0
    %1809 = vmatpush1.msra.mxu0 0.0
    %1810 = vmatprep.subr.mxu0 0.0
    %1811 = vmatpush1.msra.mxu0 0.0
    %1812 = vmatprep.subr.mxu0 0.0
    %1813 = vmatpush1.msra.mxu0 0.0
    %1814 = vmatprep.subr.mxu0 0.0
    %1815 = vmatpush1.msra.mxu0 0.0
    %1816 = vmatprep.subr.mxu0 0.0
    %1817 = vmatpush1.msra.mxu0 %v63
    %1818 = vmatprep.subr.mxu0 0.0
    %1819 = vmatpush1.msra.mxu0 %v62
    %1820 = vmatprep.subr.mxu0 0.0
    %1821 = vmatpush1.msra.mxu0 %v61
    %1822 = vmatprep.subr.mxu0 0.0
    %1823 = vmatpush1.msra.mxu0 %v60
    %1824 = vmatprep.subr.mxu0 0.0
    %1825 = vmatpush2.msra.mxu0 0.0
    %1826 = vmatprep.subr.mxu0 0.0
    %1827 = vmatpush2.msra.mxu0 0.0
    %1828 = vmatprep.subr.mxu0 0.0
    %1829 = vmatpush2.msra.mxu0 0.0
    %1830 = vmatprep.subr.mxu0 0.0
    %1831 = vmatpush2.msra.mxu0 0.0
    %1832 = vmatprep.subr.mxu0 0.0
    %1833 = vmatpush2.msra.mxu0 0.0
    %1834 = vmatprep.subr.mxu0 0.0
    %1835 = vmatpush2.msra.mxu0 0.0
    %1836 = vmatprep.subr.mxu0 0.0
    %1837 = vmatpush2.msra.mxu0 0.0
    %1838 = vmatprep.subr.mxu0 0.0
    %1839 = vmatpush2.msra.mxu0 0.0
    %1840 = vmatprep.subr.mxu0 0.0
    %1841 = vmatpush2.msra.mxu0 0.0
    %1842 = vmatprep.subr.mxu0 0.0
    %1843 = vmatpush2.msra.mxu0 0.0
    %1844 = vmatprep.subr.mxu0 0.0
    %1845 = vmatpush2.msra.mxu0 0.0
    %1846 = vmatprep.subr.mxu0 0.0
    %1847 = vmatpush2.msra.mxu0 0.0
    %1848 = vmatprep.subr.mxu0 0.0
    %1849 = vmatpush2.msra.mxu0 0.0
    %1850 = vmatprep.subr.mxu0 0.0
    %1851 = vmatpush2.msra.mxu0 0.0
    %1852 = vmatprep.subr.mxu0 0.0
    %1853 = vmatpush2.msra.mxu0 0.0
    %1854 = vmatprep.subr.mxu0 0.0
    %1855 = vmatpush2.msra.mxu0 0.0
    %1856 = vmatprep.mubr.f32.mxu0 0.0
    %1857 = vmatmul.mubr.f32.gmra.mxu0 %v1720
    %v1858 = vpop.f32.mrf.mxu0
    %v1859 = vadd.f32 %v414, %v1858
    %v1860 = vpop.f32.mrf.mxu0
    %1861 = vdwg.mxu0
    %1862 = vmatprep.subr.mxu0 0.0
    %1863 = vmatpush1.msra.mxu0 0.0
    %1864 = vmatprep.subr.mxu0 0.0
    %1865 = vmatpush1.msra.mxu0 0.0
    %1866 = vmatprep.subr.mxu0 0.0
    %1867 = vmatpush1.msra.mxu0 0.0
    %1868 = vmatprep.subr.mxu0 0.0
    %1869 = vmatpush1.msra.mxu0 0.0
    %1870 = vmatprep.subr.mxu0 0.0
    %1871 = vmatpush1.msra.mxu0 0.0
    %1872 = vmatprep.subr.mxu0 0.0
    %1873 = vmatpush1.msra.mxu0 0.0
    %1874 = vmatprep.subr.mxu0 0.0
    %1875 = vmatpush1.msra.mxu0 0.0
    %1876 = vmatprep.subr.mxu0 0.0
    %1877 = vmatpush1.msra.mxu0 0.0
    %1878 = vmatprep.subr.mxu0 0.0
    %1879 = vmatpush1.msra.mxu0 0.0
    %1880 = vmatprep.subr.mxu0 0.0
    %1881 = vmatpush1.msra.mxu0 0.0
    %1882 = vmatprep.subr.mxu0 0.0
    %1883 = vmatpush1.msra.mxu0 0.0
    %1884 = vmatprep.subr.mxu0 0.0
    %1885 = vmatpush1.msra.mxu0 0.0
    %1886 = vmatprep.subr.mxu0 0.0
    %1887 = vmatpush1.msra.mxu0 %v67
    %1888 = vmatprep.subr.mxu0 0.0
    %1889 = vmatpush1.msra.mxu0 %v66
    %1890 = vmatprep.subr.mxu0 0.0
    %1891 = vmatpush1.msra.mxu0 %v65
    %1892 = vmatprep.subr.mxu0 0.0
    %1893 = vmatpush1.msra.mxu0 %v64
    %1894 = vmatprep.subr.mxu0 0.0
    %1895 = vmatpush2.msra.mxu0 0.0
    %1896 = vmatprep.subr.mxu0 0.0
    %1897 = vmatpush2.msra.mxu0 0.0
    %1898 = vmatprep.subr.mxu0 0.0
    %1899 = vmatpush2.msra.mxu0 0.0
    %1900 = vmatprep.subr.mxu0 0.0
    %1901 = vmatpush2.msra.mxu0 0.0
    %1902 = vmatprep.subr.mxu0 0.0
    %1903 = vmatpush2.msra.mxu0 0.0
    %1904 = vmatprep.subr.mxu0 0.0
    %1905 = vmatpush2.msra.mxu0 0.0
    %1906 = vmatprep.subr.mxu0 0.0
    %1907 = vmatpush2.msra.mxu0 0.0
    %1908 = vmatprep.subr.mxu0 0.0
    %1909 = vmatpush2.msra.mxu0 0.0
    %1910 = vmatprep.subr.mxu0 0.0
    %1911 = vmatpush2.msra.mxu0 0.0
    %1912 = vmatprep.subr.mxu0 0.0
    %1913 = vmatpush2.msra.mxu0 0.0
    %1914 = vmatprep.subr.mxu0 0.0
    %1915 = vmatpush2.msra.mxu0 0.0
    %1916 = vmatprep.subr.mxu0 0.0
    %1917 = vmatpush2.msra.mxu0 0.0
    %1918 = vmatprep.subr.mxu0 0.0
    %1919 = vmatpush2.msra.mxu0 0.0
    %1920 = vmatprep.subr.mxu0 0.0
    %1921 = vmatpush2.msra.mxu0 0.0
    %1922 = vmatprep.subr.mxu0 0.0
    %1923 = vmatpush2.msra.mxu0 0.0
    %1924 = vmatprep.subr.mxu0 0.0
    %1925 = vmatpush2.msra.mxu0 0.0
    %1926 = vmatprep.mubr.f32.mxu0 0.0
    %1927 = vmatmul.mubr.f32.gmra.mxu0 %v1720
    %v1928 = vpop.f32.mrf.mxu0
    %v1929 = vadd.f32 %v490, %v1928
    %v1930 = vpop.f32.mrf.mxu0
    %1931 = vdwg.mxu0
    %v1933 = vsel %vm90, %v1483, 0
    %1935 = vmatprep.subr.mxu0 0.0
    %1936 = vmatpush1.msra.mxu0 0.0
    %1937 = vmatprep.subr.mxu0 0.0
    %1938 = vmatpush1.msra.mxu0 0.0
    %1939 = vmatprep.subr.mxu0 0.0
    %1940 = vmatpush1.msra.mxu0 0.0
    %1941 = vmatprep.subr.mxu0 0.0
    %1942 = vmatpush1.msra.mxu0 0.0
    %1943 = vmatprep.subr.mxu0 0.0
    %1944 = vmatpush1.msra.mxu0 0.0
    %1945 = vmatprep.subr.mxu0 0.0
    %1946 = vmatpush1.msra.mxu0 0.0
    %1947 = vmatprep.subr.mxu0 0.0
    %1948 = vmatpush1.msra.mxu0 0.0
    %1949 = vmatprep.subr.mxu0 0.0
    %1950 = vmatpush1.msra.mxu0 0.0
    %1951 = vmatprep.subr.mxu0 0.0
    %1952 = vmatpush1.msra.mxu0 0.0
    %1953 = vmatprep.subr.mxu0 0.0
    %1954 = vmatpush1.msra.mxu0 0.0
    %1955 = vmatprep.subr.mxu0 0.0
    %1956 = vmatpush1.msra.mxu0 0.0
    %1957 = vmatprep.subr.mxu0 0.0
    %1958 = vmatpush1.msra.mxu0 0.0
    %1959 = vmatprep.subr.mxu0 0.0
    %1960 = vmatpush1.msra.mxu0 %v74
    %1961 = vmatprep.subr.mxu0 0.0
    %1962 = vmatpush1.msra.mxu0 %v73
    %1963 = vmatprep.subr.mxu0 0.0
    %1964 = vmatpush1.msra.mxu0 %v72
    %1965 = vmatprep.subr.mxu0 0.0
    %1966 = vmatpush1.msra.mxu0 %v71
    %1967 = vmatprep.subr.mxu0 0.0
    %1968 = vmatpush2.msra.mxu0 0.0
    %1969 = vmatprep.subr.mxu0 0.0
    %1970 = vmatpush2.msra.mxu0 0.0
    %1971 = vmatprep.subr.mxu0 0.0
    %1972 = vmatpush2.msra.mxu0 0.0
    %1973 = vmatprep.subr.mxu0 0.0
    %1974 = vmatpush2.msra.mxu0 0.0
    %1975 = vmatprep.subr.mxu0 0.0
    %1976 = vmatpush2.msra.mxu0 0.0
    %1977 = vmatprep.subr.mxu0 0.0
    %1978 = vmatpush2.msra.mxu0 0.0
    %1979 = vmatprep.subr.mxu0 0.0
    %1980 = vmatpush2.msra.mxu0 0.0
    %1981 = vmatprep.subr.mxu0 0.0
    %1982 = vmatpush2.msra.mxu0 0.0
    %1983 = vmatprep.subr.mxu0 0.0
    %1984 = vmatpush2.msra.mxu0 0.0
    %1985 = vmatprep.subr.mxu0 0.0
    %1986 = vmatpush2.msra.mxu0 0.0
    %1987 = vmatprep.subr.mxu0 0.0
    %1988 = vmatpush2.msra.mxu0 0.0
    %1989 = vmatprep.subr.mxu0 0.0
    %1990 = vmatpush2.msra.mxu0 0.0
    %1991 = vmatprep.subr.mxu0 0.0
    %1992 = vmatpush2.msra.mxu0 0.0
    %1993 = vmatprep.subr.mxu0 0.0
    %1994 = vmatpush2.msra.mxu0 0.0
    %1995 = vmatprep.subr.mxu0 0.0
    %1996 = vmatpush2.msra.mxu0 0.0
    %1997 = vmatprep.subr.mxu0 0.0
    %1998 = vmatpush2.msra.mxu0 0.0
    %1999 = vmatprep.mubr.f32.mxu0 0.0
    %2000 = vmatmul.mubr.f32.gmra.mxu0 %v1933
    %v2001 = vpop.f32.mrf.mxu0
    %v2002 = vadd.f32 0.0, %v2001
    %v2003 = vpop.f32.mrf.mxu0
    %2004 = vdwg.mxu0
    %2005 = vmatprep.subr.mxu0 0.0
    %2006 = vmatpush1.msra.mxu0 0.0
    %2007 = vmatprep.subr.mxu0 0.0
    %2008 = vmatpush1.msra.mxu0 0.0
    %2009 = vmatprep.subr.mxu0 0.0
    %2010 = vmatpush1.msra.mxu0 0.0
    %2011 = vmatprep.subr.mxu0 0.0
    %2012 = vmatpush1.msra.mxu0 0.0
    %2013 = vmatprep.subr.mxu0 0.0
    %2014 = vmatpush1.msra.mxu0 0.0
    %2015 = vmatprep.subr.mxu0 0.0
    %2016 = vmatpush1.msra.mxu0 0.0
    %2017 = vmatprep.subr.mxu0 0.0
    %2018 = vmatpush1.msra.mxu0 0.0
    %2019 = vmatprep.subr.mxu0 0.0
    %2020 = vmatpush1.msra.mxu0 0.0
    %2021 = vmatprep.subr.mxu0 0.0
    %2022 = vmatpush1.msra.mxu0 0.0
    %2023 = vmatprep.subr.mxu0 0.0
    %2024 = vmatpush1.msra.mxu0 0.0
    %2025 = vmatprep.subr.mxu0 0.0
    %2026 = vmatpush1.msra.mxu0 0.0
    %2027 = vmatprep.subr.mxu0 0.0
    %2028 = vmatpush1.msra.mxu0 0.0
    %2029 = vmatprep.subr.mxu0 0.0
    %2030 = vmatpush1.msra.mxu0 %v78
    %2031 = vmatprep.subr.mxu0 0.0
    %2032 = vmatpush1.msra.mxu0 %v77
    %2033 = vmatprep.subr.mxu0 0.0
    %2034 = vmatpush1.msra.mxu0 %v76
    %2035 = vmatprep.subr.mxu0 0.0
    %2036 = vmatpush1.msra.mxu0 %v75
    %2037 = vmatprep.subr.mxu0 0.0
    %2038 = vmatpush2.msra.mxu0 0.0
    %2039 = vmatprep.subr.mxu0 0.0
    %2040 = vmatpush2.msra.mxu0 0.0
    %2041 = vmatprep.subr.mxu0 0.0
    %2042 = vmatpush2.msra.mxu0 0.0
    %2043 = vmatprep.subr.mxu0 0.0
    %2044 = vmatpush2.msra.mxu0 0.0
    %2045 = vmatprep.subr.mxu0 0.0
    %2046 = vmatpush2.msra.mxu0 0.0
    %2047 = vmatprep.subr.mxu0 0.0
    %2048 = vmatpush2.msra.mxu0 0.0
    %2049 = vmatprep.subr.mxu0 0.0
    %2050 = vmatpush2.msra.mxu0 0.0
    %2051 = vmatprep.subr.mxu0 0.0
    %2052 = vmatpush2.msra.mxu0 0.0
    %2053 = vmatprep.subr.mxu0 0.0
    %2054 = vmatpush2.msra.mxu0 0.0
    %2055 = vmatprep.subr.mxu0 0.0
    %2056 = vmatpush2.msra.mxu0 0.0
    %2057 = vmatprep.subr.mxu0 0.0
    %2058 = vmatpush2.msra.mxu0 0.0
    %2059 = vmatprep.subr.mxu0 0.0
    %2060 = vmatpush2.msra.mxu0 0.0
    %2061 = vmatprep.subr.mxu0 0.0
    %2062 = vmatpush2.msra.mxu0 0.0
    %2063 = vmatprep.subr.mxu0 0.0
    %2064 = vmatpush2.msra.mxu0 0.0
    %2065 = vmatprep.subr.mxu0 0.0
    %2066 = vmatpush2.msra.mxu0 0.0
    %2067 = vmatprep.subr.mxu0 0.0
    %2068 = vmatpush2.msra.mxu0 0.0
    %2069 = vmatprep.mubr.f32.mxu0 0.0
    %2070 = vmatmul.mubr.f32.gmra.mxu0 %v1933
    %v2071 = vpop.f32.mrf.mxu0
    %v2072 = vadd.f32 0.0, %v2071
    %v2073 = vpop.f32.mrf.mxu0
    %2074 = vdwg.mxu0
    %v2075 = vadd.f32 %v1789, %v2002
    %v2076 = vxor.u32 %v2075, 2147483648
    %v2077 = vmul.f32 %v2076, 1.442695
    %v2078 = vpow.pop %v2077
    %v2079 = vadd.f32 %v2078, 1.0
    %v2080 = vrcp.pop %v2079
    %v2081 = vmul.f32 1.0, %v2080
    %v2082 = vadd.f32 %v1859, %v2072
    %v2083 = vxor.u32 %v2082, 2147483648
    %v2084 = vmul.f32 %v2083, 1.442695
    %v2085 = vpow.pop %v2084
    %v2086 = vadd.f32 %v2085, 1.0
    %v2087 = vrcp.pop %v2086
    %v2088 = vmul.f32 1.0, %v2087
    %2089 = vmatprep.subr.mxu0 0.0
    %2090 = vmatpush1.msra.mxu0 0.0
    %2091 = vmatprep.subr.mxu0 0.0
    %2092 = vmatpush1.msra.mxu0 0.0
    %2093 = vmatprep.subr.mxu0 0.0
    %2094 = vmatpush1.msra.mxu0 0.0
    %2095 = vmatprep.subr.mxu0 0.0
    %2096 = vmatpush1.msra.mxu0 0.0
    %2097 = vmatprep.subr.mxu0 0.0
    %2098 = vmatpush1.msra.mxu0 0.0
    %2099 = vmatprep.subr.mxu0 0.0
    %2100 = vmatpush1.msra.mxu0 0.0
    %2101 = vmatprep.subr.mxu0 0.0
    %2102 = vmatpush1.msra.mxu0 0.0
    %2103 = vmatprep.subr.mxu0 0.0
    %2104 = vmatpush1.msra.mxu0 0.0
    %2105 = vmatprep.subr.mxu0 0.0
    %2106 = vmatpush1.msra.mxu0 0.0
    %2107 = vmatprep.subr.mxu0 0.0
    %2108 = vmatpush1.msra.mxu0 0.0
    %2109 = vmatprep.subr.mxu0 0.0
    %2110 = vmatpush1.msra.mxu0 0.0
    %2111 = vmatprep.subr.mxu0 0.0
    %2112 = vmatpush1.msra.mxu0 0.0
    %2113 = vmatprep.subr.mxu0 0.0
    %2114 = vmatpush1.msra.mxu0 %v82
    %2115 = vmatprep.subr.mxu0 0.0
    %2116 = vmatpush1.msra.mxu0 %v81
    %2117 = vmatprep.subr.mxu0 0.0
    %2118 = vmatpush1.msra.mxu0 %v80
    %2119 = vmatprep.subr.mxu0 0.0
    %2120 = vmatpush1.msra.mxu0 %v79
    %2121 = vmatprep.subr.mxu0 0.0
    %2122 = vmatpush2.msra.mxu0 0.0
    %2123 = vmatprep.subr.mxu0 0.0
    %2124 = vmatpush2.msra.mxu0 0.0
    %2125 = vmatprep.subr.mxu0 0.0
    %2126 = vmatpush2.msra.mxu0 0.0
    %2127 = vmatprep.subr.mxu0 0.0
    %2128 = vmatpush2.msra.mxu0 0.0
    %2129 = vmatprep.subr.mxu0 0.0
    %2130 = vmatpush2.msra.mxu0 0.0
    %2131 = vmatprep.subr.mxu0 0.0
    %2132 = vmatpush2.msra.mxu0 0.0
    %2133 = vmatprep.subr.mxu0 0.0
    %2134 = vmatpush2.msra.mxu0 0.0
    %2135 = vmatprep.subr.mxu0 0.0
    %2136 = vmatpush2.msra.mxu0 0.0
    %2137 = vmatprep.subr.mxu0 0.0
    %2138 = vmatpush2.msra.mxu0 0.0
    %2139 = vmatprep.subr.mxu0 0.0
    %2140 = vmatpush2.msra.mxu0 0.0
    %2141 = vmatprep.subr.mxu0 0.0
    %2142 = vmatpush2.msra.mxu0 0.0
    %2143 = vmatprep.subr.mxu0 0.0
    %2144 = vmatpush2.msra.mxu0 0.0
    %2145 = vmatprep.subr.mxu0 0.0
    %2146 = vmatpush2.msra.mxu0 0.0
    %2147 = vmatprep.subr.mxu0 0.0
    %2148 = vmatpush2.msra.mxu0 0.0
    %2149 = vmatprep.subr.mxu0 0.0
    %2150 = vmatpush2.msra.mxu0 0.0
    %2151 = vmatprep.subr.mxu0 0.0
    %2152 = vmatpush2.msra.mxu0 0.0
    %2153 = vmatprep.mubr.f32.mxu0 0.0
    %2154 = vmatmul.mubr.f32.gmra.mxu0 %v1933
    %v2155 = vpop.f32.mrf.mxu0
    %v2156 = vadd.f32 %v723, %v2155
    %v2157 = vpop.f32.mrf.mxu0
    %2158 = vdwg.mxu0
    %v2159 = vmul.f32 %v2081, %v2156
    %v2160 = vadd.f32 %v1929, %v2159
    %v2161 = vtanh.pop %v2160
    %v2162 = vsub.f32 1.0, %v2088
    %v2163 = vmul.f32 %v2162, %v2161
    %v2164 = vmul.f32 %v2088, %v1483
    %v2165 = vadd.f32 %v2163, %v2164
    %s2166 = scalar_lea.vmem %s0, 18
    %v2167 = vld [vmem:[%s2166] sm:$0x3]
    %v2168 = vld [vmem:[%s2166 + $0x2] sm:$0x3]
    %v2169 = vld [vmem:[%s2166 + $0x4] sm:$0x3]
    %2170 = vmatprep.subr.mxu0 0.0
    %2171 = vmatpush1.msra.mxu0 0.0
    %2172 = vmatprep.subr.mxu0 0.0
    %2173 = vmatpush1.msra.mxu0 0.0
    %2174 = vmatprep.subr.mxu0 0.0
    %2175 = vmatpush1.msra.mxu0 0.0
    %2176 = vmatprep.subr.mxu0 0.0
    %2177 = vmatpush1.msra.mxu0 0.0
    %2178 = vmatprep.subr.mxu0 0.0
    %2179 = vmatpush1.msra.mxu0 0.0
    %2180 = vmatprep.subr.mxu0 0.0
    %2181 = vmatpush1.msra.mxu0 0.0
    %2182 = vmatprep.subr.mxu0 0.0
    %2183 = vmatpush1.msra.mxu0 0.0
    %2184 = vmatprep.subr.mxu0 0.0
    %2185 = vmatpush1.msra.mxu0 0.0
    %2186 = vmatprep.subr.mxu0 0.0
    %2187 = vmatpush1.msra.mxu0 0.0
    %2188 = vmatprep.subr.mxu0 0.0
    %2189 = vmatpush1.msra.mxu0 0.0
    %2190 = vmatprep.subr.mxu0 0.0
    %2191 = vmatpush1.msra.mxu0 0.0
    %2192 = vmatprep.subr.mxu0 0.0
    %2193 = vmatpush1.msra.mxu0 0.0
    %2194 = vmatprep.subr.mxu0 0.0
    %2195 = vmatpush1.msra.mxu0 %v46
    %2196 = vmatprep.subr.mxu0 0.0
    %2197 = vmatpush1.msra.mxu0 %v45
    %2198 = vmatprep.subr.mxu0 0.0
    %2199 = vmatpush1.msra.mxu0 %v44
    %2200 = vmatprep.subr.mxu0 0.0
    %2201 = vmatpush1.msra.mxu0 %v43
    %2202 = vmatprep.subr.mxu0 0.0
    %2203 = vmatpush2.msra.mxu0 0.0
    %2204 = vmatprep.subr.mxu0 0.0
    %2205 = vmatpush2.msra.mxu0 0.0
    %2206 = vmatprep.subr.mxu0 0.0
    %2207 = vmatpush2.msra.mxu0 0.0
    %2208 = vmatprep.subr.mxu0 0.0
    %2209 = vmatpush2.msra.mxu0 0.0
    %2210 = vmatprep.subr.mxu0 0.0
    %2211 = vmatpush2.msra.mxu0 0.0
    %2212 = vmatprep.subr.mxu0 0.0
    %2213 = vmatpush2.msra.mxu0 0.0
    %2214 = vmatprep.subr.mxu0 0.0
    %2215 = vmatpush2.msra.mxu0 0.0
    %2216 = vmatprep.subr.mxu0 0.0
    %2217 = vmatpush2.msra.mxu0 0.0
    %2218 = vmatprep.subr.mxu0 0.0
    %2219 = vmatpush2.msra.mxu0 0.0
    %2220 = vmatprep.subr.mxu0 0.0
    %2221 = vmatpush2.msra.mxu0 0.0
    %2222 = vmatprep.subr.mxu0 0.0
    %2223 = vmatpush2.msra.mxu0 0.0
    %2224 = vmatprep.subr.mxu0 0.0
    %2225 = vmatpush2.msra.mxu0 0.0
    %2226 = vmatprep.subr.mxu0 0.0
    %2227 = vmatpush2.msra.mxu0 0.0
    %2228 = vmatprep.subr.mxu0 0.0
    %2229 = vmatpush2.msra.mxu0 0.0
    %2230 = vmatprep.subr.mxu0 0.0
    %2231 = vmatpush2.msra.mxu0 0.0
    %2232 = vmatprep.subr.mxu0 0.0
    %2233 = vmatpush2.msra.mxu0 0.0
    %2234 = vmatprep.mubr.f32.mxu0 0.0
    %2235 = vmatmul.mubr.f32.gmra.mxu0 %v1720
    %v2236 = vpop.f32.mrf.mxu0
    %v2237 = vadd.f32 0.0, %v2236
    %v2238 = vpop.f32.mrf.mxu0
    %2239 = vdwg.mxu0
    %2240 = vmatprep.subr.mxu0 0.0
    %2241 = vmatpush1.msra.mxu0 0.0
    %2242 = vmatprep.subr.mxu0 0.0
    %2243 = vmatpush1.msra.mxu0 0.0
    %2244 = vmatprep.subr.mxu0 0.0
    %2245 = vmatpush1.msra.mxu0 0.0
    %2246 = vmatprep.subr.mxu0 0.0
    %2247 = vmatpush1.msra.mxu0 0.0
    %2248 = vmatprep.subr.mxu0 0.0
    %2249 = vmatpush1.msra.mxu0 0.0
    %2250 = vmatprep.subr.mxu0 0.0
    %2251 = vmatpush1.msra.mxu0 0.0
    %2252 = vmatprep.subr.mxu0 0.0
    %2253 = vmatpush1.msra.mxu0 0.0
    %2254 = vmatprep.subr.mxu0 0.0
    %2255 = vmatpush1.msra.mxu0 0.0
    %2256 = vmatprep.subr.mxu0 0.0
    %2257 = vmatpush1.msra.mxu0 0.0
    %2258 = vmatprep.subr.mxu0 0.0
    %2259 = vmatpush1.msra.mxu0 0.0
    %2260 = vmatprep.subr.mxu0 0.0
    %2261 = vmatpush1.msra.mxu0 0.0
    %2262 = vmatprep.subr.mxu0 0.0
    %2263 = vmatpush1.msra.mxu0 0.0
    %2264 = vmatprep.subr.mxu0 0.0
    %2265 = vmatpush1.msra.mxu0 %v50
    %2266 = vmatprep.subr.mxu0 0.0
    %2267 = vmatpush1.msra.mxu0 %v49
    %2268 = vmatprep.subr.mxu0 0.0
    %2269 = vmatpush1.msra.mxu0 %v48
    %2270 = vmatprep.subr.mxu0 0.0
    %2271 = vmatpush1.msra.mxu0 %v47
    %2272 = vmatprep.subr.mxu0 0.0
    %2273 = vmatpush2.msra.mxu0 0.0
    %2274 = vmatprep.subr.mxu0 0.0
    %2275 = vmatpush2.msra.mxu0 0.0
    %2276 = vmatprep.subr.mxu0 0.0
    %2277 = vmatpush2.msra.mxu0 0.0
    %2278 = vmatprep.subr.mxu0 0.0
    %2279 = vmatpush2.msra.mxu0 0.0
    %2280 = vmatprep.subr.mxu0 0.0
    %2281 = vmatpush2.msra.mxu0 0.0
    %2282 = vmatprep.subr.mxu0 0.0
    %2283 = vmatpush2.msra.mxu0 0.0
    %2284 = vmatprep.subr.mxu0 0.0
    %2285 = vmatpush2.msra.mxu0 0.0
    %2286 = vmatprep.subr.mxu0 0.0
    %2287 = vmatpush2.msra.mxu0 0.0
    %2288 = vmatprep.subr.mxu0 0.0
    %2289 = vmatpush2.msra.mxu0 0.0
    %2290 = vmatprep.subr.mxu0 0.0
    %2291 = vmatpush2.msra.mxu0 0.0
    %2292 = vmatprep.subr.mxu0 0.0
    %2293 = vmatpush2.msra.mxu0 0.0
    %2294 = vmatprep.subr.mxu0 0.0
    %2295 = vmatpush2.msra.mxu0 0.0
    %2296 = vmatprep.subr.mxu0 0.0
    %2297 = vmatpush2.msra.mxu0 0.0
    %2298 = vmatprep.subr.mxu0 0.0
    %2299 = vmatpush2.msra.mxu0 0.0
    %2300 = vmatprep.subr.mxu0 0.0
    %2301 = vmatpush2.msra.mxu0 0.0
    %2302 = vmatprep.subr.mxu0 0.0
    %2303 = vmatpush2.msra.mxu0 0.0
    %2304 = vmatprep.mubr.f32.mxu0 0.0
    %2305 = vmatmul.mubr.f32.gmra.mxu0 %v1720
    %v2306 = vpop.f32.mrf.mxu0
    %v2307 = vadd.f32 0.0, %v2306
    %v2308 = vpop.f32.mrf.mxu0
    %2309 = vdwg.mxu0
    %v2310 = vadd.f32 %v2167, %v2237
    %v2311 = vxor.u32 %v2310, 2147483648
    %v2312 = vmul.f32 %v2311, 1.442695
    %v2313 = vpow.pop %v2312
    %v2314 = vadd.f32 %v2313, 1.0
    %v2315 = vrcp.pop %v2314
    %v2316 = vmul.f32 1.0, %v2315
    %v2317 = vadd.f32 %v2168, %v2307
    %v2318 = vxor.u32 %v2317, 2147483648
    %v2319 = vmul.f32 %v2318, 1.442695
    %v2320 = vpow.pop %v2319
    %v2321 = vadd.f32 %v2320, 1.0
    %v2322 = vrcp.pop %v2321
    %v2323 = vmul.f32 1.0, %v2322
    %2324 = vmatprep.subr.mxu0 0.0
    %2325 = vmatpush1.msra.mxu0 0.0
    %2326 = vmatprep.subr.mxu0 0.0
    %2327 = vmatpush1.msra.mxu0 0.0
    %2328 = vmatprep.subr.mxu0 0.0
    %2329 = vmatpush1.msra.mxu0 0.0
    %2330 = vmatprep.subr.mxu0 0.0
    %2331 = vmatpush1.msra.mxu0 0.0
    %2332 = vmatprep.subr.mxu0 0.0
    %2333 = vmatpush1.msra.mxu0 0.0
    %2334 = vmatprep.subr.mxu0 0.0
    %2335 = vmatpush1.msra.mxu0 0.0
    %2336 = vmatprep.subr.mxu0 0.0
    %2337 = vmatpush1.msra.mxu0 0.0
    %2338 = vmatprep.subr.mxu0 0.0
    %2339 = vmatpush1.msra.mxu0 0.0
    %2340 = vmatprep.subr.mxu0 0.0
    %2341 = vmatpush1.msra.mxu0 0.0
    %2342 = vmatprep.subr.mxu0 0.0
    %2343 = vmatpush1.msra.mxu0 0.0
    %2344 = vmatprep.subr.mxu0 0.0
    %2345 = vmatpush1.msra.mxu0 0.0
    %2346 = vmatprep.subr.mxu0 0.0
    %2347 = vmatpush1.msra.mxu0 0.0
    %2348 = vmatprep.subr.mxu0 0.0
    %2349 = vmatpush1.msra.mxu0 %v54
    %2350 = vmatprep.subr.mxu0 0.0
    %2351 = vmatpush1.msra.mxu0 %v53
    %2352 = vmatprep.subr.mxu0 0.0
    %2353 = vmatpush1.msra.mxu0 %v52
    %2354 = vmatprep.subr.mxu0 0.0
    %2355 = vmatpush1.msra.mxu0 %v51
    %2356 = vmatprep.subr.mxu0 0.0
    %2357 = vmatpush2.msra.mxu0 0.0
    %2358 = vmatprep.subr.mxu0 0.0
    %2359 = vmatpush2.msra.mxu0 0.0
    %2360 = vmatprep.subr.mxu0 0.0
    %2361 = vmatpush2.msra.mxu0 0.0
    %2362 = vmatprep.subr.mxu0 0.0
    %2363 = vmatpush2.msra.mxu0 0.0
    %2364 = vmatprep.subr.mxu0 0.0
    %2365 = vmatpush2.msra.mxu0 0.0
    %2366 = vmatprep.subr.mxu0 0.0
    %2367 = vmatpush2.msra.mxu0 0.0
    %2368 = vmatprep.subr.mxu0 0.0
    %2369 = vmatpush2.msra.mxu0 0.0
    %2370 = vmatprep.subr.mxu0 0.0
    %2371 = vmatpush2.msra.mxu0 0.0
    %2372 = vmatprep.subr.mxu0 0.0
    %2373 = vmatpush2.msra.mxu0 0.0
    %2374 = vmatprep.subr.mxu0 0.0
    %2375 = vmatpush2.msra.mxu0 0.0
    %2376 = vmatprep.subr.mxu0 0.0
    %2377 = vmatpush2.msra.mxu0 0.0
    %2378 = vmatprep.subr.mxu0 0.0
    %2379 = vmatpush2.msra.mxu0 0.0
    %2380 = vmatprep.subr.mxu0 0.0
    %2381 = vmatpush2.msra.mxu0 0.0
    %2382 = vmatprep.subr.mxu0 0.0
    %2383 = vmatpush2.msra.mxu0 0.0
    %2384 = vmatprep.subr.mxu0 0.0
    %2385 = vmatpush2.msra.mxu0 0.0
    %2386 = vmatprep.subr.mxu0 0.0
    %2387 = vmatpush2.msra.mxu0 0.0
    %2388 = vmatprep.mubr.f32.mxu0 0.0
    %2389 = vmatmul.mubr.f32.gmra.mxu0 %v1720
    %v2390 = vpop.f32.mrf.mxu0
    %v2391 = vadd.f32 %v252, %v2390
    %v2392 = vpop.f32.mrf.mxu0
    %2393 = vdwg.mxu0
    %v2394 = vmul.f32 %v2316, %v2391
    %v2395 = vadd.f32 %v2169, %v2394
    %v2396 = vtanh.pop %v2395
    %v2397 = vsub.f32 1.0, %v2323
    %v2398 = vmul.f32 %v2397, %v2396
    %v2399 = vmul.f32 %v2323, %v1718
    %v2400 = vadd.f32 %v2398, %v2399
    %v2402 = vsel %vm90, %v2400, 0
    %2404 = vmatprep.subr.mxu0 0.0
    %2405 = vmatpush1.msra.mxu0 0.0
    %2406 = vmatprep.subr.mxu0 0.0
    %2407 = vmatpush1.msra.mxu0 0.0
    %2408 = vmatprep.subr.mxu0 0.0
    %2409 = vmatpush1.msra.mxu0 0.0
    %2410 = vmatprep.subr.mxu0 0.0
    %2411 = vmatpush1.msra.mxu0 0.0
    %2412 = vmatprep.subr.mxu0 0.0
    %2413 = vmatpush1.msra.mxu0 0.0
    %2414 = vmatprep.subr.mxu0 0.0
    %2415 = vmatpush1.msra.mxu0 0.0
    %2416 = vmatprep.subr.mxu0 0.0
    %2417 = vmatpush1.msra.mxu0 0.0
    %2418 = vmatprep.subr.mxu0 0.0
    %2419 = vmatpush1.msra.mxu0 0.0
    %2420 = vmatprep.subr.mxu0 0.0
    %2421 = vmatpush1.msra.mxu0 0.0
    %2422 = vmatprep.subr.mxu0 0.0
    %2423 = vmatpush1.msra.mxu0 0.0
    %2424 = vmatprep.subr.mxu0 0.0
    %2425 = vmatpush1.msra.mxu0 0.0
    %2426 = vmatprep.subr.mxu0 0.0
    %2427 = vmatpush1.msra.mxu0 0.0
    %2428 = vmatprep.subr.mxu0 0.0
    %2429 = vmatpush1.msra.mxu0 %v59
    %2430 = vmatprep.subr.mxu0 0.0
    %2431 = vmatpush1.msra.mxu0 %v58
    %2432 = vmatprep.subr.mxu0 0.0
    %2433 = vmatpush1.msra.mxu0 %v57
    %2434 = vmatprep.subr.mxu0 0.0
    %2435 = vmatpush1.msra.mxu0 %v56
    %2436 = vmatprep.subr.mxu0 0.0
    %2437 = vmatpush2.msra.mxu0 0.0
    %2438 = vmatprep.subr.mxu0 0.0
    %2439 = vmatpush2.msra.mxu0 0.0
    %2440 = vmatprep.subr.mxu0 0.0
    %2441 = vmatpush2.msra.mxu0 0.0
    %2442 = vmatprep.subr.mxu0 0.0
    %2443 = vmatpush2.msra.mxu0 0.0
    %2444 = vmatprep.subr.mxu0 0.0
    %2445 = vmatpush2.msra.mxu0 0.0
    %2446 = vmatprep.subr.mxu0 0.0
    %2447 = vmatpush2.msra.mxu0 0.0
    %2448 = vmatprep.subr.mxu0 0.0
    %2449 = vmatpush2.msra.mxu0 0.0
    %2450 = vmatprep.subr.mxu0 0.0
    %2451 = vmatpush2.msra.mxu0 0.0
    %2452 = vmatprep.subr.mxu0 0.0
    %2453 = vmatpush2.msra.mxu0 0.0
    %2454 = vmatprep.subr.mxu0 0.0
    %2455 = vmatpush2.msra.mxu0 0.0
    %2456 = vmatprep.subr.mxu0 0.0
    %2457 = vmatpush2.msra.mxu0 0.0
    %2458 = vmatprep.subr.mxu0 0.0
    %2459 = vmatpush2.msra.mxu0 0.0
    %2460 = vmatprep.subr.mxu0 0.0
    %2461 = vmatpush2.msra.mxu0 0.0
    %2462 = vmatprep.subr.mxu0 0.0
    %2463 = vmatpush2.msra.mxu0 0.0
    %2464 = vmatprep.subr.mxu0 0.0
    %2465 = vmatpush2.msra.mxu0 0.0
    %2466 = vmatprep.subr.mxu0 0.0
    %2467 = vmatpush2.msra.mxu0 0.0
    %2468 = vmatprep.mubr.f32.mxu0 0.0
    %2469 = vmatmul.mubr.f32.gmra.mxu0 %v2402
    %v2470 = vpop.f32.mrf.mxu0
    %v2471 = vadd.f32 %v335, %v2470
    %v2472 = vpop.f32.mrf.mxu0
    %2473 = vdwg.mxu0
    %2474 = vmatprep.subr.mxu0 0.0
    %2475 = vmatpush1.msra.mxu0 0.0
    %2476 = vmatprep.subr.mxu0 0.0
    %2477 = vmatpush1.msra.mxu0 0.0
    %2478 = vmatprep.subr.mxu0 0.0
    %2479 = vmatpush1.msra.mxu0 0.0
    %2480 = vmatprep.subr.mxu0 0.0
    %2481 = vmatpush1.msra.mxu0 0.0
    %2482 = vmatprep.subr.mxu0 0.0
    %2483 = vmatpush1.msra.mxu0 0.0
    %2484 = vmatprep.subr.mxu0 0.0
    %2485 = vmatpush1.msra.mxu0 0.0
    %2486 = vmatprep.subr.mxu0 0.0
    %2487 = vmatpush1.msra.mxu0 0.0
    %2488 = vmatprep.subr.mxu0 0.0
    %2489 = vmatpush1.msra.mxu0 0.0
    %2490 = vmatprep.subr.mxu0 0.0
    %2491 = vmatpush1.msra.mxu0 0.0
    %2492 = vmatprep.subr.mxu0 0.0
    %2493 = vmatpush1.msra.mxu0 0.0
    %2494 = vmatprep.subr.mxu0 0.0
    %2495 = vmatpush1.msra.mxu0 0.0
    %2496 = vmatprep.subr.mxu0 0.0
    %2497 = vmatpush1.msra.mxu0 0.0
    %2498 = vmatprep.subr.mxu0 0.0
    %2499 = vmatpush1.msra.mxu0 %v63
    %2500 = vmatprep.subr.mxu0 0.0
    %2501 = vmatpush1.msra.mxu0 %v62
    %2502 = vmatprep.subr.mxu0 0.0
    %2503 = vmatpush1.msra.mxu0 %v61
    %2504 = vmatprep.subr.mxu0 0.0
    %2505 = vmatpush1.msra.mxu0 %v60
    %2506 = vmatprep.subr.mxu0 0.0
    %2507 = vmatpush2.msra.mxu0 0.0
    %2508 = vmatprep.subr.mxu0 0.0
    %2509 = vmatpush2.msra.mxu0 0.0
    %2510 = vmatprep.subr.mxu0 0.0
    %2511 = vmatpush2.msra.mxu0 0.0
    %2512 = vmatprep.subr.mxu0 0.0
    %2513 = vmatpush2.msra.mxu0 0.0
    %2514 = vmatprep.subr.mxu0 0.0
    %2515 = vmatpush2.msra.mxu0 0.0
    %2516 = vmatprep.subr.mxu0 0.0
    %2517 = vmatpush2.msra.mxu0 0.0
    %2518 = vmatprep.subr.mxu0 0.0
    %2519 = vmatpush2.msra.mxu0 0.0
    %2520 = vmatprep.subr.mxu0 0.0
    %2521 = vmatpush2.msra.mxu0 0.0
    %2522 = vmatprep.subr.mxu0 0.0
    %2523 = vmatpush2.msra.mxu0 0.0
    %2524 = vmatprep.subr.mxu0 0.0
    %2525 = vmatpush2.msra.mxu0 0.0
    %2526 = vmatprep.subr.mxu0 0.0
    %2527 = vmatpush2.msra.mxu0 0.0
    %2528 = vmatprep.subr.mxu0 0.0
    %2529 = vmatpush2.msra.mxu0 0.0
    %2530 = vmatprep.subr.mxu0 0.0
    %2531 = vmatpush2.msra.mxu0 0.0
    %2532 = vmatprep.subr.mxu0 0.0
    %2533 = vmatpush2.msra.mxu0 0.0
    %2534 = vmatprep.subr.mxu0 0.0
    %2535 = vmatpush2.msra.mxu0 0.0
    %2536 = vmatprep.subr.mxu0 0.0
    %2537 = vmatpush2.msra.mxu0 0.0
    %2538 = vmatprep.mubr.f32.mxu0 0.0
    %2539 = vmatmul.mubr.f32.gmra.mxu0 %v2402
    %v2540 = vpop.f32.mrf.mxu0
    %v2541 = vadd.f32 %v414, %v2540
    %v2542 = vpop.f32.mrf.mxu0
    %2543 = vdwg.mxu0
    %2544 = vmatprep.subr.mxu0 0.0
    %2545 = vmatpush1.msra.mxu0 0.0
    %2546 = vmatprep.subr.mxu0 0.0
    %2547 = vmatpush1.msra.mxu0 0.0
    %2548 = vmatprep.subr.mxu0 0.0
    %2549 = vmatpush1.msra.mxu0 0.0
    %2550 = vmatprep.subr.mxu0 0.0
    %2551 = vmatpush1.msra.mxu0 0.0
    %2552 = vmatprep.subr.mxu0 0.0
    %2553 = vmatpush1.msra.mxu0 0.0
    %2554 = vmatprep.subr.mxu0 0.0
    %2555 = vmatpush1.msra.mxu0 0.0
    %2556 = vmatprep.subr.mxu0 0.0
    %2557 = vmatpush1.msra.mxu0 0.0
    %2558 = vmatprep.subr.mxu0 0.0
    %2559 = vmatpush1.msra.mxu0 0.0
    %2560 = vmatprep.subr.mxu0 0.0
    %2561 = vmatpush1.msra.mxu0 0.0
    %2562 = vmatprep.subr.mxu0 0.0
    %2563 = vmatpush1.msra.mxu0 0.0
    %2564 = vmatprep.subr.mxu0 0.0
    %2565 = vmatpush1.msra.mxu0 0.0
    %2566 = vmatprep.subr.mxu0 0.0
    %2567 = vmatpush1.msra.mxu0 0.0
    %2568 = vmatprep.subr.mxu0 0.0
    %2569 = vmatpush1.msra.mxu0 %v67
    %2570 = vmatprep.subr.mxu0 0.0
    %2571 = vmatpush1.msra.mxu0 %v66
    %2572 = vmatprep.subr.mxu0 0.0
    %2573 = vmatpush1.msra.mxu0 %v65
    %2574 = vmatprep.subr.mxu0 0.0
    %2575 = vmatpush1.msra.mxu0 %v64
    %2576 = vmatprep.subr.mxu0 0.0
    %2577 = vmatpush2.msra.mxu0 0.0
    %2578 = vmatprep.subr.mxu0 0.0
    %2579 = vmatpush2.msra.mxu0 0.0
    %2580 = vmatprep.subr.mxu0 0.0
    %2581 = vmatpush2.msra.mxu0 0.0
    %2582 = vmatprep.subr.mxu0 0.0
    %2583 = vmatpush2.msra.mxu0 0.0
    %2584 = vmatprep.subr.mxu0 0.0
    %2585 = vmatpush2.msra.mxu0 0.0
    %2586 = vmatprep.subr.mxu0 0.0
    %2587 = vmatpush2.msra.mxu0 0.0
    %2588 = vmatprep.subr.mxu0 0.0
    %2589 = vmatpush2.msra.mxu0 0.0
    %2590 = vmatprep.subr.mxu0 0.0
    %2591 = vmatpush2.msra.mxu0 0.0
    %2592 = vmatprep.subr.mxu0 0.0
    %2593 = vmatpush2.msra.mxu0 0.0
    %2594 = vmatprep.subr.mxu0 0.0
    %2595 = vmatpush2.msra.mxu0 0.0
    %2596 = vmatprep.subr.mxu0 0.0
    %2597 = vmatpush2.msra.mxu0 0.0
    %2598 = vmatprep.subr.mxu0 0.0
    %2599 = vmatpush2.msra.mxu0 0.0
    %2600 = vmatprep.subr.mxu0 0.0
    %2601 = vmatpush2.msra.mxu0 0.0
    %2602 = vmatprep.subr.mxu0 0.0
    %2603 = vmatpush2.msra.mxu0 0.0
    %2604 = vmatprep.subr.mxu0 0.0
    %2605 = vmatpush2.msra.mxu0 0.0
    %2606 = vmatprep.subr.mxu0 0.0
    %2607 = vmatpush2.msra.mxu0 0.0
    %2608 = vmatprep.mubr.f32.mxu0 0.0
    %2609 = vmatmul.mubr.f32.gmra.mxu0 %v2402
    %v2610 = vpop.f32.mrf.mxu0
    %v2611 = vadd.f32 %v490, %v2610
    %v2612 = vpop.f32.mrf.mxu0
    %2613 = vdwg.mxu0
    %v2615 = vsel %vm90, %v2165, 0
    %2617 = vmatprep.subr.mxu0 0.0
    %2618 = vmatpush1.msra.mxu0 0.0
    %2619 = vmatprep.subr.mxu0 0.0
    %2620 = vmatpush1.msra.mxu0 0.0
    %2621 = vmatprep.subr.mxu0 0.0
    %2622 = vmatpush1.msra.mxu0 0.0
    %2623 = vmatprep.subr.mxu0 0.0
    %2624 = vmatpush1.msra.mxu0 0.0
    %2625 = vmatprep.subr.mxu0 0.0
    %2626 = vmatpush1.msra.mxu0 0.0
    %2627 = vmatprep.subr.mxu0 0.0
    %2628 = vmatpush1.msra.mxu0 0.0
    %2629 = vmatprep.subr.mxu0 0.0
    %2630 = vmatpush1.msra.mxu0 0.0
    %2631 = vmatprep.subr.mxu0 0.0
    %2632 = vmatpush1.msra.mxu0 0.0
    %2633 = vmatprep.subr.mxu0 0.0
    %2634 = vmatpush1.msra.mxu0 0.0
    %2635 = vmatprep.subr.mxu0 0.0
    %2636 = vmatpush1.msra.mxu0 0.0
    %2637 = vmatprep.subr.mxu0 0.0
    %2638 = vmatpush1.msra.mxu0 0.0
    %2639 = vmatprep.subr.mxu0 0.0
    %2640 = vmatpush1.msra.mxu0 0.0
    %2641 = vmatprep.subr.mxu0 0.0
    %2642 = vmatpush1.msra.mxu0 %v74
    %2643 = vmatprep.subr.mxu0 0.0
    %2644 = vmatpush1.msra.mxu0 %v73
    %2645 = vmatprep.subr.mxu0 0.0
    %2646 = vmatpush1.msra.mxu0 %v72
    %2647 = vmatprep.subr.mxu0 0.0
    %2648 = vmatpush1.msra.mxu0 %v71
    %2649 = vmatprep.subr.mxu0 0.0
    %2650 = vmatpush2.msra.mxu0 0.0
    %2651 = vmatprep.subr.mxu0 0.0
    %2652 = vmatpush2.msra.mxu0 0.0
    %2653 = vmatprep.subr.mxu0 0.0
    %2654 = vmatpush2.msra.mxu0 0.0
    %2655 = vmatprep.subr.mxu0 0.0
    %2656 = vmatpush2.msra.mxu0 0.0
    %2657 = vmatprep.subr.mxu0 0.0
    %2658 = vmatpush2.msra.mxu0 0.0
    %2659 = vmatprep.subr.mxu0 0.0
    %2660 = vmatpush2.msra.mxu0 0.0
    %2661 = vmatprep.subr.mxu0 0.0
    %2662 = vmatpush2.msra.mxu0 0.0
    %2663 = vmatprep.subr.mxu0 0.0
    %2664 = vmatpush2.msra.mxu0 0.0
    %2665 = vmatprep.subr.mxu0 0.0
    %2666 = vmatpush2.msra.mxu0 0.0
    %2667 = vmatprep.subr.mxu0 0.0
    %2668 = vmatpush2.msra.mxu0 0.0
    %2669 = vmatprep.subr.mxu0 0.0
    %2670 = vmatpush2.msra.mxu0 0.0
    %2671 = vmatprep.subr.mxu0 0.0
    %2672 = vmatpush2.msra.mxu0 0.0
    %2673 = vmatprep.subr.mxu0 0.0
    %2674 = vmatpush2.msra.mxu0 0.0
    %2675 = vmatprep.subr.mxu0 0.0
    %2676 = vmatpush2.msra.mxu0 0.0
    %2677 = vmatprep.subr.mxu0 0.0
    %2678 = vmatpush2.msra.mxu0 0.0
    %2679 = vmatprep.subr.mxu0 0.0
    %2680 = vmatpush2.msra.mxu0 0.0
    %2681 = vmatprep.mubr.f32.mxu0 0.0
    %2682 = vmatmul.mubr.f32.gmra.mxu0 %v2615
    %v2683 = vpop.f32.mrf.mxu0
    %v2684 = vadd.f32 0.0, %v2683
    %v2685 = vpop.f32.mrf.mxu0
    %2686 = vdwg.mxu0
    %2687 = vmatprep.subr.mxu0 0.0
    %2688 = vmatpush1.msra.mxu0 0.0
    %2689 = vmatprep.subr.mxu0 0.0
    %2690 = vmatpush1.msra.mxu0 0.0
    %2691 = vmatprep.subr.mxu0 0.0
    %2692 = vmatpush1.msra.mxu0 0.0
    %2693 = vmatprep.subr.mxu0 0.0
    %2694 = vmatpush1.msra.mxu0 0.0
    %2695 = vmatprep.subr.mxu0 0.0
    %2696 = vmatpush1.msra.mxu0 0.0
    %2697 = vmatprep.subr.mxu0 0.0
    %2698 = vmatpush1.msra.mxu0 0.0
    %2699 = vmatprep.subr.mxu0 0.0
    %2700 = vmatpush1.msra.mxu0 0.0
    %2701 = vmatprep.subr.mxu0 0.0
    %2702 = vmatpush1.msra.mxu0 0.0
    %2703 = vmatprep.subr.mxu0 0.0
    %2704 = vmatpush1.msra.mxu0 0.0
    %2705 = vmatprep.subr.mxu0 0.0
    %2706 = vmatpush1.msra.mxu0 0.0
    %2707 = vmatprep.subr.mxu0 0.0
    %2708 = vmatpush1.msra.mxu0 0.0
    %2709 = vmatprep.subr.mxu0 0.0
    %2710 = vmatpush1.msra.mxu0 0.0
    %2711 = vmatprep.subr.mxu0 0.0
    %2712 = vmatpush1.msra.mxu0 %v78
    %2713 = vmatprep.subr.mxu0 0.0
    %2714 = vmatpush1.msra.mxu0 %v77
    %2715 = vmatprep.subr.mxu0 0.0
    %2716 = vmatpush1.msra.mxu0 %v76
    %2717 = vmatprep.subr.mxu0 0.0
    %2718 = vmatpush1.msra.mxu0 %v75
    %2719 = vmatprep.subr.mxu0 0.0
    %2720 = vmatpush2.msra.mxu0 0.0
    %2721 = vmatprep.subr.mxu0 0.0
    %2722 = vmatpush2.msra.mxu0 0.0
    %2723 = vmatprep.subr.mxu0 0.0
    %2724 = vmatpush2.msra.mxu0 0.0
    %2725 = vmatprep.subr.mxu0 0.0
    %2726 = vmatpush2.msra.mxu0 0.0
    %2727 = vmatprep.subr.mxu0 0.0
    %2728 = vmatpush2.msra.mxu0 0.0
    %2729 = vmatprep.subr.mxu0 0.0
    %2730 = vmatpush2.msra.mxu0 0.0
    %2731 = vmatprep.subr.mxu0 0.0
    %2732 = vmatpush2.msra.mxu0 0.0
    %2733 = vmatprep.subr.mxu0 0.0
    %2734 = vmatpush2.msra.mxu0 0.0
    %2735 = vmatprep.subr.mxu0 0.0
    %2736 = vmatpush2.msra.mxu0 0.0
    %2737 = vmatprep.subr.mxu0 0.0
    %2738 = vmatpush2.msra.mxu0 0.0
    %2739 = vmatprep.subr.mxu0 0.0
    %2740 = vmatpush2.msra.mxu0 0.0
    %2741 = vmatprep.subr.mxu0 0.0
    %2742 = vmatpush2.msra.mxu0 0.0
    %2743 = vmatprep.subr.mxu0 0.0
    %2744 = vmatpush2.msra.mxu0 0.0
    %2745 = vmatprep.subr.mxu0 0.0
    %2746 = vmatpush2.msra.mxu0 0.0
    %2747 = vmatprep.subr.mxu0 0.0
    %2748 = vmatpush2.msra.mxu0 0.0
    %2749 = vmatprep.subr.mxu0 0.0
    %2750 = vmatpush2.msra.mxu0 0.0
    %2751 = vmatprep.mubr.f32.mxu0 0.0
    %2752 = vmatmul.mubr.f32.gmra.mxu0 %v2615
    %v2753 = vpop.f32.mrf.mxu0
    %v2754 = vadd.f32 0.0, %v2753
    %v2755 = vpop.f32.mrf.mxu0
    %2756 = vdwg.mxu0
    %v2757 = vadd.f32 %v2471, %v2684
    %v2758 = vxor.u32 %v2757, 2147483648
    %v2759 = vmul.f32 %v2758, 1.442695
    %v2760 = vpow.pop %v2759
    %v2761 = vadd.f32 %v2760, 1.0
    %v2762 = vrcp.pop %v2761
    %v2763 = vmul.f32 1.0, %v2762
    %v2764 = vadd.f32 %v2541, %v2754
    %v2765 = vxor.u32 %v2764, 2147483648
    %v2766 = vmul.f32 %v2765, 1.442695
    %v2767 = vpow.pop %v2766
    %v2768 = vadd.f32 %v2767, 1.0
    %v2769 = vrcp.pop %v2768
    %v2770 = vmul.f32 1.0, %v2769
    %2771 = vmatprep.subr.mxu0 0.0
    %2772 = vmatpush1.msra.mxu0 0.0
    %2773 = vmatprep.subr.mxu0 0.0
    %2774 = vmatpush1.msra.mxu0 0.0
    %2775 = vmatprep.subr.mxu0 0.0
    %2776 = vmatpush1.msra.mxu0 0.0
    %2777 = vmatprep.subr.mxu0 0.0
    %2778 = vmatpush1.msra.mxu0 0.0
    %2779 = vmatprep.subr.mxu0 0.0
    %2780 = vmatpush1.msra.mxu0 0.0
    %2781 = vmatprep.subr.mxu0 0.0
    %2782 = vmatpush1.msra.mxu0 0.0
    %2783 = vmatprep.subr.mxu0 0.0
    %2784 = vmatpush1.msra.mxu0 0.0
    %2785 = vmatprep.subr.mxu0 0.0
    %2786 = vmatpush1.msra.mxu0 0.0
    %2787 = vmatprep.subr.mxu0 0.0
    %2788 = vmatpush1.msra.mxu0 0.0
    %2789 = vmatprep.subr.mxu0 0.0
    %2790 = vmatpush1.msra.mxu0 0.0
    %2791 = vmatprep.subr.mxu0 0.0
    %2792 = vmatpush1.msra.mxu0 0.0
    %2793 = vmatprep.subr.mxu0 0.0
    %2794 = vmatpush1.msra.mxu0 0.0
    %2795 = vmatprep.subr.mxu0 0.0
    %2796 = vmatpush1.msra.mxu0 %v82
    %2797 = vmatprep.subr.mxu0 0.0
    %2798 = vmatpush1.msra.mxu0 %v81
    %2799 = vmatprep.subr.mxu0 0.0
    %2800 = vmatpush1.msra.mxu0 %v80
    %2801 = vmatprep.subr.mxu0 0.0
    %2802 = vmatpush1.msra.mxu0 %v79
    %2803 = vmatprep.subr.mxu0 0.0
    %2804 = vmatpush2.msra.mxu0 0.0
    %2805 = vmatprep.subr.mxu0 0.0
    %2806 = vmatpush2.msra.mxu0 0.0
    %2807 = vmatprep.subr.mxu0 0.0
    %2808 = vmatpush2.msra.mxu0 0.0
    %2809 = vmatprep.subr.mxu0 0.0
    %2810 = vmatpush2.msra.mxu0 0.0
    %2811 = vmatprep.subr.mxu0 0.0
    %2812 = vmatpush2.msra.mxu0 0.0
    %2813 = vmatprep.subr.mxu0 0.0
    %2814 = vmatpush2.msra.mxu0 0.0
    %2815 = vmatprep.subr.mxu0 0.0
    %2816 = vmatpush2.msra.mxu0 0.0
    %2817 = vmatprep.subr.mxu0 0.0
    %2818 = vmatpush2.msra.mxu0 0.0
    %2819 = vmatprep.subr.mxu0 0.0
    %2820 = vmatpush2.msra.mxu0 0.0
    %2821 = vmatprep.subr.mxu0 0.0
    %2822 = vmatpush2.msra.mxu0 0.0
    %2823 = vmatprep.subr.mxu0 0.0
    %2824 = vmatpush2.msra.mxu0 0.0
    %2825 = vmatprep.subr.mxu0 0.0
    %2826 = vmatpush2.msra.mxu0 0.0
    %2827 = vmatprep.subr.mxu0 0.0
    %2828 = vmatpush2.msra.mxu0 0.0
    %2829 = vmatprep.subr.mxu0 0.0
    %2830 = vmatpush2.msra.mxu0 0.0
    %2831 = vmatprep.subr.mxu0 0.0
    %2832 = vmatpush2.msra.mxu0 0.0
    %2833 = vmatprep.subr.mxu0 0.0
    %2834 = vmatpush2.msra.mxu0 0.0
    %2835 = vmatprep.mubr.f32.mxu0 0.0
    %2836 = vmatmul.mubr.f32.gmra.mxu0 %v2615
    %v2837 = vpop.f32.mrf.mxu0
    %v2838 = vadd.f32 %v723, %v2837
    %v2839 = vpop.f32.mrf.mxu0
    %2840 = vdwg.mxu0
    %v2841 = vmul.f32 %v2763, %v2838
    %v2842 = vadd.f32 %v2611, %v2841
    %v2843 = vtanh.pop %v2842
    %v2844 = vsub.f32 1.0, %v2770
    %v2845 = vmul.f32 %v2844, %v2843
    %v2846 = vmul.f32 %v2770, %v2165
    %v2847 = vadd.f32 %v2845, %v2846
    %s2848 = scalar_lea.vmem %s0, 24
    %v2849 = vld [vmem:[%s2848] sm:$0x3]
    %v2850 = vld [vmem:[%s2848 + $0x2] sm:$0x3]
    %v2851 = vld [vmem:[%s2848 + $0x4] sm:$0x3]
    %2852 = vmatprep.subr.mxu0 0.0
    %2853 = vmatpush1.msra.mxu0 0.0
    %2854 = vmatprep.subr.mxu0 0.0
    %2855 = vmatpush1.msra.mxu0 0.0
    %2856 = vmatprep.subr.mxu0 0.0
    %2857 = vmatpush1.msra.mxu0 0.0
    %2858 = vmatprep.subr.mxu0 0.0
    %2859 = vmatpush1.msra.mxu0 0.0
    %2860 = vmatprep.subr.mxu0 0.0
    %2861 = vmatpush1.msra.mxu0 0.0
    %2862 = vmatprep.subr.mxu0 0.0
    %2863 = vmatpush1.msra.mxu0 0.0
    %2864 = vmatprep.subr.mxu0 0.0
    %2865 = vmatpush1.msra.mxu0 0.0
    %2866 = vmatprep.subr.mxu0 0.0
    %2867 = vmatpush1.msra.mxu0 0.0
    %2868 = vmatprep.subr.mxu0 0.0
    %2869 = vmatpush1.msra.mxu0 0.0
    %2870 = vmatprep.subr.mxu0 0.0
    %2871 = vmatpush1.msra.mxu0 0.0
    %2872 = vmatprep.subr.mxu0 0.0
    %2873 = vmatpush1.msra.mxu0 0.0
    %2874 = vmatprep.subr.mxu0 0.0
    %2875 = vmatpush1.msra.mxu0 0.0
    %2876 = vmatprep.subr.mxu0 0.0
    %2877 = vmatpush1.msra.mxu0 %v46
    %2878 = vmatprep.subr.mxu0 0.0
    %2879 = vmatpush1.msra.mxu0 %v45
    %2880 = vmatprep.subr.mxu0 0.0
    %2881 = vmatpush1.msra.mxu0 %v44
    %2882 = vmatprep.subr.mxu0 0.0
    %2883 = vmatpush1.msra.mxu0 %v43
    %2884 = vmatprep.subr.mxu0 0.0
    %2885 = vmatpush2.msra.mxu0 0.0
    %2886 = vmatprep.subr.mxu0 0.0
    %2887 = vmatpush2.msra.mxu0 0.0
    %2888 = vmatprep.subr.mxu0 0.0
    %2889 = vmatpush2.msra.mxu0 0.0
    %2890 = vmatprep.subr.mxu0 0.0
    %2891 = vmatpush2.msra.mxu0 0.0
    %2892 = vmatprep.subr.mxu0 0.0
    %2893 = vmatpush2.msra.mxu0 0.0
    %2894 = vmatprep.subr.mxu0 0.0
    %2895 = vmatpush2.msra.mxu0 0.0
    %2896 = vmatprep.subr.mxu0 0.0
    %2897 = vmatpush2.msra.mxu0 0.0
    %2898 = vmatprep.subr.mxu0 0.0
    %2899 = vmatpush2.msra.mxu0 0.0
    %2900 = vmatprep.subr.mxu0 0.0
    %2901 = vmatpush2.msra.mxu0 0.0
    %2902 = vmatprep.subr.mxu0 0.0
    %2903 = vmatpush2.msra.mxu0 0.0
    %2904 = vmatprep.subr.mxu0 0.0
    %2905 = vmatpush2.msra.mxu0 0.0
    %2906 = vmatprep.subr.mxu0 0.0
    %2907 = vmatpush2.msra.mxu0 0.0
    %2908 = vmatprep.subr.mxu0 0.0
    %2909 = vmatpush2.msra.mxu0 0.0
    %2910 = vmatprep.subr.mxu0 0.0
    %2911 = vmatpush2.msra.mxu0 0.0
    %2912 = vmatprep.subr.mxu0 0.0
    %2913 = vmatpush2.msra.mxu0 0.0
    %2914 = vmatprep.subr.mxu0 0.0
    %2915 = vmatpush2.msra.mxu0 0.0
    %2916 = vmatprep.mubr.f32.mxu0 0.0
    %2917 = vmatmul.mubr.f32.gmra.mxu0 %v2402
    %v2918 = vpop.f32.mrf.mxu0
    %v2919 = vadd.f32 0.0, %v2918
    %v2920 = vpop.f32.mrf.mxu0
    %2921 = vdwg.mxu0
    %2922 = vmatprep.subr.mxu0 0.0
    %2923 = vmatpush1.msra.mxu0 0.0
    %2924 = vmatprep.subr.mxu0 0.0
    %2925 = vmatpush1.msra.mxu0 0.0
    %2926 = vmatprep.subr.mxu0 0.0
    %2927 = vmatpush1.msra.mxu0 0.0
    %2928 = vmatprep.subr.mxu0 0.0
    %2929 = vmatpush1.msra.mxu0 0.0
    %2930 = vmatprep.subr.mxu0 0.0
    %2931 = vmatpush1.msra.mxu0 0.0
    %2932 = vmatprep.subr.mxu0 0.0
    %2933 = vmatpush1.msra.mxu0 0.0
    %2934 = vmatprep.subr.mxu0 0.0
    %2935 = vmatpush1.msra.mxu0 0.0
    %2936 = vmatprep.subr.mxu0 0.0
    %2937 = vmatpush1.msra.mxu0 0.0
    %2938 = vmatprep.subr.mxu0 0.0
    %2939 = vmatpush1.msra.mxu0 0.0
    %2940 = vmatprep.subr.mxu0 0.0
    %2941 = vmatpush1.msra.mxu0 0.0
    %2942 = vmatprep.subr.mxu0 0.0
    %2943 = vmatpush1.msra.mxu0 0.0
    %2944 = vmatprep.subr.mxu0 0.0
    %2945 = vmatpush1.msra.mxu0 0.0
    %2946 = vmatprep.subr.mxu0 0.0
    %2947 = vmatpush1.msra.mxu0 %v50
    %2948 = vmatprep.subr.mxu0 0.0
    %2949 = vmatpush1.msra.mxu0 %v49
    %2950 = vmatprep.subr.mxu0 0.0
    %2951 = vmatpush1.msra.mxu0 %v48
    %2952 = vmatprep.subr.mxu0 0.0
    %2953 = vmatpush1.msra.mxu0 %v47
    %2954 = vmatprep.subr.mxu0 0.0
    %2955 = vmatpush2.msra.mxu0 0.0
    %2956 = vmatprep.subr.mxu0 0.0
    %2957 = vmatpush2.msra.mxu0 0.0
    %2958 = vmatprep.subr.mxu0 0.0
    %2959 = vmatpush2.msra.mxu0 0.0
    %2960 = vmatprep.subr.mxu0 0.0
    %2961 = vmatpush2.msra.mxu0 0.0
    %2962 = vmatprep.subr.mxu0 0.0
    %2963 = vmatpush2.msra.mxu0 0.0
    %2964 = vmatprep.subr.mxu0 0.0
    %2965 = vmatpush2.msra.mxu0 0.0
    %2966 = vmatprep.subr.mxu0 0.0
    %2967 = vmatpush2.msra.mxu0 0.0
    %2968 = vmatprep.subr.mxu0 0.0
    %2969 = vmatpush2.msra.mxu0 0.0
    %2970 = vmatprep.subr.mxu0 0.0
    %2971 = vmatpush2.msra.mxu0 0.0
    %2972 = vmatprep.subr.mxu0 0.0
    %2973 = vmatpush2.msra.mxu0 0.0
    %2974 = vmatprep.subr.mxu0 0.0
    %2975 = vmatpush2.msra.mxu0 0.0
    %2976 = vmatprep.subr.mxu0 0.0
    %2977 = vmatpush2.msra.mxu0 0.0
    %2978 = vmatprep.subr.mxu0 0.0
    %2979 = vmatpush2.msra.mxu0 0.0
    %2980 = vmatprep.subr.mxu0 0.0
    %2981 = vmatpush2.msra.mxu0 0.0
    %2982 = vmatprep.subr.mxu0 0.0
    %2983 = vmatpush2.msra.mxu0 0.0
    %2984 = vmatprep.subr.mxu0 0.0
    %2985 = vmatpush2.msra.mxu0 0.0
    %2986 = vmatprep.mubr.f32.mxu0 0.0
    %2987 = vmatmul.mubr.f32.gmra.mxu0 %v2402
    %v2988 = vpop.f32.mrf.mxu0
    %v2989 = vadd.f32 0.0, %v2988
    %v2990 = vpop.f32.mrf.mxu0
    %2991 = vdwg.mxu0
    %v2992 = vadd.f32 %v2849, %v2919
    %v2993 = vxor.u32 %v2992, 2147483648
    %v2994 = vmul.f32 %v2993, 1.442695
    %v2995 = vpow.pop %v2994
    %v2996 = vadd.f32 %v2995, 1.0
    %v2997 = vrcp.pop %v2996
    %v2998 = vmul.f32 1.0, %v2997
    %v2999 = vadd.f32 %v2850, %v2989
    %v3000 = vxor.u32 %v2999, 2147483648
    %v3001 = vmul.f32 %v3000, 1.442695
    %v3002 = vpow.pop %v3001
    %v3003 = vadd.f32 %v3002, 1.0
    %v3004 = vrcp.pop %v3003
    %v3005 = vmul.f32 1.0, %v3004
    %3006 = vmatprep.subr.mxu0 0.0
    %3007 = vmatpush1.msra.mxu0 0.0
    %3008 = vmatprep.subr.mxu0 0.0
    %3009 = vmatpush1.msra.mxu0 0.0
    %3010 = vmatprep.subr.mxu0 0.0
    %3011 = vmatpush1.msra.mxu0 0.0
    %3012 = vmatprep.subr.mxu0 0.0
    %3013 = vmatpush1.msra.mxu0 0.0
    %3014 = vmatprep.subr.mxu0 0.0
    %3015 = vmatpush1.msra.mxu0 0.0
    %3016 = vmatprep.subr.mxu0 0.0
    %3017 = vmatpush1.msra.mxu0 0.0
    %3018 = vmatprep.subr.mxu0 0.0
    %3019 = vmatpush1.msra.mxu0 0.0
    %3020 = vmatprep.subr.mxu0 0.0
    %3021 = vmatpush1.msra.mxu0 0.0
    %3022 = vmatprep.subr.mxu0 0.0
    %3023 = vmatpush1.msra.mxu0 0.0
    %3024 = vmatprep.subr.mxu0 0.0
    %3025 = vmatpush1.msra.mxu0 0.0
    %3026 = vmatprep.subr.mxu0 0.0
    %3027 = vmatpush1.msra.mxu0 0.0
    %3028 = vmatprep.subr.mxu0 0.0
    %3029 = vmatpush1.msra.mxu0 0.0
    %3030 = vmatprep.subr.mxu0 0.0
    %3031 = vmatpush1.msra.mxu0 %v54
    %3032 = vmatprep.subr.mxu0 0.0
    %3033 = vmatpush1.msra.mxu0 %v53
    %3034 = vmatprep.subr.mxu0 0.0
    %3035 = vmatpush1.msra.mxu0 %v52
    %3036 = vmatprep.subr.mxu0 0.0
    %3037 = vmatpush1.msra.mxu0 %v51
    %3038 = vmatprep.subr.mxu0 0.0
    %3039 = vmatpush2.msra.mxu0 0.0
    %3040 = vmatprep.subr.mxu0 0.0
    %3041 = vmatpush2.msra.mxu0 0.0
    %3042 = vmatprep.subr.mxu0 0.0
    %3043 = vmatpush2.msra.mxu0 0.0
    %3044 = vmatprep.subr.mxu0 0.0
    %3045 = vmatpush2.msra.mxu0 0.0
    %3046 = vmatprep.subr.mxu0 0.0
    %3047 = vmatpush2.msra.mxu0 0.0
    %3048 = vmatprep.subr.mxu0 0.0
    %3049 = vmatpush2.msra.mxu0 0.0
    %3050 = vmatprep.subr.mxu0 0.0
    %3051 = vmatpush2.msra.mxu0 0.0
    %3052 = vmatprep.subr.mxu0 0.0
    %3053 = vmatpush2.msra.mxu0 0.0
    %3054 = vmatprep.subr.mxu0 0.0
    %3055 = vmatpush2.msra.mxu0 0.0
    %3056 = vmatprep.subr.mxu0 0.0
    %3057 = vmatpush2.msra.mxu0 0.0
    %3058 = vmatprep.subr.mxu0 0.0
    %3059 = vmatpush2.msra.mxu0 0.0
    %3060 = vmatprep.subr.mxu0 0.0
    %3061 = vmatpush2.msra.mxu0 0.0
    %3062 = vmatprep.subr.mxu0 0.0
    %3063 = vmatpush2.msra.mxu0 0.0
    %3064 = vmatprep.subr.mxu0 0.0
    %3065 = vmatpush2.msra.mxu0 0.0
    %3066 = vmatprep.subr.mxu0 0.0
    %3067 = vmatpush2.msra.mxu0 0.0
    %3068 = vmatprep.subr.mxu0 0.0
    %3069 = vmatpush2.msra.mxu0 0.0
    %3070 = vmatprep.mubr.f32.mxu0 0.0
    %3071 = vmatmul.mubr.f32.gmra.mxu0 %v2402
    %v3072 = vpop.f32.mrf.mxu0
    %v3073 = vadd.f32 %v252, %v3072
    %v3074 = vpop.f32.mrf.mxu0
    %3075 = vdwg.mxu0
    %v3076 = vmul.f32 %v2998, %v3073
    %v3077 = vadd.f32 %v2851, %v3076
    %v3078 = vtanh.pop %v3077
    %v3079 = vsub.f32 1.0, %v3005
    %v3080 = vmul.f32 %v3079, %v3078
    %v3081 = vmul.f32 %v3005, %v2400
    %v3082 = vadd.f32 %v3080, %v3081
    %v3084 = vsel %vm90, %v3082, 0
    %3086 = vmatprep.subr.mxu0 0.0
    %3087 = vmatpush1.msra.mxu0 0.0
    %3088 = vmatprep.subr.mxu0 0.0
    %3089 = vmatpush1.msra.mxu0 0.0
    %3090 = vmatprep.subr.mxu0 0.0
    %3091 = vmatpush1.msra.mxu0 0.0
    %3092 = vmatprep.subr.mxu0 0.0
    %3093 = vmatpush1.msra.mxu0 0.0
    %3094 = vmatprep.subr.mxu0 0.0
    %3095 = vmatpush1.msra.mxu0 0.0
    %3096 = vmatprep.subr.mxu0 0.0
    %3097 = vmatpush1.msra.mxu0 0.0
    %3098 = vmatprep.subr.mxu0 0.0
    %3099 = vmatpush1.msra.mxu0 0.0
    %3100 = vmatprep.subr.mxu0 0.0
    %3101 = vmatpush1.msra.mxu0 0.0
    %3102 = vmatprep.subr.mxu0 0.0
    %3103 = vmatpush1.msra.mxu0 0.0
    %3104 = vmatprep.subr.mxu0 0.0
    %3105 = vmatpush1.msra.mxu0 0.0
    %3106 = vmatprep.subr.mxu0 0.0
    %3107 = vmatpush1.msra.mxu0 0.0
    %3108 = vmatprep.subr.mxu0 0.0
    %3109 = vmatpush1.msra.mxu0 0.0
    %3110 = vmatprep.subr.mxu0 0.0
    %3111 = vmatpush1.msra.mxu0 %v59
    %3112 = vmatprep.subr.mxu0 0.0
    %3113 = vmatpush1.msra.mxu0 %v58
    %3114 = vmatprep.subr.mxu0 0.0
    %3115 = vmatpush1.msra.mxu0 %v57
    %3116 = vmatprep.subr.mxu0 0.0
    %3117 = vmatpush1.msra.mxu0 %v56
    %3118 = vmatprep.subr.mxu0 0.0
    %3119 = vmatpush2.msra.mxu0 0.0
    %3120 = vmatprep.subr.mxu0 0.0
    %3121 = vmatpush2.msra.mxu0 0.0
    %3122 = vmatprep.subr.mxu0 0.0
    %3123 = vmatpush2.msra.mxu0 0.0
    %3124 = vmatprep.subr.mxu0 0.0
    %3125 = vmatpush2.msra.mxu0 0.0
    %3126 = vmatprep.subr.mxu0 0.0
    %3127 = vmatpush2.msra.mxu0 0.0
    %3128 = vmatprep.subr.mxu0 0.0
    %3129 = vmatpush2.msra.mxu0 0.0
    %3130 = vmatprep.subr.mxu0 0.0
    %3131 = vmatpush2.msra.mxu0 0.0
    %3132 = vmatprep.subr.mxu0 0.0
    %3133 = vmatpush2.msra.mxu0 0.0
    %3134 = vmatprep.subr.mxu0 0.0
    %3135 = vmatpush2.msra.mxu0 0.0
    %3136 = vmatprep.subr.mxu0 0.0
    %3137 = vmatpush2.msra.mxu0 0.0
    %3138 = vmatprep.subr.mxu0 0.0
    %3139 = vmatpush2.msra.mxu0 0.0
    %3140 = vmatprep.subr.mxu0 0.0
    %3141 = vmatpush2.msra.mxu0 0.0
    %3142 = vmatprep.subr.mxu0 0.0
    %3143 = vmatpush2.msra.mxu0 0.0
    %3144 = vmatprep.subr.mxu0 0.0
    %3145 = vmatpush2.msra.mxu0 0.0
    %3146 = vmatprep.subr.mxu0 0.0
    %3147 = vmatpush2.msra.mxu0 0.0
    %3148 = vmatprep.subr.mxu0 0.0
    %3149 = vmatpush2.msra.mxu0 0.0
    %3150 = vmatprep.mubr.f32.mxu0 0.0
    %3151 = vmatmul.mubr.f32.gmra.mxu0 %v3084
    %v3152 = vpop.f32.mrf.mxu0
    %v3153 = vadd.f32 %v335, %v3152
    %v3154 = vpop.f32.mrf.mxu0
    %3155 = vdwg.mxu0
    %3156 = vmatprep.subr.mxu0 0.0
    %3157 = vmatpush1.msra.mxu0 0.0
    %3158 = vmatprep.subr.mxu0 0.0
    %3159 = vmatpush1.msra.mxu0 0.0
    %3160 = vmatprep.subr.mxu0 0.0
    %3161 = vmatpush1.msra.mxu0 0.0
    %3162 = vmatprep.subr.mxu0 0.0
    %3163 = vmatpush1.msra.mxu0 0.0
    %3164 = vmatprep.subr.mxu0 0.0
    %3165 = vmatpush1.msra.mxu0 0.0
    %3166 = vmatprep.subr.mxu0 0.0
    %3167 = vmatpush1.msra.mxu0 0.0
    %3168 = vmatprep.subr.mxu0 0.0
    %3169 = vmatpush1.msra.mxu0 0.0
    %3170 = vmatprep.subr.mxu0 0.0
    %3171 = vmatpush1.msra.mxu0 0.0
    %3172 = vmatprep.subr.mxu0 0.0
    %3173 = vmatpush1.msra.mxu0 0.0
    %3174 = vmatprep.subr.mxu0 0.0
    %3175 = vmatpush1.msra.mxu0 0.0
    %3176 = vmatprep.subr.mxu0 0.0
    %3177 = vmatpush1.msra.mxu0 0.0
    %3178 = vmatprep.subr.mxu0 0.0
    %3179 = vmatpush1.msra.mxu0 0.0
    %3180 = vmatprep.subr.mxu0 0.0
    %3181 = vmatpush1.msra.mxu0 %v63
    %3182 = vmatprep.subr.mxu0 0.0
    %3183 = vmatpush1.msra.mxu0 %v62
    %3184 = vmatprep.subr.mxu0 0.0
    %3185 = vmatpush1.msra.mxu0 %v61
    %3186 = vmatprep.subr.mxu0 0.0
    %3187 = vmatpush1.msra.mxu0 %v60
    %3188 = vmatprep.subr.mxu0 0.0
    %3189 = vmatpush2.msra.mxu0 0.0
    %3190 = vmatprep.subr.mxu0 0.0
    %3191 = vmatpush2.msra.mxu0 0.0
    %3192 = vmatprep.subr.mxu0 0.0
    %3193 = vmatpush2.msra.mxu0 0.0
    %3194 = vmatprep.subr.mxu0 0.0
    %3195 = vmatpush2.msra.mxu0 0.0
    %3196 = vmatprep.subr.mxu0 0.0
    %3197 = vmatpush2.msra.mxu0 0.0
    %3198 = vmatprep.subr.mxu0 0.0
    %3199 = vmatpush2.msra.mxu0 0.0
    %3200 = vmatprep.subr.mxu0 0.0
    %3201 = vmatpush2.msra.mxu0 0.0
    %3202 = vmatprep.subr.mxu0 0.0
    %3203 = vmatpush2.msra.mxu0 0.0
    %3204 = vmatprep.subr.mxu0 0.0
    %3205 = vmatpush2.msra.mxu0 0.0
    %3206 = vmatprep.subr.mxu0 0.0
    %3207 = vmatpush2.msra.mxu0 0.0
    %3208 = vmatprep.subr.mxu0 0.0
    %3209 = vmatpush2.msra.mxu0 0.0
    %3210 = vmatprep.subr.mxu0 0.0
    %3211 = vmatpush2.msra.mxu0 0.0
    %3212 = vmatprep.subr.mxu0 0.0
    %3213 = vmatpush2.msra.mxu0 0.0
    %3214 = vmatprep.subr.mxu0 0.0
    %3215 = vmatpush2.msra.mxu0 0.0
    %3216 = vmatprep.subr.mxu0 0.0
    %3217 = vmatpush2.msra.mxu0 0.0
    %3218 = vmatprep.subr.mxu0 0.0
    %3219 = vmatpush2.msra.mxu0 0.0
    %3220 = vmatprep.mubr.f32.mxu0 0.0
    %3221 = vmatmul.mubr.f32.gmra.mxu0 %v3084
    %v3222 = vpop.f32.mrf.mxu0
    %v3223 = vadd.f32 %v414, %v3222
    %v3224 = vpop.f32.mrf.mxu0
    %3225 = vdwg.mxu0
    %3226 = vmatprep.subr.mxu0 0.0
    %3227 = vmatpush1.msra.mxu0 0.0
    %3228 = vmatprep.subr.mxu0 0.0
    %3229 = vmatpush1.msra.mxu0 0.0
    %3230 = vmatprep.subr.mxu0 0.0
    %3231 = vmatpush1.msra.mxu0 0.0
    %3232 = vmatprep.subr.mxu0 0.0
    %3233 = vmatpush1.msra.mxu0 0.0
    %3234 = vmatprep.subr.mxu0 0.0
    %3235 = vmatpush1.msra.mxu0 0.0
    %3236 = vmatprep.subr.mxu0 0.0
    %3237 = vmatpush1.msra.mxu0 0.0
    %3238 = vmatprep.subr.mxu0 0.0
    %3239 = vmatpush1.msra.mxu0 0.0
    %3240 = vmatprep.subr.mxu0 0.0
    %3241 = vmatpush1.msra.mxu0 0.0
    %3242 = vmatprep.subr.mxu0 0.0
    %3243 = vmatpush1.msra.mxu0 0.0
    %3244 = vmatprep.subr.mxu0 0.0
    %3245 = vmatpush1.msra.mxu0 0.0
    %3246 = vmatprep.subr.mxu0 0.0
    %3247 = vmatpush1.msra.mxu0 0.0
    %3248 = vmatprep.subr.mxu0 0.0
    %3249 = vmatpush1.msra.mxu0 0.0
    %3250 = vmatprep.subr.mxu0 0.0
    %3251 = vmatpush1.msra.mxu0 %v67
    %3252 = vmatprep.subr.mxu0 0.0
    %3253 = vmatpush1.msra.mxu0 %v66
    %3254 = vmatprep.subr.mxu0 0.0
    %3255 = vmatpush1.msra.mxu0 %v65
    %3256 = vmatprep.subr.mxu0 0.0
    %3257 = vmatpush1.msra.mxu0 %v64
    %3258 = vmatprep.subr.mxu0 0.0
    %3259 = vmatpush2.msra.mxu0 0.0
    %3260 = vmatprep.subr.mxu0 0.0
    %3261 = vmatpush2.msra.mxu0 0.0
    %3262 = vmatprep.subr.mxu0 0.0
    %3263 = vmatpush2.msra.mxu0 0.0
    %3264 = vmatprep.subr.mxu0 0.0
    %3265 = vmatpush2.msra.mxu0 0.0
    %3266 = vmatprep.subr.mxu0 0.0
    %3267 = vmatpush2.msra.mxu0 0.0
    %3268 = vmatprep.subr.mxu0 0.0
    %3269 = vmatpush2.msra.mxu0 0.0
    %3270 = vmatprep.subr.mxu0 0.0
    %3271 = vmatpush2.msra.mxu0 0.0
    %3272 = vmatprep.subr.mxu0 0.0
    %3273 = vmatpush2.msra.mxu0 0.0
    %3274 = vmatprep.subr.mxu0 0.0
    %3275 = vmatpush2.msra.mxu0 0.0
    %3276 = vmatprep.subr.mxu0 0.0
    %3277 = vmatpush2.msra.mxu0 0.0
    %3278 = vmatprep.subr.mxu0 0.0
    %3279 = vmatpush2.msra.mxu0 0.0
    %3280 = vmatprep.subr.mxu0 0.0
    %3281 = vmatpush2.msra.mxu0 0.0
    %3282 = vmatprep.subr.mxu0 0.0
    %3283 = vmatpush2.msra.mxu0 0.0
    %3284 = vmatprep.subr.mxu0 0.0
    %3285 = vmatpush2.msra.mxu0 0.0
    %3286 = vmatprep.subr.mxu0 0.0
    %3287 = vmatpush2.msra.mxu0 0.0
    %3288 = vmatprep.subr.mxu0 0.0
    %3289 = vmatpush2.msra.mxu0 0.0
    %3290 = vmatprep.mubr.f32.mxu0 0.0
    %3291 = vmatmul.mubr.f32.gmra.mxu0 %v3084
    %v3292 = vpop.f32.mrf.mxu0
    %v3293 = vadd.f32 %v490, %v3292
    %v3294 = vpop.f32.mrf.mxu0
    %3295 = vdwg.mxu0
    %v3297 = vsel %vm90, %v2847, 0
    %3299 = vmatprep.subr.mxu0 0.0
    %3300 = vmatpush1.msra.mxu0 0.0
    %3301 = vmatprep.subr.mxu0 0.0
    %3302 = vmatpush1.msra.mxu0 0.0
    %3303 = vmatprep.subr.mxu0 0.0
    %3304 = vmatpush1.msra.mxu0 0.0
    %3305 = vmatprep.subr.mxu0 0.0
    %3306 = vmatpush1.msra.mxu0 0.0
    %3307 = vmatprep.subr.mxu0 0.0
    %3308 = vmatpush1.msra.mxu0 0.0
    %3309 = vmatprep.subr.mxu0 0.0
    %3310 = vmatpush1.msra.mxu0 0.0
    %3311 = vmatprep.subr.mxu0 0.0
    %3312 = vmatpush1.msra.mxu0 0.0
    %3313 = vmatprep.subr.mxu0 0.0
    %3314 = vmatpush1.msra.mxu0 0.0
    %3315 = vmatprep.subr.mxu0 0.0
    %3316 = vmatpush1.msra.mxu0 0.0
    %3317 = vmatprep.subr.mxu0 0.0
    %3318 = vmatpush1.msra.mxu0 0.0
    %3319 = vmatprep.subr.mxu0 0.0
    %3320 = vmatpush1.msra.mxu0 0.0
    %3321 = vmatprep.subr.mxu0 0.0
    %3322 = vmatpush1.msra.mxu0 0.0
    %3323 = vmatprep.subr.mxu0 0.0
    %3324 = vmatpush1.msra.mxu0 %v74
    %3325 = vmatprep.subr.mxu0 0.0
    %3326 = vmatpush1.msra.mxu0 %v73
    %3327 = vmatprep.subr.mxu0 0.0
    %3328 = vmatpush1.msra.mxu0 %v72
    %3329 = vmatprep.subr.mxu0 0.0
    %3330 = vmatpush1.msra.mxu0 %v71
    %3331 = vmatprep.subr.mxu0 0.0
    %3332 = vmatpush2.msra.mxu0 0.0
    %3333 = vmatprep.subr.mxu0 0.0
    %3334 = vmatpush2.msra.mxu0 0.0
    %3335 = vmatprep.subr.mxu0 0.0
    %3336 = vmatpush2.msra.mxu0 0.0
    %3337 = vmatprep.subr.mxu0 0.0
    %3338 = vmatpush2.msra.mxu0 0.0
    %3339 = vmatprep.subr.mxu0 0.0
    %3340 = vmatpush2.msra.mxu0 0.0
    %3341 = vmatprep.subr.mxu0 0.0
    %3342 = vmatpush2.msra.mxu0 0.0
    %3343 = vmatprep.subr.mxu0 0.0
    %3344 = vmatpush2.msra.mxu0 0.0
    %3345 = vmatprep.subr.mxu0 0.0
    %3346 = vmatpush2.msra.mxu0 0.0
    %3347 = vmatprep.subr.mxu0 0.0
    %3348 = vmatpush2.msra.mxu0 0.0
    %3349 = vmatprep.subr.mxu0 0.0
    %3350 = vmatpush2.msra.mxu0 0.0
    %3351 = vmatprep.subr.mxu0 0.0
    %3352 = vmatpush2.msra.mxu0 0.0
    %3353 = vmatprep.subr.mxu0 0.0
    %3354 = vmatpush2.msra.mxu0 0.0
    %3355 = vmatprep.subr.mxu0 0.0
    %3356 = vmatpush2.msra.mxu0 0.0
    %3357 = vmatprep.subr.mxu0 0.0
    %3358 = vmatpush2.msra.mxu0 0.0
    %3359 = vmatprep.subr.mxu0 0.0
    %3360 = vmatpush2.msra.mxu0 0.0
    %3361 = vmatprep.subr.mxu0 0.0
    %3362 = vmatpush2.msra.mxu0 0.0
    %3363 = vmatprep.mubr.f32.mxu0 0.0
    %3364 = vmatmul.mubr.f32.gmra.mxu0 %v3297
    %v3365 = vpop.f32.mrf.mxu0
    %v3366 = vadd.f32 0.0, %v3365
    %v3367 = vpop.f32.mrf.mxu0
    %3368 = vdwg.mxu0
    %3369 = vmatprep.subr.mxu0 0.0
    %3370 = vmatpush1.msra.mxu0 0.0
    %3371 = vmatprep.subr.mxu0 0.0
    %3372 = vmatpush1.msra.mxu0 0.0
    %3373 = vmatprep.subr.mxu0 0.0
    %3374 = vmatpush1.msra.mxu0 0.0
    %3375 = vmatprep.subr.mxu0 0.0
    %3376 = vmatpush1.msra.mxu0 0.0
    %3377 = vmatprep.subr.mxu0 0.0
    %3378 = vmatpush1.msra.mxu0 0.0
    %3379 = vmatprep.subr.mxu0 0.0
    %3380 = vmatpush1.msra.mxu0 0.0
    %3381 = vmatprep.subr.mxu0 0.0
    %3382 = vmatpush1.msra.mxu0 0.0
    %3383 = vmatprep.subr.mxu0 0.0
    %3384 = vmatpush1.msra.mxu0 0.0
    %3385 = vmatprep.subr.mxu0 0.0
    %3386 = vmatpush1.msra.mxu0 0.0
    %3387 = vmatprep.subr.mxu0 0.0
    %3388 = vmatpush1.msra.mxu0 0.0
    %3389 = vmatprep.subr.mxu0 0.0
    %3390 = vmatpush1.msra.mxu0 0.0
    %3391 = vmatprep.subr.mxu0 0.0
    %3392 = vmatpush1.msra.mxu0 0.0
    %3393 = vmatprep.subr.mxu0 0.0
    %3394 = vmatpush1.msra.mxu0 %v78
    %3395 = vmatprep.subr.mxu0 0.0
    %3396 = vmatpush1.msra.mxu0 %v77
    %3397 = vmatprep.subr.mxu0 0.0
    %3398 = vmatpush1.msra.mxu0 %v76
    %3399 = vmatprep.subr.mxu0 0.0
    %3400 = vmatpush1.msra.mxu0 %v75
    %3401 = vmatprep.subr.mxu0 0.0
    %3402 = vmatpush2.msra.mxu0 0.0
    %3403 = vmatprep.subr.mxu0 0.0
    %3404 = vmatpush2.msra.mxu0 0.0
    %3405 = vmatprep.subr.mxu0 0.0
    %3406 = vmatpush2.msra.mxu0 0.0
    %3407 = vmatprep.subr.mxu0 0.0
    %3408 = vmatpush2.msra.mxu0 0.0
    %3409 = vmatprep.subr.mxu0 0.0
    %3410 = vmatpush2.msra.mxu0 0.0
    %3411 = vmatprep.subr.mxu0 0.0
    %3412 = vmatpush2.msra.mxu0 0.0
    %3413 = vmatprep.subr.mxu0 0.0
    %3414 = vmatpush2.msra.mxu0 0.0
    %3415 = vmatprep.subr.mxu0 0.0
    %3416 = vmatpush2.msra.mxu0 0.0
    %3417 = vmatprep.subr.mxu0 0.0
    %3418 = vmatpush2.msra.mxu0 0.0
    %3419 = vmatprep.subr.mxu0 0.0
    %3420 = vmatpush2.msra.mxu0 0.0
    %3421 = vmatprep.subr.mxu0 0.0
    %3422 = vmatpush2.msra.mxu0 0.0
    %3423 = vmatprep.subr.mxu0 0.0
    %3424 = vmatpush2.msra.mxu0 0.0
    %3425 = vmatprep.subr.mxu0 0.0
    %3426 = vmatpush2.msra.mxu0 0.0
    %3427 = vmatprep.subr.mxu0 0.0
    %3428 = vmatpush2.msra.mxu0 0.0
    %3429 = vmatprep.subr.mxu0 0.0
    %3430 = vmatpush2.msra.mxu0 0.0
    %3431 = vmatprep.subr.mxu0 0.0
    %3432 = vmatpush2.msra.mxu0 0.0
    %3433 = vmatprep.mubr.f32.mxu0 0.0
    %3434 = vmatmul.mubr.f32.gmra.mxu0 %v3297
    %v3435 = vpop.f32.mrf.mxu0
    %v3436 = vadd.f32 0.0, %v3435
    %v3437 = vpop.f32.mrf.mxu0
    %3438 = vdwg.mxu0
    %v3439 = vadd.f32 %v3153, %v3366
    %v3440 = vxor.u32 %v3439, 2147483648
    %v3441 = vmul.f32 %v3440, 1.442695
    %v3442 = vpow.pop %v3441
    %v3443 = vadd.f32 %v3442, 1.0
    %v3444 = vrcp.pop %v3443
    %v3445 = vmul.f32 1.0, %v3444
    %v3446 = vadd.f32 %v3223, %v3436
    %v3447 = vxor.u32 %v3446, 2147483648
    %v3448 = vmul.f32 %v3447, 1.442695
    %v3449 = vpow.pop %v3448
    %v3450 = vadd.f32 %v3449, 1.0
    %v3451 = vrcp.pop %v3450
    %v3452 = vmul.f32 1.0, %v3451
    %3453 = vmatprep.subr.mxu0 0.0
    %3454 = vmatpush1.msra.mxu0 0.0
    %3455 = vmatprep.subr.mxu0 0.0
    %3456 = vmatpush1.msra.mxu0 0.0
    %3457 = vmatprep.subr.mxu0 0.0
    %3458 = vmatpush1.msra.mxu0 0.0
    %3459 = vmatprep.subr.mxu0 0.0
    %3460 = vmatpush1.msra.mxu0 0.0
    %3461 = vmatprep.subr.mxu0 0.0
    %3462 = vmatpush1.msra.mxu0 0.0
    %3463 = vmatprep.subr.mxu0 0.0
    %3464 = vmatpush1.msra.mxu0 0.0
    %3465 = vmatprep.subr.mxu0 0.0
    %3466 = vmatpush1.msra.mxu0 0.0
    %3467 = vmatprep.subr.mxu0 0.0
    %3468 = vmatpush1.msra.mxu0 0.0
    %3469 = vmatprep.subr.mxu0 0.0
    %3470 = vmatpush1.msra.mxu0 0.0
    %3471 = vmatprep.subr.mxu0 0.0
    %3472 = vmatpush1.msra.mxu0 0.0
    %3473 = vmatprep.subr.mxu0 0.0
    %3474 = vmatpush1.msra.mxu0 0.0
    %3475 = vmatprep.subr.mxu0 0.0
    %3476 = vmatpush1.msra.mxu0 0.0
    %3477 = vmatprep.subr.mxu0 0.0
    %3478 = vmatpush1.msra.mxu0 %v82
    %3479 = vmatprep.subr.mxu0 0.0
    %3480 = vmatpush1.msra.mxu0 %v81
    %3481 = vmatprep.subr.mxu0 0.0
    %3482 = vmatpush1.msra.mxu0 %v80
    %3483 = vmatprep.subr.mxu0 0.0
    %3484 = vmatpush1.msra.mxu0 %v79
    %3485 = vmatprep.subr.mxu0 0.0
    %3486 = vmatpush2.msra.mxu0 0.0
    %3487 = vmatprep.subr.mxu0 0.0
    %3488 = vmatpush2.msra.mxu0 0.0
    %3489 = vmatprep.subr.mxu0 0.0
    %3490 = vmatpush2.msra.mxu0 0.0
    %3491 = vmatprep.subr.mxu0 0.0
    %3492 = vmatpush2.msra.mxu0 0.0
    %3493 = vmatprep.subr.mxu0 0.0
    %3494 = vmatpush2.msra.mxu0 0.0
    %3495 = vmatprep.subr.mxu0 0.0
    %3496 = vmatpush2.msra.mxu0 0.0
    %3497 = vmatprep.subr.mxu0 0.0
    %3498 = vmatpush2.msra.mxu0 0.0
    %3499 = vmatprep.subr.mxu0 0.0
    %3500 = vmatpush2.msra.mxu0 0.0
    %3501 = vmatprep.subr.mxu0 0.0
    %3502 = vmatpush2.msra.mxu0 0.0
    %3503 = vmatprep.subr.mxu0 0.0
    %3504 = vmatpush2.msra.mxu0 0.0
    %3505 = vmatprep.subr.mxu0 0.0
    %3506 = vmatpush2.msra.mxu0 0.0
    %3507 = vmatprep.subr.mxu0 0.0
    %3508 = vmatpush2.msra.mxu0 0.0
    %3509 = vmatprep.subr.mxu0 0.0
    %3510 = vmatpush2.msra.mxu0 0.0
    %3511 = vmatprep.subr.mxu0 0.0
    %3512 = vmatpush2.msra.mxu0 0.0
    %3513 = vmatprep.subr.mxu0 0.0
    %3514 = vmatpush2.msra.mxu0 0.0
    %3515 = vmatprep.subr.mxu0 0.0
    %3516 = vmatpush2.msra.mxu0 0.0
    %3517 = vmatprep.mubr.f32.mxu0 0.0
    %3518 = vmatmul.mubr.f32.gmra.mxu0 %v3297
    %v3519 = vpop.f32.mrf.mxu0
    %v3520 = vadd.f32 %v723, %v3519
    %v3521 = vpop.f32.mrf.mxu0
    %3522 = vdwg.mxu0
    %v3523 = vmul.f32 %v3445, %v3520
    %v3524 = vadd.f32 %v3293, %v3523
    %v3525 = vtanh.pop %v3524
    %v3526 = vsub.f32 1.0, %v3452
    %v3527 = vmul.f32 %v3526, %v3525
    %v3528 = vmul.f32 %v3452, %v2847
    %v3529 = vadd.f32 %v3527, %v3528
    %s3530 = scalar_lea.vmem %s0, 30
    %v3531 = vld [vmem:[%s3530] sm:$0x3]
    %v3532 = vld [vmem:[%s3530 + $0x2] sm:$0x3]
    %v3533 = vld [vmem:[%s3530 + $0x4] sm:$0x3]
    %3534 = vmatprep.subr.mxu0 0.0
    %3535 = vmatpush1.msra.mxu0 0.0
    %3536 = vmatprep.subr.mxu0 0.0
    %3537 = vmatpush1.msra.mxu0 0.0
    %3538 = vmatprep.subr.mxu0 0.0
    %3539 = vmatpush1.msra.mxu0 0.0
    %3540 = vmatprep.subr.mxu0 0.0
    %3541 = vmatpush1.msra.mxu0 0.0
    %3542 = vmatprep.subr.mxu0 0.0
    %3543 = vmatpush1.msra.mxu0 0.0
    %3544 = vmatprep.subr.mxu0 0.0
    %3545 = vmatpush1.msra.mxu0 0.0
    %3546 = vmatprep.subr.mxu0 0.0
    %3547 = vmatpush1.msra.mxu0 0.0
    %3548 = vmatprep.subr.mxu0 0.0
    %3549 = vmatpush1.msra.mxu0 0.0
    %3550 = vmatprep.subr.mxu0 0.0
    %3551 = vmatpush1.msra.mxu0 0.0
    %3552 = vmatprep.subr.mxu0 0.0
    %3553 = vmatpush1.msra.mxu0 0.0
    %3554 = vmatprep.subr.mxu0 0.0
    %3555 = vmatpush1.msra.mxu0 0.0
    %3556 = vmatprep.subr.mxu0 0.0
    %3557 = vmatpush1.msra.mxu0 0.0
    %3558 = vmatprep.subr.mxu0 0.0
    %3559 = vmatpush1.msra.mxu0 %v46
    %3560 = vmatprep.subr.mxu0 0.0
    %3561 = vmatpush1.msra.mxu0 %v45
    %3562 = vmatprep.subr.mxu0 0.0
    %3563 = vmatpush1.msra.mxu0 %v44
    %3564 = vmatprep.subr.mxu0 0.0
    %3565 = vmatpush1.msra.mxu0 %v43
    %3566 = vmatprep.subr.mxu0 0.0
    %3567 = vmatpush2.msra.mxu0 0.0
    %3568 = vmatprep.subr.mxu0 0.0
    %3569 = vmatpush2.msra.mxu0 0.0
    %3570 = vmatprep.subr.mxu0 0.0
    %3571 = vmatpush2.msra.mxu0 0.0
    %3572 = vmatprep.subr.mxu0 0.0
    %3573 = vmatpush2.msra.mxu0 0.0
    %3574 = vmatprep.subr.mxu0 0.0
    %3575 = vmatpush2.msra.mxu0 0.0
    %3576 = vmatprep.subr.mxu0 0.0
    %3577 = vmatpush2.msra.mxu0 0.0
    %3578 = vmatprep.subr.mxu0 0.0
    %3579 = vmatpush2.msra.mxu0 0.0
    %3580 = vmatprep.subr.mxu0 0.0
    %3581 = vmatpush2.msra.mxu0 0.0
    %3582 = vmatprep.subr.mxu0 0.0
    %3583 = vmatpush2.msra.mxu0 0.0
    %3584 = vmatprep.subr.mxu0 0.0
    %3585 = vmatpush2.msra.mxu0 0.0
    %3586 = vmatprep.subr.mxu0 0.0
    %3587 = vmatpush2.msra.mxu0 0.0
    %3588 = vmatprep.subr.mxu0 0.0
    %3589 = vmatpush2.msra.mxu0 0.0
    %3590 = vmatprep.subr.mxu0 0.0
    %3591 = vmatpush2.msra.mxu0 0.0
    %3592 = vmatprep.subr.mxu0 0.0
    %3593 = vmatpush2.msra.mxu0 0.0
    %3594 = vmatprep.subr.mxu0 0.0
    %3595 = vmatpush2.msra.mxu0 0.0
    %3596 = vmatprep.subr.mxu0 0.0
    %3597 = vmatpush2.msra.mxu0 0.0
    %3598 = vmatprep.mubr.f32.mxu0 0.0
    %3599 = vmatmul.mubr.f32.gmra.mxu0 %v3084
    %v3600 = vpop.f32.mrf.mxu0
    %v3601 = vadd.f32 0.0, %v3600
    %v3602 = vpop.f32.mrf.mxu0
    %3603 = vdwg.mxu0
    %3604 = vmatprep.subr.mxu0 0.0
    %3605 = vmatpush1.msra.mxu0 0.0
    %3606 = vmatprep.subr.mxu0 0.0
    %3607 = vmatpush1.msra.mxu0 0.0
    %3608 = vmatprep.subr.mxu0 0.0
    %3609 = vmatpush1.msra.mxu0 0.0
    %3610 = vmatprep.subr.mxu0 0.0
    %3611 = vmatpush1.msra.mxu0 0.0
    %3612 = vmatprep.subr.mxu0 0.0
    %3613 = vmatpush1.msra.mxu0 0.0
    %3614 = vmatprep.subr.mxu0 0.0
    %3615 = vmatpush1.msra.mxu0 0.0
    %3616 = vmatprep.subr.mxu0 0.0
    %3617 = vmatpush1.msra.mxu0 0.0
    %3618 = vmatprep.subr.mxu0 0.0
    %3619 = vmatpush1.msra.mxu0 0.0
    %3620 = vmatprep.subr.mxu0 0.0
    %3621 = vmatpush1.msra.mxu0 0.0
    %3622 = vmatprep.subr.mxu0 0.0
    %3623 = vmatpush1.msra.mxu0 0.0
    %3624 = vmatprep.subr.mxu0 0.0
    %3625 = vmatpush1.msra.mxu0 0.0
    %3626 = vmatprep.subr.mxu0 0.0
    %3627 = vmatpush1.msra.mxu0 0.0
    %3628 = vmatprep.subr.mxu0 0.0
    %3629 = vmatpush1.msra.mxu0 %v50
    %3630 = vmatprep.subr.mxu0 0.0
    %3631 = vmatpush1.msra.mxu0 %v49
    %3632 = vmatprep.subr.mxu0 0.0
    %3633 = vmatpush1.msra.mxu0 %v48
    %3634 = vmatprep.subr.mxu0 0.0
    %3635 = vmatpush1.msra.mxu0 %v47
    %3636 = vmatprep.subr.mxu0 0.0
    %3637 = vmatpush2.msra.mxu0 0.0
    %3638 = vmatprep.subr.mxu0 0.0
    %3639 = vmatpush2.msra.mxu0 0.0
    %3640 = vmatprep.subr.mxu0 0.0
    %3641 = vmatpush2.msra.mxu0 0.0
    %3642 = vmatprep.subr.mxu0 0.0
    %3643 = vmatpush2.msra.mxu0 0.0
    %3644 = vmatprep.subr.mxu0 0.0
    %3645 = vmatpush2.msra.mxu0 0.0
    %3646 = vmatprep.subr.mxu0 0.0
    %3647 = vmatpush2.msra.mxu0 0.0
    %3648 = vmatprep.subr.mxu0 0.0
    %3649 = vmatpush2.msra.mxu0 0.0
    %3650 = vmatprep.subr.mxu0 0.0
    %3651 = vmatpush2.msra.mxu0 0.0
    %3652 = vmatprep.subr.mxu0 0.0
    %3653 = vmatpush2.msra.mxu0 0.0
    %3654 = vmatprep.subr.mxu0 0.0
    %3655 = vmatpush2.msra.mxu0 0.0
    %3656 = vmatprep.subr.mxu0 0.0
    %3657 = vmatpush2.msra.mxu0 0.0
    %3658 = vmatprep.subr.mxu0 0.0
    %3659 = vmatpush2.msra.mxu0 0.0
    %3660 = vmatprep.subr.mxu0 0.0
    %3661 = vmatpush2.msra.mxu0 0.0
    %3662 = vmatprep.subr.mxu0 0.0
    %3663 = vmatpush2.msra.mxu0 0.0
    %3664 = vmatprep.subr.mxu0 0.0
    %3665 = vmatpush2.msra.mxu0 0.0
    %3666 = vmatprep.subr.mxu0 0.0
    %3667 = vmatpush2.msra.mxu0 0.0
    %3668 = vmatprep.mubr.f32.mxu0 0.0
    %3669 = vmatmul.mubr.f32.gmra.mxu0 %v3084
    %v3670 = vpop.f32.mrf.mxu0
    %v3671 = vadd.f32 0.0, %v3670
    %v3672 = vpop.f32.mrf.mxu0
    %3673 = vdwg.mxu0
    %v3674 = vadd.f32 %v3531, %v3601
    %v3675 = vxor.u32 %v3674, 2147483648
    %v3676 = vmul.f32 %v3675, 1.442695
    %v3677 = vpow.pop %v3676
    %v3678 = vadd.f32 %v3677, 1.0
    %v3679 = vrcp.pop %v3678
    %v3680 = vmul.f32 1.0, %v3679
    %v3681 = vadd.f32 %v3532, %v3671
    %v3682 = vxor.u32 %v3681, 2147483648
    %v3683 = vmul.f32 %v3682, 1.442695
    %v3684 = vpow.pop %v3683
    %v3685 = vadd.f32 %v3684, 1.0
    %v3686 = vrcp.pop %v3685
    %v3687 = vmul.f32 1.0, %v3686
    %3688 = vmatprep.subr.mxu0 0.0
    %3689 = vmatpush1.msra.mxu0 0.0
    %3690 = vmatprep.subr.mxu0 0.0
    %3691 = vmatpush1.msra.mxu0 0.0
    %3692 = vmatprep.subr.mxu0 0.0
    %3693 = vmatpush1.msra.mxu0 0.0
    %3694 = vmatprep.subr.mxu0 0.0
    %3695 = vmatpush1.msra.mxu0 0.0
    %3696 = vmatprep.subr.mxu0 0.0
    %3697 = vmatpush1.msra.mxu0 0.0
    %3698 = vmatprep.subr.mxu0 0.0
    %3699 = vmatpush1.msra.mxu0 0.0
    %3700 = vmatprep.subr.mxu0 0.0
    %3701 = vmatpush1.msra.mxu0 0.0
    %3702 = vmatprep.subr.mxu0 0.0
    %3703 = vmatpush1.msra.mxu0 0.0
    %3704 = vmatprep.subr.mxu0 0.0
    %3705 = vmatpush1.msra.mxu0 0.0
    %3706 = vmatprep.subr.mxu0 0.0
    %3707 = vmatpush1.msra.mxu0 0.0
    %3708 = vmatprep.subr.mxu0 0.0
    %3709 = vmatpush1.msra.mxu0 0.0
    %3710 = vmatprep.subr.mxu0 0.0
    %3711 = vmatpush1.msra.mxu0 0.0
    %3712 = vmatprep.subr.mxu0 0.0
    %3713 = vmatpush1.msra.mxu0 %v54
    %3714 = vmatprep.subr.mxu0 0.0
    %3715 = vmatpush1.msra.mxu0 %v53
    %3716 = vmatprep.subr.mxu0 0.0
    %3717 = vmatpush1.msra.mxu0 %v52
    %3718 = vmatprep.subr.mxu0 0.0
    %3719 = vmatpush1.msra.mxu0 %v51
    %3720 = vmatprep.subr.mxu0 0.0
    %3721 = vmatpush2.msra.mxu0 0.0
    %3722 = vmatprep.subr.mxu0 0.0
    %3723 = vmatpush2.msra.mxu0 0.0
    %3724 = vmatprep.subr.mxu0 0.0
    %3725 = vmatpush2.msra.mxu0 0.0
    %3726 = vmatprep.subr.mxu0 0.0
    %3727 = vmatpush2.msra.mxu0 0.0
    %3728 = vmatprep.subr.mxu0 0.0
    %3729 = vmatpush2.msra.mxu0 0.0
    %3730 = vmatprep.subr.mxu0 0.0
    %3731 = vmatpush2.msra.mxu0 0.0
    %3732 = vmatprep.subr.mxu0 0.0
    %3733 = vmatpush2.msra.mxu0 0.0
    %3734 = vmatprep.subr.mxu0 0.0
    %3735 = vmatpush2.msra.mxu0 0.0
    %3736 = vmatprep.subr.mxu0 0.0
    %3737 = vmatpush2.msra.mxu0 0.0
    %3738 = vmatprep.subr.mxu0 0.0
    %3739 = vmatpush2.msra.mxu0 0.0
    %3740 = vmatprep.subr.mxu0 0.0
    %3741 = vmatpush2.msra.mxu0 0.0
    %3742 = vmatprep.subr.mxu0 0.0
    %3743 = vmatpush2.msra.mxu0 0.0
    %3744 = vmatprep.subr.mxu0 0.0
    %3745 = vmatpush2.msra.mxu0 0.0
    %3746 = vmatprep.subr.mxu0 0.0
    %3747 = vmatpush2.msra.mxu0 0.0
    %3748 = vmatprep.subr.mxu0 0.0
    %3749 = vmatpush2.msra.mxu0 0.0
    %3750 = vmatprep.subr.mxu0 0.0
    %3751 = vmatpush2.msra.mxu0 0.0
    %3752 = vmatprep.mubr.f32.mxu0 0.0
    %3753 = vmatmul.mubr.f32.gmra.mxu0 %v3084
    %v3754 = vpop.f32.mrf.mxu0
    %v3755 = vadd.f32 %v252, %v3754
    %v3756 = vpop.f32.mrf.mxu0
    %3757 = vdwg.mxu0
    %v3758 = vmul.f32 %v3680, %v3755
    %v3759 = vadd.f32 %v3533, %v3758
    %v3760 = vtanh.pop %v3759
    %v3761 = vsub.f32 1.0, %v3687
    %v3762 = vmul.f32 %v3761, %v3760
    %v3763 = vmul.f32 %v3687, %v3082
    %v3764 = vadd.f32 %v3762, %v3763
    %v3766 = vsel %vm90, %v3764, 0
    %3768 = vmatprep.subr.mxu0 0.0
    %3769 = vmatpush1.msra.mxu0 0.0
    %3770 = vmatprep.subr.mxu0 0.0
    %3771 = vmatpush1.msra.mxu0 0.0
    %3772 = vmatprep.subr.mxu0 0.0
    %3773 = vmatpush1.msra.mxu0 0.0
    %3774 = vmatprep.subr.mxu0 0.0
    %3775 = vmatpush1.msra.mxu0 0.0
    %3776 = vmatprep.subr.mxu0 0.0
    %3777 = vmatpush1.msra.mxu0 0.0
    %3778 = vmatprep.subr.mxu0 0.0
    %3779 = vmatpush1.msra.mxu0 0.0
    %3780 = vmatprep.subr.mxu0 0.0
    %3781 = vmatpush1.msra.mxu0 0.0
    %3782 = vmatprep.subr.mxu0 0.0
    %3783 = vmatpush1.msra.mxu0 0.0
    %3784 = vmatprep.subr.mxu0 0.0
    %3785 = vmatpush1.msra.mxu0 0.0
    %3786 = vmatprep.subr.mxu0 0.0
    %3787 = vmatpush1.msra.mxu0 0.0
    %3788 = vmatprep.subr.mxu0 0.0
    %3789 = vmatpush1.msra.mxu0 0.0
    %3790 = vmatprep.subr.mxu0 0.0
    %3791 = vmatpush1.msra.mxu0 0.0
    %3792 = vmatprep.subr.mxu0 0.0
    %3793 = vmatpush1.msra.mxu0 %v59
    %3794 = vmatprep.subr.mxu0 0.0
    %3795 = vmatpush1.msra.mxu0 %v58
    %3796 = vmatprep.subr.mxu0 0.0
    %3797 = vmatpush1.msra.mxu0 %v57
    %3798 = vmatprep.subr.mxu0 0.0
    %3799 = vmatpush1.msra.mxu0 %v56
    %3800 = vmatprep.subr.mxu0 0.0
    %3801 = vmatpush2.msra.mxu0 0.0
    %3802 = vmatprep.subr.mxu0 0.0
    %3803 = vmatpush2.msra.mxu0 0.0
    %3804 = vmatprep.subr.mxu0 0.0
    %3805 = vmatpush2.msra.mxu0 0.0
    %3806 = vmatprep.subr.mxu0 0.0
    %3807 = vmatpush2.msra.mxu0 0.0
    %3808 = vmatprep.subr.mxu0 0.0
    %3809 = vmatpush2.msra.mxu0 0.0
    %3810 = vmatprep.subr.mxu0 0.0
    %3811 = vmatpush2.msra.mxu0 0.0
    %3812 = vmatprep.subr.mxu0 0.0
    %3813 = vmatpush2.msra.mxu0 0.0
    %3814 = vmatprep.subr.mxu0 0.0
    %3815 = vmatpush2.msra.mxu0 0.0
    %3816 = vmatprep.subr.mxu0 0.0
    %3817 = vmatpush2.msra.mxu0 0.0
    %3818 = vmatprep.subr.mxu0 0.0
    %3819 = vmatpush2.msra.mxu0 0.0
    %3820 = vmatprep.subr.mxu0 0.0
    %3821 = vmatpush2.msra.mxu0 0.0
    %3822 = vmatprep.subr.mxu0 0.0
    %3823 = vmatpush2.msra.mxu0 0.0
    %3824 = vmatprep.subr.mxu0 0.0
    %3825 = vmatpush2.msra.mxu0 0.0
    %3826 = vmatprep.subr.mxu0 0.0
    %3827 = vmatpush2.msra.mxu0 0.0
    %3828 = vmatprep.subr.mxu0 0.0
    %3829 = vmatpush2.msra.mxu0 0.0
    %3830 = vmatprep.subr.mxu0 0.0
    %3831 = vmatpush2.msra.mxu0 0.0
    %3832 = vmatprep.mubr.f32.mxu0 0.0
    %3833 = vmatmul.mubr.f32.gmra.mxu0 %v3766
    %v3834 = vpop.f32.mrf.mxu0
    %v3835 = vadd.f32 %v335, %v3834
    %v3836 = vpop.f32.mrf.mxu0
    %3837 = vdwg.mxu0
    %3838 = vmatprep.subr.mxu0 0.0
    %3839 = vmatpush1.msra.mxu0 0.0
    %3840 = vmatprep.subr.mxu0 0.0
    %3841 = vmatpush1.msra.mxu0 0.0
    %3842 = vmatprep.subr.mxu0 0.0
    %3843 = vmatpush1.msra.mxu0 0.0
    %3844 = vmatprep.subr.mxu0 0.0
    %3845 = vmatpush1.msra.mxu0 0.0
    %3846 = vmatprep.subr.mxu0 0.0
    %3847 = vmatpush1.msra.mxu0 0.0
    %3848 = vmatprep.subr.mxu0 0.0
    %3849 = vmatpush1.msra.mxu0 0.0
    %3850 = vmatprep.subr.mxu0 0.0
    %3851 = vmatpush1.msra.mxu0 0.0
    %3852 = vmatprep.subr.mxu0 0.0
    %3853 = vmatpush1.msra.mxu0 0.0
    %3854 = vmatprep.subr.mxu0 0.0
    %3855 = vmatpush1.msra.mxu0 0.0
    %3856 = vmatprep.subr.mxu0 0.0
    %3857 = vmatpush1.msra.mxu0 0.0
    %3858 = vmatprep.subr.mxu0 0.0
    %3859 = vmatpush1.msra.mxu0 0.0
    %3860 = vmatprep.subr.mxu0 0.0
    %3861 = vmatpush1.msra.mxu0 0.0
    %3862 = vmatprep.subr.mxu0 0.0
    %3863 = vmatpush1.msra.mxu0 %v63
    %3864 = vmatprep.subr.mxu0 0.0
    %3865 = vmatpush1.msra.mxu0 %v62
    %3866 = vmatprep.subr.mxu0 0.0
    %3867 = vmatpush1.msra.mxu0 %v61
    %3868 = vmatprep.subr.mxu0 0.0
    %3869 = vmatpush1.msra.mxu0 %v60
    %3870 = vmatprep.subr.mxu0 0.0
    %3871 = vmatpush2.msra.mxu0 0.0
    %3872 = vmatprep.subr.mxu0 0.0
    %3873 = vmatpush2.msra.mxu0 0.0
    %3874 = vmatprep.subr.mxu0 0.0
    %3875 = vmatpush2.msra.mxu0 0.0
    %3876 = vmatprep.subr.mxu0 0.0
    %3877 = vmatpush2.msra.mxu0 0.0
    %3878 = vmatprep.subr.mxu0 0.0
    %3879 = vmatpush2.msra.mxu0 0.0
    %3880 = vmatprep.subr.mxu0 0.0
    %3881 = vmatpush2.msra.mxu0 0.0
    %3882 = vmatprep.subr.mxu0 0.0
    %3883 = vmatpush2.msra.mxu0 0.0
    %3884 = vmatprep.subr.mxu0 0.0
    %3885 = vmatpush2.msra.mxu0 0.0
    %3886 = vmatprep.subr.mxu0 0.0
    %3887 = vmatpush2.msra.mxu0 0.0
    %3888 = vmatprep.subr.mxu0 0.0
    %3889 = vmatpush2.msra.mxu0 0.0
    %3890 = vmatprep.subr.mxu0 0.0
    %3891 = vmatpush2.msra.mxu0 0.0
    %3892 = vmatprep.subr.mxu0 0.0
    %3893 = vmatpush2.msra.mxu0 0.0
    %3894 = vmatprep.subr.mxu0 0.0
    %3895 = vmatpush2.msra.mxu0 0.0
    %3896 = vmatprep.subr.mxu0 0.0
    %3897 = vmatpush2.msra.mxu0 0.0
    %3898 = vmatprep.subr.mxu0 0.0
    %3899 = vmatpush2.msra.mxu0 0.0
    %3900 = vmatprep.subr.mxu0 0.0
    %3901 = vmatpush2.msra.mxu0 0.0
    %3902 = vmatprep.mubr.f32.mxu0 0.0
    %3903 = vmatmul.mubr.f32.gmra.mxu0 %v3766
    %v3904 = vpop.f32.mrf.mxu0
    %v3905 = vadd.f32 %v414, %v3904
    %v3906 = vpop.f32.mrf.mxu0
    %3907 = vdwg.mxu0
    %3908 = vmatprep.subr.mxu0 0.0
    %3909 = vmatpush1.msra.mxu0 0.0
    %3910 = vmatprep.subr.mxu0 0.0
    %3911 = vmatpush1.msra.mxu0 0.0
    %3912 = vmatprep.subr.mxu0 0.0
    %3913 = vmatpush1.msra.mxu0 0.0
    %3914 = vmatprep.subr.mxu0 0.0
    %3915 = vmatpush1.msra.mxu0 0.0
    %3916 = vmatprep.subr.mxu0 0.0
    %3917 = vmatpush1.msra.mxu0 0.0
    %3918 = vmatprep.subr.mxu0 0.0
    %3919 = vmatpush1.msra.mxu0 0.0
    %3920 = vmatprep.subr.mxu0 0.0
    %3921 = vmatpush1.msra.mxu0 0.0
    %3922 = vmatprep.subr.mxu0 0.0
    %3923 = vmatpush1.msra.mxu0 0.0
    %3924 = vmatprep.subr.mxu0 0.0
    %3925 = vmatpush1.msra.mxu0 0.0
    %3926 = vmatprep.subr.mxu0 0.0
    %3927 = vmatpush1.msra.mxu0 0.0
    %3928 = vmatprep.subr.mxu0 0.0
    %3929 = vmatpush1.msra.mxu0 0.0
    %3930 = vmatprep.subr.mxu0 0.0
    %3931 = vmatpush1.msra.mxu0 0.0
    %3932 = vmatprep.subr.mxu0 0.0
    %3933 = vmatpush1.msra.mxu0 %v67
    %3934 = vmatprep.subr.mxu0 0.0
    %3935 = vmatpush1.msra.mxu0 %v66
    %3936 = vmatprep.subr.mxu0 0.0
    %3937 = vmatpush1.msra.mxu0 %v65
    %3938 = vmatprep.subr.mxu0 0.0
    %3939 = vmatpush1.msra.mxu0 %v64
    %3940 = vmatprep.subr.mxu0 0.0
    %3941 = vmatpush2.msra.mxu0 0.0
    %3942 = vmatprep.subr.mxu0 0.0
    %3943 = vmatpush2.msra.mxu0 0.0
    %3944 = vmatprep.subr.mxu0 0.0
    %3945 = vmatpush2.msra.mxu0 0.0
    %3946 = vmatprep.subr.mxu0 0.0
    %3947 = vmatpush2.msra.mxu0 0.0
    %3948 = vmatprep.subr.mxu0 0.0
    %3949 = vmatpush2.msra.mxu0 0.0
    %3950 = vmatprep.subr.mxu0 0.0
    %3951 = vmatpush2.msra.mxu0 0.0
    %3952 = vmatprep.subr.mxu0 0.0
    %3953 = vmatpush2.msra.mxu0 0.0
    %3954 = vmatprep.subr.mxu0 0.0
    %3955 = vmatpush2.msra.mxu0 0.0
    %3956 = vmatprep.subr.mxu0 0.0
    %3957 = vmatpush2.msra.mxu0 0.0
    %3958 = vmatprep.subr.mxu0 0.0
    %3959 = vmatpush2.msra.mxu0 0.0
    %3960 = vmatprep.subr.mxu0 0.0
    %3961 = vmatpush2.msra.mxu0 0.0
    %3962 = vmatprep.subr.mxu0 0.0
    %3963 = vmatpush2.msra.mxu0 0.0
    %3964 = vmatprep.subr.mxu0 0.0
    %3965 = vmatpush2.msra.mxu0 0.0
    %3966 = vmatprep.subr.mxu0 0.0
    %3967 = vmatpush2.msra.mxu0 0.0
    %3968 = vmatprep.subr.mxu0 0.0
    %3969 = vmatpush2.msra.mxu0 0.0
    %3970 = vmatprep.subr.mxu0 0.0
    %3971 = vmatpush2.msra.mxu0 0.0
    %3972 = vmatprep.mubr.f32.mxu0 0.0
    %3973 = vmatmul.mubr.f32.gmra.mxu0 %v3766
    %v3974 = vpop.f32.mrf.mxu0
    %v3975 = vadd.f32 %v490, %v3974
    %v3976 = vpop.f32.mrf.mxu0
    %3977 = vdwg.mxu0
    %v3979 = vsel %vm90, %v3529, 0
    %3981 = vmatprep.subr.mxu0 0.0
    %3982 = vmatpush1.msra.mxu0 0.0
    %3983 = vmatprep.subr.mxu0 0.0
    %3984 = vmatpush1.msra.mxu0 0.0
    %3985 = vmatprep.subr.mxu0 0.0
    %3986 = vmatpush1.msra.mxu0 0.0
    %3987 = vmatprep.subr.mxu0 0.0
    %3988 = vmatpush1.msra.mxu0 0.0
    %3989 = vmatprep.subr.mxu0 0.0
    %3990 = vmatpush1.msra.mxu0 0.0
    %3991 = vmatprep.subr.mxu0 0.0
    %3992 = vmatpush1.msra.mxu0 0.0
    %3993 = vmatprep.subr.mxu0 0.0
    %3994 = vmatpush1.msra.mxu0 0.0
    %3995 = vmatprep.subr.mxu0 0.0
    %3996 = vmatpush1.msra.mxu0 0.0
    %3997 = vmatprep.subr.mxu0 0.0
    %3998 = vmatpush1.msra.mxu0 0.0
    %3999 = vmatprep.subr.mxu0 0.0
    %4000 = vmatpush1.msra.mxu0 0.0
    %4001 = vmatprep.subr.mxu0 0.0
    %4002 = vmatpush1.msra.mxu0 0.0
    %4003 = vmatprep.subr.mxu0 0.0
    %4004 = vmatpush1.msra.mxu0 0.0
    %4005 = vmatprep.subr.mxu0 0.0
    %4006 = vmatpush1.msra.mxu0 %v74
    %4007 = vmatprep.subr.mxu0 0.0
    %4008 = vmatpush1.msra.mxu0 %v73
    %4009 = vmatprep.subr.mxu0 0.0
    %4010 = vmatpush1.msra.mxu0 %v72
    %4011 = vmatprep.subr.mxu0 0.0
    %4012 = vmatpush1.msra.mxu0 %v71
    %4013 = vmatprep.subr.mxu0 0.0
    %4014 = vmatpush2.msra.mxu0 0.0
    %4015 = vmatprep.subr.mxu0 0.0
    %4016 = vmatpush2.msra.mxu0 0.0
    %4017 = vmatprep.subr.mxu0 0.0
    %4018 = vmatpush2.msra.mxu0 0.0
    %4019 = vmatprep.subr.mxu0 0.0
    %4020 = vmatpush2.msra.mxu0 0.0
    %4021 = vmatprep.subr.mxu0 0.0
    %4022 = vmatpush2.msra.mxu0 0.0
    %4023 = vmatprep.subr.mxu0 0.0
    %4024 = vmatpush2.msra.mxu0 0.0
    %4025 = vmatprep.subr.mxu0 0.0
    %4026 = vmatpush2.msra.mxu0 0.0
    %4027 = vmatprep.subr.mxu0 0.0
    %4028 = vmatpush2.msra.mxu0 0.0
    %4029 = vmatprep.subr.mxu0 0.0
    %4030 = vmatpush2.msra.mxu0 0.0
    %4031 = vmatprep.subr.mxu0 0.0
    %4032 = vmatpush2.msra.mxu0 0.0
    %4033 = vmatprep.subr.mxu0 0.0
    %4034 = vmatpush2.msra.mxu0 0.0
    %4035 = vmatprep.subr.mxu0 0.0
    %4036 = vmatpush2.msra.mxu0 0.0
    %4037 = vmatprep.subr.mxu0 0.0
    %4038 = vmatpush2.msra.mxu0 0.0
    %4039 = vmatprep.subr.mxu0 0.0
    %4040 = vmatpush2.msra.mxu0 0.0
    %4041 = vmatprep.subr.mxu0 0.0
    %4042 = vmatpush2.msra.mxu0 0.0
    %4043 = vmatprep.subr.mxu0 0.0
    %4044 = vmatpush2.msra.mxu0 0.0
    %4045 = vmatprep.mubr.f32.mxu0 0.0
    %4046 = vmatmul.mubr.f32.gmra.mxu0 %v3979
    %v4047 = vpop.f32.mrf.mxu0
    %v4048 = vadd.f32 0.0, %v4047
    %v4049 = vpop.f32.mrf.mxu0
    %4050 = vdwg.mxu0
    %4051 = vmatprep.subr.mxu0 0.0
    %4052 = vmatpush1.msra.mxu0 0.0
    %4053 = vmatprep.subr.mxu0 0.0
    %4054 = vmatpush1.msra.mxu0 0.0
    %4055 = vmatprep.subr.mxu0 0.0
    %4056 = vmatpush1.msra.mxu0 0.0
    %4057 = vmatprep.subr.mxu0 0.0
    %4058 = vmatpush1.msra.mxu0 0.0
    %4059 = vmatprep.subr.mxu0 0.0
    %4060 = vmatpush1.msra.mxu0 0.0
    %4061 = vmatprep.subr.mxu0 0.0
    %4062 = vmatpush1.msra.mxu0 0.0
    %4063 = vmatprep.subr.mxu0 0.0
    %4064 = vmatpush1.msra.mxu0 0.0
    %4065 = vmatprep.subr.mxu0 0.0
    %4066 = vmatpush1.msra.mxu0 0.0
    %4067 = vmatprep.subr.mxu0 0.0
    %4068 = vmatpush1.msra.mxu0 0.0
    %4069 = vmatprep.subr.mxu0 0.0
    %4070 = vmatpush1.msra.mxu0 0.0
    %4071 = vmatprep.subr.mxu0 0.0
    %4072 = vmatpush1.msra.mxu0 0.0
    %4073 = vmatprep.subr.mxu0 0.0
    %4074 = vmatpush1.msra.mxu0 0.0
    %4075 = vmatprep.subr.mxu0 0.0
    %4076 = vmatpush1.msra.mxu0 %v78
    %4077 = vmatprep.subr.mxu0 0.0
    %4078 = vmatpush1.msra.mxu0 %v77
    %4079 = vmatprep.subr.mxu0 0.0
    %4080 = vmatpush1.msra.mxu0 %v76
    %4081 = vmatprep.subr.mxu0 0.0
    %4082 = vmatpush1.msra.mxu0 %v75
    %4083 = vmatprep.subr.mxu0 0.0
    %4084 = vmatpush2.msra.mxu0 0.0
    %4085 = vmatprep.subr.mxu0 0.0
    %4086 = vmatpush2.msra.mxu0 0.0
    %4087 = vmatprep.subr.mxu0 0.0
    %4088 = vmatpush2.msra.mxu0 0.0
    %4089 = vmatprep.subr.mxu0 0.0
    %4090 = vmatpush2.msra.mxu0 0.0
    %4091 = vmatprep.subr.mxu0 0.0
    %4092 = vmatpush2.msra.mxu0 0.0
    %4093 = vmatprep.subr.mxu0 0.0
    %4094 = vmatpush2.msra.mxu0 0.0
    %4095 = vmatprep.subr.mxu0 0.0
    %4096 = vmatpush2.msra.mxu0 0.0
    %4097 = vmatprep.subr.mxu0 0.0
    %4098 = vmatpush2.msra.mxu0 0.0
    %4099 = vmatprep.subr.mxu0 0.0
    %4100 = vmatpush2.msra.mxu0 0.0
    %4101 = vmatprep.subr.mxu0 0.0
    %4102 = vmatpush2.msra.mxu0 0.0
    %4103 = vmatprep.subr.mxu0 0.0
    %4104 = vmatpush2.msra.mxu0 0.0
    %4105 = vmatprep.subr.mxu0 0.0
    %4106 = vmatpush2.msra.mxu0 0.0
    %4107 = vmatprep.subr.mxu0 0.0
    %4108 = vmatpush2.msra.mxu0 0.0
    %4109 = vmatprep.subr.mxu0 0.0
    %4110 = vmatpush2.msra.mxu0 0.0
    %4111 = vmatprep.subr.mxu0 0.0
    %4112 = vmatpush2.msra.mxu0 0.0
    %4113 = vmatprep.subr.mxu0 0.0
    %4114 = vmatpush2.msra.mxu0 0.0
    %4115 = vmatprep.mubr.f32.mxu0 0.0
    %4116 = vmatmul.mubr.f32.gmra.mxu0 %v3979
    %v4117 = vpop.f32.mrf.mxu0
    %v4118 = vadd.f32 0.0, %v4117
    %v4119 = vpop.f32.mrf.mxu0
    %4120 = vdwg.mxu0
    %v4121 = vadd.f32 %v3835, %v4048
    %v4122 = vxor.u32 %v4121, 2147483648
    %v4123 = vmul.f32 %v4122, 1.442695
    %v4124 = vpow.pop %v4123
    %v4125 = vadd.f32 %v4124, 1.0
    %v4126 = vrcp.pop %v4125
    %v4127 = vmul.f32 1.0, %v4126
    %v4128 = vadd.f32 %v3905, %v4118
    %v4129 = vxor.u32 %v4128, 2147483648
    %v4130 = vmul.f32 %v4129, 1.442695
    %v4131 = vpow.pop %v4130
    %v4132 = vadd.f32 %v4131, 1.0
    %v4133 = vrcp.pop %v4132
    %v4134 = vmul.f32 1.0, %v4133
    %4135 = vmatprep.subr.mxu0 0.0
    %4136 = vmatpush1.msra.mxu0 0.0
    %4137 = vmatprep.subr.mxu0 0.0
    %4138 = vmatpush1.msra.mxu0 0.0
    %4139 = vmatprep.subr.mxu0 0.0
    %4140 = vmatpush1.msra.mxu0 0.0
    %4141 = vmatprep.subr.mxu0 0.0
    %4142 = vmatpush1.msra.mxu0 0.0
    %4143 = vmatprep.subr.mxu0 0.0
    %4144 = vmatpush1.msra.mxu0 0.0
    %4145 = vmatprep.subr.mxu0 0.0
    %4146 = vmatpush1.msra.mxu0 0.0
    %4147 = vmatprep.subr.mxu0 0.0
    %4148 = vmatpush1.msra.mxu0 0.0
    %4149 = vmatprep.subr.mxu0 0.0
    %4150 = vmatpush1.msra.mxu0 0.0
    %4151 = vmatprep.subr.mxu0 0.0
    %4152 = vmatpush1.msra.mxu0 0.0
    %4153 = vmatprep.subr.mxu0 0.0
    %4154 = vmatpush1.msra.mxu0 0.0
    %4155 = vmatprep.subr.mxu0 0.0
    %4156 = vmatpush1.msra.mxu0 0.0
    %4157 = vmatprep.subr.mxu0 0.0
    %4158 = vmatpush1.msra.mxu0 0.0
    %4159 = vmatprep.subr.mxu0 0.0
    %4160 = vmatpush1.msra.mxu0 %v82
    %4161 = vmatprep.subr.mxu0 0.0
    %4162 = vmatpush1.msra.mxu0 %v81
    %4163 = vmatprep.subr.mxu0 0.0
    %4164 = vmatpush1.msra.mxu0 %v80
    %4165 = vmatprep.subr.mxu0 0.0
    %4166 = vmatpush1.msra.mxu0 %v79
    %4167 = vmatprep.subr.mxu0 0.0
    %4168 = vmatpush2.msra.mxu0 0.0
    %4169 = vmatprep.subr.mxu0 0.0
    %4170 = vmatpush2.msra.mxu0 0.0
    %4171 = vmatprep.subr.mxu0 0.0
    %4172 = vmatpush2.msra.mxu0 0.0
    %4173 = vmatprep.subr.mxu0 0.0
    %4174 = vmatpush2.msra.mxu0 0.0
    %4175 = vmatprep.subr.mxu0 0.0
    %4176 = vmatpush2.msra.mxu0 0.0
    %4177 = vmatprep.subr.mxu0 0.0
    %4178 = vmatpush2.msra.mxu0 0.0
    %4179 = vmatprep.subr.mxu0 0.0
    %4180 = vmatpush2.msra.mxu0 0.0
    %4181 = vmatprep.subr.mxu0 0.0
    %4182 = vmatpush2.msra.mxu0 0.0
    %4183 = vmatprep.subr.mxu0 0.0
    %4184 = vmatpush2.msra.mxu0 0.0
    %4185 = vmatprep.subr.mxu0 0.0
    %4186 = vmatpush2.msra.mxu0 0.0
    %4187 = vmatprep.subr.mxu0 0.0
    %4188 = vmatpush2.msra.mxu0 0.0
    %4189 = vmatprep.subr.mxu0 0.0
    %4190 = vmatpush2.msra.mxu0 0.0
    %4191 = vmatprep.subr.mxu0 0.0
    %4192 = vmatpush2.msra.mxu0 0.0
    %4193 = vmatprep.subr.mxu0 0.0
    %4194 = vmatpush2.msra.mxu0 0.0
    %4195 = vmatprep.subr.mxu0 0.0
    %4196 = vmatpush2.msra.mxu0 0.0
    %4197 = vmatprep.subr.mxu0 0.0
    %4198 = vmatpush2.msra.mxu0 0.0
    %4199 = vmatprep.mubr.f32.mxu0 0.0
    %4200 = vmatmul.mubr.f32.gmra.mxu0 %v3979
    %v4201 = vpop.f32.mrf.mxu0
    %v4202 = vadd.f32 %v723, %v4201
    %v4203 = vpop.f32.mrf.mxu0
    %4204 = vdwg.mxu0
    %v4205 = vmul.f32 %v4127, %v4202
    %v4206 = vadd.f32 %v3975, %v4205
    %v4207 = vtanh.pop %v4206
    %v4208 = vsub.f32 1.0, %v4134
    %v4209 = vmul.f32 %v4208, %v4207
    %v4210 = vmul.f32 %v4134, %v3529
    %v4211 = vadd.f32 %v4209, %v4210
    %s4212 = scalar_lea.vmem %s0, 36
    %v4213 = vld [vmem:[%s4212] sm:$0x3]
    %v4214 = vld [vmem:[%s4212 + $0x2] sm:$0x3]
    %v4215 = vld [vmem:[%s4212 + $0x4] sm:$0x3]
    %4216 = vmatprep.subr.mxu0 0.0
    %4217 = vmatpush1.msra.mxu0 0.0
    %4218 = vmatprep.subr.mxu0 0.0
    %4219 = vmatpush1.msra.mxu0 0.0
    %4220 = vmatprep.subr.mxu0 0.0
    %4221 = vmatpush1.msra.mxu0 0.0
    %4222 = vmatprep.subr.mxu0 0.0
    %4223 = vmatpush1.msra.mxu0 0.0
    %4224 = vmatprep.subr.mxu0 0.0
    %4225 = vmatpush1.msra.mxu0 0.0
    %4226 = vmatprep.subr.mxu0 0.0
    %4227 = vmatpush1.msra.mxu0 0.0
    %4228 = vmatprep.subr.mxu0 0.0
    %4229 = vmatpush1.msra.mxu0 0.0
    %4230 = vmatprep.subr.mxu0 0.0
    %4231 = vmatpush1.msra.mxu0 0.0
    %4232 = vmatprep.subr.mxu0 0.0
    %4233 = vmatpush1.msra.mxu0 0.0
    %4234 = vmatprep.subr.mxu0 0.0
    %4235 = vmatpush1.msra.mxu0 0.0
    %4236 = vmatprep.subr.mxu0 0.0
    %4237 = vmatpush1.msra.mxu0 0.0
    %4238 = vmatprep.subr.mxu0 0.0
    %4239 = vmatpush1.msra.mxu0 0.0
    %4240 = vmatprep.subr.mxu0 0.0
    %4241 = vmatpush1.msra.mxu0 %v46
    %4242 = vmatprep.subr.mxu0 0.0
    %4243 = vmatpush1.msra.mxu0 %v45
    %4244 = vmatprep.subr.mxu0 0.0
    %4245 = vmatpush1.msra.mxu0 %v44
    %4246 = vmatprep.subr.mxu0 0.0
    %4247 = vmatpush1.msra.mxu0 %v43
    %4248 = vmatprep.subr.mxu0 0.0
    %4249 = vmatpush2.msra.mxu0 0.0
    %4250 = vmatprep.subr.mxu0 0.0
    %4251 = vmatpush2.msra.mxu0 0.0
    %4252 = vmatprep.subr.mxu0 0.0
    %4253 = vmatpush2.msra.mxu0 0.0
    %4254 = vmatprep.subr.mxu0 0.0
    %4255 = vmatpush2.msra.mxu0 0.0
    %4256 = vmatprep.subr.mxu0 0.0
    %4257 = vmatpush2.msra.mxu0 0.0
    %4258 = vmatprep.subr.mxu0 0.0
    %4259 = vmatpush2.msra.mxu0 0.0
    %4260 = vmatprep.subr.mxu0 0.0
    %4261 = vmatpush2.msra.mxu0 0.0
    %4262 = vmatprep.subr.mxu0 0.0
    %4263 = vmatpush2.msra.mxu0 0.0
    %4264 = vmatprep.subr.mxu0 0.0
    %4265 = vmatpush2.msra.mxu0 0.0
    %4266 = vmatprep.subr.mxu0 0.0
    %4267 = vmatpush2.msra.mxu0 0.0
    %4268 = vmatprep.subr.mxu0 0.0
    %4269 = vmatpush2.msra.mxu0 0.0
    %4270 = vmatprep.subr.mxu0 0.0
    %4271 = vmatpush2.msra.mxu0 0.0
    %4272 = vmatprep.subr.mxu0 0.0
    %4273 = vmatpush2.msra.mxu0 0.0
    %4274 = vmatprep.subr.mxu0 0.0
    %4275 = vmatpush2.msra.mxu0 0.0
    %4276 = vmatprep.subr.mxu0 0.0
    %4277 = vmatpush2.msra.mxu0 0.0
    %4278 = vmatprep.subr.mxu0 0.0
    %4279 = vmatpush2.msra.mxu0 0.0
    %4280 = vmatprep.mubr.f32.mxu0 0.0
    %4281 = vmatmul.mubr.f32.gmra.mxu0 %v3766
    %v4282 = vpop.f32.mrf.mxu0
    %v4283 = vadd.f32 0.0, %v4282
    %v4284 = vpop.f32.mrf.mxu0
    %4285 = vdwg.mxu0
    %4286 = vmatprep.subr.mxu0 0.0
    %4287 = vmatpush1.msra.mxu0 0.0
    %4288 = vmatprep.subr.mxu0 0.0
    %4289 = vmatpush1.msra.mxu0 0.0
    %4290 = vmatprep.subr.mxu0 0.0
    %4291 = vmatpush1.msra.mxu0 0.0
    %4292 = vmatprep.subr.mxu0 0.0
    %4293 = vmatpush1.msra.mxu0 0.0
    %4294 = vmatprep.subr.mxu0 0.0
    %4295 = vmatpush1.msra.mxu0 0.0
    %4296 = vmatprep.subr.mxu0 0.0
    %4297 = vmatpush1.msra.mxu0 0.0
    %4298 = vmatprep.subr.mxu0 0.0
    %4299 = vmatpush1.msra.mxu0 0.0
    %4300 = vmatprep.subr.mxu0 0.0
    %4301 = vmatpush1.msra.mxu0 0.0
    %4302 = vmatprep.subr.mxu0 0.0
    %4303 = vmatpush1.msra.mxu0 0.0
    %4304 = vmatprep.subr.mxu0 0.0
    %4305 = vmatpush1.msra.mxu0 0.0
    %4306 = vmatprep.subr.mxu0 0.0
    %4307 = vmatpush1.msra.mxu0 0.0
    %4308 = vmatprep.subr.mxu0 0.0
    %4309 = vmatpush1.msra.mxu0 0.0
    %4310 = vmatprep.subr.mxu0 0.0
    %4311 = vmatpush1.msra.mxu0 %v50
    %4312 = vmatprep.subr.mxu0 0.0
    %4313 = vmatpush1.msra.mxu0 %v49
    %4314 = vmatprep.subr.mxu0 0.0
    %4315 = vmatpush1.msra.mxu0 %v48
    %4316 = vmatprep.subr.mxu0 0.0
    %4317 = vmatpush1.msra.mxu0 %v47
    %4318 = vmatprep.subr.mxu0 0.0
    %4319 = vmatpush2.msra.mxu0 0.0
    %4320 = vmatprep.subr.mxu0 0.0
    %4321 = vmatpush2.msra.mxu0 0.0
    %4322 = vmatprep.subr.mxu0 0.0
    %4323 = vmatpush2.msra.mxu0 0.0
    %4324 = vmatprep.subr.mxu0 0.0
    %4325 = vmatpush2.msra.mxu0 0.0
    %4326 = vmatprep.subr.mxu0 0.0
    %4327 = vmatpush2.msra.mxu0 0.0
    %4328 = vmatprep.subr.mxu0 0.0
    %4329 = vmatpush2.msra.mxu0 0.0
    %4330 = vmatprep.subr.mxu0 0.0
    %4331 = vmatpush2.msra.mxu0 0.0
    %4332 = vmatprep.subr.mxu0 0.0
    %4333 = vmatpush2.msra.mxu0 0.0
    %4334 = vmatprep.subr.mxu0 0.0
    %4335 = vmatpush2.msra.mxu0 0.0
    %4336 = vmatprep.subr.mxu0 0.0
    %4337 = vmatpush2.msra.mxu0 0.0
    %4338 = vmatprep.subr.mxu0 0.0
    %4339 = vmatpush2.msra.mxu0 0.0
    %4340 = vmatprep.subr.mxu0 0.0
    %4341 = vmatpush2.msra.mxu0 0.0
    %4342 = vmatprep.subr.mxu0 0.0
    %4343 = vmatpush2.msra.mxu0 0.0
    %4344 = vmatprep.subr.mxu0 0.0
    %4345 = vmatpush2.msra.mxu0 0.0
    %4346 = vmatprep.subr.mxu0 0.0
    %4347 = vmatpush2.msra.mxu0 0.0
    %4348 = vmatprep.subr.mxu0 0.0
    %4349 = vmatpush2.msra.mxu0 0.0
    %4350 = vmatprep.mubr.f32.mxu0 0.0
    %4351 = vmatmul.mubr.f32.gmra.mxu0 %v3766
    %v4352 = vpop.f32.mrf.mxu0
    %v4353 = vadd.f32 0.0, %v4352
    %v4354 = vpop.f32.mrf.mxu0
    %4355 = vdwg.mxu0
    %v4356 = vadd.f32 %v4213, %v4283
    %v4357 = vxor.u32 %v4356, 2147483648
    %v4358 = vmul.f32 %v4357, 1.442695
    %v4359 = vpow.pop %v4358
    %v4360 = vadd.f32 %v4359, 1.0
    %v4361 = vrcp.pop %v4360
    %v4362 = vmul.f32 1.0, %v4361
    %v4363 = vadd.f32 %v4214, %v4353
    %v4364 = vxor.u32 %v4363, 2147483648
    %v4365 = vmul.f32 %v4364, 1.442695
    %v4366 = vpow.pop %v4365
    %v4367 = vadd.f32 %v4366, 1.0
    %v4368 = vrcp.pop %v4367
    %v4369 = vmul.f32 1.0, %v4368
    %4370 = vmatprep.subr.mxu0 0.0
    %4371 = vmatpush1.msra.mxu0 0.0
    %4372 = vmatprep.subr.mxu0 0.0
    %4373 = vmatpush1.msra.mxu0 0.0
    %4374 = vmatprep.subr.mxu0 0.0
    %4375 = vmatpush1.msra.mxu0 0.0
    %4376 = vmatprep.subr.mxu0 0.0
    %4377 = vmatpush1.msra.mxu0 0.0
    %4378 = vmatprep.subr.mxu0 0.0
    %4379 = vmatpush1.msra.mxu0 0.0
    %4380 = vmatprep.subr.mxu0 0.0
    %4381 = vmatpush1.msra.mxu0 0.0
    %4382 = vmatprep.subr.mxu0 0.0
    %4383 = vmatpush1.msra.mxu0 0.0
    %4384 = vmatprep.subr.mxu0 0.0
    %4385 = vmatpush1.msra.mxu0 0.0
    %4386 = vmatprep.subr.mxu0 0.0
    %4387 = vmatpush1.msra.mxu0 0.0
    %4388 = vmatprep.subr.mxu0 0.0
    %4389 = vmatpush1.msra.mxu0 0.0
    %4390 = vmatprep.subr.mxu0 0.0
    %4391 = vmatpush1.msra.mxu0 0.0
    %4392 = vmatprep.subr.mxu0 0.0
    %4393 = vmatpush1.msra.mxu0 0.0
    %4394 = vmatprep.subr.mxu0 0.0
    %4395 = vmatpush1.msra.mxu0 %v54
    %4396 = vmatprep.subr.mxu0 0.0
    %4397 = vmatpush1.msra.mxu0 %v53
    %4398 = vmatprep.subr.mxu0 0.0
    %4399 = vmatpush1.msra.mxu0 %v52
    %4400 = vmatprep.subr.mxu0 0.0
    %4401 = vmatpush1.msra.mxu0 %v51
    %4402 = vmatprep.subr.mxu0 0.0
    %4403 = vmatpush2.msra.mxu0 0.0
    %4404 = vmatprep.subr.mxu0 0.0
    %4405 = vmatpush2.msra.mxu0 0.0
    %4406 = vmatprep.subr.mxu0 0.0
    %4407 = vmatpush2.msra.mxu0 0.0
    %4408 = vmatprep.subr.mxu0 0.0
    %4409 = vmatpush2.msra.mxu0 0.0
    %4410 = vmatprep.subr.mxu0 0.0
    %4411 = vmatpush2.msra.mxu0 0.0
    %4412 = vmatprep.subr.mxu0 0.0
    %4413 = vmatpush2.msra.mxu0 0.0
    %4414 = vmatprep.subr.mxu0 0.0
    %4415 = vmatpush2.msra.mxu0 0.0
    %4416 = vmatprep.subr.mxu0 0.0
    %4417 = vmatpush2.msra.mxu0 0.0
    %4418 = vmatprep.subr.mxu0 0.0
    %4419 = vmatpush2.msra.mxu0 0.0
    %4420 = vmatprep.subr.mxu0 0.0
    %4421 = vmatpush2.msra.mxu0 0.0
    %4422 = vmatprep.subr.mxu0 0.0
    %4423 = vmatpush2.msra.mxu0 0.0
    %4424 = vmatprep.subr.mxu0 0.0
    %4425 = vmatpush2.msra.mxu0 0.0
    %4426 = vmatprep.subr.mxu0 0.0
    %4427 = vmatpush2.msra.mxu0 0.0
    %4428 = vmatprep.subr.mxu0 0.0
    %4429 = vmatpush2.msra.mxu0 0.0
    %4430 = vmatprep.subr.mxu0 0.0
    %4431 = vmatpush2.msra.mxu0 0.0
    %4432 = vmatprep.subr.mxu0 0.0
    %4433 = vmatpush2.msra.mxu0 0.0
    %4434 = vmatprep.mubr.f32.mxu0 0.0
    %4435 = vmatmul.mubr.f32.gmra.mxu0 %v3766
    %v4436 = vpop.f32.mrf.mxu0
    %v4437 = vadd.f32 %v252, %v4436
    %v4438 = vpop.f32.mrf.mxu0
    %4439 = vdwg.mxu0
    %v4440 = vmul.f32 %v4362, %v4437
    %v4441 = vadd.f32 %v4215, %v4440
    %v4442 = vtanh.pop %v4441
    %v4443 = vsub.f32 1.0, %v4369
    %v4444 = vmul.f32 %v4443, %v4442
    %v4445 = vmul.f32 %v4369, %v3764
    %v4446 = vadd.f32 %v4444, %v4445
    %v4448 = vsel %vm90, %v4446, 0
    %4450 = vmatprep.subr.mxu0 0.0
    %4451 = vmatpush1.msra.mxu0 0.0
    %4452 = vmatprep.subr.mxu0 0.0
    %4453 = vmatpush1.msra.mxu0 0.0
    %4454 = vmatprep.subr.mxu0 0.0
    %4455 = vmatpush1.msra.mxu0 0.0
    %4456 = vmatprep.subr.mxu0 0.0
    %4457 = vmatpush1.msra.mxu0 0.0
    %4458 = vmatprep.subr.mxu0 0.0
    %4459 = vmatpush1.msra.mxu0 0.0
    %4460 = vmatprep.subr.mxu0 0.0
    %4461 = vmatpush1.msra.mxu0 0.0
    %4462 = vmatprep.subr.mxu0 0.0
    %4463 = vmatpush1.msra.mxu0 0.0
    %4464 = vmatprep.subr.mxu0 0.0
    %4465 = vmatpush1.msra.mxu0 0.0
    %4466 = vmatprep.subr.mxu0 0.0
    %4467 = vmatpush1.msra.mxu0 0.0
    %4468 = vmatprep.subr.mxu0 0.0
    %4469 = vmatpush1.msra.mxu0 0.0
    %4470 = vmatprep.subr.mxu0 0.0
    %4471 = vmatpush1.msra.mxu0 0.0
    %4472 = vmatprep.subr.mxu0 0.0
    %4473 = vmatpush1.msra.mxu0 0.0
    %4474 = vmatprep.subr.mxu0 0.0
    %4475 = vmatpush1.msra.mxu0 %v59
    %4476 = vmatprep.subr.mxu0 0.0
    %4477 = vmatpush1.msra.mxu0 %v58
    %4478 = vmatprep.subr.mxu0 0.0
    %4479 = vmatpush1.msra.mxu0 %v57
    %4480 = vmatprep.subr.mxu0 0.0
    %4481 = vmatpush1.msra.mxu0 %v56
    %4482 = vmatprep.subr.mxu0 0.0
    %4483 = vmatpush2.msra.mxu0 0.0
    %4484 = vmatprep.subr.mxu0 0.0
    %4485 = vmatpush2.msra.mxu0 0.0
    %4486 = vmatprep.subr.mxu0 0.0
    %4487 = vmatpush2.msra.mxu0 0.0
    %4488 = vmatprep.subr.mxu0 0.0
    %4489 = vmatpush2.msra.mxu0 0.0
    %4490 = vmatprep.subr.mxu0 0.0
    %4491 = vmatpush2.msra.mxu0 0.0
    %4492 = vmatprep.subr.mxu0 0.0
    %4493 = vmatpush2.msra.mxu0 0.0
    %4494 = vmatprep.subr.mxu0 0.0
    %4495 = vmatpush2.msra.mxu0 0.0
    %4496 = vmatprep.subr.mxu0 0.0
    %4497 = vmatpush2.msra.mxu0 0.0
    %4498 = vmatprep.subr.mxu0 0.0
    %4499 = vmatpush2.msra.mxu0 0.0
    %4500 = vmatprep.subr.mxu0 0.0
    %4501 = vmatpush2.msra.mxu0 0.0
    %4502 = vmatprep.subr.mxu0 0.0
    %4503 = vmatpush2.msra.mxu0 0.0
    %4504 = vmatprep.subr.mxu0 0.0
    %4505 = vmatpush2.msra.mxu0 0.0
    %4506 = vmatprep.subr.mxu0 0.0
    %4507 = vmatpush2.msra.mxu0 0.0
    %4508 = vmatprep.subr.mxu0 0.0
    %4509 = vmatpush2.msra.mxu0 0.0
    %4510 = vmatprep.subr.mxu0 0.0
    %4511 = vmatpush2.msra.mxu0 0.0
    %4512 = vmatprep.subr.mxu0 0.0
    %4513 = vmatpush2.msra.mxu0 0.0
    %4514 = vmatprep.mubr.f32.mxu0 0.0
    %4515 = vmatmul.mubr.f32.gmra.mxu0 %v4448
    %v4516 = vpop.f32.mrf.mxu0
    %v4517 = vadd.f32 %v335, %v4516
    %v4518 = vpop.f32.mrf.mxu0
    %4519 = vdwg.mxu0
    %4520 = vmatprep.subr.mxu0 0.0
    %4521 = vmatpush1.msra.mxu0 0.0
    %4522 = vmatprep.subr.mxu0 0.0
    %4523 = vmatpush1.msra.mxu0 0.0
    %4524 = vmatprep.subr.mxu0 0.0
    %4525 = vmatpush1.msra.mxu0 0.0
    %4526 = vmatprep.subr.mxu0 0.0
    %4527 = vmatpush1.msra.mxu0 0.0
    %4528 = vmatprep.subr.mxu0 0.0
    %4529 = vmatpush1.msra.mxu0 0.0
    %4530 = vmatprep.subr.mxu0 0.0
    %4531 = vmatpush1.msra.mxu0 0.0
    %4532 = vmatprep.subr.mxu0 0.0
    %4533 = vmatpush1.msra.mxu0 0.0
    %4534 = vmatprep.subr.mxu0 0.0
    %4535 = vmatpush1.msra.mxu0 0.0
    %4536 = vmatprep.subr.mxu0 0.0
    %4537 = vmatpush1.msra.mxu0 0.0
    %4538 = vmatprep.subr.mxu0 0.0
    %4539 = vmatpush1.msra.mxu0 0.0
    %4540 = vmatprep.subr.mxu0 0.0
    %4541 = vmatpush1.msra.mxu0 0.0
    %4542 = vmatprep.subr.mxu0 0.0
    %4543 = vmatpush1.msra.mxu0 0.0
    %4544 = vmatprep.subr.mxu0 0.0
    %4545 = vmatpush1.msra.mxu0 %v63
    %4546 = vmatprep.subr.mxu0 0.0
    %4547 = vmatpush1.msra.mxu0 %v62
    %4548 = vmatprep.subr.mxu0 0.0
    %4549 = vmatpush1.msra.mxu0 %v61
    %4550 = vmatprep.subr.mxu0 0.0
    %4551 = vmatpush1.msra.mxu0 %v60
    %4552 = vmatprep.subr.mxu0 0.0
    %4553 = vmatpush2.msra.mxu0 0.0
    %4554 = vmatprep.subr.mxu0 0.0
    %4555 = vmatpush2.msra.mxu0 0.0
    %4556 = vmatprep.subr.mxu0 0.0
    %4557 = vmatpush2.msra.mxu0 0.0
    %4558 = vmatprep.subr.mxu0 0.0
    %4559 = vmatpush2.msra.mxu0 0.0
    %4560 = vmatprep.subr.mxu0 0.0
    %4561 = vmatpush2.msra.mxu0 0.0
    %4562 = vmatprep.subr.mxu0 0.0
    %4563 = vmatpush2.msra.mxu0 0.0
    %4564 = vmatprep.subr.mxu0 0.0
    %4565 = vmatpush2.msra.mxu0 0.0
    %4566 = vmatprep.subr.mxu0 0.0
    %4567 = vmatpush2.msra.mxu0 0.0
    %4568 = vmatprep.subr.mxu0 0.0
    %4569 = vmatpush2.msra.mxu0 0.0
    %4570 = vmatprep.subr.mxu0 0.0
    %4571 = vmatpush2.msra.mxu0 0.0
    %4572 = vmatprep.subr.mxu0 0.0
    %4573 = vmatpush2.msra.mxu0 0.0
    %4574 = vmatprep.subr.mxu0 0.0
    %4575 = vmatpush2.msra.mxu0 0.0
    %4576 = vmatprep.subr.mxu0 0.0
    %4577 = vmatpush2.msra.mxu0 0.0
    %4578 = vmatprep.subr.mxu0 0.0
    %4579 = vmatpush2.msra.mxu0 0.0
    %4580 = vmatprep.subr.mxu0 0.0
    %4581 = vmatpush2.msra.mxu0 0.0
    %4582 = vmatprep.subr.mxu0 0.0
    %4583 = vmatpush2.msra.mxu0 0.0
    %4584 = vmatprep.mubr.f32.mxu0 0.0
    %4585 = vmatmul.mubr.f32.gmra.mxu0 %v4448
    %v4586 = vpop.f32.mrf.mxu0
    %v4587 = vadd.f32 %v414, %v4586
    %v4588 = vpop.f32.mrf.mxu0
    %4589 = vdwg.mxu0
    %4590 = vmatprep.subr.mxu0 0.0
    %4591 = vmatpush1.msra.mxu0 0.0
    %4592 = vmatprep.subr.mxu0 0.0
    %4593 = vmatpush1.msra.mxu0 0.0
    %4594 = vmatprep.subr.mxu0 0.0
    %4595 = vmatpush1.msra.mxu0 0.0
    %4596 = vmatprep.subr.mxu0 0.0
    %4597 = vmatpush1.msra.mxu0 0.0
    %4598 = vmatprep.subr.mxu0 0.0
    %4599 = vmatpush1.msra.mxu0 0.0
    %4600 = vmatprep.subr.mxu0 0.0
    %4601 = vmatpush1.msra.mxu0 0.0
    %4602 = vmatprep.subr.mxu0 0.0
    %4603 = vmatpush1.msra.mxu0 0.0
    %4604 = vmatprep.subr.mxu0 0.0
    %4605 = vmatpush1.msra.mxu0 0.0
    %4606 = vmatprep.subr.mxu0 0.0
    %4607 = vmatpush1.msra.mxu0 0.0
    %4608 = vmatprep.subr.mxu0 0.0
    %4609 = vmatpush1.msra.mxu0 0.0
    %4610 = vmatprep.subr.mxu0 0.0
    %4611 = vmatpush1.msra.mxu0 0.0
    %4612 = vmatprep.subr.mxu0 0.0
    %4613 = vmatpush1.msra.mxu0 0.0
    %4614 = vmatprep.subr.mxu0 0.0
    %4615 = vmatpush1.msra.mxu0 %v67
    %4616 = vmatprep.subr.mxu0 0.0
    %4617 = vmatpush1.msra.mxu0 %v66
    %4618 = vmatprep.subr.mxu0 0.0
    %4619 = vmatpush1.msra.mxu0 %v65
    %4620 = vmatprep.subr.mxu0 0.0
    %4621 = vmatpush1.msra.mxu0 %v64
    %4622 = vmatprep.subr.mxu0 0.0
    %4623 = vmatpush2.msra.mxu0 0.0
    %4624 = vmatprep.subr.mxu0 0.0
    %4625 = vmatpush2.msra.mxu0 0.0
    %4626 = vmatprep.subr.mxu0 0.0
    %4627 = vmatpush2.msra.mxu0 0.0
    %4628 = vmatprep.subr.mxu0 0.0
    %4629 = vmatpush2.msra.mxu0 0.0
    %4630 = vmatprep.subr.mxu0 0.0
    %4631 = vmatpush2.msra.mxu0 0.0
    %4632 = vmatprep.subr.mxu0 0.0
    %4633 = vmatpush2.msra.mxu0 0.0
    %4634 = vmatprep.subr.mxu0 0.0
    %4635 = vmatpush2.msra.mxu0 0.0
    %4636 = vmatprep.subr.mxu0 0.0
    %4637 = vmatpush2.msra.mxu0 0.0
    %4638 = vmatprep.subr.mxu0 0.0
    %4639 = vmatpush2.msra.mxu0 0.0
    %4640 = vmatprep.subr.mxu0 0.0
    %4641 = vmatpush2.msra.mxu0 0.0
    %4642 = vmatprep.subr.mxu0 0.0
    %4643 = vmatpush2.msra.mxu0 0.0
    %4644 = vmatprep.subr.mxu0 0.0
    %4645 = vmatpush2.msra.mxu0 0.0
    %4646 = vmatprep.subr.mxu0 0.0
    %4647 = vmatpush2.msra.mxu0 0.0
    %4648 = vmatprep.subr.mxu0 0.0
    %4649 = vmatpush2.msra.mxu0 0.0
    %4650 = vmatprep.subr.mxu0 0.0
    %4651 = vmatpush2.msra.mxu0 0.0
    %4652 = vmatprep.subr.mxu0 0.0
    %4653 = vmatpush2.msra.mxu0 0.0
    %4654 = vmatprep.mubr.f32.mxu0 0.0
    %4655 = vmatmul.mubr.f32.gmra.mxu0 %v4448
    %v4656 = vpop.f32.mrf.mxu0
    %v4657 = vadd.f32 %v490, %v4656
    %v4658 = vpop.f32.mrf.mxu0
    %4659 = vdwg.mxu0
    %v4661 = vsel %vm90, %v4211, 0
    %4663 = vmatprep.subr.mxu0 0.0
    %4664 = vmatpush1.msra.mxu0 0.0
    %4665 = vmatprep.subr.mxu0 0.0
    %4666 = vmatpush1.msra.mxu0 0.0
    %4667 = vmatprep.subr.mxu0 0.0
    %4668 = vmatpush1.msra.mxu0 0.0
    %4669 = vmatprep.subr.mxu0 0.0
    %4670 = vmatpush1.msra.mxu0 0.0
    %4671 = vmatprep.subr.mxu0 0.0
    %4672 = vmatpush1.msra.mxu0 0.0
    %4673 = vmatprep.subr.mxu0 0.0
    %4674 = vmatpush1.msra.mxu0 0.0
    %4675 = vmatprep.subr.mxu0 0.0
    %4676 = vmatpush1.msra.mxu0 0.0
    %4677 = vmatprep.subr.mxu0 0.0
    %4678 = vmatpush1.msra.mxu0 0.0
    %4679 = vmatprep.subr.mxu0 0.0
    %4680 = vmatpush1.msra.mxu0 0.0
    %4681 = vmatprep.subr.mxu0 0.0
    %4682 = vmatpush1.msra.mxu0 0.0
    %4683 = vmatprep.subr.mxu0 0.0
    %4684 = vmatpush1.msra.mxu0 0.0
    %4685 = vmatprep.subr.mxu0 0.0
    %4686 = vmatpush1.msra.mxu0 0.0
    %4687 = vmatprep.subr.mxu0 0.0
    %4688 = vmatpush1.msra.mxu0 %v74
    %4689 = vmatprep.subr.mxu0 0.0
    %4690 = vmatpush1.msra.mxu0 %v73
    %4691 = vmatprep.subr.mxu0 0.0
    %4692 = vmatpush1.msra.mxu0 %v72
    %4693 = vmatprep.subr.mxu0 0.0
    %4694 = vmatpush1.msra.mxu0 %v71
    %4695 = vmatprep.subr.mxu0 0.0
    %4696 = vmatpush2.msra.mxu0 0.0
    %4697 = vmatprep.subr.mxu0 0.0
    %4698 = vmatpush2.msra.mxu0 0.0
    %4699 = vmatprep.subr.mxu0 0.0
    %4700 = vmatpush2.msra.mxu0 0.0
    %4701 = vmatprep.subr.mxu0 0.0
    %4702 = vmatpush2.msra.mxu0 0.0
    %4703 = vmatprep.subr.mxu0 0.0
    %4704 = vmatpush2.msra.mxu0 0.0
    %4705 = vmatprep.subr.mxu0 0.0
    %4706 = vmatpush2.msra.mxu0 0.0
    %4707 = vmatprep.subr.mxu0 0.0
    %4708 = vmatpush2.msra.mxu0 0.0
    %4709 = vmatprep.subr.mxu0 0.0
    %4710 = vmatpush2.msra.mxu0 0.0
    %4711 = vmatprep.subr.mxu0 0.0
    %4712 = vmatpush2.msra.mxu0 0.0
    %4713 = vmatprep.subr.mxu0 0.0
    %4714 = vmatpush2.msra.mxu0 0.0
    %4715 = vmatprep.subr.mxu0 0.0
    %4716 = vmatpush2.msra.mxu0 0.0
    %4717 = vmatprep.subr.mxu0 0.0
    %4718 = vmatpush2.msra.mxu0 0.0
    %4719 = vmatprep.subr.mxu0 0.0
    %4720 = vmatpush2.msra.mxu0 0.0
    %4721 = vmatprep.subr.mxu0 0.0
    %4722 = vmatpush2.msra.mxu0 0.0
    %4723 = vmatprep.subr.mxu0 0.0
    %4724 = vmatpush2.msra.mxu0 0.0
    %4725 = vmatprep.subr.mxu0 0.0
    %4726 = vmatpush2.msra.mxu0 0.0
    %4727 = vmatprep.mubr.f32.mxu0 0.0
    %4728 = vmatmul.mubr.f32.gmra.mxu0 %v4661
    %v4729 = vpop.f32.mrf.mxu0
    %v4730 = vadd.f32 0.0, %v4729
    %v4731 = vpop.f32.mrf.mxu0
    %4732 = vdwg.mxu0
    %4733 = vmatprep.subr.mxu0 0.0
    %4734 = vmatpush1.msra.mxu0 0.0
    %4735 = vmatprep.subr.mxu0 0.0
    %4736 = vmatpush1.msra.mxu0 0.0
    %4737 = vmatprep.subr.mxu0 0.0
    %4738 = vmatpush1.msra.mxu0 0.0
    %4739 = vmatprep.subr.mxu0 0.0
    %4740 = vmatpush1.msra.mxu0 0.0
    %4741 = vmatprep.subr.mxu0 0.0
    %4742 = vmatpush1.msra.mxu0 0.0
    %4743 = vmatprep.subr.mxu0 0.0
    %4744 = vmatpush1.msra.mxu0 0.0
    %4745 = vmatprep.subr.mxu0 0.0
    %4746 = vmatpush1.msra.mxu0 0.0
    %4747 = vmatprep.subr.mxu0 0.0
    %4748 = vmatpush1.msra.mxu0 0.0
    %4749 = vmatprep.subr.mxu0 0.0
    %4750 = vmatpush1.msra.mxu0 0.0
    %4751 = vmatprep.subr.mxu0 0.0
    %4752 = vmatpush1.msra.mxu0 0.0
    %4753 = vmatprep.subr.mxu0 0.0
    %4754 = vmatpush1.msra.mxu0 0.0
    %4755 = vmatprep.subr.mxu0 0.0
    %4756 = vmatpush1.msra.mxu0 0.0
    %4757 = vmatprep.subr.mxu0 0.0
    %4758 = vmatpush1.msra.mxu0 %v78
    %4759 = vmatprep.subr.mxu0 0.0
    %4760 = vmatpush1.msra.mxu0 %v77
    %4761 = vmatprep.subr.mxu0 0.0
    %4762 = vmatpush1.msra.mxu0 %v76
    %4763 = vmatprep.subr.mxu0 0.0
    %4764 = vmatpush1.msra.mxu0 %v75
    %4765 = vmatprep.subr.mxu0 0.0
    %4766 = vmatpush2.msra.mxu0 0.0
    %4767 = vmatprep.subr.mxu0 0.0
    %4768 = vmatpush2.msra.mxu0 0.0
    %4769 = vmatprep.subr.mxu0 0.0
    %4770 = vmatpush2.msra.mxu0 0.0
    %4771 = vmatprep.subr.mxu0 0.0
    %4772 = vmatpush2.msra.mxu0 0.0
    %4773 = vmatprep.subr.mxu0 0.0
    %4774 = vmatpush2.msra.mxu0 0.0
    %4775 = vmatprep.subr.mxu0 0.0
    %4776 = vmatpush2.msra.mxu0 0.0
    %4777 = vmatprep.subr.mxu0 0.0
    %4778 = vmatpush2.msra.mxu0 0.0
    %4779 = vmatprep.subr.mxu0 0.0
    %4780 = vmatpush2.msra.mxu0 0.0
    %4781 = vmatprep.subr.mxu0 0.0
    %4782 = vmatpush2.msra.mxu0 0.0
    %4783 = vmatprep.subr.mxu0 0.0
    %4784 = vmatpush2.msra.mxu0 0.0
    %4785 = vmatprep.subr.mxu0 0.0
    %4786 = vmatpush2.msra.mxu0 0.0
    %4787 = vmatprep.subr.mxu0 0.0
    %4788 = vmatpush2.msra.mxu0 0.0
    %4789 = vmatprep.subr.mxu0 0.0
    %4790 = vmatpush2.msra.mxu0 0.0
    %4791 = vmatprep.subr.mxu0 0.0
    %4792 = vmatpush2.msra.mxu0 0.0
    %4793 = vmatprep.subr.mxu0 0.0
    %4794 = vmatpush2.msra.mxu0 0.0
    %4795 = vmatprep.subr.mxu0 0.0
    %4796 = vmatpush2.msra.mxu0 0.0
    %4797 = vmatprep.mubr.f32.mxu0 0.0
    %4798 = vmatmul.mubr.f32.gmra.mxu0 %v4661
    %v4799 = vpop.f32.mrf.mxu0
    %v4800 = vadd.f32 0.0, %v4799
    %v4801 = vpop.f32.mrf.mxu0
    %4802 = vdwg.mxu0
    %v4803 = vadd.f32 %v4517, %v4730
    %v4804 = vxor.u32 %v4803, 2147483648
    %v4805 = vmul.f32 %v4804, 1.442695
    %v4806 = vpow.pop %v4805
    %v4807 = vadd.f32 %v4806, 1.0
    %v4808 = vrcp.pop %v4807
    %v4809 = vmul.f32 1.0, %v4808
    %v4810 = vadd.f32 %v4587, %v4800
    %v4811 = vxor.u32 %v4810, 2147483648
    %v4812 = vmul.f32 %v4811, 1.442695
    %v4813 = vpow.pop %v4812
    %v4814 = vadd.f32 %v4813, 1.0
    %v4815 = vrcp.pop %v4814
    %v4816 = vmul.f32 1.0, %v4815
    %4817 = vmatprep.subr.mxu0 0.0
    %4818 = vmatpush1.msra.mxu0 0.0
    %4819 = vmatprep.subr.mxu0 0.0
    %4820 = vmatpush1.msra.mxu0 0.0
    %4821 = vmatprep.subr.mxu0 0.0
    %4822 = vmatpush1.msra.mxu0 0.0
    %4823 = vmatprep.subr.mxu0 0.0
    %4824 = vmatpush1.msra.mxu0 0.0
    %4825 = vmatprep.subr.mxu0 0.0
    %4826 = vmatpush1.msra.mxu0 0.0
    %4827 = vmatprep.subr.mxu0 0.0
    %4828 = vmatpush1.msra.mxu0 0.0
    %4829 = vmatprep.subr.mxu0 0.0
    %4830 = vmatpush1.msra.mxu0 0.0
    %4831 = vmatprep.subr.mxu0 0.0
    %4832 = vmatpush1.msra.mxu0 0.0
    %4833 = vmatprep.subr.mxu0 0.0
    %4834 = vmatpush1.msra.mxu0 0.0
    %4835 = vmatprep.subr.mxu0 0.0
    %4836 = vmatpush1.msra.mxu0 0.0
    %4837 = vmatprep.subr.mxu0 0.0
    %4838 = vmatpush1.msra.mxu0 0.0
    %4839 = vmatprep.subr.mxu0 0.0
    %4840 = vmatpush1.msra.mxu0 0.0
    %4841 = vmatprep.subr.mxu0 0.0
    %4842 = vmatpush1.msra.mxu0 %v82
    %4843 = vmatprep.subr.mxu0 0.0
    %4844 = vmatpush1.msra.mxu0 %v81
    %4845 = vmatprep.subr.mxu0 0.0
    %4846 = vmatpush1.msra.mxu0 %v80
    %4847 = vmatprep.subr.mxu0 0.0
    %4848 = vmatpush1.msra.mxu0 %v79
    %4849 = vmatprep.subr.mxu0 0.0
    %4850 = vmatpush2.msra.mxu0 0.0
    %4851 = vmatprep.subr.mxu0 0.0
    %4852 = vmatpush2.msra.mxu0 0.0
    %4853 = vmatprep.subr.mxu0 0.0
    %4854 = vmatpush2.msra.mxu0 0.0
    %4855 = vmatprep.subr.mxu0 0.0
    %4856 = vmatpush2.msra.mxu0 0.0
    %4857 = vmatprep.subr.mxu0 0.0
    %4858 = vmatpush2.msra.mxu0 0.0
    %4859 = vmatprep.subr.mxu0 0.0
    %4860 = vmatpush2.msra.mxu0 0.0
    %4861 = vmatprep.subr.mxu0 0.0
    %4862 = vmatpush2.msra.mxu0 0.0
    %4863 = vmatprep.subr.mxu0 0.0
    %4864 = vmatpush2.msra.mxu0 0.0
    %4865 = vmatprep.subr.mxu0 0.0
    %4866 = vmatpush2.msra.mxu0 0.0
    %4867 = vmatprep.subr.mxu0 0.0
    %4868 = vmatpush2.msra.mxu0 0.0
    %4869 = vmatprep.subr.mxu0 0.0
    %4870 = vmatpush2.msra.mxu0 0.0
    %4871 = vmatprep.subr.mxu0 0.0
    %4872 = vmatpush2.msra.mxu0 0.0
    %4873 = vmatprep.subr.mxu0 0.0
    %4874 = vmatpush2.msra.mxu0 0.0
    %4875 = vmatprep.subr.mxu0 0.0
    %4876 = vmatpush2.msra.mxu0 0.0
    %4877 = vmatprep.subr.mxu0 0.0
    %4878 = vmatpush2.msra.mxu0 0.0
    %4879 = vmatprep.subr.mxu0 0.0
    %4880 = vmatpush2.msra.mxu0 0.0
    %4881 = vmatprep.mubr.f32.mxu0 0.0
    %4882 = vmatmul.mubr.f32.gmra.mxu0 %v4661
    %v4883 = vpop.f32.mrf.mxu0
    %v4884 = vadd.f32 %v723, %v4883
    %v4885 = vpop.f32.mrf.mxu0
    %4886 = vdwg.mxu0
    %v4887 = vmul.f32 %v4809, %v4884
    %v4888 = vadd.f32 %v4657, %v4887
    %v4889 = vtanh.pop %v4888
    %v4890 = vsub.f32 1.0, %v4816
    %v4891 = vmul.f32 %v4890, %v4889
    %v4892 = vmul.f32 %v4816, %v4211
    %v4893 = vadd.f32 %v4891, %v4892
    %s4894 = scalar_lea.vmem %s0, 42
    %v4895 = vld [vmem:[%s4894] sm:$0x3]
    %v4896 = vld [vmem:[%s4894 + $0x2] sm:$0x3]
    %v4897 = vld [vmem:[%s4894 + $0x4] sm:$0x3]
    %4898 = vmatprep.subr.mxu0 0.0
    %4899 = vmatpush1.msra.mxu0 0.0
    %4900 = vmatprep.subr.mxu0 0.0
    %4901 = vmatpush1.msra.mxu0 0.0
    %4902 = vmatprep.subr.mxu0 0.0
    %4903 = vmatpush1.msra.mxu0 0.0
    %4904 = vmatprep.subr.mxu0 0.0
    %4905 = vmatpush1.msra.mxu0 0.0
    %4906 = vmatprep.subr.mxu0 0.0
    %4907 = vmatpush1.msra.mxu0 0.0
    %4908 = vmatprep.subr.mxu0 0.0
    %4909 = vmatpush1.msra.mxu0 0.0
    %4910 = vmatprep.subr.mxu0 0.0
    %4911 = vmatpush1.msra.mxu0 0.0
    %4912 = vmatprep.subr.mxu0 0.0
    %4913 = vmatpush1.msra.mxu0 0.0
    %4914 = vmatprep.subr.mxu0 0.0
    %4915 = vmatpush1.msra.mxu0 0.0
    %4916 = vmatprep.subr.mxu0 0.0
    %4917 = vmatpush1.msra.mxu0 0.0
    %4918 = vmatprep.subr.mxu0 0.0
    %4919 = vmatpush1.msra.mxu0 0.0
    %4920 = vmatprep.subr.mxu0 0.0
    %4921 = vmatpush1.msra.mxu0 0.0
    %4922 = vmatprep.subr.mxu0 0.0
    %4923 = vmatpush1.msra.mxu0 %v46
    %4924 = vmatprep.subr.mxu0 0.0
    %4925 = vmatpush1.msra.mxu0 %v45
    %4926 = vmatprep.subr.mxu0 0.0
    %4927 = vmatpush1.msra.mxu0 %v44
    %4928 = vmatprep.subr.mxu0 0.0
    %4929 = vmatpush1.msra.mxu0 %v43
    %4930 = vmatprep.subr.mxu0 0.0
    %4931 = vmatpush2.msra.mxu0 0.0
    %4932 = vmatprep.subr.mxu0 0.0
    %4933 = vmatpush2.msra.mxu0 0.0
    %4934 = vmatprep.subr.mxu0 0.0
    %4935 = vmatpush2.msra.mxu0 0.0
    %4936 = vmatprep.subr.mxu0 0.0
    %4937 = vmatpush2.msra.mxu0 0.0
    %4938 = vmatprep.subr.mxu0 0.0
    %4939 = vmatpush2.msra.mxu0 0.0
    %4940 = vmatprep.subr.mxu0 0.0
    %4941 = vmatpush2.msra.mxu0 0.0
    %4942 = vmatprep.subr.mxu0 0.0
    %4943 = vmatpush2.msra.mxu0 0.0
    %4944 = vmatprep.subr.mxu0 0.0
    %4945 = vmatpush2.msra.mxu0 0.0
    %4946 = vmatprep.subr.mxu0 0.0
    %4947 = vmatpush2.msra.mxu0 0.0
    %4948 = vmatprep.subr.mxu0 0.0
    %4949 = vmatpush2.msra.mxu0 0.0
    %4950 = vmatprep.subr.mxu0 0.0
    %4951 = vmatpush2.msra.mxu0 0.0
    %4952 = vmatprep.subr.mxu0 0.0
    %4953 = vmatpush2.msra.mxu0 0.0
    %4954 = vmatprep.subr.mxu0 0.0
    %4955 = vmatpush2.msra.mxu0 0.0
    %4956 = vmatprep.subr.mxu0 0.0
    %4957 = vmatpush2.msra.mxu0 0.0
    %4958 = vmatprep.subr.mxu0 0.0
    %4959 = vmatpush2.msra.mxu0 0.0
    %4960 = vmatprep.subr.mxu0 0.0
    %4961 = vmatpush2.msra.mxu0 0.0
    %4962 = vmatprep.mubr.f32.mxu0 0.0
    %4963 = vmatmul.mubr.f32.gmra.mxu0 %v4448
    %v4964 = vpop.f32.mrf.mxu0
    %v4965 = vadd.f32 0.0, %v4964
    %v4966 = vpop.f32.mrf.mxu0
    %4967 = vdwg.mxu0
    %4968 = vmatprep.subr.mxu0 0.0
    %4969 = vmatpush1.msra.mxu0 0.0
    %4970 = vmatprep.subr.mxu0 0.0
    %4971 = vmatpush1.msra.mxu0 0.0
    %4972 = vmatprep.subr.mxu0 0.0
    %4973 = vmatpush1.msra.mxu0 0.0
    %4974 = vmatprep.subr.mxu0 0.0
    %4975 = vmatpush1.msra.mxu0 0.0
    %4976 = vmatprep.subr.mxu0 0.0
    %4977 = vmatpush1.msra.mxu0 0.0
    %4978 = vmatprep.subr.mxu0 0.0
    %4979 = vmatpush1.msra.mxu0 0.0
    %4980 = vmatprep.subr.mxu0 0.0
    %4981 = vmatpush1.msra.mxu0 0.0
    %4982 = vmatprep.subr.mxu0 0.0
    %4983 = vmatpush1.msra.mxu0 0.0
    %4984 = vmatprep.subr.mxu0 0.0
    %4985 = vmatpush1.msra.mxu0 0.0
    %4986 = vmatprep.subr.mxu0 0.0
    %4987 = vmatpush1.msra.mxu0 0.0
    %4988 = vmatprep.subr.mxu0 0.0
    %4989 = vmatpush1.msra.mxu0 0.0
    %4990 = vmatprep.subr.mxu0 0.0
    %4991 = vmatpush1.msra.mxu0 0.0
    %4992 = vmatprep.subr.mxu0 0.0
    %4993 = vmatpush1.msra.mxu0 %v50
    %4994 = vmatprep.subr.mxu0 0.0
    %4995 = vmatpush1.msra.mxu0 %v49
    %4996 = vmatprep.subr.mxu0 0.0
    %4997 = vmatpush1.msra.mxu0 %v48
    %4998 = vmatprep.subr.mxu0 0.0
    %4999 = vmatpush1.msra.mxu0 %v47
    %5000 = vmatprep.subr.mxu0 0.0
    %5001 = vmatpush2.msra.mxu0 0.0
    %5002 = vmatprep.subr.mxu0 0.0
    %5003 = vmatpush2.msra.mxu0 0.0
    %5004 = vmatprep.subr.mxu0 0.0
    %5005 = vmatpush2.msra.mxu0 0.0
    %5006 = vmatprep.subr.mxu0 0.0
    %5007 = vmatpush2.msra.mxu0 0.0
    %5008 = vmatprep.subr.mxu0 0.0
    %5009 = vmatpush2.msra.mxu0 0.0
    %5010 = vmatprep.subr.mxu0 0.0
    %5011 = vmatpush2.msra.mxu0 0.0
    %5012 = vmatprep.subr.mxu0 0.0
    %5013 = vmatpush2.msra.mxu0 0.0
    %5014 = vmatprep.subr.mxu0 0.0
    %5015 = vmatpush2.msra.mxu0 0.0
    %5016 = vmatprep.subr.mxu0 0.0
    %5017 = vmatpush2.msra.mxu0 0.0
    %5018 = vmatprep.subr.mxu0 0.0
    %5019 = vmatpush2.msra.mxu0 0.0
    %5020 = vmatprep.subr.mxu0 0.0
    %5021 = vmatpush2.msra.mxu0 0.0
    %5022 = vmatprep.subr.mxu0 0.0
    %5023 = vmatpush2.msra.mxu0 0.0
    %5024 = vmatprep.subr.mxu0 0.0
    %5025 = vmatpush2.msra.mxu0 0.0
    %5026 = vmatprep.subr.mxu0 0.0
    %5027 = vmatpush2.msra.mxu0 0.0
    %5028 = vmatprep.subr.mxu0 0.0
    %5029 = vmatpush2.msra.mxu0 0.0
    %5030 = vmatprep.subr.mxu0 0.0
    %5031 = vmatpush2.msra.mxu0 0.0
    %5032 = vmatprep.mubr.f32.mxu0 0.0
    %5033 = vmatmul.mubr.f32.gmra.mxu0 %v4448
    %v5034 = vpop.f32.mrf.mxu0
    %v5035 = vadd.f32 0.0, %v5034
    %v5036 = vpop.f32.mrf.mxu0
    %5037 = vdwg.mxu0
    %v5038 = vadd.f32 %v4895, %v4965
    %v5039 = vxor.u32 %v5038, 2147483648
    %v5040 = vmul.f32 %v5039, 1.442695
    %v5041 = vpow.pop %v5040
    %v5042 = vadd.f32 %v5041, 1.0
    %v5043 = vrcp.pop %v5042
    %v5044 = vmul.f32 1.0, %v5043
    %v5045 = vadd.f32 %v4896, %v5035
    %v5046 = vxor.u32 %v5045, 2147483648
    %v5047 = vmul.f32 %v5046, 1.442695
    %v5048 = vpow.pop %v5047
    %v5049 = vadd.f32 %v5048, 1.0
    %v5050 = vrcp.pop %v5049
    %v5051 = vmul.f32 1.0, %v5050
    %5052 = vmatprep.subr.mxu0 0.0
    %5053 = vmatpush1.msra.mxu0 0.0
    %5054 = vmatprep.subr.mxu0 0.0
    %5055 = vmatpush1.msra.mxu0 0.0
    %5056 = vmatprep.subr.mxu0 0.0
    %5057 = vmatpush1.msra.mxu0 0.0
    %5058 = vmatprep.subr.mxu0 0.0
    %5059 = vmatpush1.msra.mxu0 0.0
    %5060 = vmatprep.subr.mxu0 0.0
    %5061 = vmatpush1.msra.mxu0 0.0
    %5062 = vmatprep.subr.mxu0 0.0
    %5063 = vmatpush1.msra.mxu0 0.0
    %5064 = vmatprep.subr.mxu0 0.0
    %5065 = vmatpush1.msra.mxu0 0.0
    %5066 = vmatprep.subr.mxu0 0.0
    %5067 = vmatpush1.msra.mxu0 0.0
    %5068 = vmatprep.subr.mxu0 0.0
    %5069 = vmatpush1.msra.mxu0 0.0
    %5070 = vmatprep.subr.mxu0 0.0
    %5071 = vmatpush1.msra.mxu0 0.0
    %5072 = vmatprep.subr.mxu0 0.0
    %5073 = vmatpush1.msra.mxu0 0.0
    %5074 = vmatprep.subr.mxu0 0.0
    %5075 = vmatpush1.msra.mxu0 0.0
    %5076 = vmatprep.subr.mxu0 0.0
    %5077 = vmatpush1.msra.mxu0 %v54
    %5078 = vmatprep.subr.mxu0 0.0
    %5079 = vmatpush1.msra.mxu0 %v53
    %5080 = vmatprep.subr.mxu0 0.0
    %5081 = vmatpush1.msra.mxu0 %v52
    %5082 = vmatprep.subr.mxu0 0.0
    %5083 = vmatpush1.msra.mxu0 %v51
    %5084 = vmatprep.subr.mxu0 0.0
    %5085 = vmatpush2.msra.mxu0 0.0
    %5086 = vmatprep.subr.mxu0 0.0
    %5087 = vmatpush2.msra.mxu0 0.0
    %5088 = vmatprep.subr.mxu0 0.0
    %5089 = vmatpush2.msra.mxu0 0.0
    %5090 = vmatprep.subr.mxu0 0.0
    %5091 = vmatpush2.msra.mxu0 0.0
    %5092 = vmatprep.subr.mxu0 0.0
    %5093 = vmatpush2.msra.mxu0 0.0
    %5094 = vmatprep.subr.mxu0 0.0
    %5095 = vmatpush2.msra.mxu0 0.0
    %5096 = vmatprep.subr.mxu0 0.0
    %5097 = vmatpush2.msra.mxu0 0.0
    %5098 = vmatprep.subr.mxu0 0.0
    %5099 = vmatpush2.msra.mxu0 0.0
    %5100 = vmatprep.subr.mxu0 0.0
    %5101 = vmatpush2.msra.mxu0 0.0
    %5102 = vmatprep.subr.mxu0 0.0
    %5103 = vmatpush2.msra.mxu0 0.0
    %5104 = vmatprep.subr.mxu0 0.0
    %5105 = vmatpush2.msra.mxu0 0.0
    %5106 = vmatprep.subr.mxu0 0.0
    %5107 = vmatpush2.msra.mxu0 0.0
    %5108 = vmatprep.subr.mxu0 0.0
    %5109 = vmatpush2.msra.mxu0 0.0
    %5110 = vmatprep.subr.mxu0 0.0
    %5111 = vmatpush2.msra.mxu0 0.0
    %5112 = vmatprep.subr.mxu0 0.0
    %5113 = vmatpush2.msra.mxu0 0.0
    %5114 = vmatprep.subr.mxu0 0.0
    %5115 = vmatpush2.msra.mxu0 0.0
    %5116 = vmatprep.mubr.f32.mxu0 0.0
    %5117 = vmatmul.mubr.f32.gmra.mxu0 %v4448
    %v5118 = vpop.f32.mrf.mxu0
    %v5119 = vadd.f32 %v252, %v5118
    %v5120 = vpop.f32.mrf.mxu0
    %5121 = vdwg.mxu0
    %v5122 = vmul.f32 %v5044, %v5119
    %v5123 = vadd.f32 %v4897, %v5122
    %v5124 = vtanh.pop %v5123
    %v5125 = vsub.f32 1.0, %v5051
    %v5126 = vmul.f32 %v5125, %v5124
    %v5127 = vmul.f32 %v5051, %v4446
    %v5128 = vadd.f32 %v5126, %v5127
    %v5130 = vsel %vm90, %v5128, 0
    %5132 = vmatprep.subr.mxu0 0.0
    %5133 = vmatpush1.msra.mxu0 0.0
    %5134 = vmatprep.subr.mxu0 0.0
    %5135 = vmatpush1.msra.mxu0 0.0
    %5136 = vmatprep.subr.mxu0 0.0
    %5137 = vmatpush1.msra.mxu0 0.0
    %5138 = vmatprep.subr.mxu0 0.0
    %5139 = vmatpush1.msra.mxu0 0.0
    %5140 = vmatprep.subr.mxu0 0.0
    %5141 = vmatpush1.msra.mxu0 0.0
    %5142 = vmatprep.subr.mxu0 0.0
    %5143 = vmatpush1.msra.mxu0 0.0
    %5144 = vmatprep.subr.mxu0 0.0
    %5145 = vmatpush1.msra.mxu0 0.0
    %5146 = vmatprep.subr.mxu0 0.0
    %5147 = vmatpush1.msra.mxu0 0.0
    %5148 = vmatprep.subr.mxu0 0.0
    %5149 = vmatpush1.msra.mxu0 0.0
    %5150 = vmatprep.subr.mxu0 0.0
    %5151 = vmatpush1.msra.mxu0 0.0
    %5152 = vmatprep.subr.mxu0 0.0
    %5153 = vmatpush1.msra.mxu0 0.0
    %5154 = vmatprep.subr.mxu0 0.0
    %5155 = vmatpush1.msra.mxu0 0.0
    %5156 = vmatprep.subr.mxu0 0.0
    %5157 = vmatpush1.msra.mxu0 %v59
    %5158 = vmatprep.subr.mxu0 0.0
    %5159 = vmatpush1.msra.mxu0 %v58
    %5160 = vmatprep.subr.mxu0 0.0
    %5161 = vmatpush1.msra.mxu0 %v57
    %5162 = vmatprep.subr.mxu0 0.0
    %5163 = vmatpush1.msra.mxu0 %v56
    %5164 = vmatprep.subr.mxu0 0.0
    %5165 = vmatpush2.msra.mxu0 0.0
    %5166 = vmatprep.subr.mxu0 0.0
    %5167 = vmatpush2.msra.mxu0 0.0
    %5168 = vmatprep.subr.mxu0 0.0
    %5169 = vmatpush2.msra.mxu0 0.0
    %5170 = vmatprep.subr.mxu0 0.0
    %5171 = vmatpush2.msra.mxu0 0.0
    %5172 = vmatprep.subr.mxu0 0.0
    %5173 = vmatpush2.msra.mxu0 0.0
    %5174 = vmatprep.subr.mxu0 0.0
    %5175 = vmatpush2.msra.mxu0 0.0
    %5176 = vmatprep.subr.mxu0 0.0
    %5177 = vmatpush2.msra.mxu0 0.0
    %5178 = vmatprep.subr.mxu0 0.0
    %5179 = vmatpush2.msra.mxu0 0.0
    %5180 = vmatprep.subr.mxu0 0.0
    %5181 = vmatpush2.msra.mxu0 0.0
    %5182 = vmatprep.subr.mxu0 0.0
    %5183 = vmatpush2.msra.mxu0 0.0
    %5184 = vmatprep.subr.mxu0 0.0
    %5185 = vmatpush2.msra.mxu0 0.0
    %5186 = vmatprep.subr.mxu0 0.0
    %5187 = vmatpush2.msra.mxu0 0.0
    %5188 = vmatprep.subr.mxu0 0.0
    %5189 = vmatpush2.msra.mxu0 0.0
    %5190 = vmatprep.subr.mxu0 0.0
    %5191 = vmatpush2.msra.mxu0 0.0
    %5192 = vmatprep.subr.mxu0 0.0
    %5193 = vmatpush2.msra.mxu0 0.0
    %5194 = vmatprep.subr.mxu0 0.0
    %5195 = vmatpush2.msra.mxu0 0.0
    %5196 = vmatprep.mubr.f32.mxu0 0.0
    %5197 = vmatmul.mubr.f32.gmra.mxu0 %v5130
    %v5198 = vpop.f32.mrf.mxu0
    %v5199 = vadd.f32 %v335, %v5198
    %v5200 = vpop.f32.mrf.mxu0
    %5201 = vdwg.mxu0
    %5202 = vmatprep.subr.mxu0 0.0
    %5203 = vmatpush1.msra.mxu0 0.0
    %5204 = vmatprep.subr.mxu0 0.0
    %5205 = vmatpush1.msra.mxu0 0.0
    %5206 = vmatprep.subr.mxu0 0.0
    %5207 = vmatpush1.msra.mxu0 0.0
    %5208 = vmatprep.subr.mxu0 0.0
    %5209 = vmatpush1.msra.mxu0 0.0
    %5210 = vmatprep.subr.mxu0 0.0
    %5211 = vmatpush1.msra.mxu0 0.0
    %5212 = vmatprep.subr.mxu0 0.0
    %5213 = vmatpush1.msra.mxu0 0.0
    %5214 = vmatprep.subr.mxu0 0.0
    %5215 = vmatpush1.msra.mxu0 0.0
    %5216 = vmatprep.subr.mxu0 0.0
    %5217 = vmatpush1.msra.mxu0 0.0
    %5218 = vmatprep.subr.mxu0 0.0
    %5219 = vmatpush1.msra.mxu0 0.0
    %5220 = vmatprep.subr.mxu0 0.0
    %5221 = vmatpush1.msra.mxu0 0.0
    %5222 = vmatprep.subr.mxu0 0.0
    %5223 = vmatpush1.msra.mxu0 0.0
    %5224 = vmatprep.subr.mxu0 0.0
    %5225 = vmatpush1.msra.mxu0 0.0
    %5226 = vmatprep.subr.mxu0 0.0
    %5227 = vmatpush1.msra.mxu0 %v63
    %5228 = vmatprep.subr.mxu0 0.0
    %5229 = vmatpush1.msra.mxu0 %v62
    %5230 = vmatprep.subr.mxu0 0.0
    %5231 = vmatpush1.msra.mxu0 %v61
    %5232 = vmatprep.subr.mxu0 0.0
    %5233 = vmatpush1.msra.mxu0 %v60
    %5234 = vmatprep.subr.mxu0 0.0
    %5235 = vmatpush2.msra.mxu0 0.0
    %5236 = vmatprep.subr.mxu0 0.0
    %5237 = vmatpush2.msra.mxu0 0.0
    %5238 = vmatprep.subr.mxu0 0.0
    %5239 = vmatpush2.msra.mxu0 0.0
    %5240 = vmatprep.subr.mxu0 0.0
    %5241 = vmatpush2.msra.mxu0 0.0
    %5242 = vmatprep.subr.mxu0 0.0
    %5243 = vmatpush2.msra.mxu0 0.0
    %5244 = vmatprep.subr.mxu0 0.0
    %5245 = vmatpush2.msra.mxu0 0.0
    %5246 = vmatprep.subr.mxu0 0.0
    %5247 = vmatpush2.msra.mxu0 0.0
    %5248 = vmatprep.subr.mxu0 0.0
    %5249 = vmatpush2.msra.mxu0 0.0
    %5250 = vmatprep.subr.mxu0 0.0
    %5251 = vmatpush2.msra.mxu0 0.0
    %5252 = vmatprep.subr.mxu0 0.0
    %5253 = vmatpush2.msra.mxu0 0.0
    %5254 = vmatprep.subr.mxu0 0.0
    %5255 = vmatpush2.msra.mxu0 0.0
    %5256 = vmatprep.subr.mxu0 0.0
    %5257 = vmatpush2.msra.mxu0 0.0
    %5258 = vmatprep.subr.mxu0 0.0
    %5259 = vmatpush2.msra.mxu0 0.0
    %5260 = vmatprep.subr.mxu0 0.0
    %5261 = vmatpush2.msra.mxu0 0.0
    %5262 = vmatprep.subr.mxu0 0.0
    %5263 = vmatpush2.msra.mxu0 0.0
    %5264 = vmatprep.subr.mxu0 0.0
    %5265 = vmatpush2.msra.mxu0 0.0
    %5266 = vmatprep.mubr.f32.mxu0 0.0
    %5267 = vmatmul.mubr.f32.gmra.mxu0 %v5130
    %v5268 = vpop.f32.mrf.mxu0
    %v5269 = vadd.f32 %v414, %v5268
    %v5270 = vpop.f32.mrf.mxu0
    %5271 = vdwg.mxu0
    %5272 = vmatprep.subr.mxu0 0.0
    %5273 = vmatpush1.msra.mxu0 0.0
    %5274 = vmatprep.subr.mxu0 0.0
    %5275 = vmatpush1.msra.mxu0 0.0
    %5276 = vmatprep.subr.mxu0 0.0
    %5277 = vmatpush1.msra.mxu0 0.0
    %5278 = vmatprep.subr.mxu0 0.0
    %5279 = vmatpush1.msra.mxu0 0.0
    %5280 = vmatprep.subr.mxu0 0.0
    %5281 = vmatpush1.msra.mxu0 0.0
    %5282 = vmatprep.subr.mxu0 0.0
    %5283 = vmatpush1.msra.mxu0 0.0
    %5284 = vmatprep.subr.mxu0 0.0
    %5285 = vmatpush1.msra.mxu0 0.0
    %5286 = vmatprep.subr.mxu0 0.0
    %5287 = vmatpush1.msra.mxu0 0.0
    %5288 = vmatprep.subr.mxu0 0.0
    %5289 = vmatpush1.msra.mxu0 0.0
    %5290 = vmatprep.subr.mxu0 0.0
    %5291 = vmatpush1.msra.mxu0 0.0
    %5292 = vmatprep.subr.mxu0 0.0
    %5293 = vmatpush1.msra.mxu0 0.0
    %5294 = vmatprep.subr.mxu0 0.0
    %5295 = vmatpush1.msra.mxu0 0.0
    %5296 = vmatprep.subr.mxu0 0.0
    %5297 = vmatpush1.msra.mxu0 %v67
    %5298 = vmatprep.subr.mxu0 0.0
    %5299 = vmatpush1.msra.mxu0 %v66
    %5300 = vmatprep.subr.mxu0 0.0
    %5301 = vmatpush1.msra.mxu0 %v65
    %5302 = vmatprep.subr.mxu0 0.0
    %5303 = vmatpush1.msra.mxu0 %v64
    %5304 = vmatprep.subr.mxu0 0.0
    %5305 = vmatpush2.msra.mxu0 0.0
    %5306 = vmatprep.subr.mxu0 0.0
    %5307 = vmatpush2.msra.mxu0 0.0
    %5308 = vmatprep.subr.mxu0 0.0
    %5309 = vmatpush2.msra.mxu0 0.0
    %5310 = vmatprep.subr.mxu0 0.0
    %5311 = vmatpush2.msra.mxu0 0.0
    %5312 = vmatprep.subr.mxu0 0.0
    %5313 = vmatpush2.msra.mxu0 0.0
    %5314 = vmatprep.subr.mxu0 0.0
    %5315 = vmatpush2.msra.mxu0 0.0
    %5316 = vmatprep.subr.mxu0 0.0
    %5317 = vmatpush2.msra.mxu0 0.0
    %5318 = vmatprep.subr.mxu0 0.0
    %5319 = vmatpush2.msra.mxu0 0.0
    %5320 = vmatprep.subr.mxu0 0.0
    %5321 = vmatpush2.msra.mxu0 0.0
    %5322 = vmatprep.subr.mxu0 0.0
    %5323 = vmatpush2.msra.mxu0 0.0
    %5324 = vmatprep.subr.mxu0 0.0
    %5325 = vmatpush2.msra.mxu0 0.0
    %5326 = vmatprep.subr.mxu0 0.0
    %5327 = vmatpush2.msra.mxu0 0.0
    %5328 = vmatprep.subr.mxu0 0.0
    %5329 = vmatpush2.msra.mxu0 0.0
    %5330 = vmatprep.subr.mxu0 0.0
    %5331 = vmatpush2.msra.mxu0 0.0
    %5332 = vmatprep.subr.mxu0 0.0
    %5333 = vmatpush2.msra.mxu0 0.0
    %5334 = vmatprep.subr.mxu0 0.0
    %5335 = vmatpush2.msra.mxu0 0.0
    %5336 = vmatprep.mubr.f32.mxu0 0.0
    %5337 = vmatmul.mubr.f32.gmra.mxu0 %v5130
    %v5338 = vpop.f32.mrf.mxu0
    %v5339 = vadd.f32 %v490, %v5338
    %v5340 = vpop.f32.mrf.mxu0
    %5341 = vdwg.mxu0
    %v5343 = vsel %vm90, %v4893, 0
    %5345 = vmatprep.subr.mxu0 0.0
    %5346 = vmatpush1.msra.mxu0 0.0
    %5347 = vmatprep.subr.mxu0 0.0
    %5348 = vmatpush1.msra.mxu0 0.0
    %5349 = vmatprep.subr.mxu0 0.0
    %5350 = vmatpush1.msra.mxu0 0.0
    %5351 = vmatprep.subr.mxu0 0.0
    %5352 = vmatpush1.msra.mxu0 0.0
    %5353 = vmatprep.subr.mxu0 0.0
    %5354 = vmatpush1.msra.mxu0 0.0
    %5355 = vmatprep.subr.mxu0 0.0
    %5356 = vmatpush1.msra.mxu0 0.0
    %5357 = vmatprep.subr.mxu0 0.0
    %5358 = vmatpush1.msra.mxu0 0.0
    %5359 = vmatprep.subr.mxu0 0.0
    %5360 = vmatpush1.msra.mxu0 0.0
    %5361 = vmatprep.subr.mxu0 0.0
    %5362 = vmatpush1.msra.mxu0 0.0
    %5363 = vmatprep.subr.mxu0 0.0
    %5364 = vmatpush1.msra.mxu0 0.0
    %5365 = vmatprep.subr.mxu0 0.0
    %5366 = vmatpush1.msra.mxu0 0.0
    %5367 = vmatprep.subr.mxu0 0.0
    %5368 = vmatpush1.msra.mxu0 0.0
    %5369 = vmatprep.subr.mxu0 0.0
    %5370 = vmatpush1.msra.mxu0 %v74
    %5371 = vmatprep.subr.mxu0 0.0
    %5372 = vmatpush1.msra.mxu0 %v73
    %5373 = vmatprep.subr.mxu0 0.0
    %5374 = vmatpush1.msra.mxu0 %v72
    %5375 = vmatprep.subr.mxu0 0.0
    %5376 = vmatpush1.msra.mxu0 %v71
    %5377 = vmatprep.subr.mxu0 0.0
    %5378 = vmatpush2.msra.mxu0 0.0
    %5379 = vmatprep.subr.mxu0 0.0
    %5380 = vmatpush2.msra.mxu0 0.0
    %5381 = vmatprep.subr.mxu0 0.0
    %5382 = vmatpush2.msra.mxu0 0.0
    %5383 = vmatprep.subr.mxu0 0.0
    %5384 = vmatpush2.msra.mxu0 0.0
    %5385 = vmatprep.subr.mxu0 0.0
    %5386 = vmatpush2.msra.mxu0 0.0
    %5387 = vmatprep.subr.mxu0 0.0
    %5388 = vmatpush2.msra.mxu0 0.0
    %5389 = vmatprep.subr.mxu0 0.0
    %5390 = vmatpush2.msra.mxu0 0.0
    %5391 = vmatprep.subr.mxu0 0.0
    %5392 = vmatpush2.msra.mxu0 0.0
    %5393 = vmatprep.subr.mxu0 0.0
    %5394 = vmatpush2.msra.mxu0 0.0
    %5395 = vmatprep.subr.mxu0 0.0
    %5396 = vmatpush2.msra.mxu0 0.0
    %5397 = vmatprep.subr.mxu0 0.0
    %5398 = vmatpush2.msra.mxu0 0.0
    %5399 = vmatprep.subr.mxu0 0.0
    %5400 = vmatpush2.msra.mxu0 0.0
    %5401 = vmatprep.subr.mxu0 0.0
    %5402 = vmatpush2.msra.mxu0 0.0
    %5403 = vmatprep.subr.mxu0 0.0
    %5404 = vmatpush2.msra.mxu0 0.0
    %5405 = vmatprep.subr.mxu0 0.0
    %5406 = vmatpush2.msra.mxu0 0.0
    %5407 = vmatprep.subr.mxu0 0.0
    %5408 = vmatpush2.msra.mxu0 0.0
    %5409 = vmatprep.mubr.f32.mxu0 0.0
    %5410 = vmatmul.mubr.f32.gmra.mxu0 %v5343
    %v5411 = vpop.f32.mrf.mxu0
    %v5412 = vadd.f32 0.0, %v5411
    %v5413 = vpop.f32.mrf.mxu0
    %5414 = vdwg.mxu0
    %5415 = vmatprep.subr.mxu0 0.0
    %5416 = vmatpush1.msra.mxu0 0.0
    %5417 = vmatprep.subr.mxu0 0.0
    %5418 = vmatpush1.msra.mxu0 0.0
    %5419 = vmatprep.subr.mxu0 0.0
    %5420 = vmatpush1.msra.mxu0 0.0
    %5421 = vmatprep.subr.mxu0 0.0
    %5422 = vmatpush1.msra.mxu0 0.0
    %5423 = vmatprep.subr.mxu0 0.0
    %5424 = vmatpush1.msra.mxu0 0.0
    %5425 = vmatprep.subr.mxu0 0.0
    %5426 = vmatpush1.msra.mxu0 0.0
    %5427 = vmatprep.subr.mxu0 0.0
    %5428 = vmatpush1.msra.mxu0 0.0
    %5429 = vmatprep.subr.mxu0 0.0
    %5430 = vmatpush1.msra.mxu0 0.0
    %5431 = vmatprep.subr.mxu0 0.0
    %5432 = vmatpush1.msra.mxu0 0.0
    %5433 = vmatprep.subr.mxu0 0.0
    %5434 = vmatpush1.msra.mxu0 0.0
    %5435 = vmatprep.subr.mxu0 0.0
    %5436 = vmatpush1.msra.mxu0 0.0
    %5437 = vmatprep.subr.mxu0 0.0
    %5438 = vmatpush1.msra.mxu0 0.0
    %5439 = vmatprep.subr.mxu0 0.0
    %5440 = vmatpush1.msra.mxu0 %v78
    %5441 = vmatprep.subr.mxu0 0.0
    %5442 = vmatpush1.msra.mxu0 %v77
    %5443 = vmatprep.subr.mxu0 0.0
    %5444 = vmatpush1.msra.mxu0 %v76
    %5445 = vmatprep.subr.mxu0 0.0
    %5446 = vmatpush1.msra.mxu0 %v75
    %5447 = vmatprep.subr.mxu0 0.0
    %5448 = vmatpush2.msra.mxu0 0.0
    %5449 = vmatprep.subr.mxu0 0.0
    %5450 = vmatpush2.msra.mxu0 0.0
    %5451 = vmatprep.subr.mxu0 0.0
    %5452 = vmatpush2.msra.mxu0 0.0
    %5453 = vmatprep.subr.mxu0 0.0
    %5454 = vmatpush2.msra.mxu0 0.0
    %5455 = vmatprep.subr.mxu0 0.0
    %5456 = vmatpush2.msra.mxu0 0.0
    %5457 = vmatprep.subr.mxu0 0.0
    %5458 = vmatpush2.msra.mxu0 0.0
    %5459 = vmatprep.subr.mxu0 0.0
    %5460 = vmatpush2.msra.mxu0 0.0
    %5461 = vmatprep.subr.mxu0 0.0
    %5462 = vmatpush2.msra.mxu0 0.0
    %5463 = vmatprep.subr.mxu0 0.0
    %5464 = vmatpush2.msra.mxu0 0.0
    %5465 = vmatprep.subr.mxu0 0.0
    %5466 = vmatpush2.msra.mxu0 0.0
    %5467 = vmatprep.subr.mxu0 0.0
    %5468 = vmatpush2.msra.mxu0 0.0
    %5469 = vmatprep.subr.mxu0 0.0
    %5470 = vmatpush2.msra.mxu0 0.0
    %5471 = vmatprep.subr.mxu0 0.0
    %5472 = vmatpush2.msra.mxu0 0.0
    %5473 = vmatprep.subr.mxu0 0.0
    %5474 = vmatpush2.msra.mxu0 0.0
    %5475 = vmatprep.subr.mxu0 0.0
    %5476 = vmatpush2.msra.mxu0 0.0
    %5477 = vmatprep.subr.mxu0 0.0
    %5478 = vmatpush2.msra.mxu0 0.0
    %5479 = vmatprep.mubr.f32.mxu0 0.0
    %5480 = vmatmul.mubr.f32.gmra.mxu0 %v5343
    %v5481 = vpop.f32.mrf.mxu0
    %v5482 = vadd.f32 0.0, %v5481
    %v5483 = vpop.f32.mrf.mxu0
    %5484 = vdwg.mxu0
    %v5485 = vadd.f32 %v5199, %v5412
    %v5486 = vxor.u32 %v5485, 2147483648
    %v5487 = vmul.f32 %v5486, 1.442695
    %v5488 = vpow.pop %v5487
    %v5489 = vadd.f32 %v5488, 1.0
    %v5490 = vrcp.pop %v5489
    %v5491 = vmul.f32 1.0, %v5490
    %v5492 = vadd.f32 %v5269, %v5482
    %v5493 = vxor.u32 %v5492, 2147483648
    %v5494 = vmul.f32 %v5493, 1.442695
    %v5495 = vpow.pop %v5494
    %v5496 = vadd.f32 %v5495, 1.0
    %v5497 = vrcp.pop %v5496
    %v5498 = vmul.f32 1.0, %v5497
    %5499 = vmatprep.subr.mxu0 0.0
    %5500 = vmatpush1.msra.mxu0 0.0
    %5501 = vmatprep.subr.mxu0 0.0
    %5502 = vmatpush1.msra.mxu0 0.0
    %5503 = vmatprep.subr.mxu0 0.0
    %5504 = vmatpush1.msra.mxu0 0.0
    %5505 = vmatprep.subr.mxu0 0.0
    %5506 = vmatpush1.msra.mxu0 0.0
    %5507 = vmatprep.subr.mxu0 0.0
    %5508 = vmatpush1.msra.mxu0 0.0
    %5509 = vmatprep.subr.mxu0 0.0
    %5510 = vmatpush1.msra.mxu0 0.0
    %5511 = vmatprep.subr.mxu0 0.0
    %5512 = vmatpush1.msra.mxu0 0.0
    %5513 = vmatprep.subr.mxu0 0.0
    %5514 = vmatpush1.msra.mxu0 0.0
    %5515 = vmatprep.subr.mxu0 0.0
    %5516 = vmatpush1.msra.mxu0 0.0
    %5517 = vmatprep.subr.mxu0 0.0
    %5518 = vmatpush1.msra.mxu0 0.0
    %5519 = vmatprep.subr.mxu0 0.0
    %5520 = vmatpush1.msra.mxu0 0.0
    %5521 = vmatprep.subr.mxu0 0.0
    %5522 = vmatpush1.msra.mxu0 0.0
    %5523 = vmatprep.subr.mxu0 0.0
    %5524 = vmatpush1.msra.mxu0 %v82
    %5525 = vmatprep.subr.mxu0 0.0
    %5526 = vmatpush1.msra.mxu0 %v81
    %5527 = vmatprep.subr.mxu0 0.0
    %5528 = vmatpush1.msra.mxu0 %v80
    %5529 = vmatprep.subr.mxu0 0.0
    %5530 = vmatpush1.msra.mxu0 %v79
    %5531 = vmatprep.subr.mxu0 0.0
    %5532 = vmatpush2.msra.mxu0 0.0
    %5533 = vmatprep.subr.mxu0 0.0
    %5534 = vmatpush2.msra.mxu0 0.0
    %5535 = vmatprep.subr.mxu0 0.0
    %5536 = vmatpush2.msra.mxu0 0.0
    %5537 = vmatprep.subr.mxu0 0.0
    %5538 = vmatpush2.msra.mxu0 0.0
    %5539 = vmatprep.subr.mxu0 0.0
    %5540 = vmatpush2.msra.mxu0 0.0
    %5541 = vmatprep.subr.mxu0 0.0
    %5542 = vmatpush2.msra.mxu0 0.0
    %5543 = vmatprep.subr.mxu0 0.0
    %5544 = vmatpush2.msra.mxu0 0.0
    %5545 = vmatprep.subr.mxu0 0.0
    %5546 = vmatpush2.msra.mxu0 0.0
    %5547 = vmatprep.subr.mxu0 0.0
    %5548 = vmatpush2.msra.mxu0 0.0
    %5549 = vmatprep.subr.mxu0 0.0
    %5550 = vmatpush2.msra.mxu0 0.0
    %5551 = vmatprep.subr.mxu0 0.0
    %5552 = vmatpush2.msra.mxu0 0.0
    %5553 = vmatprep.subr.mxu0 0.0
    %5554 = vmatpush2.msra.mxu0 0.0
    %5555 = vmatprep.subr.mxu0 0.0
    %5556 = vmatpush2.msra.mxu0 0.0
    %5557 = vmatprep.subr.mxu0 0.0
    %5558 = vmatpush2.msra.mxu0 0.0
    %5559 = vmatprep.subr.mxu0 0.0
    %5560 = vmatpush2.msra.mxu0 0.0
    %5561 = vmatprep.subr.mxu0 0.0
    %5562 = vmatpush2.msra.mxu0 0.0
    %5563 = vmatprep.mubr.f32.mxu0 0.0
    %5564 = vmatmul.mubr.f32.gmra.mxu0 %v5343
    %v5565 = vpop.f32.mrf.mxu0
    %v5566 = vadd.f32 %v723, %v5565
    %v5567 = vpop.f32.mrf.mxu0
    %5568 = vdwg.mxu0
    %v5569 = vmul.f32 %v5491, %v5566
    %v5570 = vadd.f32 %v5339, %v5569
    %v5571 = vtanh.pop %v5570
    %v5572 = vsub.f32 1.0, %v5498
    %v5573 = vmul.f32 %v5572, %v5571
    %v5574 = vmul.f32 %v5498, %v4893
    %v5575 = vadd.f32 %v5573, %v5574
    %vm5576 = vcmask 254976
    %5577 = vst.msk [vmem:[#allocation5] sm:$0x3] %vm5576, %v5128
    %s5578 = scalar_lea.vmem [#allocation5], 2
    %5579 = vst.msk [vmem:[%s5578] sm:$0x3] %vm5576, %v5575
    %v5580 = vld [vmem:[%s8] sm:$0xff]
    %v5581 = vld [vmem:[%s8 + $0x8] sm:$0xff]
    %v5582 = vld [vmem:[%s8 + $0x10] sm:$0xff]
    %v5583 = vld [vmem:[%s8 + $0x18] sm:$0xff]
    %v5584 = vld [vmem:[%s9] sm:$0x1]
    %v5586 = vlaneseq
    %v5587 = vshrl.u32 %v5586, 7
    %v5588 = vsub.s32 0, %v5587
    %v5589 = vrot.slane %v5584, %v5588
    %v5592 = vsel %vm90, %v5575, 0
    %5594 = vmatprep.subr.mxu0 0.0
    %5595 = vmatpush1.msra.mxu0 0.0
    %5596 = vmatprep.subr.mxu0 0.0
    %5597 = vmatpush1.msra.mxu0 0.0
    %5598 = vmatprep.subr.mxu0 0.0
    %5599 = vmatpush1.msra.mxu0 0.0
    %5600 = vmatprep.subr.mxu0 0.0
    %5601 = vmatpush1.msra.mxu0 0.0
    %5602 = vmatprep.subr.mxu0 0.0
    %5603 = vmatpush1.msra.mxu0 0.0
    %5604 = vmatprep.subr.mxu0 0.0
    %5605 = vmatpush1.msra.mxu0 0.0
    %5606 = vmatprep.subr.mxu0 0.0
    %5607 = vmatpush1.msra.mxu0 0.0
    %5608 = vmatprep.subr.mxu0 0.0
    %5609 = vmatpush1.msra.mxu0 0.0
    %5610 = vmatprep.subr.mxu0 0.0
    %5611 = vmatpush1.msra.mxu0 0.0
    %5612 = vmatprep.subr.mxu0 0.0
    %5613 = vmatpush1.msra.mxu0 0.0
    %5614 = vmatprep.subr.mxu0 0.0
    %5615 = vmatpush1.msra.mxu0 0.0
    %5616 = vmatprep.subr.mxu0 0.0
    %5617 = vmatpush1.msra.mxu0 0.0
    %5618 = vmatprep.subr.mxu0 0.0
    %5619 = vmatpush1.msra.mxu0 %v5583
    %5620 = vmatprep.subr.mxu0 0.0
    %5621 = vmatpush1.msra.mxu0 %v5582
    %5622 = vmatprep.subr.mxu0 0.0
    %5623 = vmatpush1.msra.mxu0 %v5581
    %5624 = vmatprep.subr.mxu0 0.0
    %5625 = vmatpush1.msra.mxu0 %v5580
    %5626 = vmatprep.subr.mxu0 0.0
    %5627 = vmatpush2.msra.mxu0 0.0
    %5628 = vmatprep.subr.mxu0 0.0
    %5629 = vmatpush2.msra.mxu0 0.0
    %5630 = vmatprep.subr.mxu0 0.0
    %5631 = vmatpush2.msra.mxu0 0.0
    %5632 = vmatprep.subr.mxu0 0.0
    %5633 = vmatpush2.msra.mxu0 0.0
    %5634 = vmatprep.subr.mxu0 0.0
    %5635 = vmatpush2.msra.mxu0 0.0
    %5636 = vmatprep.subr.mxu0 0.0
    %5637 = vmatpush2.msra.mxu0 0.0
    %5638 = vmatprep.subr.mxu0 0.0
    %5639 = vmatpush2.msra.mxu0 0.0
    %5640 = vmatprep.subr.mxu0 0.0
    %5641 = vmatpush2.msra.mxu0 0.0
    %5642 = vmatprep.subr.mxu0 0.0
    %5643 = vmatpush2.msra.mxu0 0.0
    %5644 = vmatprep.subr.mxu0 0.0
    %5645 = vmatpush2.msra.mxu0 0.0
    %5646 = vmatprep.subr.mxu0 0.0
    %5647 = vmatpush2.msra.mxu0 0.0
    %5648 = vmatprep.subr.mxu0 0.0
    %5649 = vmatpush2.msra.mxu0 0.0
    %5650 = vmatprep.subr.mxu0 0.0
    %5651 = vmatpush2.msra.mxu0 0.0
    %5652 = vmatprep.subr.mxu0 0.0
    %5653 = vmatpush2.msra.mxu0 0.0
    %5654 = vmatprep.subr.mxu0 0.0
    %5655 = vmatpush2.msra.mxu0 0.0
    %5656 = vmatprep.subr.mxu0 0.0
    %5657 = vmatpush2.msra.mxu0 0.0
    %5658 = vmatprep.mubr.f32.mxu0 0.0
    %5659 = vmatmul.mubr.f32.gmra.mxu0 %v5592
    %v5660 = vpop.f32.mrf.mxu0
    %v5661 = vadd.f32 %v5589, %v5660
    %v5662 = vpop.f32.mrf.mxu0
    %5663 = vdwg.mxu0
    %s5664 = sld [smem:[#allocation2]]
    %vm5665 = vcmp.ge.f32.partialorder %v5661, 0.0
    %v5666 = vstv %s5664
    %v5667 = vmul.f32 %v5666, %v5661
    %v5668 = vsel %vm5665, %v5661, %v5667
    %vm5669 = vcmask 33792
    %5670 = vst.msk [vmem:[#allocation3] sm:$0x3] %vm5669, %v5668
    // Predicated region
    $region46: #{gru_forward.1} parent=1 // pred_check
      _
    $region47: #{gru_forward.1} parent=1 // pred_check_branch
      %5672 = sbr.rel (0) target = $region49
    $region48: #{gru_forward.1} parent=1 // pred_region
      %s5674 = ssub.s32 32, 32
      %5675 = vsyncadd [#allocation4], %s5674
      %s5677 = sshll.u32 [#allocation3], 4
      %s5678 = int_to_ptr.vmem [resolvable:$true] %s5677
      %5680 = dma.vmem_to_hbm [thread:$0]  %s5678, 32, %s11, [#allocation4]
    $region49: #{gru_forward.1} parent=1 // pred_fallthru
      _
    // Predicated region
    $region50: #{gru_forward.1} parent=1 // pred_check
      _
    $region51: #{gru_forward.1} parent=1 // pred_check_branch
      %5682 = sbr.rel (0) target = $region53
    $region52: #{gru_forward.1} parent=1 // pred_region
      %s5684 = ssub.s32 64, 64
      %5685 = vsyncadd [#allocation6], %s5684
      %s5686 = sshll.u32 [#allocation5], 4
      %s5687 = int_to_ptr.vmem [resolvable:$true] %s5686
      %5692 = dma.vmem_to_hbm [thread:$0]  %s5687, 64, %s12, [#allocation6], 32, 32, 2
    $region53: #{gru_forward.1} parent=1 // pred_fallthru
      _
    // Predicated region
    $region54: #{gru_forward.1} parent=1 // pred_check
      _
    $region55: #{gru_forward.1} parent=1 // pred_check_branch
      %5694 = sbr.rel (0) target = $region57
    $region56: #{gru_forward.1} parent=1 // pred_region
      %5695 = dma.done [#allocation4], 32
    $region57: #{gru_forward.1} parent=1 // pred_fallthru
      _
    // Predicated region
    $region58: #{gru_forward.1} parent=1 // pred_check
      _
    $region59: #{gru_forward.1} parent=1 // pred_check_branch
      %5697 = sbr.rel (0) target = $region61
    $region60: #{gru_forward.1} parent=1 // pred_region
      %5698 = dma.done [#allocation6], 64
    $region61: #{gru_forward.1} parent=1 // pred_fallthru
      _
    %5699 = vsyncpa [#allocation4], 1
    %5700 = vsyncpa [#allocation6], 1

</llo_original>
